<compile_context>
chip_gen: v7x
topology: tpu7x:2x2x1
jax: 0.10.0
libtpu: 0.0.40
codegen_flags: <defaults>
</compile_context>

<pallas_src>
import functools

import jax
import jax.numpy as jnp
from jax.experimental import pallas as pl
from jax.experimental.pallas import tpu as pltpu


# ---------------------------------------------------------------------------
# Fused RGCN (2 x RelGraphConv[basis] + ReLU) + AdaptiveMaxPool1d(1024)
# ---------------------------------------------------------------------------
def _rgcn_pool_kernel(adj_ref, feat_ref, w1_ref, l1_ref, b1_ref,
                      w2_ref, l2_ref, b2_ref, o_ref, *, pool_k):
    R = adj_ref.shape[0]
    f1 = l1_ref.shape[1]
    f2 = l2_ref.shape[1]

    feat = feat_ref[...]

    # layer 1: h = sum_r A_r @ (feat @ W_r) + feat @ W_loop + bias ; relu
    t1 = jnp.dot(feat, w1_ref[...], preferred_element_type=jnp.float32)   # (N, R*f1)
    h = jnp.dot(feat, l1_ref[...], preferred_element_type=jnp.float32) + b1_ref[...]
    for r in range(R):
        h = h + jnp.dot(adj_ref[r], t1[:, r * f1:(r + 1) * f1],
                        preferred_element_type=jnp.float32)
    h = jnp.maximum(h, 0.0)

    # layer 2
    t2 = jnp.dot(h, w2_ref[...], preferred_element_type=jnp.float32)      # (N, R*f2)
    h2 = jnp.dot(h, l2_ref[...], preferred_element_type=jnp.float32) + b2_ref[...]
    for r in range(R):
        h2 = h2 + jnp.dot(adj_ref[r], t2[:, r * f2:(r + 1) * f2],
                          preferred_element_type=jnp.float32)
    h2 = jnp.maximum(h2, 0.0)                                             # (N, f2)

    # AdaptiveMaxPool1d(1024) of flat(h2): exact windows of size pool_k that never
    # straddle rows (f2 % pool_k == 0), i.e. windowed max along the feature axis.
    cols = [
        jnp.max(h2[:, j * pool_k:(j + 1) * pool_k], axis=1, keepdims=True)
        for j in range(f2 // pool_k)
    ]
    o_ref[...] = jnp.concatenate(cols, axis=1)


def rgcn_pool_forward(adj, feat, rgcn1, rgcn2, pool_out=1024):
    w1_cat, loop1, bias1 = rgcn1
    w2_cat, loop2, bias2 = rgcn2
    R, N, _ = adj.shape
    fin = feat.shape[1]
    f1 = loop1.shape[1]
    f2 = loop2.shape[1]

    total = N * f2
    # TODO(synk): general AdaptiveMaxPool1d (non-uniform windows) not implemented.
    assert total % pool_out == 0 and total >= pool_out, \
        "requires num_nodes*32 to be a multiple of 1024"
    pool_k = total // pool_out
    assert f2 % pool_k == 0, "pool windows must not straddle node rows"

    out = pl.pallas_call(
        functools.partial(_rgcn_pool_kernel, pool_k=pool_k),
        out_shape=jax.ShapeDtypeStruct((N, f2 // pool_k), jnp.float32),
        grid_spec=pltpu.PrefetchScalarGridSpec(
            num_scalar_prefetch=0,
            grid=(1,),
            in_specs=[
                pl.BlockSpec((R, N, N), lambda i: (0, 0, 0)),
                pl.BlockSpec((N, fin), lambda i: (0, 0)),
                pl.BlockSpec((fin, R * f1), lambda i: (0, 0)),
                pl.BlockSpec((fin, f1), lambda i: (0, 0)),
                pl.BlockSpec((1, f1), lambda i: (0, 0)),
                pl.BlockSpec((f1, R * f2), lambda i: (0, 0)),
                pl.BlockSpec((f1, f2), lambda i: (0, 0)),
                pl.BlockSpec((1, f2), lambda i: (0, 0)),
            ],
            out_specs=pl.BlockSpec((N, f2 // pool_k), lambda i: (0, 0)),
        ),
        compiler_params=pltpu.CompilerParams(dimension_semantics=("arbitrary",)),
    )(adj, feat, w1_cat, loop1, bias1, w2_cat, loop2, bias2)
    # tiny (4 KB) relayout handled by XLA; decoder consumes a lane-dense (1, 1024).
    return out.reshape(1, pool_out)


# ---------------------------------------------------------------------------
# Fused 6-layer TransformerDecoder (post-norm, eval, seq = batch = 1)
# Activation stays resident in VMEM; weights stream as (1024,1024) bf16 blocks.
# Stage s meaning:  0: self-attn  1: cross-attn  2: W1a  3: W1b  4: W2a  5: W2b
# ---------------------------------------------------------------------------
def _decoder_kernel(mem_ref, w_ref, p_ref, o_ref,
                    x_ref, h1a_ref, h1b_ref, acc_ref):
    l = pl.program_id(0)
    s = pl.program_id(1)

    @pl.when(jnp.logical_and(l == 0, s == 0))
    def _():
        x_ref[...] = mem_ref[...]

    x = x_ref[...]
    p = p_ref[...]          # (11, D): [b_sa,g1,be1, b_ca,g2,be2, b1a,b1b, b2,g3,be3]

    # pick the matmul LHS for this stage (single matmul per grid step)
    lhs = jnp.where(s == 1, mem_ref[...],
          jnp.where(s == 4, h1a_ref[...],
          jnp.where(s == 5, h1b_ref[...], x)))

    y = jnp.dot(lhs.astype(jnp.bfloat16), w_ref[...],
                preferred_element_type=jnp.float32)               # (1, D) f32

    def layer_norm(v, g, b):
        mean = jnp.mean(v, axis=-1, keepdims=True)
        var = jnp.mean((v - mean) ** 2, axis=-1, keepdims=True)
        return (v - mean) * jax.lax.rsqrt(var + 1e-5) * g + b

    @pl.when(s == 0)  # x = LN1(x + x @ W_sa + b_sa)
    def _():
        x_ref[...] = layer_norm(x + y + p[0:1, :], p[1:2, :], p[2:3, :])

    @pl.when(s == 1)  # x = LN2(x + memory @ W_ca + b_ca)
    def _():
        x_ref[...] = layer_norm(x + y + p[3:4, :], p[4:5, :], p[5:6, :])

    @pl.when(s == 2)  # h1a = relu(x @ W1a + b1a)
    def _():
        h1a_ref[...] = jnp.maximum(y + p[6:7, :], 0.0)

    @pl.when(s == 3)  # h1b = relu(x @ W1b + b1b)
    def _():
        h1b_ref[...] = jnp.maximum(y + p[7:8, :], 0.0)

    @pl.when(s == 4)  # acc = h1a @ W2a
    def _():
        acc_ref[...] = y

    @pl.when(s == 5)  # ff = acc + h1b @ W2b + b2 ; x = LN3(x + ff)
    def _():
        ff = acc_ref[...] + y + p[8:9, :]
        x_ref[...] = layer_norm(x + ff, p[9:10, :], p[10:11, :])

    @pl.when(jnp.logical_and(l == pl.num_programs(0) - 1,
                             s == pl.num_programs(1) - 1))
    def _():
        o_ref[...] = x_ref[...]


def decoder_forward(memory, w_all, p_all):
    L, S, D, _ = w_all.shape
    P = p_all.shape[1]
    return pl.pallas_call(
        _decoder_kernel,
        out_shape=jax.ShapeDtypeStruct((1, D), jnp.float32),
        grid_spec=pltpu.PrefetchScalarGridSpec(
            num_scalar_prefetch=0,
            grid=(L, S),
            in_specs=[
                pl.BlockSpec((1, D), lambda l, s: (0, 0)),                   # memory (resident)
                pl.BlockSpec((None, None, D, D), lambda l, s: (l, s, 0, 0)),  # weight stream
                pl.BlockSpec((None, P, D), lambda l, s: (l, 0, 0)),           # per-layer vectors
            ],
            out_specs=pl.BlockSpec((1, D), lambda l, s: (0, 0)),
            scratch_shapes=[
                pltpu.VMEM((1, D), jnp.float32),   # x (carried activation)
                pltpu.VMEM((1, D), jnp.float32),   # h1a
                pltpu.VMEM((1, D), jnp.float32),   # h1b
                pltpu.VMEM((1, D), jnp.float32),   # acc
            ],
        ),
        compiler_params=pltpu.CompilerParams(
            dimension_semantics=("arbitrary", "arbitrary"),
        ),
    )(memory, w_all, p_all)


# ---------------------------------------------------------------------------
# Small linear head: y = x @ W + b
# ---------------------------------------------------------------------------
def _linear_kernel(x_ref, w_ref, b_ref, o_ref):
    o_ref[...] = (
        jnp.dot(x_ref[...], w_ref[...], preferred_element_type=jnp.float32)
        + b_ref[...]
    ).astype(o_ref.dtype)


def linear(x, w, b):
    M, K = x.shape
    N = w.shape[1]
    return pl.pallas_call(
        _linear_kernel,
        out_shape=jax.ShapeDtypeStruct((M, N), jnp.float32),
        grid_spec=pltpu.PrefetchScalarGridSpec(
            num_scalar_prefetch=0,
            grid=(1,),
            in_specs=[
                pl.BlockSpec((M, K), lambda i: (0, 0)),
                pl.BlockSpec((K, N), lambda i: (0, 0)),
                pl.BlockSpec((1, N), lambda i: (0, 0)),
            ],
            out_specs=pl.BlockSpec((M, N), lambda i: (0, 0)),
        ),
    )(x, w, b.reshape(1, N))


# ---------------------------------------------------------------------------
# Full model forward
# ---------------------------------------------------------------------------
def model_forward(adj, feat, prepped):
    memory = rgcn_pool_forward(adj, feat, prepped["rgcn1"], prepped["rgcn2"])
    x = decoder_forward(memory, prepped["dec_w"], prepped["dec_p"])
    return linear(x, prepped["fc_w"], prepped["fc_b"])


# ---------------------------------------------------------------------------
# Parameter construction (torch-like raw params) + one-time weight preparation
# ---------------------------------------------------------------------------
def make_params(key, num_nodes, num_rels, d_model, d_ff, num_classes, num_layers=6):
    def nrm(k, shape, fan_in):
        return (jax.random.normal(k, shape, jnp.float32)
                / jnp.sqrt(float(fan_in))).astype(jnp.float32)

    keys = iter(jax.random.split(key, 256))
    params = {}

    # RelGraphConv(num_nodes, 64, num_rels, basis, num_bases=num_rels)
    params["rgcn1"] = (
        nrm(next(keys), (num_rels, num_nodes, 64), num_nodes),            # basis
        jax.random.normal(next(keys), (num_rels, num_rels), jnp.float32),  # comp
        nrm(next(keys), (num_nodes, 64), num_nodes),                       # loop weight
        jnp.zeros((64,), jnp.float32),                                     # bias
    )
    # RelGraphConv(h_dim=64, 32, num_rels, basis, num_bases=num_rels)
    params["rgcn2"] = (
        nrm(next(keys), (num_rels, 64, 32), 64),
        jax.random.normal(next(keys), (num_rels, num_rels), jnp.float32),
        nrm(next(keys), (64, 32), 64),
        jnp.zeros((32,), jnp.float32),
    )

    layers = []
    for _ in range(num_layers):
        layers.append({
            # attention V / out projections, stored as (in, out) = torch W.T
            "wv_sa": nrm(next(keys), (d_model, d_model), d_model),
            "bv_sa": 0.02 * jax.random.normal(next(keys), (d_model,), jnp.float32),
            "wo_sa": nrm(next(keys), (d_model, d_model), d_model),
            "bo_sa": 0.02 * jax.random.normal(next(keys), (d_model,), jnp.float32),
            "wv_ca": nrm(next(keys), (d_model, d_model), d_model),
            "bv_ca": 0.02 * jax.random.normal(next(keys), (d_model,), jnp.float32),
            "wo_ca": nrm(next(keys), (d_model, d_model), d_model),
            "bo_ca": 0.02 * jax.random.normal(next(keys), (d_model,), jnp.float32),
            # feed-forward
            "w1": nrm(next(keys), (d_model, d_ff), d_model),
            "b1": 0.02 * jax.random.normal(next(keys), (d_ff,), jnp.float32),
            "w2": nrm(next(keys), (d_ff, d_model), d_ff),
            "b2": 0.02 * jax.random.normal(next(keys), (d_model,), jnp.float32),
            # layer norms (torch default init)
            "g1": jnp.ones((d_model,), jnp.float32),
            "be1": jnp.zeros((d_model,), jnp.float32),
            "g2": jnp.ones((d_model,), jnp.float32),
            "be2": jnp.zeros((d_model,), jnp.float32),
            "g3": jnp.ones((d_model,), jnp.float32),
            "be3": jnp.zeros((d_model,), jnp.float32),
        })
    params["decoder"] = layers

    params["fc_w"] = nrm(next(keys), (d_model, num_classes), d_model)
    params["fc_b"] = 0.02 * jax.random.normal(next(keys), (num_classes,), jnp.float32)
    return params


def prepare_params(raw):
    """One-time weight prep: basis combination, Wv@Wo folding, FFN split, bf16 pack."""
    def prep_rgcn(basis, comp, loop_w, bias):
        W = jnp.einsum("rb,bio->rio", comp, basis)                 # (R, Fin, Fout)
        R, Fin, Fout = W.shape
        w_cat = jnp.transpose(W, (1, 0, 2)).reshape(Fin, R * Fout)  # [W_0 | ... | W_{R-1}]
        return w_cat, loop_w, bias.reshape(1, -1)

    prepped = {
        "rgcn1": prep_rgcn(*raw["rgcn1"]),
        "rgcn2": prep_rgcn(*raw["rgcn2"]),
        "fc_w": raw["fc_w"],
        "fc_b": raw["fc_b"],
    }

    w_blocks, p_blocks = [], []
    for lyr in raw["decoder"]:
        d = lyr["wv_sa"].shape[0]
        assert lyr["w1"].shape[1] == 2 * d, "fused decoder assumes d_ff == 2 * d_model"
        # exact for seq = batch = 1: attention == out_proj(V_proj(input))
        W_sa = lyr["wv_sa"] @ lyr["wo_sa"]
        b_sa = lyr["bv_sa"] @ lyr["wo_sa"] + lyr["bo_sa"]
        W_ca = lyr["wv_ca"] @ lyr["wo_ca"]
        b_ca = lyr["bv_ca"] @ lyr["wo_ca"] + lyr["bo_ca"]
        W1a, W1b = lyr["w1"][:, :d], lyr["w1"][:, d:]
        b1a, b1b = lyr["b1"][:d], lyr["b1"][d:]
        W2a, W2b = lyr["w2"][:d, :], lyr["w2"][d:, :]
        w_blocks.append(
            jnp.stack([W_sa, W_ca, W1a, W1b, W2a, W2b]).astype(jnp.bfloat16))
        p_blocks.append(
            jnp.stack([b_sa, lyr["g1"], lyr["be1"],
                       b_ca, lyr["g2"], lyr["be2"],
                       b1a, b1b, lyr["b2"], lyr["g3"], lyr["be3"]]))
    prepped["dec_w"] = jnp.stack(w_blocks)   # (L, 6, D, D) bf16 — contiguous stream
    prepped["dec_p"] = jnp.stack(p_blocks)   # (L, 11, D)  f32
    return prepped


if __name__ == "__main__":
    # small shapes consistent with the module:
    # layer1 in_feat == num_nodes, h_dim == 64, transformer_dim == 1024 (pool out).
    num_nodes = 64
    num_rels = 3
    d_model = 1024
    d_ff = 2048
    num_classes = 10
    num_edges = 256

    key = jax.random.PRNGKey(0)
    k_feat, k_src, k_dst, k_et, k_par = jax.random.split(key, 5)

    # node features: (num_nodes, num_nodes)
    feat = jax.random.normal(k_feat, (num_nodes, num_nodes), jnp.float32)

    # synthetic graph -> dense per-relation adjacency A[r, dst, src]
    src = jax.random.randint(k_src, (num_edges,), 0, num_nodes)
    dst = jax.random.randint(k_dst, (num_edges,), 0, num_nodes)
    etypes = jax.random.randint(k_et, (num_edges,), 0, num_rels)
    adj = jnp.zeros((num_rels, num_nodes, num_nodes), jnp.float32).at[
        etypes, dst, src].add(1.0)

    raw = make_params(k_par, num_nodes, num_rels, d_model, d_ff, num_classes)
    prepped = prepare_params(raw)

    fwd = jax.jit(model_forward)
    out = jax.block_until_ready(fwd(adj, feat, prepped))
    assert out.shape == (1, num_classes)
    assert bool(jnp.all(jnp.isfinite(out)))
    print("KERNEL_OK")
</pallas_src>

<mosaic_0001>
module attributes {stable_mosaic.version = 11 : i64} {
  func.func @_rgcn_pool_kernel(%arg0: i32, %arg1: memref<3x64x64xf32, #tpu.memory_space<vmem>>, %arg2: memref<64x64xf32, #tpu.memory_space<vmem>>, %arg3: memref<64x192xf32, #tpu.memory_space<vmem>>, %arg4: memref<64x64xf32, #tpu.memory_space<vmem>>, %arg5: memref<1x64xf32, #tpu.memory_space<vmem>>, %arg6: memref<64x96xf32, #tpu.memory_space<vmem>>, %arg7: memref<64x32xf32, #tpu.memory_space<vmem>>, %arg8: memref<1x32xf32, #tpu.memory_space<vmem>>, %arg9: memref<64x16xf32, #tpu.memory_space<vmem>>) attributes {dimension_semantics = [#tpu.dimension_semantics<arbitrary>], iteration_bounds = array<i64: 1>, scalar_prefetch = 0 : i64, scratch_operands = 0 : i64, tpu.core_type = #tpu.core_type<tc>, window_params = [{pipeline_mode = #tpu.pipeline_mode<synchronous>, transform_indices = @transform_0, window_bounds = array<i64: 3, 64, 64>}, {pipeline_mode = #tpu.pipeline_mode<synchronous>, transform_indices = @transform_1, window_bounds = array<i64: 64, 64>}, {pipeline_mode = #tpu.pipeline_mode<synchronous>, transform_indices = @transform_2, window_bounds = array<i64: 64, 192>}, {pipeline_mode = #tpu.pipeline_mode<synchronous>, transform_indices = @transform_3, window_bounds = array<i64: 64, 64>}, {pipeline_mode = #tpu.pipeline_mode<synchronous>, transform_indices = @transform_4, window_bounds = array<i64: 1, 64>}, {pipeline_mode = #tpu.pipeline_mode<synchronous>, transform_indices = @transform_5, window_bounds = array<i64: 64, 96>}, {pipeline_mode = #tpu.pipeline_mode<synchronous>, transform_indices = @transform_6, window_bounds = array<i64: 64, 32>}, {pipeline_mode = #tpu.pipeline_mode<synchronous>, transform_indices = @transform_7, window_bounds = array<i64: 1, 32>}, {pipeline_mode = #tpu.pipeline_mode<synchronous>, transform_indices = @transform_8, window_bounds = array<i64: 64, 16>}]} {
    %c0 = arith.constant 0 : index
    %c0_0 = arith.constant 0 : index
    %0 = vector.load %arg2[%c0, %c0_0] : memref<64x64xf32, #tpu.memory_space<vmem>>, vector<64x64xf32>
    %c0_1 = arith.constant 0 : index
    %c0_2 = arith.constant 0 : index
    %1 = vector.load %arg3[%c0_1, %c0_2] : memref<64x192xf32, #tpu.memory_space<vmem>>, vector<64x192xf32>
    %cst = arith.constant dense<0.000000e+00> : vector<64x192xf32>
    %2 = tpu.matmul %0, %1, %cst {dimension_numbers = #tpu.dot_dimension_numbers<[1], [0], [0], [1], [0, 0, 1, 1], [], []>} : vector<64x64xf32>, vector<64x192xf32>, vector<64x192xf32> -> vector<64x192xf32>
    %c0_3 = arith.constant 0 : index
    %c0_4 = arith.constant 0 : index
    %3 = vector.load %arg4[%c0_3, %c0_4] : memref<64x64xf32, #tpu.memory_space<vmem>>, vector<64x64xf32>
    %cst_5 = arith.constant dense<0.000000e+00> : vector<64x64xf32>
    %4 = tpu.matmul %0, %3, %cst_5 {dimension_numbers = #tpu.dot_dimension_numbers<[1], [0], [0], [1], [0, 0, 1, 1], [], []>} : vector<64x64xf32>, vector<64x64xf32>, vector<64x64xf32> -> vector<64x64xf32>
    %c0_6 = arith.constant 0 : index
    %c0_7 = arith.constant 0 : index
    %5 = vector.load %arg5[%c0_6, %c0_7] : memref<1x64xf32, #tpu.memory_space<vmem>>, vector<1x64xf32>
    %6 = vector.broadcast %5 : vector<1x64xf32> to vector<64x64xf32>
    %7 = arith.addf %4, %6 : vector<64x64xf32>
    %c0_8 = arith.constant 0 : index
    %c0_9 = arith.constant 0 : index
    %c0_10 = arith.constant 0 : index
    %8 = vector.load %arg1[%c0_8, %c0_9, %c0_10] : memref<3x64x64xf32, #tpu.memory_space<vmem>>, vector<1x64x64xf32>
    %9 = vector.shape_cast %8 : vector<1x64x64xf32> to vector<64x64xf32>
    %10 = vector.extract_strided_slice %2 {offsets = [0, 0], sizes = [64, 64], strides = [1, 1]} : vector<64x192xf32> to vector<64x64xf32>
    %cst_11 = arith.constant dense<0.000000e+00> : vector<64x64xf32>
    %11 = tpu.matmul %9, %10, %cst_11 {dimension_numbers = #tpu.dot_dimension_numbers<[1], [0], [0], [1], [0, 0, 1, 1], [], []>} : vector<64x64xf32>, vector<64x64xf32>, vector<64x64xf32> -> vector<64x64xf32>
    %12 = arith.addf %7, %11 : vector<64x64xf32>
    %c1 = arith.constant 1 : index
    %c0_12 = arith.constant 0 : index
    %c0_13 = arith.constant 0 : index
    %13 = vector.load %arg1[%c1, %c0_12, %c0_13] : memref<3x64x64xf32, #tpu.memory_space<vmem>>, vector<1x64x64xf32>
    %14 = vector.shape_cast %13 : vector<1x64x64xf32> to vector<64x64xf32>
    %15 = vector.extract_strided_slice %2 {offsets = [0, 64], sizes = [64, 64], strides = [1, 1]} : vector<64x192xf32> to vector<64x64xf32>
    %cst_14 = arith.constant dense<0.000000e+00> : vector<64x64xf32>
    %16 = tpu.matmul %14, %15, %cst_14 {dimension_numbers = #tpu.dot_dimension_numbers<[1], [0], [0], [1], [0, 0, 1, 1], [], []>} : vector<64x64xf32>, vector<64x64xf32>, vector<64x64xf32> -> vector<64x64xf32>
    %17 = arith.addf %12, %16 : vector<64x64xf32>
    %c2 = arith.constant 2 : index
    %c0_15 = arith.constant 0 : index
    %c0_16 = arith.constant 0 : index
    %18 = vector.load %arg1[%c2, %c0_15, %c0_16] : memref<3x64x64xf32, #tpu.memory_space<vmem>>, vector<1x64x64xf32>
    %19 = vector.shape_cast %18 : vector<1x64x64xf32> to vector<64x64xf32>
    %20 = vector.extract_strided_slice %2 {offsets = [0, 128], sizes = [64, 64], strides = [1, 1]} : vector<64x192xf32> to vector<64x64xf32>
    %cst_17 = arith.constant dense<0.000000e+00> : vector<64x64xf32>
    %21 = tpu.matmul %19, %20, %cst_17 {dimension_numbers = #tpu.dot_dimension_numbers<[1], [0], [0], [1], [0, 0, 1, 1], [], []>} : vector<64x64xf32>, vector<64x64xf32>, vector<64x64xf32> -> vector<64x64xf32>
    %22 = arith.addf %17, %21 : vector<64x64xf32>
    %cst_18 = arith.constant 0.000000e+00 : f32
    %23 = vector.broadcast %cst_18 : f32 to vector<64x64xf32>
    %24 = arith.maximumf %22, %23 : vector<64x64xf32>
    %c0_19 = arith.constant 0 : index
    %c0_20 = arith.constant 0 : index
    %25 = vector.load %arg6[%c0_19, %c0_20] : memref<64x96xf32, #tpu.memory_space<vmem>>, vector<64x96xf32>
    %cst_21 = arith.constant dense<0.000000e+00> : vector<64x96xf32>
    %26 = tpu.matmul %24, %25, %cst_21 {dimension_numbers = #tpu.dot_dimension_numbers<[1], [0], [0], [1], [0, 0, 1, 1], [], []>} : vector<64x64xf32>, vector<64x96xf32>, vector<64x96xf32> -> vector<64x96xf32>
    %c0_22 = arith.constant 0 : index
    %c0_23 = arith.constant 0 : index
    %27 = vector.load %arg7[%c0_22, %c0_23] : memref<64x32xf32, #tpu.memory_space<vmem>>, vector<64x32xf32>
    %cst_24 = arith.constant dense<0.000000e+00> : vector<64x32xf32>
    %28 = tpu.matmul %24, %27, %cst_24 {dimension_numbers = #tpu.dot_dimension_numbers<[1], [0], [0], [1], [0, 0, 1, 1], [], []>} : vector<64x64xf32>, vector<64x32xf32>, vector<64x32xf32> -> vector<64x32xf32>
    %c0_25 = arith.constant 0 : index
    %c0_26 = arith.constant 0 : index
    %29 = vector.load %arg8[%c0_25, %c0_26] : memref<1x32xf32, #tpu.memory_space<vmem>>, vector<1x32xf32>
    %30 = vector.broadcast %29 : vector<1x32xf32> to vector<64x32xf32>
    %31 = arith.addf %28, %30 : vector<64x32xf32>
    %c0_27 = arith.constant 0 : index
    %c0_28 = arith.constant 0 : index
    %c0_29 = arith.constant 0 : index
    %32 = vector.load %arg1[%c0_27, %c0_28, %c0_29] : memref<3x64x64xf32, #tpu.memory_space<vmem>>, vector<1x64x64xf32>
    %33 = vector.shape_cast %32 : vector<1x64x64xf32> to vector<64x64xf32>
    %34 = vector.extract_strided_slice %26 {offsets = [0, 0], sizes = [64, 32], strides = [1, 1]} : vector<64x96xf32> to vector<64x32xf32>
    %cst_30 = arith.constant dense<0.000000e+00> : vector<64x32xf32>
    %35 = tpu.matmul %33, %34, %cst_30 {dimension_numbers = #tpu.dot_dimension_numbers<[1], [0], [0], [1], [0, 0, 1, 1], [], []>} : vector<64x64xf32>, vector<64x32xf32>, vector<64x32xf32> -> vector<64x32xf32>
    %36 = arith.addf %31, %35 : vector<64x32xf32>
    %c1_31 = arith.constant 1 : index
    %c0_32 = arith.constant 0 : index
    %c0_33 = arith.constant 0 : index
    %37 = vector.load %arg1[%c1_31, %c0_32, %c0_33] : memref<3x64x64xf32, #tpu.memory_space<vmem>>, vector<1x64x64xf32>
    %38 = vector.shape_cast %37 : vector<1x64x64xf32> to vector<64x64xf32>
    %39 = vector.extract_strided_slice %26 {offsets = [0, 32], sizes = [64, 32], strides = [1, 1]} : vector<64x96xf32> to vector<64x32xf32>
    %cst_34 = arith.constant dense<0.000000e+00> : vector<64x32xf32>
    %40 = tpu.matmul %38, %39, %cst_34 {dimension_numbers = #tpu.dot_dimension_numbers<[1], [0], [0], [1], [0, 0, 1, 1], [], []>} : vector<64x64xf32>, vector<64x32xf32>, vector<64x32xf32> -> vector<64x32xf32>
    %41 = arith.addf %36, %40 : vector<64x32xf32>
    %c2_35 = arith.constant 2 : index
    %c0_36 = arith.constant 0 : index
    %c0_37 = arith.constant 0 : index
    %42 = vector.load %arg1[%c2_35, %c0_36, %c0_37] : memref<3x64x64xf32, #tpu.memory_space<vmem>>, vector<1x64x64xf32>
    %43 = vector.shape_cast %42 : vector<1x64x64xf32> to vector<64x64xf32>
    %44 = vector.extract_strided_slice %26 {offsets = [0, 64], sizes = [64, 32], strides = [1, 1]} : vector<64x96xf32> to vector<64x32xf32>
    %cst_38 = arith.constant dense<0.000000e+00> : vector<64x32xf32>
    %45 = tpu.matmul %43, %44, %cst_38 {dimension_numbers = #tpu.dot_dimension_numbers<[1], [0], [0], [1], [0, 0, 1, 1], [], []>} : vector<64x64xf32>, vector<64x32xf32>, vector<64x32xf32> -> vector<64x32xf32>
    %46 = arith.addf %41, %45 : vector<64x32xf32>
    %cst_39 = arith.constant 0.000000e+00 : f32
    %47 = vector.broadcast %cst_39 : f32 to vector<64x32xf32>
    %48 = arith.maximumf %46, %47 : vector<64x32xf32>
    %49 = vector.extract_strided_slice %48 {offsets = [0, 0], sizes = [64, 2], strides = [1, 1]} : vector<64x32xf32> to vector<64x2xf32>
    %cst_40 = arith.constant dense<0xFF800000> : vector<64xf32>
    %50 = vector.multi_reduction <maximumf>, %49, %cst_40 [1] : vector<64x2xf32> to vector<64xf32>
    %51 = vector.shape_cast %50 : vector<64xf32> to vector<64x1xf32>
    %52 = vector.extract_strided_slice %48 {offsets = [0, 2], sizes = [64, 2], strides = [1, 1]} : vector<64x32xf32> to vector<64x2xf32>
    %cst_41 = arith.constant dense<0xFF800000> : vector<64xf32>
    %53 = vector.multi_reduction <maximumf>, %52, %cst_41 [1] : vector<64x2xf32> to vector<64xf32>
    %54 = vector.shape_cast %53 : vector<64xf32> to vector<64x1xf32>
    %55 = vector.extract_strided_slice %48 {offsets = [0, 4], sizes = [64, 2], strides = [1, 1]} : vector<64x32xf32> to vector<64x2xf32>
    %cst_42 = arith.constant dense<0xFF800000> : vector<64xf32>
    %56 = vector.multi_reduction <maximumf>, %55, %cst_42 [1] : vector<64x2xf32> to vector<64xf32>
    %57 = vector.shape_cast %56 : vector<64xf32> to vector<64x1xf32>
    %58 = vector.extract_strided_slice %48 {offsets = [0, 6], sizes = [64, 2], strides = [1, 1]} : vector<64x32xf32> to vector<64x2xf32>
    %cst_43 = arith.constant dense<0xFF800000> : vector<64xf32>
    %59 = vector.multi_reduction <maximumf>, %58, %cst_43 [1] : vector<64x2xf32> to vector<64xf32>
    %60 = vector.shape_cast %59 : vector<64xf32> to vector<64x1xf32>
    %61 = vector.extract_strided_slice %48 {offsets = [0, 8], sizes = [64, 2], strides = [1, 1]} : vector<64x32xf32> to vector<64x2xf32>
    %cst_44 = arith.constant dense<0xFF800000> : vector<64xf32>
    %62 = vector.multi_reduction <maximumf>, %61, %cst_44 [1] : vector<64x2xf32> to vector<64xf32>
    %63 = vector.shape_cast %62 : vector<64xf32> to vector<64x1xf32>
    %64 = vector.extract_strided_slice %48 {offsets = [0, 10], sizes = [64, 2], strides = [1, 1]} : vector<64x32xf32> to vector<64x2xf32>
    %cst_45 = arith.constant dense<0xFF800000> : vector<64xf32>
    %65 = vector.multi_reduction <maximumf>, %64, %cst_45 [1] : vector<64x2xf32> to vector<64xf32>
    %66 = vector.shape_cast %65 : vector<64xf32> to vector<64x1xf32>
    %67 = vector.extract_strided_slice %48 {offsets = [0, 12], sizes = [64, 2], strides = [1, 1]} : vector<64x32xf32> to vector<64x2xf32>
    %cst_46 = arith.constant dense<0xFF800000> : vector<64xf32>
    %68 = vector.multi_reduction <maximumf>, %67, %cst_46 [1] : vector<64x2xf32> to vector<64xf32>
    %69 = vector.shape_cast %68 : vector<64xf32> to vector<64x1xf32>
    %70 = vector.extract_strided_slice %48 {offsets = [0, 14], sizes = [64, 2], strides = [1, 1]} : vector<64x32xf32> to vector<64x2xf32>
    %cst_47 = arith.constant dense<0xFF800000> : vector<64xf32>
    %71 = vector.multi_reduction <maximumf>, %70, %cst_47 [1] : vector<64x2xf32> to vector<64xf32>
    %72 = vector.shape_cast %71 : vector<64xf32> to vector<64x1xf32>
    %73 = vector.extract_strided_slice %48 {offsets = [0, 16], sizes = [64, 2], strides = [1, 1]} : vector<64x32xf32> to vector<64x2xf32>
    %cst_48 = arith.constant dense<0xFF800000> : vector<64xf32>
    %74 = vector.multi_reduction <maximumf>, %73, %cst_48 [1] : vector<64x2xf32> to vector<64xf32>
    %75 = vector.shape_cast %74 : vector<64xf32> to vector<64x1xf32>
    %76 = vector.extract_strided_slice %48 {offsets = [0, 18], sizes = [64, 2], strides = [1, 1]} : vector<64x32xf32> to vector<64x2xf32>
    %cst_49 = arith.constant dense<0xFF800000> : vector<64xf32>
    %77 = vector.multi_reduction <maximumf>, %76, %cst_49 [1] : vector<64x2xf32> to vector<64xf32>
    %78 = vector.shape_cast %77 : vector<64xf32> to vector<64x1xf32>
    %79 = vector.extract_strided_slice %48 {offsets = [0, 20], sizes = [64, 2], strides = [1, 1]} : vector<64x32xf32> to vector<64x2xf32>
    %cst_50 = arith.constant dense<0xFF800000> : vector<64xf32>
    %80 = vector.multi_reduction <maximumf>, %79, %cst_50 [1] : vector<64x2xf32> to vector<64xf32>
    %81 = vector.shape_cast %80 : vector<64xf32> to vector<64x1xf32>
    %82 = vector.extract_strided_slice %48 {offsets = [0, 22], sizes = [64, 2], strides = [1, 1]} : vector<64x32xf32> to vector<64x2xf32>
    %cst_51 = arith.constant dense<0xFF800000> : vector<64xf32>
    %83 = vector.multi_reduction <maximumf>, %82, %cst_51 [1] : vector<64x2xf32> to vector<64xf32>
    %84 = vector.shape_cast %83 : vector<64xf32> to vector<64x1xf32>
    %85 = vector.extract_strided_slice %48 {offsets = [0, 24], sizes = [64, 2], strides = [1, 1]} : vector<64x32xf32> to vector<64x2xf32>
    %cst_52 = arith.constant dense<0xFF800000> : vector<64xf32>
    %86 = vector.multi_reduction <maximumf>, %85, %cst_52 [1] : vector<64x2xf32> to vector<64xf32>
    %87 = vector.shape_cast %86 : vector<64xf32> to vector<64x1xf32>
    %88 = vector.extract_strided_slice %48 {offsets = [0, 26], sizes = [64, 2], strides = [1, 1]} : vector<64x32xf32> to vector<64x2xf32>
    %cst_53 = arith.constant dense<0xFF800000> : vector<64xf32>
    %89 = vector.multi_reduction <maximumf>, %88, %cst_53 [1] : vector<64x2xf32> to vector<64xf32>
    %90 = vector.shape_cast %89 : vector<64xf32> to vector<64x1xf32>
    %91 = vector.extract_strided_slice %48 {offsets = [0, 28], sizes = [64, 2], strides = [1, 1]} : vector<64x32xf32> to vector<64x2xf32>
    %cst_54 = arith.constant dense<0xFF800000> : vector<64xf32>
    %92 = vector.multi_reduction <maximumf>, %91, %cst_54 [1] : vector<64x2xf32> to vector<64xf32>
    %93 = vector.shape_cast %92 : vector<64xf32> to vector<64x1xf32>
    %94 = vector.extract_strided_slice %48 {offsets = [0, 30], sizes = [64, 2], strides = [1, 1]} : vector<64x32xf32> to vector<64x2xf32>
    %cst_55 = arith.constant dense<0xFF800000> : vector<64xf32>
    %95 = vector.multi_reduction <maximumf>, %94, %cst_55 [1] : vector<64x2xf32> to vector<64xf32>
    %96 = vector.shape_cast %95 : vector<64xf32> to vector<64x1xf32>
    %97 = tpu.concatenate %51, %54, %57, %60, %63, %66, %69, %72, %75, %78, %81, %84, %87, %90, %93, %96 in 1 : vector<64x1xf32>, vector<64x1xf32>, vector<64x1xf32>, vector<64x1xf32>, vector<64x1xf32>, vector<64x1xf32>, vector<64x1xf32>, vector<64x1xf32>, vector<64x1xf32>, vector<64x1xf32>, vector<64x1xf32>, vector<64x1xf32>, vector<64x1xf32>, vector<64x1xf32>, vector<64x1xf32>, vector<64x1xf32> -> vector<64x16xf32>
    %c0_56 = arith.constant 0 : index
    %c0_57 = arith.constant 0 : index
    %98 = vector.load %arg9[%c0_56, %c0_57] : memref<64x16xf32, #tpu.memory_space<vmem>>, vector<64x16xf32>
    tpu.vector_store %arg9[%c0_56, %c0_57], %97 {strides = array<i32>} : memref<64x16xf32, #tpu.memory_space<vmem>>, vector<64x16xf32>,
    return
  }
  func.func @transform_0(%arg0: i32) -> (i32, i32, i32) {
    %c0_i32 = arith.constant 0 : i32
    %c0_i32_0 = arith.constant 0 : i32
    %c0_i32_1 = arith.constant 0 : i32
    %c0_i32_2 = arith.constant 0 : i32
    return %c0_i32, %c0_i32_0, %c0_i32_1 : i32, i32, i32
  }
  func.func @transform_1(%arg0: i32) -> (i32, i32) {
    %c0_i32 = arith.constant 0 : i32
    %c0_i32_0 = arith.constant 0 : i32
    %c0_i32_1 = arith.constant 0 : i32
    return %c0_i32, %c0_i32_0 : i32, i32
  }
  func.func @transform_2(%arg0: i32) -> (i32, i32) {
    %c0_i32 = arith.constant 0 : i32
    %c0_i32_0 = arith.constant 0 : i32
    %c0_i32_1 = arith.constant 0 : i32
    return %c0_i32, %c0_i32_0 : i32, i32
  }
  func.func @transform_3(%arg0: i32) -> (i32, i32) {
    %c0_i32 = arith.constant 0 : i32
    %c0_i32_0 = arith.constant 0 : i32
    %c0_i32_1 = arith.constant 0 : i32
    return %c0_i32, %c0_i32_0 : i32, i32
  }
  func.func @transform_4(%arg0: i32) -> (i32, i32) {
    %c0_i32 = arith.constant 0 : i32
    %c0_i32_0 = arith.constant 0 : i32
    %c0_i32_1 = arith.constant 0 : i32
    return %c0_i32, %c0_i32_0 : i32, i32
  }
  func.func @transform_5(%arg0: i32) -> (i32, i32) {
    %c0_i32 = arith.constant 0 : i32
    %c0_i32_0 = arith.constant 0 : i32
    %c0_i32_1 = arith.constant 0 : i32
    return %c0_i32, %c0_i32_0 : i32, i32
  }
  func.func @transform_6(%arg0: i32) -> (i32, i32) {
    %c0_i32 = arith.constant 0 : i32
    %c0_i32_0 = arith.constant 0 : i32
    %c0_i32_1 = arith.constant 0 : i32
    return %c0_i32, %c0_i32_0 : i32, i32
  }
  func.func @transform_7(%arg0: i32) -> (i32, i32) {
    %c0_i32 = arith.constant 0 : i32
    %c0_i32_0 = arith.constant 0 : i32
    %c0_i32_1 = arith.constant 0 : i32
    return %c0_i32, %c0_i32_0 : i32, i32
  }
  func.func @transform_8(%arg0: i32) -> (i32, i32) {
    %c0_i32 = arith.constant 0 : i32
    %c0_i32_0 = arith.constant 0 : i32
    %c0_i32_1 = arith.constant 0 : i32
    return %c0_i32, %c0_i32_0 : i32, i32
  }
}

module attributes {stable_mosaic.version = 11 : i64} {
  func.func @_decoder_kernel(%arg0: i32, %arg1: i32, %arg2: memref<1x1024xf32, #tpu.memory_space<vmem>>, %arg3: memref<1x1x1024x1024xbf16, #tpu.memory_space<vmem>>, %arg4: memref<1x11x1024xf32, #tpu.memory_space<vmem>>, %arg5: memref<1x1024xf32, #tpu.memory_space<vmem>>, %arg6: memref<1x1024xf32, #tpu.memory_space<vmem>>, %arg7: memref<1x1024xf32, #tpu.memory_space<vmem>>, %arg8: memref<1x1024xf32, #tpu.memory_space<vmem>>, %arg9: memref<1x1024xf32, #tpu.memory_space<vmem>>) attributes {dimension_semantics = [#tpu.dimension_semantics<arbitrary>, #tpu.dimension_semantics<arbitrary>], iteration_bounds = array<i64: 6, 6>, scalar_prefetch = 0 : i64, scratch_operands = 4 : i64, tpu.core_type = #tpu.core_type<tc>, window_params = [{pipeline_mode = #tpu.pipeline_mode<synchronous>, transform_indices = @transform_0, window_bounds = array<i64: 1, 1024>}, {transform_indices = @transform_1, window_bounds = array<i64: 1, 1, 1024, 1024>}, {transform_indices = @transform_2, window_bounds = array<i64: 1, 11, 1024>}, {pipeline_mode = #tpu.pipeline_mode<synchronous>, transform_indices = @transform_3, window_bounds = array<i64: 1, 1024>}]} {
    %c0_i32 = arith.constant 0 : i32
    %0 = arith.cmpi eq, %arg0, %c0_i32 : i32
    %c0_i32_0 = arith.constant 0 : i32
    %1 = arith.cmpi eq, %arg1, %c0_i32_0 : i32
    %2 = arith.andi %0, %1 : i1
    %3 = arith.extui %2 : i1 to i32
    %c0_i32_1 = arith.constant 0 : i32
    %4 = arith.cmpi ne, %3, %c0_i32_1 : i32
    scf.if %4 {
      %c0_29 = arith.constant 0 : index
      %c0_30 = arith.constant 0 : index
      %44 = vector.load %arg2[%c0_29, %c0_30] : memref<1x1024xf32, #tpu.memory_space<vmem>>, vector<1x1024xf32>
      %c0_31 = arith.constant 0 : index
      %c0_32 = arith.constant 0 : index
      %45 = vector.load %arg6[%c0_31, %c0_32] : memref<1x1024xf32, #tpu.memory_space<vmem>>, vector<1x1024xf32>
      tpu.vector_store %arg6[%c0_31, %c0_32], %44 {strides = array<i32>} : memref<1x1024xf32, #tpu.memory_space<vmem>>, vector<1x1024xf32>,
    } else {
    }
    %c0 = arith.constant 0 : index
    %c0_2 = arith.constant 0 : index
    %5 = vector.load %arg6[%c0, %c0_2] : memref<1x1024xf32, #tpu.memory_space<vmem>>, vector<1x1024xf32>
    %c0_3 = arith.constant 0 : index
    %c0_4 = arith.constant 0 : index
    %c0_5 = arith.constant 0 : index
    %6 = vector.load %arg4[%c0_3, %c0_4, %c0_5] : memref<1x11x1024xf32, #tpu.memory_space<vmem>>, vector<1x11x1024xf32>
    %7 = vector.shape_cast %6 : vector<1x11x1024xf32> to vector<11x1024xf32>
    %c1_i32 = arith.constant 1 : i32
    %8 = arith.cmpi eq, %arg1, %c1_i32 : i32
    %c0_6 = arith.constant 0 : index
    %c0_7 = arith.constant 0 : index
    %9 = vector.load %arg2[%c0_6, %c0_7] : memref<1x1024xf32, #tpu.memory_space<vmem>>, vector<1x1024xf32>
    %c4_i32 = arith.constant 4 : i32
    %10 = arith.cmpi eq, %arg1, %c4_i32 : i32
    %c0_8 = arith.constant 0 : index
    %c0_9 = arith.constant 0 : index
    %11 = vector.load %arg7[%c0_8, %c0_9] : memref<1x1024xf32, #tpu.memory_space<vmem>>, vector<1x1024xf32>
    %c5_i32 = arith.constant 5 : i32
    %12 = arith.cmpi eq, %arg1, %c5_i32 : i32
    %c0_10 = arith.constant 0 : index
    %c0_11 = arith.constant 0 : index
    %13 = vector.load %arg8[%c0_10, %c0_11] : memref<1x1024xf32, #tpu.memory_space<vmem>>, vector<1x1024xf32>
    %14 = arith.select %12, %13, %5 : vector<1x1024xf32>
    %15 = arith.select %10, %11, %14 : vector<1x1024xf32>
    %16 = arith.select %8, %9, %15 : vector<1x1024xf32>
    %17 = arith.truncf %16 : vector<1x1024xf32> to vector<1x1024xbf16>
    %c0_12 = arith.constant 0 : index
    %c0_13 = arith.constant 0 : index
    %c0_14 = arith.constant 0 : index
    %c0_15 = arith.constant 0 : index
    %18 = vector.load %arg3[%c0_12, %c0_13, %c0_14, %c0_15] : memref<1x1x1024x1024xbf16, #tpu.memory_space<vmem>>, vector<1x1x1024x1024xbf16>
    %19 = vector.shape_cast %18 : vector<1x1x1024x1024xbf16> to vector<1024x1024xbf16>
    %cst = arith.constant dense<0.000000e+00> : vector<1x1024xf32>
    %20 = tpu.matmul %17, %19, %cst {dimension_numbers = #tpu.dot_dimension_numbers<[1], [0], [0], [1], [0, 0, 1, 1], [], []>} : vector<1x1024xbf16>, vector<1024x1024xbf16>, vector<1x1024xf32> -> vector<1x1024xf32>
    %c0_i32_16 = arith.constant 0 : i32
    %21 = arith.cmpi eq, %arg1, %c0_i32_16 : i32
    %22 = arith.extui %21 : i1 to i32
    %c0_i32_17 = arith.constant 0 : i32
    %23 = arith.cmpi ne, %22, %c0_i32_17 : i32
    scf.if %23 {
      %44 = arith.addf %5, %20 : vector<1x1024xf32>
      %45 = vector.extract_strided_slice %7 {offsets = [0, 0], sizes = [1, 1024], strides = [1, 1]} : vector<11x1024xf32> to vector<1x1024xf32>
      %46 = arith.addf %44, %45 : vector<1x1024xf32>
      %47 = vector.extract_strided_slice %7 {offsets = [1, 0], sizes = [1, 1024], strides = [1, 1]} : vector<11x1024xf32> to vector<1x1024xf32>
      %48 = vector.extract_strided_slice %7 {offsets = [2, 0], sizes = [1, 1024], strides = [1, 1]} : vector<11x1024xf32> to vector<1x1024xf32>
      %cst_29 = arith.constant dense<0.000000e+00> : vector<1xf32>
      %49 = vector.multi_reduction <add>, %46, %cst_29 [1] : vector<1x1024xf32> to vector<1xf32>
      %50 = vector.shape_cast %49 : vector<1xf32> to vector<1x1xf32>
      %cst_30 = arith.constant 1.024000e+03 : f32
      %51 = vector.broadcast %cst_30 : f32 to vector<1x1xf32>
      %52 = arith.divf %50, %51 : vector<1x1xf32>
      %53 = vector.broadcast %52 : vector<1x1xf32> to vector<1x1024xf32>
      %54 = arith.subf %46, %53 : vector<1x1024xf32>
      %55 = arith.mulf %54, %54 : vector<1x1024xf32>
      %cst_31 = arith.constant dense<0.000000e+00> : vector<1xf32>
      %56 = vector.multi_reduction <add>, %55, %cst_31 [1] : vector<1x1024xf32> to vector<1xf32>
      %57 = vector.shape_cast %56 : vector<1xf32> to vector<1x1xf32>
      %cst_32 = arith.constant 1.024000e+03 : f32
      %58 = vector.broadcast %cst_32 : f32 to vector<1x1xf32>
      %59 = arith.divf %57, %58 : vector<1x1xf32>
      %60 = vector.broadcast %52 : vector<1x1xf32> to vector<1x1024xf32>
      %61 = arith.subf %46, %60 : vector<1x1024xf32>
      %cst_33 = arith.constant 9.99999974E-6 : f32
      %62 = vector.broadcast %cst_33 : f32 to vector<1x1xf32>
      %63 = arith.addf %59, %62 : vector<1x1xf32>
      %64 = math.rsqrt %63 : vector<1x1xf32>
      %65 = vector.broadcast %64 : vector<1x1xf32> to vector<1x1024xf32>
      %66 = arith.mulf %61, %65 : vector<1x1024xf32>
      %67 = arith.mulf %66, %47 : vector<1x1024xf32>
      %68 = arith.addf %67, %48 : vector<1x1024xf32>
      %c0_34 = arith.constant 0 : index
      %c0_35 = arith.constant 0 : index
      %69 = vector.load %arg6[%c0_34, %c0_35] : memref<1x1024xf32, #tpu.memory_space<vmem>>, vector<1x1024xf32>
      tpu.vector_store %arg6[%c0_34, %c0_35], %68 {strides = array<i32>} : memref<1x1024xf32, #tpu.memory_space<vmem>>, vector<1x1024xf32>,
    } else {
    }
    %c1_i32_18 = arith.constant 1 : i32
    %24 = arith.cmpi eq, %arg1, %c1_i32_18 : i32
    %25 = arith.extui %24 : i1 to i32
    %c0_i32_19 = arith.constant 0 : i32
    %26 = arith.cmpi ne, %25, %c0_i32_19 : i32
    scf.if %26 {
      %44 = arith.addf %5, %20 : vector<1x1024xf32>
      %45 = vector.extract_strided_slice %7 {offsets = [3, 0], sizes = [1, 1024], strides = [1, 1]} : vector<11x1024xf32> to vector<1x1024xf32>
      %46 = arith.addf %44, %45 : vector<1x1024xf32>
      %47 = vector.extract_strided_slice %7 {offsets = [4, 0], sizes = [1, 1024], strides = [1, 1]} : vector<11x1024xf32> to vector<1x1024xf32>
      %48 = vector.extract_strided_slice %7 {offsets = [5, 0], sizes = [1, 1024], strides = [1, 1]} : vector<11x1024xf32> to vector<1x1024xf32>
      %cst_29 = arith.constant dense<0.000000e+00> : vector<1xf32>
      %49 = vector.multi_reduction <add>, %46, %cst_29 [1] : vector<1x1024xf32> to vector<1xf32>
      %50 = vector.shape_cast %49 : vector<1xf32> to vector<1x1xf32>
      %cst_30 = arith.constant 1.024000e+03 : f32
      %51 = vector.broadcast %cst_30 : f32 to vector<1x1xf32>
      %52 = arith.divf %50, %51 : vector<1x1xf32>
      %53 = vector.broadcast %52 : vector<1x1xf32> to vector<1x1024xf32>
      %54 = arith.subf %46, %53 : vector<1x1024xf32>
      %55 = arith.mulf %54, %54 : vector<1x1024xf32>
      %cst_31 = arith.constant dense<0.000000e+00> : vector<1xf32>
      %56 = vector.multi_reduction <add>, %55, %cst_31 [1] : vector<1x1024xf32> to vector<1xf32>
      %57 = vector.shape_cast %56 : vector<1xf32> to vector<1x1xf32>
      %cst_32 = arith.constant 1.024000e+03 : f32
      %58 = vector.broadcast %cst_32 : f32 to vector<1x1xf32>
      %59 = arith.divf %57, %58 : vector<1x1xf32>
      %60 = vector.broadcast %52 : vector<1x1xf32> to vector<1x1024xf32>
      %61 = arith.subf %46, %60 : vector<1x1024xf32>
      %cst_33 = arith.constant 9.99999974E-6 : f32
      %62 = vector.broadcast %cst_33 : f32 to vector<1x1xf32>
      %63 = arith.addf %59, %62 : vector<1x1xf32>
      %64 = math.rsqrt %63 : vector<1x1xf32>
      %65 = vector.broadcast %64 : vector<1x1xf32> to vector<1x1024xf32>
      %66 = arith.mulf %61, %65 : vector<1x1024xf32>
      %67 = arith.mulf %66, %47 : vector<1x1024xf32>
      %68 = arith.addf %67, %48 : vector<1x1024xf32>
      %c0_34 = arith.constant 0 : index
      %c0_35 = arith.constant 0 : index
      %69 = vector.load %arg6[%c0_34, %c0_35] : memref<1x1024xf32, #tpu.memory_space<vmem>>, vector<1x1024xf32>
      tpu.vector_store %arg6[%c0_34, %c0_35], %68 {strides = array<i32>} : memref<1x1024xf32, #tpu.memory_space<vmem>>, vector<1x1024xf32>,
    } else {
    }
    %c2_i32 = arith.constant 2 : i32
    %27 = arith.cmpi eq, %arg1, %c2_i32 : i32
    %28 = arith.extui %27 : i1 to i32
    %c0_i32_20 = arith.constant 0 : i32
    %29 = arith.cmpi ne, %28, %c0_i32_20 : i32
    scf.if %29 {
      %44 = vector.extract_strided_slice %7 {offsets = [6, 0], sizes = [1, 1024], strides = [1, 1]} : vector<11x1024xf32> to vector<1x1024xf32>
      %45 = arith.addf %20, %44 : vector<1x1024xf32>
      %cst_29 = arith.constant 0.000000e+00 : f32
      %46 = vector.broadcast %cst_29 : f32 to vector<1x1024xf32>
      %47 = arith.maximumf %45, %46 : vector<1x1024xf32>
      %c0_30 = arith.constant 0 : index
      %c0_31 = arith.constant 0 : index
      %48 = vector.load %arg7[%c0_30, %c0_31] : memref<1x1024xf32, #tpu.memory_space<vmem>>, vector<1x1024xf32>
      tpu.vector_store %arg7[%c0_30, %c0_31], %47 {strides = array<i32>} : memref<1x1024xf32, #tpu.memory_space<vmem>>, vector<1x1024xf32>,
    } else {
    }
    %c3_i32 = arith.constant 3 : i32
    %30 = arith.cmpi eq, %arg1, %c3_i32 : i32
    %31 = arith.extui %30 : i1 to i32
    %c0_i32_21 = arith.constant 0 : i32
    %32 = arith.cmpi ne, %31, %c0_i32_21 : i32
    scf.if %32 {
      %44 = vector.extract_strided_slice %7 {offsets = [7, 0], sizes = [1, 1024], strides = [1, 1]} : vector<11x1024xf32> to vector<1x1024xf32>
      %45 = arith.addf %20, %44 : vector<1x1024xf32>
      %cst_29 = arith.constant 0.000000e+00 : f32
      %46 = vector.broadcast %cst_29 : f32 to vector<1x1024xf32>
      %47 = arith.maximumf %45, %46 : vector<1x1024xf32>
      %c0_30 = arith.constant 0 : index
      %c0_31 = arith.constant 0 : index
      %48 = vector.load %arg8[%c0_30, %c0_31] : memref<1x1024xf32, #tpu.memory_space<vmem>>, vector<1x1024xf32>
      tpu.vector_store %arg8[%c0_30, %c0_31], %47 {strides = array<i32>} : memref<1x1024xf32, #tpu.memory_space<vmem>>, vector<1x1024xf32>,
    } else {
    }
    %c4_i32_22 = arith.constant 4 : i32
    %33 = arith.cmpi eq, %arg1, %c4_i32_22 : i32
    %34 = arith.extui %33 : i1 to i32
    %c0_i32_23 = arith.constant 0 : i32
    %35 = arith.cmpi ne, %34, %c0_i32_23 : i32
    scf.if %35 {
      %c0_29 = arith.constant 0 : index
      %c0_30 = arith.constant 0 : index
      %44 = vector.load %arg9[%c0_29, %c0_30] : memref<1x1024xf32, #tpu.memory_space<vmem>>, vector<1x1024xf32>
      tpu.vector_store %arg9[%c0_29, %c0_30], %20 {strides = array<i32>} : memref<1x1024xf32, #tpu.memory_space<vmem>>, vector<1x1024xf32>,
    } else {
    }
    %c5_i32_24 = arith.constant 5 : i32
    %36 = arith.cmpi eq, %arg1, %c5_i32_24 : i32
    %37 = arith.extui %36 : i1 to i32
    %c0_i32_25 = arith.constant 0 : i32
    %38 = arith.cmpi ne, %37, %c0_i32_25 : i32
    scf.if %38 {
      %c0_29 = arith.constant 0 : index
      %c0_30 = arith.constant 0 : index
      %44 = vector.load %arg9[%c0_29, %c0_30] : memref<1x1024xf32, #tpu.memory_space<vmem>>, vector<1x1024xf32>
      %45 = arith.addf %44, %20 : vector<1x1024xf32>
      %46 = vector.extract_strided_slice %7 {offsets = [8, 0], sizes = [1, 1024], strides = [1, 1]} : vector<11x1024xf32> to vector<1x1024xf32>
      %47 = arith.addf %45, %46 : vector<1x1024xf32>
      %48 = arith.addf %5, %47 : vector<1x1024xf32>
      %49 = vector.extract_strided_slice %7 {offsets = [9, 0], sizes = [1, 1024], strides = [1, 1]} : vector<11x1024xf32> to vector<1x1024xf32>
      %50 = vector.extract_strided_slice %7 {offsets = [10, 0], sizes = [1, 1024], strides = [1, 1]} : vector<11x1024xf32> to vector<1x1024xf32>
      %cst_31 = arith.constant dense<0.000000e+00> : vector<1xf32>
      %51 = vector.multi_reduction <add>, %48, %cst_31 [1] : vector<1x1024xf32> to vector<1xf32>
      %52 = vector.shape_cast %51 : vector<1xf32> to vector<1x1xf32>
      %cst_32 = arith.constant 1.024000e+03 : f32
      %53 = vector.broadcast %cst_32 : f32 to vector<1x1xf32>
      %54 = arith.divf %52, %53 : vector<1x1xf32>
      %55 = vector.broadcast %54 : vector<1x1xf32> to vector<1x1024xf32>
      %56 = arith.subf %48, %55 : vector<1x1024xf32>
      %57 = arith.mulf %56, %56 : vector<1x1024xf32>
      %cst_33 = arith.constant dense<0.000000e+00> : vector<1xf32>
      %58 = vector.multi_reduction <add>, %57, %cst_33 [1] : vector<1x1024xf32> to vector<1xf32>
      %59 = vector.shape_cast %58 : vector<1xf32> to vector<1x1xf32>
      %cst_34 = arith.constant 1.024000e+03 : f32
      %60 = vector.broadcast %cst_34 : f32 to vector<1x1xf32>
      %61 = arith.divf %59, %60 : vector<1x1xf32>
      %62 = vector.broadcast %54 : vector<1x1xf32> to vector<1x1024xf32>
      %63 = arith.subf %48, %62 : vector<1x1024xf32>
      %cst_35 = arith.constant 9.99999974E-6 : f32
      %64 = vector.broadcast %cst_35 : f32 to vector<1x1xf32>
      %65 = arith.addf %61, %64 : vector<1x1xf32>
      %66 = math.rsqrt %65 : vector<1x1xf32>
      %67 = vector.broadcast %66 : vector<1x1xf32> to vector<1x1024xf32>
      %68 = arith.mulf %63, %67 : vector<1x1024xf32>
      %69 = arith.mulf %68, %49 : vector<1x1024xf32>
      %70 = arith.addf %69, %50 : vector<1x1024xf32>
      %c0_36 = arith.constant 0 : index
      %c0_37 = arith.constant 0 : index
      %71 = vector.load %arg6[%c0_36, %c0_37] : memref<1x1024xf32, #tpu.memory_space<vmem>>, vector<1x1024xf32>
      tpu.vector_store %arg6[%c0_36, %c0_37], %70 {strides = array<i32>} : memref<1x1024xf32, #tpu.memory_space<vmem>>, vector<1x1024xf32>,
    } else {
    }
    %c5_i32_26 = arith.constant 5 : i32
    %39 = arith.cmpi eq, %arg0, %c5_i32_26 : i32
    %c5_i32_27 = arith.constant 5 : i32
    %40 = arith.cmpi eq, %arg1, %c5_i32_27 : i32
    %41 = arith.andi %39, %40 : i1
    %42 = arith.extui %41 : i1 to i32
    %c0_i32_28 = arith.constant 0 : i32
    %43 = arith.cmpi ne, %42, %c0_i32_28 : i32
    scf.if %43 {
      %c0_29 = arith.constant 0 : index
      %c0_30 = arith.constant 0 : index
      %44 = vector.load %arg6[%c0_29, %c0_30] : memref<1x1024xf32, #tpu.memory_space<vmem>>, vector<1x1024xf32>
      %c0_31 = arith.constant 0 : index
      %c0_32 = arith.constant 0 : index
      %45 = vector.load %arg5[%c0_31, %c0_32] : memref<1x1024xf32, #tpu.memory_space<vmem>>, vector<1x1024xf32>
      tpu.vector_store %arg5[%c0_31, %c0_32], %44 {strides = array<i32>} : memref<1x1024xf32, #tpu.memory_space<vmem>>, vector<1x1024xf32>,
    } else {
    }
    return
  }
  func.func @transform_0(%arg0: i32, %arg1: i32) -> (i32, i32) {
    %c0_i32 = arith.constant 0 : i32
    %c0_i32_0 = arith.constant 0 : i32
    %c0_i32_1 = arith.constant 0 : i32
    return %c0_i32, %c0_i32_0 : i32, i32
  }
  func.func @transform_1(%arg0: i32, %arg1: i32) -> (i32, i32, i32, i32) {
    %c0_i32 = arith.constant 0 : i32
    %c0_i32_0 = arith.constant 0 : i32
    %c0_i32_1 = arith.constant 0 : i32
    return %arg0, %arg1, %c0_i32, %c0_i32_0 : i32, i32, i32, i32
  }
  func.func @transform_2(%arg0: i32, %arg1: i32) -> (i32, i32, i32) {
    %c0_i32 = arith.constant 0 : i32
    %c0_i32_0 = arith.constant 0 : i32
    %c0_i32_1 = arith.constant 0 : i32
    return %arg0, %c0_i32, %c0_i32_0 : i32, i32, i32
  }
  func.func @transform_3(%arg0: i32, %arg1: i32) -> (i32, i32) {
    %c0_i32 = arith.constant 0 : i32
    %c0_i32_0 = arith.constant 0 : i32
    %c0_i32_1 = arith.constant 0 : i32
    return %c0_i32, %c0_i32_0 : i32, i32
  }
}

module attributes {stable_mosaic.version = 11 : i64} {
  func.func @_linear_kernel(%arg0: i32, %arg1: memref<1x1024xf32, #tpu.memory_space<vmem>>, %arg2: memref<1024x10xf32, #tpu.memory_space<vmem>>, %arg3: memref<1x10xf32, #tpu.memory_space<vmem>>, %arg4: memref<1x10xf32, #tpu.memory_space<vmem>>) attributes {dimension_semantics = [#tpu.dimension_semantics<arbitrary>], iteration_bounds = array<i64: 1>, scalar_prefetch = 0 : i64, scratch_operands = 0 : i64, tpu.core_type = #tpu.core_type<tc>, window_params = [{pipeline_mode = #tpu.pipeline_mode<synchronous>, transform_indices = @transform_0, window_bounds = array<i64: 1, 1024>}, {pipeline_mode = #tpu.pipeline_mode<synchronous>, transform_indices = @transform_1, window_bounds = array<i64: 1024, 10>}, {pipeline_mode = #tpu.pipeline_mode<synchronous>, transform_indices = @transform_2, window_bounds = array<i64: 1, 10>}, {pipeline_mode = #tpu.pipeline_mode<synchronous>, transform_indices = @transform_3, window_bounds = array<i64: 1, 10>}]} {
    %c0 = arith.constant 0 : index
    %c0_0 = arith.constant 0 : index
    %0 = vector.load %arg1[%c0, %c0_0] : memref<1x1024xf32, #tpu.memory_space<vmem>>, vector<1x1024xf32>
    %c0_1 = arith.constant 0 : index
    %c0_2 = arith.constant 0 : index
    %1 = vector.load %arg2[%c0_1, %c0_2] : memref<1024x10xf32, #tpu.memory_space<vmem>>, vector<1024x10xf32>
    %cst = arith.constant dense<0.000000e+00> : vector<1x10xf32>
    %2 = tpu.matmul %0, %1, %cst {dimension_numbers = #tpu.dot_dimension_numbers<[1], [0], [0], [1], [0, 0, 1, 1], [], []>} : vector<1x1024xf32>, vector<1024x10xf32>, vector<1x10xf32> -> vector<1x10xf32>
    %c0_3 = arith.constant 0 : index
    %c0_4 = arith.constant 0 : index
    %3 = vector.load %arg3[%c0_3, %c0_4] : memref<1x10xf32, #tpu.memory_space<vmem>>, vector<1x10xf32>
    %4 = arith.addf %2, %3 : vector<1x10xf32>
    %c0_5 = arith.constant 0 : index
    %c0_6 = arith.constant 0 : index
    %5 = vector.load %arg4[%c0_5, %c0_6] : memref<1x10xf32, #tpu.memory_space<vmem>>, vector<1x10xf32>
    tpu.vector_store %arg4[%c0_5, %c0_6], %4 {strides = array<i32>} : memref<1x10xf32, #tpu.memory_space<vmem>>, vector<1x10xf32>,
    return
  }
  func.func @transform_0(%arg0: i32) -> (i32, i32) {
    %c0_i32 = arith.constant 0 : i32
    %c0_i32_0 = arith.constant 0 : i32
    %c0_i32_1 = arith.constant 0 : i32
    return %c0_i32, %c0_i32_0 : i32, i32
  }
  func.func @transform_1(%arg0: i32) -> (i32, i32) {
    %c0_i32 = arith.constant 0 : i32
    %c0_i32_0 = arith.constant 0 : i32
    %c0_i32_1 = arith.constant 0 : i32
    return %c0_i32, %c0_i32_0 : i32, i32
  }
  func.func @transform_2(%arg0: i32) -> (i32, i32) {
    %c0_i32 = arith.constant 0 : i32
    %c0_i32_0 = arith.constant 0 : i32
    %c0_i32_1 = arith.constant 0 : i32
    return %c0_i32, %c0_i32_0 : i32, i32
  }
  func.func @transform_3(%arg0: i32) -> (i32, i32) {
    %c0_i32 = arith.constant 0 : i32
    %c0_i32_0 = arith.constant 0 : i32
    %c0_i32_1 = arith.constant 0 : i32
    return %c0_i32, %c0_i32_0 : i32, i32
  }
}

</mosaic_0001>

<llo_original>
// kernel: model_forward.3
$region0: #{model_forward.3}
  #allocation0 [shape = 'u32[]', space=smem, size = 0x4, offset = 0x4, fixed_abs, tag = 'smem constant byte address 0x4 - core index']
  #allocation1 [shape = 'u32[144,128]{1,0:T(1,128)}', space=vmem, size = 0x12000, scoped, tag = 'internal scratch']
  %s0 = inlined_call_operand.hbm [shape: f32[3,64,64], index: 0, kind: input, shape index: {}]
  %s1 = inlined_call_operand.hbm [shape: f32[64,64], index: 1, kind: input, shape index: {}]
  %s2 = inlined_call_operand.hbm [shape: f32[64,192], index: 2, kind: input, shape index: {}]
  %s3 = inlined_call_operand.hbm [shape: f32[64,64], index: 3, kind: input, shape index: {}]
  %s4 = inlined_call_operand.hbm [shape: f32[1,64], index: 4, kind: input, shape index: {}]
  %s5 = inlined_call_operand.hbm [shape: f32[64,96], index: 5, kind: input, shape index: {}]
  %s6 = inlined_call_operand.vmem [shape: f32[64,32], index: 6, kind: input, shape index: {}]
  %s7 = inlined_call_operand.hbm [shape: f32[1,32], index: 7, kind: input, shape index: {}]
  %s8 = inlined_call_operand.vmem [shape: f32[64,16], index: 8, kind: output, shape index: {}]
  %s9 = sld [smem:[#allocation0]]
  $region70: #{model_forward.3} parent=0
    _
  %s11 = ssub.s32 1, %s9
  %s12 = scalar_select 0, %s11, %s9
  $region1: #{model_forward.3} parent=0
    #allocation2 [shape = 'u8[98304]{0}', space=vmem, size = 0x18000, scoped, tag = 'input window, operand 0, single buffered']
    #allocation3 [shape = 's32[1]{0}', space=sflag, size = 0x4, scoped, tag = 'scoped memory for model_forward.3']
    #allocation4 [shape = 'u8[32768]{0}', space=vmem, size = 0x8000, scoped, tag = 'input window, operand 1, single buffered']
    #allocation5 [shape = 's32[1]{0}', space=sflag, size = 0x4, scoped, tag = 'scoped memory for model_forward.3']
    #allocation6 [shape = 'u8[65536]{0}', space=vmem, size = 0x10000, scoped, tag = 'input window, operand 2, single buffered']
    #allocation7 [shape = 'u8[32768]{0}', space=vmem, size = 0x8000, scoped, tag = 'input window, operand 3, single buffered']
    #allocation8 [shape = 's32[1]{0}', space=sflag, size = 0x4, scoped, tag = 'scoped memory for model_forward.3']
    #allocation9 [shape = 'u8[512]{0}', space=vmem, size = 0x400, scoped, tag = 'input window, operand 4, single buffered']
    #allocation10 [shape = 'u8[32768]{0}', space=vmem, size = 0x8000, scoped, tag = 'input window, operand 5, single buffered']
    #allocation11 [shape = 's32[1]{0}', space=sflag, size = 0x4, scoped, tag = 'scoped memory for model_forward.3']
    #allocation12 [shape = 'u8[512]{0}', space=vmem, size = 0x400, scoped, tag = 'input window, operand 7, single buffered']
    %13 = vsyncpa [#allocation3], 0
    %14 = vsyncpa [#allocation5], 0
    %15 = vsyncpa [#allocation8], 0
    %16 = vsyncpa [#allocation11], 0
    // Predicated region
    $region2: #{model_forward.3} parent=1 // pred_check
      _
    $region3: #{model_forward.3} parent=1 // pred_check_branch
      %18 = sbr.rel (0) target = $region5
    $region4: #{model_forward.3} parent=1 // pred_region
      %s20 = ssub.s32 3072, 3072
      %21 = vsyncadd [#allocation3], %s20
      %s22 = sshll.u32 [#allocation2], 4
      %s23 = int_to_ptr.vmem [resolvable:$true] %s22
      %28 = dma.hbm_to_vmem [thread:$0]  %s0, 3072, %s23, [#allocation3], 128, 128, 8
    $region5: #{model_forward.3} parent=1 // pred_fallthru
      _
    // Predicated region
    $region6: #{model_forward.3} parent=1 // pred_check
      _
    $region7: #{model_forward.3} parent=1 // pred_check_branch
      %30 = sbr.rel (0) target = $region9
    $region8: #{model_forward.3} parent=1 // pred_region
      %s32 = ssub.s32 1024, 1024
      %33 = vsyncadd [#allocation5], %s32
      %s34 = sshll.u32 [#allocation4], 4
      %s35 = int_to_ptr.vmem [resolvable:$true] %s34
      %40 = dma.hbm_to_vmem [thread:$0]  %s1, 1024, %s35, [#allocation5], 128, 128, 8
    $region9: #{model_forward.3} parent=1 // pred_fallthru
      _
    // Predicated region
    $region10: #{model_forward.3} parent=1 // pred_check
      _
    $region11: #{model_forward.3} parent=1 // pred_check_branch
      %42 = sbr.rel (0) target = $region13
    $region12: #{model_forward.3} parent=1 // pred_region
      %s44 = ssub.s32 2048, 2048
      %45 = vsyncadd [#allocation5], %s44
      %s46 = sshll.u32 [#allocation6], 4
      %s47 = int_to_ptr.vmem [resolvable:$true] %s46
      %52 = dma.hbm_to_vmem [thread:$0]  %s2, 2048, %s47, [#allocation5], 256, 256, 16
    $region13: #{model_forward.3} parent=1 // pred_fallthru
      _
    // Predicated region
    $region14: #{model_forward.3} parent=1 // pred_check
      _
    $region15: #{model_forward.3} parent=1 // pred_check_branch
      %54 = sbr.rel (0) target = $region17
    $region16: #{model_forward.3} parent=1 // pred_region
      %s56 = ssub.s32 1024, 1024
      %57 = vsyncadd [#allocation8], %s56
      %s58 = sshll.u32 [#allocation7], 4
      %s59 = int_to_ptr.vmem [resolvable:$true] %s58
      %64 = dma.hbm_to_vmem [thread:$0]  %s3, 1024, %s59, [#allocation8], 128, 128, 8
    $region17: #{model_forward.3} parent=1 // pred_fallthru
      _
    // Predicated region
    $region18: #{model_forward.3} parent=1 // pred_check
      _
    $region19: #{model_forward.3} parent=1 // pred_check_branch
      %66 = sbr.rel (0) target = $region21
    $region20: #{model_forward.3} parent=1 // pred_region
      %s68 = ssub.s32 16, 16
      %69 = vsyncadd [#allocation8], %s68
      %s71 = sshll.u32 [#allocation9], 4
      %s72 = int_to_ptr.vmem [resolvable:$true] %s71
      %74 = dma.hbm_to_vmem [thread:$0]  %s4, 16, %s72, [#allocation8]
    $region21: #{model_forward.3} parent=1 // pred_fallthru
      _
    // Predicated region
    $region22: #{model_forward.3} parent=1 // pred_check
      _
    $region23: #{model_forward.3} parent=1 // pred_check_branch
      %76 = sbr.rel (0) target = $region25
    $region24: #{model_forward.3} parent=1 // pred_region
      %s78 = ssub.s32 1024, 1024
      %79 = vsyncadd [#allocation11], %s78
      %s80 = sshll.u32 [#allocation10], 4
      %s81 = int_to_ptr.vmem [resolvable:$true] %s80
      %86 = dma.hbm_to_vmem [thread:$0]  %s5, 1024, %s81, [#allocation11], 128, 128, 8
    $region25: #{model_forward.3} parent=1 // pred_fallthru
      _
    // Predicated region
    $region26: #{model_forward.3} parent=1 // pred_check
      _
    $region27: #{model_forward.3} parent=1 // pred_check_branch
      %88 = sbr.rel (0) target = $region29
    $region28: #{model_forward.3} parent=1 // pred_region
      _
    $region29: #{model_forward.3} parent=1 // pred_fallthru
      _
    // Predicated region
    $region30: #{model_forward.3} parent=1 // pred_check
      _
    $region31: #{model_forward.3} parent=1 // pred_check_branch
      %90 = sbr.rel (0) target = $region33
    $region32: #{model_forward.3} parent=1 // pred_region
      %s92 = ssub.s32 16, 16
      %93 = vsyncadd [#allocation11], %s92
      %s95 = sshll.u32 [#allocation12], 4
      %s96 = int_to_ptr.vmem [resolvable:$true] %s95
      %98 = dma.hbm_to_vmem [thread:$0]  %s7, 16, %s96, [#allocation11]
    $region33: #{model_forward.3} parent=1 // pred_fallthru
      _
    // Predicated region
    $region34: #{model_forward.3} parent=1 // pred_check
      _
    $region35: #{model_forward.3} parent=1 // pred_check_branch
      %100 = sbr.rel (0) target = $region37
    $region36: #{model_forward.3} parent=1 // pred_region
      %101 = dma.done [#allocation3], 3072
    $region37: #{model_forward.3} parent=1 // pred_fallthru
      _
    // Predicated region
    $region38: #{model_forward.3} parent=1 // pred_check
      _
    $region39: #{model_forward.3} parent=1 // pred_check_branch
      %103 = sbr.rel (0) target = $region41
    $region40: #{model_forward.3} parent=1 // pred_region
      %104 = dma.done [#allocation5], 1024
    $region41: #{model_forward.3} parent=1 // pred_fallthru
      _
    // Predicated region
    $region42: #{model_forward.3} parent=1 // pred_check
      _
    $region43: #{model_forward.3} parent=1 // pred_check_branch
      %106 = sbr.rel (0) target = $region45
    $region44: #{model_forward.3} parent=1 // pred_region
      %107 = dma.done [#allocation5], 2048
    $region45: #{model_forward.3} parent=1 // pred_fallthru
      _
    // Predicated region
    $region46: #{model_forward.3} parent=1 // pred_check
      _
    $region47: #{model_forward.3} parent=1 // pred_check_branch
      %109 = sbr.rel (0) target = $region49
    $region48: #{model_forward.3} parent=1 // pred_region
      %110 = dma.done [#allocation8], 1024
    $region49: #{model_forward.3} parent=1 // pred_fallthru
      _
    // Predicated region
    $region50: #{model_forward.3} parent=1 // pred_check
      _
    $region51: #{model_forward.3} parent=1 // pred_check_branch
      %112 = sbr.rel (0) target = $region53
    $region52: #{model_forward.3} parent=1 // pred_region
      %113 = dma.done [#allocation8], 16
    $region53: #{model_forward.3} parent=1 // pred_fallthru
      _
    // Predicated region
    $region54: #{model_forward.3} parent=1 // pred_check
      _
    $region55: #{model_forward.3} parent=1 // pred_check_branch
      %115 = sbr.rel (0) target = $region57
    $region56: #{model_forward.3} parent=1 // pred_region
      %116 = dma.done [#allocation11], 1024
    $region57: #{model_forward.3} parent=1 // pred_fallthru
      _
    // Predicated region
    $region58: #{model_forward.3} parent=1 // pred_check
      _
    $region59: #{model_forward.3} parent=1 // pred_check_branch
      %118 = sbr.rel (0) target = $region61
    $region60: #{model_forward.3} parent=1 // pred_region
      %119 = dma.done [#allocation11], 16
    $region61: #{model_forward.3} parent=1 // pred_fallthru
      _
    %v120 = vld [vmem:[#allocation4] sm:$0xff]
    %v121 = vld [vmem:[#allocation4 + $0x8] sm:$0xff]
    %v122 = vld [vmem:[#allocation4 + $0x10] sm:$0xff]
    %v123 = vld [vmem:[#allocation4 + $0x18] sm:$0xff]
    %v124 = vld [vmem:[#allocation4 + $0x20] sm:$0xff]
    %v125 = vld [vmem:[#allocation4 + $0x28] sm:$0xff]
    %v126 = vld [vmem:[#allocation4 + $0x30] sm:$0xff]
    %v127 = vld [vmem:[#allocation4 + $0x38] sm:$0xff]
    %v128 = vld [vmem:[#allocation6] sm:$0xff]
    %v129 = vld [vmem:[#allocation6 + $0x8] sm:$0xff]
    %v130 = vld [vmem:[#allocation6 + $0x10] sm:$0xff]
    %v131 = vld [vmem:[#allocation6 + $0x18] sm:$0xff]
    %v132 = vld [vmem:[#allocation6 + $0x20] sm:$0xff]
    %v133 = vld [vmem:[#allocation6 + $0x28] sm:$0xff]
    %v134 = vld [vmem:[#allocation6 + $0x30] sm:$0xff]
    %v135 = vld [vmem:[#allocation6 + $0x38] sm:$0xff]
    %v136 = vld [vmem:[#allocation6 + $0x40] sm:$0xff]
    %v137 = vld [vmem:[#allocation6 + $0x48] sm:$0xff]
    %v138 = vld [vmem:[#allocation6 + $0x50] sm:$0xff]
    %v139 = vld [vmem:[#allocation6 + $0x58] sm:$0xff]
    %v140 = vld [vmem:[#allocation6 + $0x60] sm:$0xff]
    %v141 = vld [vmem:[#allocation6 + $0x68] sm:$0xff]
    %v142 = vld [vmem:[#allocation6 + $0x70] sm:$0xff]
    %v143 = vld [vmem:[#allocation6 + $0x78] sm:$0xff]
    %vm144 = vcmask 523264
    %v146 = vsel %vm144, %v120, 0
    %v149 = vsel %vm144, %v121, 0
    %v152 = vsel %vm144, %v122, 0
    %v155 = vsel %vm144, %v123, 0
    %v158 = vsel %vm144, %v124, 0
    %v161 = vsel %vm144, %v125, 0
    %v164 = vsel %vm144, %v126, 0
    %v167 = vsel %vm144, %v127, 0
    %169 = vmatprep.subr.mxu0 %v129
    %170 = vmatpush1.msra.mxu0 %v128
    %171 = vmatprep.subr.mxu0 %v131
    %172 = vmatpush1.msra.mxu0 %v130
    %173 = vmatprep.subr.mxu0 %v133
    %174 = vmatpush1.msra.mxu0 %v132
    %175 = vmatprep.subr.mxu0 %v135
    %176 = vmatpush1.msra.mxu0 %v134
    %177 = vmatprep.subr.mxu0 %v137
    %178 = vmatpush1.msra.mxu0 %v136
    %179 = vmatprep.subr.mxu0 %v139
    %180 = vmatpush1.msra.mxu0 %v138
    %181 = vmatprep.subr.mxu0 %v141
    %182 = vmatpush1.msra.mxu0 %v140
    %183 = vmatprep.subr.mxu0 %v143
    %184 = vmatpush1.msra.mxu0 %v142
    %185 = vmatprep.subr.mxu0 0.0
    %186 = vmatpush1.msra.mxu0 0.0
    %187 = vmatprep.subr.mxu0 0.0
    %188 = vmatpush1.msra.mxu0 0.0
    %189 = vmatprep.subr.mxu0 0.0
    %190 = vmatpush1.msra.mxu0 0.0
    %191 = vmatprep.subr.mxu0 0.0
    %192 = vmatpush1.msra.mxu0 0.0
    %193 = vmatprep.subr.mxu0 0.0
    %194 = vmatpush1.msra.mxu0 0.0
    %195 = vmatprep.subr.mxu0 0.0
    %196 = vmatpush1.msra.mxu0 0.0
    %197 = vmatprep.subr.mxu0 0.0
    %198 = vmatpush1.msra.mxu0 0.0
    %199 = vmatprep.subr.mxu0 0.0
    %200 = vmatpush1.msra.mxu0 0.0
    %201 = vmatprep.subr.mxu0 0.0
    %202 = vmatpush1.msra.mxu0 0.0
    %203 = vmatprep.subr.mxu0 0.0
    %204 = vmatpush1.msra.mxu0 0.0
    %205 = vmatprep.subr.mxu0 0.0
    %206 = vmatpush1.msra.mxu0 0.0
    %207 = vmatprep.subr.mxu0 0.0
    %208 = vmatpush1.msra.mxu0 0.0
    %209 = vmatprep.subr.mxu0 0.0
    %210 = vmatpush1.msra.mxu0 0.0
    %211 = vmatprep.subr.mxu0 0.0
    %212 = vmatpush1.msra.mxu0 0.0
    %213 = vmatprep.subr.mxu0 0.0
    %214 = vmatpush1.msra.mxu0 0.0
    %215 = vmatprep.subr.mxu0 0.0
    %216 = vmatpush1.msra.mxu0 0.0
    %217 = vmatprep.subr.mxu0 0.0
    %218 = vmatpush1.msra.mxu0 0.0
    %219 = vmatprep.subr.mxu0 0.0
    %220 = vmatpush1.msra.mxu0 0.0
    %221 = vmatprep.subr.mxu0 0.0
    %222 = vmatpush1.msra.mxu0 0.0
    %223 = vmatprep.subr.mxu0 0.0
    %224 = vmatpush1.msra.mxu0 0.0
    %225 = vmatprep.subr.mxu0 0.0
    %226 = vmatpush1.msra.mxu0 0.0
    %227 = vmatprep.subr.mxu0 0.0
    %228 = vmatpush1.msra.mxu0 0.0
    %229 = vmatprep.subr.mxu0 0.0
    %230 = vmatpush1.msra.mxu0 0.0
    %231 = vmatprep.subr.mxu0 0.0
    %232 = vmatpush1.msra.mxu0 0.0
    %233 = vmatprep.mubr.f32.mxu0 0.0
    %234 = vmatmul.mubr.f32.gmra.mrb[0].mxu0 %v146
    %v235 = vpop.f32.mrb[0].mxu0
    %v236 = vadd.f32 0.0, %v235
    %v237 = vpop.f32.mrb[0].mxu0
    %v238 = vadd.f32 0.0, %v237
    %239 = vmatprep.mubr.f32.mxu0 0.0
    %240 = vmatmul.mubr.f32.gmra.mrb[0].mxu0 %v149
    %v241 = vpop.f32.mrb[0].mxu0
    %v242 = vadd.f32 0.0, %v241
    %v243 = vpop.f32.mrb[0].mxu0
    %v244 = vadd.f32 0.0, %v243
    %245 = vmatprep.mubr.f32.mxu0 0.0
    %246 = vmatmul.mubr.f32.gmra.mrb[0].mxu0 %v152
    %v247 = vpop.f32.mrb[0].mxu0
    %v248 = vadd.f32 0.0, %v247
    %v249 = vpop.f32.mrb[0].mxu0
    %v250 = vadd.f32 0.0, %v249
    %251 = vmatprep.mubr.f32.mxu0 0.0
    %252 = vmatmul.mubr.f32.gmra.mrb[0].mxu0 %v155
    %v253 = vpop.f32.mrb[0].mxu0
    %v254 = vadd.f32 0.0, %v253
    %v255 = vpop.f32.mrb[0].mxu0
    %v256 = vadd.f32 0.0, %v255
    %257 = vmatprep.mubr.f32.mxu0 0.0
    %258 = vmatmul.mubr.f32.gmra.mrb[0].mxu0 %v158
    %v259 = vpop.f32.mrb[0].mxu0
    %v260 = vadd.f32 0.0, %v259
    %v261 = vpop.f32.mrb[0].mxu0
    %v262 = vadd.f32 0.0, %v261
    %263 = vmatprep.mubr.f32.mxu0 0.0
    %264 = vmatmul.mubr.f32.gmra.mrb[0].mxu0 %v161
    %v265 = vpop.f32.mrb[0].mxu0
    %v266 = vadd.f32 0.0, %v265
    %v267 = vpop.f32.mrb[0].mxu0
    %v268 = vadd.f32 0.0, %v267
    %269 = vmatprep.mubr.f32.mxu0 0.0
    %270 = vmatmul.mubr.f32.gmra.mrb[0].mxu0 %v164
    %v271 = vpop.f32.mrb[0].mxu0
    %v272 = vadd.f32 0.0, %v271
    %v273 = vpop.f32.mrb[0].mxu0
    %v274 = vadd.f32 0.0, %v273
    %275 = vmatprep.mubr.f32.mxu0 0.0
    %276 = vmatmul.mubr.f32.gmra.mrb[0].mxu0 %v167
    %v277 = vpop.f32.mrb[0].mxu0
    %v278 = vadd.f32 0.0, %v277
    %v279 = vpop.f32.mrb[0].mxu0
    %v280 = vadd.f32 0.0, %v279
    %281 = vdwg.mxu0
    %v282 = vld [vmem:[#allocation7] sm:$0xff]
    %v283 = vld [vmem:[#allocation7 + $0x8] sm:$0xff]
    %v284 = vld [vmem:[#allocation7 + $0x10] sm:$0xff]
    %v285 = vld [vmem:[#allocation7 + $0x18] sm:$0xff]
    %v286 = vld [vmem:[#allocation7 + $0x20] sm:$0xff]
    %v287 = vld [vmem:[#allocation7 + $0x28] sm:$0xff]
    %v288 = vld [vmem:[#allocation7 + $0x30] sm:$0xff]
    %v289 = vld [vmem:[#allocation7 + $0x38] sm:$0xff]
    %v290 = vld [vmem:[#allocation9] sm:$0x1]
    %v292 = vlaneseq
    %v293 = vshrl.u32 %v292, 7
    %v294 = vsub.s32 0, %v293
    %v295 = vrot.slane %v290, %v294
    %297 = vmatprep.subr.mxu0 0.0
    %298 = vmatpush1.msra.mxu0 %v282
    %299 = vmatprep.subr.mxu0 0.0
    %300 = vmatpush1.msra.mxu0 %v283
    %301 = vmatprep.subr.mxu0 0.0
    %302 = vmatpush1.msra.mxu0 %v284
    %303 = vmatprep.subr.mxu0 0.0
    %304 = vmatpush1.msra.mxu0 %v285
    %305 = vmatprep.subr.mxu0 0.0
    %306 = vmatpush1.msra.mxu0 %v286
    %307 = vmatprep.subr.mxu0 0.0
    %308 = vmatpush1.msra.mxu0 %v287
    %309 = vmatprep.subr.mxu0 0.0
    %310 = vmatpush1.msra.mxu0 %v288
    %311 = vmatprep.subr.mxu0 0.0
    %312 = vmatpush1.msra.mxu0 %v289
    %313 = vmatprep.subr.mxu0 0.0
    %314 = vmatpush1.msra.mxu0 0.0
    %315 = vmatprep.subr.mxu0 0.0
    %316 = vmatpush1.msra.mxu0 0.0
    %317 = vmatprep.subr.mxu0 0.0
    %318 = vmatpush1.msra.mxu0 0.0
    %319 = vmatprep.subr.mxu0 0.0
    %320 = vmatpush1.msra.mxu0 0.0
    %321 = vmatprep.subr.mxu0 0.0
    %322 = vmatpush1.msra.mxu0 0.0
    %323 = vmatprep.subr.mxu0 0.0
    %324 = vmatpush1.msra.mxu0 0.0
    %325 = vmatprep.subr.mxu0 0.0
    %326 = vmatpush1.msra.mxu0 0.0
    %327 = vmatprep.subr.mxu0 0.0
    %328 = vmatpush1.msra.mxu0 0.0
    %329 = vmatprep.subr.mxu0 0.0
    %330 = vmatpush1.msra.mxu0 0.0
    %331 = vmatprep.subr.mxu0 0.0
    %332 = vmatpush1.msra.mxu0 0.0
    %333 = vmatprep.subr.mxu0 0.0
    %334 = vmatpush1.msra.mxu0 0.0
    %335 = vmatprep.subr.mxu0 0.0
    %336 = vmatpush1.msra.mxu0 0.0
    %337 = vmatprep.subr.mxu0 0.0
    %338 = vmatpush1.msra.mxu0 0.0
    %339 = vmatprep.subr.mxu0 0.0
    %340 = vmatpush1.msra.mxu0 0.0
    %341 = vmatprep.subr.mxu0 0.0
    %342 = vmatpush1.msra.mxu0 0.0
    %343 = vmatprep.subr.mxu0 0.0
    %344 = vmatpush1.msra.mxu0 0.0
    %345 = vmatprep.subr.mxu0 0.0
    %346 = vmatpush1.msra.mxu0 0.0
    %347 = vmatprep.subr.mxu0 0.0
    %348 = vmatpush1.msra.mxu0 0.0
    %349 = vmatprep.subr.mxu0 0.0
    %350 = vmatpush1.msra.mxu0 0.0
    %351 = vmatprep.subr.mxu0 0.0
    %352 = vmatpush1.msra.mxu0 0.0
    %353 = vmatprep.subr.mxu0 0.0
    %354 = vmatpush1.msra.mxu0 0.0
    %355 = vmatprep.subr.mxu0 0.0
    %356 = vmatpush1.msra.mxu0 0.0
    %357 = vmatprep.subr.mxu0 0.0
    %358 = vmatpush1.msra.mxu0 0.0
    %359 = vmatprep.subr.mxu0 0.0
    %360 = vmatpush1.msra.mxu0 0.0
    %361 = vmatprep.mubr.f32.mxu0 0.0
    %362 = vmatmul.mubr.f32.gmra.mrb[0].mxu0 %v146
    %v363 = vpop.f32.mrb[0].mxu0
    %v364 = vadd.f32 %v295, %v363
    %v365 = vpop.f32.mrb[0].mxu0
    %366 = vmatprep.mubr.f32.mxu0 0.0
    %367 = vmatmul.mubr.f32.gmra.mrb[0].mxu0 %v149
    %v368 = vpop.f32.mrb[0].mxu0
    %v369 = vadd.f32 %v295, %v368
    %v370 = vpop.f32.mrb[0].mxu0
    %371 = vmatprep.mubr.f32.mxu0 0.0
    %372 = vmatmul.mubr.f32.gmra.mrb[0].mxu0 %v152
    %v373 = vpop.f32.mrb[0].mxu0
    %v374 = vadd.f32 %v295, %v373
    %v375 = vpop.f32.mrb[0].mxu0
    %376 = vmatprep.mubr.f32.mxu0 0.0
    %377 = vmatmul.mubr.f32.gmra.mrb[0].mxu0 %v155
    %v378 = vpop.f32.mrb[0].mxu0
    %v379 = vadd.f32 %v295, %v378
    %v380 = vpop.f32.mrb[0].mxu0
    %381 = vmatprep.mubr.f32.mxu0 0.0
    %382 = vmatmul.mubr.f32.gmra.mrb[0].mxu0 %v158
    %v383 = vpop.f32.mrb[0].mxu0
    %v384 = vadd.f32 %v295, %v383
    %v385 = vpop.f32.mrb[0].mxu0
    %386 = vmatprep.mubr.f32.mxu0 0.0
    %387 = vmatmul.mubr.f32.gmra.mrb[0].mxu0 %v161
    %v388 = vpop.f32.mrb[0].mxu0
    %v389 = vadd.f32 %v295, %v388
    %v390 = vpop.f32.mrb[0].mxu0
    %391 = vmatprep.mubr.f32.mxu0 0.0
    %392 = vmatmul.mubr.f32.gmra.mrb[0].mxu0 %v164
    %v393 = vpop.f32.mrb[0].mxu0
    %v394 = vadd.f32 %v295, %v393
    %v395 = vpop.f32.mrb[0].mxu0
    %396 = vmatprep.mubr.f32.mxu0 0.0
    %397 = vmatmul.mubr.f32.gmra.mrb[0].mxu0 %v167
    %v398 = vpop.f32.mrb[0].mxu0
    %v399 = vadd.f32 %v295, %v398
    %v400 = vpop.f32.mrb[0].mxu0
    %401 = vdwg.mxu0
    %v402 = vld [vmem:[#allocation2] sm:$0xff]
    %v403 = vld [vmem:[#allocation2 + $0x8] sm:$0xff]
    %v404 = vld [vmem:[#allocation2 + $0x10] sm:$0xff]
    %v405 = vld [vmem:[#allocation2 + $0x18] sm:$0xff]
    %v406 = vld [vmem:[#allocation2 + $0x20] sm:$0xff]
    %v407 = vld [vmem:[#allocation2 + $0x28] sm:$0xff]
    %v408 = vld [vmem:[#allocation2 + $0x30] sm:$0xff]
    %v409 = vld [vmem:[#allocation2 + $0x38] sm:$0xff]
    %v411 = vsel %vm144, %v402, 0
    %v414 = vsel %vm144, %v403, 0
    %v417 = vsel %vm144, %v404, 0
    %v420 = vsel %vm144, %v405, 0
    %v423 = vsel %vm144, %v406, 0
    %v426 = vsel %vm144, %v407, 0
    %v429 = vsel %vm144, %v408, 0
    %v432 = vsel %vm144, %v409, 0
    %434 = vmatprep.subr.mxu0 0.0
    %435 = vmatpush1.msra.mxu0 %v236
    %436 = vmatprep.subr.mxu0 0.0
    %437 = vmatpush1.msra.mxu0 %v242
    %438 = vmatprep.subr.mxu0 0.0
    %439 = vmatpush1.msra.mxu0 %v248
    %440 = vmatprep.subr.mxu0 0.0
    %441 = vmatpush1.msra.mxu0 %v254
    %442 = vmatprep.subr.mxu0 0.0
    %443 = vmatpush1.msra.mxu0 %v260
    %444 = vmatprep.subr.mxu0 0.0
    %445 = vmatpush1.msra.mxu0 %v266
    %446 = vmatprep.subr.mxu0 0.0
    %447 = vmatpush1.msra.mxu0 %v272
    %448 = vmatprep.subr.mxu0 0.0
    %449 = vmatpush1.msra.mxu0 %v278
    %450 = vmatprep.subr.mxu0 0.0
    %451 = vmatpush1.msra.mxu0 0.0
    %452 = vmatprep.subr.mxu0 0.0
    %453 = vmatpush1.msra.mxu0 0.0
    %454 = vmatprep.subr.mxu0 0.0
    %455 = vmatpush1.msra.mxu0 0.0
    %456 = vmatprep.subr.mxu0 0.0
    %457 = vmatpush1.msra.mxu0 0.0
    %458 = vmatprep.subr.mxu0 0.0
    %459 = vmatpush1.msra.mxu0 0.0
    %460 = vmatprep.subr.mxu0 0.0
    %461 = vmatpush1.msra.mxu0 0.0
    %462 = vmatprep.subr.mxu0 0.0
    %463 = vmatpush1.msra.mxu0 0.0
    %464 = vmatprep.subr.mxu0 0.0
    %465 = vmatpush1.msra.mxu0 0.0
    %466 = vmatprep.subr.mxu0 0.0
    %467 = vmatpush1.msra.mxu0 0.0
    %468 = vmatprep.subr.mxu0 0.0
    %469 = vmatpush1.msra.mxu0 0.0
    %470 = vmatprep.subr.mxu0 0.0
    %471 = vmatpush1.msra.mxu0 0.0
    %472 = vmatprep.subr.mxu0 0.0
    %473 = vmatpush1.msra.mxu0 0.0
    %474 = vmatprep.subr.mxu0 0.0
    %475 = vmatpush1.msra.mxu0 0.0
    %476 = vmatprep.subr.mxu0 0.0
    %477 = vmatpush1.msra.mxu0 0.0
    %478 = vmatprep.subr.mxu0 0.0
    %479 = vmatpush1.msra.mxu0 0.0
    %480 = vmatprep.subr.mxu0 0.0
    %481 = vmatpush1.msra.mxu0 0.0
    %482 = vmatprep.subr.mxu0 0.0
    %483 = vmatpush1.msra.mxu0 0.0
    %484 = vmatprep.subr.mxu0 0.0
    %485 = vmatpush1.msra.mxu0 0.0
    %486 = vmatprep.subr.mxu0 0.0
    %487 = vmatpush1.msra.mxu0 0.0
    %488 = vmatprep.subr.mxu0 0.0
    %489 = vmatpush1.msra.mxu0 0.0
    %490 = vmatprep.subr.mxu0 0.0
    %491 = vmatpush1.msra.mxu0 0.0
    %492 = vmatprep.subr.mxu0 0.0
    %493 = vmatpush1.msra.mxu0 0.0
    %494 = vmatprep.subr.mxu0 0.0
    %495 = vmatpush1.msra.mxu0 0.0
    %496 = vmatprep.subr.mxu0 0.0
    %497 = vmatpush1.msra.mxu0 0.0
    %498 = vmatprep.mubr.f32.mxu0 0.0
    %499 = vmatmul.mubr.f32.gmra.mrb[0].mxu0 %v411
    %v500 = vpop.f32.mrb[0].mxu0
    %v501 = vadd.f32 0.0, %v500
    %v502 = vpop.f32.mrb[0].mxu0
    %503 = vmatprep.mubr.f32.mxu0 0.0
    %504 = vmatmul.mubr.f32.gmra.mrb[0].mxu0 %v414
    %v505 = vpop.f32.mrb[0].mxu0
    %v506 = vadd.f32 0.0, %v505
    %v507 = vpop.f32.mrb[0].mxu0
    %508 = vmatprep.mubr.f32.mxu0 0.0
    %509 = vmatmul.mubr.f32.gmra.mrb[0].mxu0 %v417
    %v510 = vpop.f32.mrb[0].mxu0
    %v511 = vadd.f32 0.0, %v510
    %v512 = vpop.f32.mrb[0].mxu0
    %513 = vmatprep.mubr.f32.mxu0 0.0
    %514 = vmatmul.mubr.f32.gmra.mrb[0].mxu0 %v420
    %v515 = vpop.f32.mrb[0].mxu0
    %v516 = vadd.f32 0.0, %v515
    %v517 = vpop.f32.mrb[0].mxu0
    %518 = vmatprep.mubr.f32.mxu0 0.0
    %519 = vmatmul.mubr.f32.gmra.mrb[0].mxu0 %v423
    %v520 = vpop.f32.mrb[0].mxu0
    %v521 = vadd.f32 0.0, %v520
    %v522 = vpop.f32.mrb[0].mxu0
    %523 = vmatprep.mubr.f32.mxu0 0.0
    %524 = vmatmul.mubr.f32.gmra.mrb[0].mxu0 %v426
    %v525 = vpop.f32.mrb[0].mxu0
    %v526 = vadd.f32 0.0, %v525
    %v527 = vpop.f32.mrb[0].mxu0
    %528 = vmatprep.mubr.f32.mxu0 0.0
    %529 = vmatmul.mubr.f32.gmra.mrb[0].mxu0 %v429
    %v530 = vpop.f32.mrb[0].mxu0
    %v531 = vadd.f32 0.0, %v530
    %v532 = vpop.f32.mrb[0].mxu0
    %533 = vmatprep.mubr.f32.mxu0 0.0
    %534 = vmatmul.mubr.f32.gmra.mrb[0].mxu0 %v432
    %v535 = vpop.f32.mrb[0].mxu0
    %v536 = vadd.f32 0.0, %v535
    %v537 = vpop.f32.mrb[0].mxu0
    %538 = vdwg.mxu0
    %v539 = vadd.f32 %v364, %v501
    %v540 = vadd.f32 %v369, %v506
    %v541 = vadd.f32 %v374, %v511
    %v542 = vadd.f32 %v379, %v516
    %v543 = vadd.f32 %v384, %v521
    %v544 = vadd.f32 %v389, %v526
    %v545 = vadd.f32 %v394, %v531
    %v546 = vadd.f32 %v399, %v536
    %s547 = scalar_lea.vmem [#allocation2], 64
    %v548 = vld [vmem:[%s547] sm:$0xff]
    %v549 = vld [vmem:[%s547 + $0x8] sm:$0xff]
    %v550 = vld [vmem:[%s547 + $0x10] sm:$0xff]
    %v551 = vld [vmem:[%s547 + $0x18] sm:$0xff]
    %v552 = vld [vmem:[%s547 + $0x20] sm:$0xff]
    %v553 = vld [vmem:[%s547 + $0x28] sm:$0xff]
    %v554 = vld [vmem:[%s547 + $0x30] sm:$0xff]
    %v555 = vld [vmem:[%s547 + $0x38] sm:$0xff]
    %564 = vrot.lane.b32.xlu0 %v236, 64
    %v565 = vpop.permute.xlu0 %564
    %566 = vrot.lane.b32.xlu0 %v242, 64
    %v567 = vpop.permute.xlu0 %566
    %568 = vrot.lane.b32.xlu0 %v248, 64
    %v569 = vpop.permute.xlu0 %568
    %570 = vrot.lane.b32.xlu0 %v254, 64
    %v571 = vpop.permute.xlu0 %570
    %572 = vrot.lane.b32.xlu0 %v260, 64
    %v573 = vpop.permute.xlu0 %572
    %574 = vrot.lane.b32.xlu0 %v266, 64
    %v575 = vpop.permute.xlu0 %574
    %576 = vrot.lane.b32.xlu0 %v272, 64
    %v577 = vpop.permute.xlu0 %576
    %578 = vrot.lane.b32.xlu0 %v278, 64
    %v579 = vpop.permute.xlu0 %578
    %v589 = vsel %vm144, %v548, 0
    %v592 = vsel %vm144, %v549, 0
    %v595 = vsel %vm144, %v550, 0
    %v598 = vsel %vm144, %v551, 0
    %v601 = vsel %vm144, %v552, 0
    %v604 = vsel %vm144, %v553, 0
    %v607 = vsel %vm144, %v554, 0
    %v610 = vsel %vm144, %v555, 0
    %612 = vmatprep.subr.mxu0 0.0
    %613 = vmatpush1.msra.mxu0 %v565
    %614 = vmatprep.subr.mxu0 0.0
    %615 = vmatpush1.msra.mxu0 %v567
    %616 = vmatprep.subr.mxu0 0.0
    %617 = vmatpush1.msra.mxu0 %v569
    %618 = vmatprep.subr.mxu0 0.0
    %619 = vmatpush1.msra.mxu0 %v571
    %620 = vmatprep.subr.mxu0 0.0
    %621 = vmatpush1.msra.mxu0 %v573
    %622 = vmatprep.subr.mxu0 0.0
    %623 = vmatpush1.msra.mxu0 %v575
    %624 = vmatprep.subr.mxu0 0.0
    %625 = vmatpush1.msra.mxu0 %v577
    %626 = vmatprep.subr.mxu0 0.0
    %627 = vmatpush1.msra.mxu0 %v579
    %628 = vmatprep.subr.mxu0 0.0
    %629 = vmatpush1.msra.mxu0 0.0
    %630 = vmatprep.subr.mxu0 0.0
    %631 = vmatpush1.msra.mxu0 0.0
    %632 = vmatprep.subr.mxu0 0.0
    %633 = vmatpush1.msra.mxu0 0.0
    %634 = vmatprep.subr.mxu0 0.0
    %635 = vmatpush1.msra.mxu0 0.0
    %636 = vmatprep.subr.mxu0 0.0
    %637 = vmatpush1.msra.mxu0 0.0
    %638 = vmatprep.subr.mxu0 0.0
    %639 = vmatpush1.msra.mxu0 0.0
    %640 = vmatprep.subr.mxu0 0.0
    %641 = vmatpush1.msra.mxu0 0.0
    %642 = vmatprep.subr.mxu0 0.0
    %643 = vmatpush1.msra.mxu0 0.0
    %644 = vmatprep.subr.mxu0 0.0
    %645 = vmatpush1.msra.mxu0 0.0
    %646 = vmatprep.subr.mxu0 0.0
    %647 = vmatpush1.msra.mxu0 0.0
    %648 = vmatprep.subr.mxu0 0.0
    %649 = vmatpush1.msra.mxu0 0.0
    %650 = vmatprep.subr.mxu0 0.0
    %651 = vmatpush1.msra.mxu0 0.0
    %652 = vmatprep.subr.mxu0 0.0
    %653 = vmatpush1.msra.mxu0 0.0
    %654 = vmatprep.subr.mxu0 0.0
    %655 = vmatpush1.msra.mxu0 0.0
    %656 = vmatprep.subr.mxu0 0.0
    %657 = vmatpush1.msra.mxu0 0.0
    %658 = vmatprep.subr.mxu0 0.0
    %659 = vmatpush1.msra.mxu0 0.0
    %660 = vmatprep.subr.mxu0 0.0
    %661 = vmatpush1.msra.mxu0 0.0
    %662 = vmatprep.subr.mxu0 0.0
    %663 = vmatpush1.msra.mxu0 0.0
    %664 = vmatprep.subr.mxu0 0.0
    %665 = vmatpush1.msra.mxu0 0.0
    %666 = vmatprep.subr.mxu0 0.0
    %667 = vmatpush1.msra.mxu0 0.0
    %668 = vmatprep.subr.mxu0 0.0
    %669 = vmatpush1.msra.mxu0 0.0
    %670 = vmatprep.subr.mxu0 0.0
    %671 = vmatpush1.msra.mxu0 0.0
    %672 = vmatprep.subr.mxu0 0.0
    %673 = vmatpush1.msra.mxu0 0.0
    %674 = vmatprep.subr.mxu0 0.0
    %675 = vmatpush1.msra.mxu0 0.0
    %676 = vmatprep.mubr.f32.mxu0 0.0
    %677 = vmatmul.mubr.f32.gmra.mrb[0].mxu0 %v589
    %v678 = vpop.f32.mrb[0].mxu0
    %v679 = vadd.f32 0.0, %v678
    %v680 = vpop.f32.mrb[0].mxu0
    %681 = vmatprep.mubr.f32.mxu0 0.0
    %682 = vmatmul.mubr.f32.gmra.mrb[0].mxu0 %v592
    %v683 = vpop.f32.mrb[0].mxu0
    %v684 = vadd.f32 0.0, %v683
    %v685 = vpop.f32.mrb[0].mxu0
    %686 = vmatprep.mubr.f32.mxu0 0.0
    %687 = vmatmul.mubr.f32.gmra.mrb[0].mxu0 %v595
    %v688 = vpop.f32.mrb[0].mxu0
    %v689 = vadd.f32 0.0, %v688
    %v690 = vpop.f32.mrb[0].mxu0
    %691 = vmatprep.mubr.f32.mxu0 0.0
    %692 = vmatmul.mubr.f32.gmra.mrb[0].mxu0 %v598
    %v693 = vpop.f32.mrb[0].mxu0
    %v694 = vadd.f32 0.0, %v693
    %v695 = vpop.f32.mrb[0].mxu0
    %696 = vmatprep.mubr.f32.mxu0 0.0
    %697 = vmatmul.mubr.f32.gmra.mrb[0].mxu0 %v601
    %v698 = vpop.f32.mrb[0].mxu0
    %v699 = vadd.f32 0.0, %v698
    %v700 = vpop.f32.mrb[0].mxu0
    %701 = vmatprep.mubr.f32.mxu0 0.0
    %702 = vmatmul.mubr.f32.gmra.mrb[0].mxu0 %v604
    %v703 = vpop.f32.mrb[0].mxu0
    %v704 = vadd.f32 0.0, %v703
    %v705 = vpop.f32.mrb[0].mxu0
    %706 = vmatprep.mubr.f32.mxu0 0.0
    %707 = vmatmul.mubr.f32.gmra.mrb[0].mxu0 %v607
    %v708 = vpop.f32.mrb[0].mxu0
    %v709 = vadd.f32 0.0, %v708
    %v710 = vpop.f32.mrb[0].mxu0
    %711 = vmatprep.mubr.f32.mxu0 0.0
    %712 = vmatmul.mubr.f32.gmra.mrb[0].mxu0 %v610
    %v713 = vpop.f32.mrb[0].mxu0
    %v714 = vadd.f32 0.0, %v713
    %v715 = vpop.f32.mrb[0].mxu0
    %716 = vdwg.mxu0
    %v717 = vadd.f32 %v539, %v679
    %v718 = vadd.f32 %v540, %v684
    %v719 = vadd.f32 %v541, %v689
    %v720 = vadd.f32 %v542, %v694
    %v721 = vadd.f32 %v543, %v699
    %v722 = vadd.f32 %v544, %v704
    %v723 = vadd.f32 %v545, %v709
    %v724 = vadd.f32 %v546, %v714
    %s725 = scalar_lea.vmem [#allocation2], 128
    %v726 = vld [vmem:[%s725] sm:$0xff]
    %v727 = vld [vmem:[%s725 + $0x8] sm:$0xff]
    %v728 = vld [vmem:[%s725 + $0x10] sm:$0xff]
    %v729 = vld [vmem:[%s725 + $0x18] sm:$0xff]
    %v730 = vld [vmem:[%s725 + $0x20] sm:$0xff]
    %v731 = vld [vmem:[%s725 + $0x28] sm:$0xff]
    %v732 = vld [vmem:[%s725 + $0x30] sm:$0xff]
    %v733 = vld [vmem:[%s725 + $0x38] sm:$0xff]
    %v735 = vsel %vm144, %v726, 0
    %v738 = vsel %vm144, %v727, 0
    %v741 = vsel %vm144, %v728, 0
    %v744 = vsel %vm144, %v729, 0
    %v747 = vsel %vm144, %v730, 0
    %v750 = vsel %vm144, %v731, 0
    %v753 = vsel %vm144, %v732, 0
    %v756 = vsel %vm144, %v733, 0
    %758 = vmatprep.subr.mxu0 0.0
    %759 = vmatpush1.msra.mxu0 %v238
    %760 = vmatprep.subr.mxu0 0.0
    %761 = vmatpush1.msra.mxu0 %v244
    %762 = vmatprep.subr.mxu0 0.0
    %763 = vmatpush1.msra.mxu0 %v250
    %764 = vmatprep.subr.mxu0 0.0
    %765 = vmatpush1.msra.mxu0 %v256
    %766 = vmatprep.subr.mxu0 0.0
    %767 = vmatpush1.msra.mxu0 %v262
    %768 = vmatprep.subr.mxu0 0.0
    %769 = vmatpush1.msra.mxu0 %v268
    %770 = vmatprep.subr.mxu0 0.0
    %771 = vmatpush1.msra.mxu0 %v274
    %772 = vmatprep.subr.mxu0 0.0
    %773 = vmatpush1.msra.mxu0 %v280
    %774 = vmatprep.subr.mxu0 0.0
    %775 = vmatpush1.msra.mxu0 0.0
    %776 = vmatprep.subr.mxu0 0.0
    %777 = vmatpush1.msra.mxu0 0.0
    %778 = vmatprep.subr.mxu0 0.0
    %779 = vmatpush1.msra.mxu0 0.0
    %780 = vmatprep.subr.mxu0 0.0
    %781 = vmatpush1.msra.mxu0 0.0
    %782 = vmatprep.subr.mxu0 0.0
    %783 = vmatpush1.msra.mxu0 0.0
    %784 = vmatprep.subr.mxu0 0.0
    %785 = vmatpush1.msra.mxu0 0.0
    %786 = vmatprep.subr.mxu0 0.0
    %787 = vmatpush1.msra.mxu0 0.0
    %788 = vmatprep.subr.mxu0 0.0
    %789 = vmatpush1.msra.mxu0 0.0
    %790 = vmatprep.subr.mxu0 0.0
    %791 = vmatpush1.msra.mxu0 0.0
    %792 = vmatprep.subr.mxu0 0.0
    %793 = vmatpush1.msra.mxu0 0.0
    %794 = vmatprep.subr.mxu0 0.0
    %795 = vmatpush1.msra.mxu0 0.0
    %796 = vmatprep.subr.mxu0 0.0
    %797 = vmatpush1.msra.mxu0 0.0
    %798 = vmatprep.subr.mxu0 0.0
    %799 = vmatpush1.msra.mxu0 0.0
    %800 = vmatprep.subr.mxu0 0.0
    %801 = vmatpush1.msra.mxu0 0.0
    %802 = vmatprep.subr.mxu0 0.0
    %803 = vmatpush1.msra.mxu0 0.0
    %804 = vmatprep.subr.mxu0 0.0
    %805 = vmatpush1.msra.mxu0 0.0
    %806 = vmatprep.subr.mxu0 0.0
    %807 = vmatpush1.msra.mxu0 0.0
    %808 = vmatprep.subr.mxu0 0.0
    %809 = vmatpush1.msra.mxu0 0.0
    %810 = vmatprep.subr.mxu0 0.0
    %811 = vmatpush1.msra.mxu0 0.0
    %812 = vmatprep.subr.mxu0 0.0
    %813 = vmatpush1.msra.mxu0 0.0
    %814 = vmatprep.subr.mxu0 0.0
    %815 = vmatpush1.msra.mxu0 0.0
    %816 = vmatprep.subr.mxu0 0.0
    %817 = vmatpush1.msra.mxu0 0.0
    %818 = vmatprep.subr.mxu0 0.0
    %819 = vmatpush1.msra.mxu0 0.0
    %820 = vmatprep.subr.mxu0 0.0
    %821 = vmatpush1.msra.mxu0 0.0
    %822 = vmatprep.mubr.f32.mxu0 0.0
    %823 = vmatmul.mubr.f32.gmra.mrb[0].mxu0 %v735
    %v824 = vpop.f32.mrb[0].mxu0
    %v825 = vadd.f32 0.0, %v824
    %v826 = vpop.f32.mrb[0].mxu0
    %827 = vmatprep.mubr.f32.mxu0 0.0
    %828 = vmatmul.mubr.f32.gmra.mrb[0].mxu0 %v738
    %v829 = vpop.f32.mrb[0].mxu0
    %v830 = vadd.f32 0.0, %v829
    %v831 = vpop.f32.mrb[0].mxu0
    %832 = vmatprep.mubr.f32.mxu0 0.0
    %833 = vmatmul.mubr.f32.gmra.mrb[0].mxu0 %v741
    %v834 = vpop.f32.mrb[0].mxu0
    %v835 = vadd.f32 0.0, %v834
    %v836 = vpop.f32.mrb[0].mxu0
    %837 = vmatprep.mubr.f32.mxu0 0.0
    %838 = vmatmul.mubr.f32.gmra.mrb[0].mxu0 %v744
    %v839 = vpop.f32.mrb[0].mxu0
    %v840 = vadd.f32 0.0, %v839
    %v841 = vpop.f32.mrb[0].mxu0
    %842 = vmatprep.mubr.f32.mxu0 0.0
    %843 = vmatmul.mubr.f32.gmra.mrb[0].mxu0 %v747
    %v844 = vpop.f32.mrb[0].mxu0
    %v845 = vadd.f32 0.0, %v844
    %v846 = vpop.f32.mrb[0].mxu0
    %847 = vmatprep.mubr.f32.mxu0 0.0
    %848 = vmatmul.mubr.f32.gmra.mrb[0].mxu0 %v750
    %v849 = vpop.f32.mrb[0].mxu0
    %v850 = vadd.f32 0.0, %v849
    %v851 = vpop.f32.mrb[0].mxu0
    %852 = vmatprep.mubr.f32.mxu0 0.0
    %853 = vmatmul.mubr.f32.gmra.mrb[0].mxu0 %v753
    %v854 = vpop.f32.mrb[0].mxu0
    %v855 = vadd.f32 0.0, %v854
    %v856 = vpop.f32.mrb[0].mxu0
    %857 = vmatprep.mubr.f32.mxu0 0.0
    %858 = vmatmul.mubr.f32.gmra.mrb[0].mxu0 %v756
    %v859 = vpop.f32.mrb[0].mxu0
    %v860 = vadd.f32 0.0, %v859
    %v861 = vpop.f32.mrb[0].mxu0
    %862 = vdwg.mxu0
    %v863 = vadd.f32 %v717, %v825
    %v864 = vadd.f32 %v718, %v830
    %v865 = vadd.f32 %v719, %v835
    %v866 = vadd.f32 %v720, %v840
    %v867 = vadd.f32 %v721, %v845
    %v868 = vadd.f32 %v722, %v850
    %v869 = vadd.f32 %v723, %v855
    %v870 = vadd.f32 %v724, %v860
    %v871 = vmax.f32 %v863, 0.0
    %v872 = vmax.f32 %v864, 0.0
    %v873 = vmax.f32 %v865, 0.0
    %v874 = vmax.f32 %v866, 0.0
    %v875 = vmax.f32 %v867, 0.0
    %v876 = vmax.f32 %v868, 0.0
    %v877 = vmax.f32 %v869, 0.0
    %v878 = vmax.f32 %v870, 0.0
    %v879 = vld [vmem:[#allocation10] sm:$0xff]
    %v880 = vld [vmem:[#allocation10 + $0x8] sm:$0xff]
    %v881 = vld [vmem:[#allocation10 + $0x10] sm:$0xff]
    %v882 = vld [vmem:[#allocation10 + $0x18] sm:$0xff]
    %v883 = vld [vmem:[#allocation10 + $0x20] sm:$0xff]
    %v884 = vld [vmem:[#allocation10 + $0x28] sm:$0xff]
    %v885 = vld [vmem:[#allocation10 + $0x30] sm:$0xff]
    %v886 = vld [vmem:[#allocation10 + $0x38] sm:$0xff]
    %v888 = vsel %vm144, %v871, 0
    %v891 = vsel %vm144, %v872, 0
    %v894 = vsel %vm144, %v873, 0
    %v897 = vsel %vm144, %v874, 0
    %v900 = vsel %vm144, %v875, 0
    %v903 = vsel %vm144, %v876, 0
    %v906 = vsel %vm144, %v877, 0
    %v909 = vsel %vm144, %v878, 0
    %911 = vmatprep.subr.mxu0 0.0
    %912 = vmatpush1.msra.mxu0 %v879
    %913 = vmatprep.subr.mxu0 0.0
    %914 = vmatpush1.msra.mxu0 %v880
    %915 = vmatprep.subr.mxu0 0.0
    %916 = vmatpush1.msra.mxu0 %v881
    %917 = vmatprep.subr.mxu0 0.0
    %918 = vmatpush1.msra.mxu0 %v882
    %919 = vmatprep.subr.mxu0 0.0
    %920 = vmatpush1.msra.mxu0 %v883
    %921 = vmatprep.subr.mxu0 0.0
    %922 = vmatpush1.msra.mxu0 %v884
    %923 = vmatprep.subr.mxu0 0.0
    %924 = vmatpush1.msra.mxu0 %v885
    %925 = vmatprep.subr.mxu0 0.0
    %926 = vmatpush1.msra.mxu0 %v886
    %927 = vmatprep.subr.mxu0 0.0
    %928 = vmatpush1.msra.mxu0 0.0
    %929 = vmatprep.subr.mxu0 0.0
    %930 = vmatpush1.msra.mxu0 0.0
    %931 = vmatprep.subr.mxu0 0.0
    %932 = vmatpush1.msra.mxu0 0.0
    %933 = vmatprep.subr.mxu0 0.0
    %934 = vmatpush1.msra.mxu0 0.0
    %935 = vmatprep.subr.mxu0 0.0
    %936 = vmatpush1.msra.mxu0 0.0
    %937 = vmatprep.subr.mxu0 0.0
    %938 = vmatpush1.msra.mxu0 0.0
    %939 = vmatprep.subr.mxu0 0.0
    %940 = vmatpush1.msra.mxu0 0.0
    %941 = vmatprep.subr.mxu0 0.0
    %942 = vmatpush1.msra.mxu0 0.0
    %943 = vmatprep.subr.mxu0 0.0
    %944 = vmatpush1.msra.mxu0 0.0
    %945 = vmatprep.subr.mxu0 0.0
    %946 = vmatpush1.msra.mxu0 0.0
    %947 = vmatprep.subr.mxu0 0.0
    %948 = vmatpush1.msra.mxu0 0.0
    %949 = vmatprep.subr.mxu0 0.0
    %950 = vmatpush1.msra.mxu0 0.0
    %951 = vmatprep.subr.mxu0 0.0
    %952 = vmatpush1.msra.mxu0 0.0
    %953 = vmatprep.subr.mxu0 0.0
    %954 = vmatpush1.msra.mxu0 0.0
    %955 = vmatprep.subr.mxu0 0.0
    %956 = vmatpush1.msra.mxu0 0.0
    %957 = vmatprep.subr.mxu0 0.0
    %958 = vmatpush1.msra.mxu0 0.0
    %959 = vmatprep.subr.mxu0 0.0
    %960 = vmatpush1.msra.mxu0 0.0
    %961 = vmatprep.subr.mxu0 0.0
    %962 = vmatpush1.msra.mxu0 0.0
    %963 = vmatprep.subr.mxu0 0.0
    %964 = vmatpush1.msra.mxu0 0.0
    %965 = vmatprep.subr.mxu0 0.0
    %966 = vmatpush1.msra.mxu0 0.0
    %967 = vmatprep.subr.mxu0 0.0
    %968 = vmatpush1.msra.mxu0 0.0
    %969 = vmatprep.subr.mxu0 0.0
    %970 = vmatpush1.msra.mxu0 0.0
    %971 = vmatprep.subr.mxu0 0.0
    %972 = vmatpush1.msra.mxu0 0.0
    %973 = vmatprep.subr.mxu0 0.0
    %974 = vmatpush1.msra.mxu0 0.0
    %975 = vmatprep.mubr.f32.mxu0 0.0
    %976 = vmatmul.mubr.f32.gmra.mrb[0].mxu0 %v888
    %v977 = vpop.f32.mrb[0].mxu0
    %v978 = vadd.f32 0.0, %v977
    %v979 = vpop.f32.mrb[0].mxu0
    %980 = vmatprep.mubr.f32.mxu0 0.0
    %981 = vmatmul.mubr.f32.gmra.mrb[0].mxu0 %v891
    %v982 = vpop.f32.mrb[0].mxu0
    %v983 = vadd.f32 0.0, %v982
    %v984 = vpop.f32.mrb[0].mxu0
    %985 = vmatprep.mubr.f32.mxu0 0.0
    %986 = vmatmul.mubr.f32.gmra.mrb[0].mxu0 %v894
    %v987 = vpop.f32.mrb[0].mxu0
    %v988 = vadd.f32 0.0, %v987
    %v989 = vpop.f32.mrb[0].mxu0
    %990 = vmatprep.mubr.f32.mxu0 0.0
    %991 = vmatmul.mubr.f32.gmra.mrb[0].mxu0 %v897
    %v992 = vpop.f32.mrb[0].mxu0
    %v993 = vadd.f32 0.0, %v992
    %v994 = vpop.f32.mrb[0].mxu0
    %995 = vmatprep.mubr.f32.mxu0 0.0
    %996 = vmatmul.mubr.f32.gmra.mrb[0].mxu0 %v900
    %v997 = vpop.f32.mrb[0].mxu0
    %v998 = vadd.f32 0.0, %v997
    %v999 = vpop.f32.mrb[0].mxu0
    %1000 = vmatprep.mubr.f32.mxu0 0.0
    %1001 = vmatmul.mubr.f32.gmra.mrb[0].mxu0 %v903
    %v1002 = vpop.f32.mrb[0].mxu0
    %v1003 = vadd.f32 0.0, %v1002
    %v1004 = vpop.f32.mrb[0].mxu0
    %1005 = vmatprep.mubr.f32.mxu0 0.0
    %1006 = vmatmul.mubr.f32.gmra.mrb[0].mxu0 %v906
    %v1007 = vpop.f32.mrb[0].mxu0
    %v1008 = vadd.f32 0.0, %v1007
    %v1009 = vpop.f32.mrb[0].mxu0
    %1010 = vmatprep.mubr.f32.mxu0 0.0
    %1011 = vmatmul.mubr.f32.gmra.mrb[0].mxu0 %v909
    %v1012 = vpop.f32.mrb[0].mxu0
    %v1013 = vadd.f32 0.0, %v1012
    %v1014 = vpop.f32.mrb[0].mxu0
    %1015 = vdwg.mxu0
    %v1016 = vld [vmem:[%s6] sm:$0xff]
    %v1017 = vld [vmem:[%s6 + $0x8] sm:$0xff]
    %v1018 = vld [vmem:[%s6 + $0x10] sm:$0xff]
    %v1019 = vld [vmem:[%s6 + $0x18] sm:$0xff]
    %v1020 = vld [vmem:[%s6 + $0x20] sm:$0xff]
    %v1021 = vld [vmem:[%s6 + $0x28] sm:$0xff]
    %v1022 = vld [vmem:[%s6 + $0x30] sm:$0xff]
    %v1023 = vld [vmem:[%s6 + $0x38] sm:$0xff]
    %v1024 = vld [vmem:[#allocation12] sm:$0x1]
    %v1026 = vlaneseq
    %v1027 = vshrl.u32 %v1026, 7
    %v1028 = vsub.s32 0, %v1027
    %v1029 = vrot.slane %v1024, %v1028
    %1031 = vmatprep.subr.mxu0 0.0
    %1032 = vmatpush1.msra.mxu0 %v1016
    %1033 = vmatprep.subr.mxu0 0.0
    %1034 = vmatpush1.msra.mxu0 %v1017
    %1035 = vmatprep.subr.mxu0 0.0
    %1036 = vmatpush1.msra.mxu0 %v1018
    %1037 = vmatprep.subr.mxu0 0.0
    %1038 = vmatpush1.msra.mxu0 %v1019
    %1039 = vmatprep.subr.mxu0 0.0
    %1040 = vmatpush1.msra.mxu0 %v1020
    %1041 = vmatprep.subr.mxu0 0.0
    %1042 = vmatpush1.msra.mxu0 %v1021
    %1043 = vmatprep.subr.mxu0 0.0
    %1044 = vmatpush1.msra.mxu0 %v1022
    %1045 = vmatprep.subr.mxu0 0.0
    %1046 = vmatpush1.msra.mxu0 %v1023
    %1047 = vmatprep.subr.mxu0 0.0
    %1048 = vmatpush1.msra.mxu0 0.0
    %1049 = vmatprep.subr.mxu0 0.0
    %1050 = vmatpush1.msra.mxu0 0.0
    %1051 = vmatprep.subr.mxu0 0.0
    %1052 = vmatpush1.msra.mxu0 0.0
    %1053 = vmatprep.subr.mxu0 0.0
    %1054 = vmatpush1.msra.mxu0 0.0
    %1055 = vmatprep.subr.mxu0 0.0
    %1056 = vmatpush1.msra.mxu0 0.0
    %1057 = vmatprep.subr.mxu0 0.0
    %1058 = vmatpush1.msra.mxu0 0.0
    %1059 = vmatprep.subr.mxu0 0.0
    %1060 = vmatpush1.msra.mxu0 0.0
    %1061 = vmatprep.subr.mxu0 0.0
    %1062 = vmatpush1.msra.mxu0 0.0
    %1063 = vmatprep.subr.mxu0 0.0
    %1064 = vmatpush1.msra.mxu0 0.0
    %1065 = vmatprep.subr.mxu0 0.0
    %1066 = vmatpush1.msra.mxu0 0.0
    %1067 = vmatprep.subr.mxu0 0.0
    %1068 = vmatpush1.msra.mxu0 0.0
    %1069 = vmatprep.subr.mxu0 0.0
    %1070 = vmatpush1.msra.mxu0 0.0
    %1071 = vmatprep.subr.mxu0 0.0
    %1072 = vmatpush1.msra.mxu0 0.0
    %1073 = vmatprep.subr.mxu0 0.0
    %1074 = vmatpush1.msra.mxu0 0.0
    %1075 = vmatprep.subr.mxu0 0.0
    %1076 = vmatpush1.msra.mxu0 0.0
    %1077 = vmatprep.subr.mxu0 0.0
    %1078 = vmatpush1.msra.mxu0 0.0
    %1079 = vmatprep.subr.mxu0 0.0
    %1080 = vmatpush1.msra.mxu0 0.0
    %1081 = vmatprep.subr.mxu0 0.0
    %1082 = vmatpush1.msra.mxu0 0.0
    %1083 = vmatprep.subr.mxu0 0.0
    %1084 = vmatpush1.msra.mxu0 0.0
    %1085 = vmatprep.subr.mxu0 0.0
    %1086 = vmatpush1.msra.mxu0 0.0
    %1087 = vmatprep.subr.mxu0 0.0
    %1088 = vmatpush1.msra.mxu0 0.0
    %1089 = vmatprep.subr.mxu0 0.0
    %1090 = vmatpush1.msra.mxu0 0.0
    %1091 = vmatprep.subr.mxu0 0.0
    %1092 = vmatpush1.msra.mxu0 0.0
    %1093 = vmatprep.subr.mxu0 0.0
    %1094 = vmatpush1.msra.mxu0 0.0
    %1095 = vmatprep.mubr.f32.mxu0 0.0
    %1096 = vmatmul.mubr.f32.gmra.mrb[0].mxu0 %v888
    %v1097 = vpop.f32.mrb[0].mxu0
    %v1098 = vadd.f32 %v1029, %v1097
    %v1099 = vpop.f32.mrb[0].mxu0
    %1100 = vmatprep.mubr.f32.mxu0 0.0
    %1101 = vmatmul.mubr.f32.gmra.mrb[0].mxu0 %v891
    %v1102 = vpop.f32.mrb[0].mxu0
    %v1103 = vadd.f32 %v1029, %v1102
    %v1104 = vpop.f32.mrb[0].mxu0
    %1105 = vmatprep.mubr.f32.mxu0 0.0
    %1106 = vmatmul.mubr.f32.gmra.mrb[0].mxu0 %v894
    %v1107 = vpop.f32.mrb[0].mxu0
    %v1108 = vadd.f32 %v1029, %v1107
    %v1109 = vpop.f32.mrb[0].mxu0
    %1110 = vmatprep.mubr.f32.mxu0 0.0
    %1111 = vmatmul.mubr.f32.gmra.mrb[0].mxu0 %v897
    %v1112 = vpop.f32.mrb[0].mxu0
    %v1113 = vadd.f32 %v1029, %v1112
    %v1114 = vpop.f32.mrb[0].mxu0
    %1115 = vmatprep.mubr.f32.mxu0 0.0
    %1116 = vmatmul.mubr.f32.gmra.mrb[0].mxu0 %v900
    %v1117 = vpop.f32.mrb[0].mxu0
    %v1118 = vadd.f32 %v1029, %v1117
    %v1119 = vpop.f32.mrb[0].mxu0
    %1120 = vmatprep.mubr.f32.mxu0 0.0
    %1121 = vmatmul.mubr.f32.gmra.mrb[0].mxu0 %v903
    %v1122 = vpop.f32.mrb[0].mxu0
    %v1123 = vadd.f32 %v1029, %v1122
    %v1124 = vpop.f32.mrb[0].mxu0
    %1125 = vmatprep.mubr.f32.mxu0 0.0
    %1126 = vmatmul.mubr.f32.gmra.mrb[0].mxu0 %v906
    %v1127 = vpop.f32.mrb[0].mxu0
    %v1128 = vadd.f32 %v1029, %v1127
    %v1129 = vpop.f32.mrb[0].mxu0
    %1130 = vmatprep.mubr.f32.mxu0 0.0
    %1131 = vmatmul.mubr.f32.gmra.mrb[0].mxu0 %v909
    %v1132 = vpop.f32.mrb[0].mxu0
    %v1133 = vadd.f32 %v1029, %v1132
    %v1134 = vpop.f32.mrb[0].mxu0
    %1135 = vdwg.mxu0
    %1136 = vmatprep.subr.mxu0 0.0
    %1137 = vmatpush1.msra.mxu0 %v978
    %1138 = vmatprep.subr.mxu0 0.0
    %1139 = vmatpush1.msra.mxu0 %v983
    %1140 = vmatprep.subr.mxu0 0.0
    %1141 = vmatpush1.msra.mxu0 %v988
    %1142 = vmatprep.subr.mxu0 0.0
    %1143 = vmatpush1.msra.mxu0 %v993
    %1144 = vmatprep.subr.mxu0 0.0
    %1145 = vmatpush1.msra.mxu0 %v998
    %1146 = vmatprep.subr.mxu0 0.0
    %1147 = vmatpush1.msra.mxu0 %v1003
    %1148 = vmatprep.subr.mxu0 0.0
    %1149 = vmatpush1.msra.mxu0 %v1008
    %1150 = vmatprep.subr.mxu0 0.0
    %1151 = vmatpush1.msra.mxu0 %v1013
    %1152 = vmatprep.subr.mxu0 0.0
    %1153 = vmatpush1.msra.mxu0 0.0
    %1154 = vmatprep.subr.mxu0 0.0
    %1155 = vmatpush1.msra.mxu0 0.0
    %1156 = vmatprep.subr.mxu0 0.0
    %1157 = vmatpush1.msra.mxu0 0.0
    %1158 = vmatprep.subr.mxu0 0.0
    %1159 = vmatpush1.msra.mxu0 0.0
    %1160 = vmatprep.subr.mxu0 0.0
    %1161 = vmatpush1.msra.mxu0 0.0
    %1162 = vmatprep.subr.mxu0 0.0
    %1163 = vmatpush1.msra.mxu0 0.0
    %1164 = vmatprep.subr.mxu0 0.0
    %1165 = vmatpush1.msra.mxu0 0.0
    %1166 = vmatprep.subr.mxu0 0.0
    %1167 = vmatpush1.msra.mxu0 0.0
    %1168 = vmatprep.subr.mxu0 0.0
    %1169 = vmatpush1.msra.mxu0 0.0
    %1170 = vmatprep.subr.mxu0 0.0
    %1171 = vmatpush1.msra.mxu0 0.0
    %1172 = vmatprep.subr.mxu0 0.0
    %1173 = vmatpush1.msra.mxu0 0.0
    %1174 = vmatprep.subr.mxu0 0.0
    %1175 = vmatpush1.msra.mxu0 0.0
    %1176 = vmatprep.subr.mxu0 0.0
    %1177 = vmatpush1.msra.mxu0 0.0
    %1178 = vmatprep.subr.mxu0 0.0
    %1179 = vmatpush1.msra.mxu0 0.0
    %1180 = vmatprep.subr.mxu0 0.0
    %1181 = vmatpush1.msra.mxu0 0.0
    %1182 = vmatprep.subr.mxu0 0.0
    %1183 = vmatpush1.msra.mxu0 0.0
    %1184 = vmatprep.subr.mxu0 0.0
    %1185 = vmatpush1.msra.mxu0 0.0
    %1186 = vmatprep.subr.mxu0 0.0
    %1187 = vmatpush1.msra.mxu0 0.0
    %1188 = vmatprep.subr.mxu0 0.0
    %1189 = vmatpush1.msra.mxu0 0.0
    %1190 = vmatprep.subr.mxu0 0.0
    %1191 = vmatpush1.msra.mxu0 0.0
    %1192 = vmatprep.subr.mxu0 0.0
    %1193 = vmatpush1.msra.mxu0 0.0
    %1194 = vmatprep.subr.mxu0 0.0
    %1195 = vmatpush1.msra.mxu0 0.0
    %1196 = vmatprep.subr.mxu0 0.0
    %1197 = vmatpush1.msra.mxu0 0.0
    %1198 = vmatprep.subr.mxu0 0.0
    %1199 = vmatpush1.msra.mxu0 0.0
    %1200 = vmatprep.mubr.f32.mxu0 0.0
    %1201 = vmatmul.mubr.f32.gmra.mrb[0].mxu0 %v411
    %v1202 = vpop.f32.mrb[0].mxu0
    %v1203 = vadd.f32 0.0, %v1202
    %v1204 = vpop.f32.mrb[0].mxu0
    %1205 = vmatprep.mubr.f32.mxu0 0.0
    %1206 = vmatmul.mubr.f32.gmra.mrb[0].mxu0 %v414
    %v1207 = vpop.f32.mrb[0].mxu0
    %v1208 = vadd.f32 0.0, %v1207
    %v1209 = vpop.f32.mrb[0].mxu0
    %1210 = vmatprep.mubr.f32.mxu0 0.0
    %1211 = vmatmul.mubr.f32.gmra.mrb[0].mxu0 %v417
    %v1212 = vpop.f32.mrb[0].mxu0
    %v1213 = vadd.f32 0.0, %v1212
    %v1214 = vpop.f32.mrb[0].mxu0
    %1215 = vmatprep.mubr.f32.mxu0 0.0
    %1216 = vmatmul.mubr.f32.gmra.mrb[0].mxu0 %v420
    %v1217 = vpop.f32.mrb[0].mxu0
    %v1218 = vadd.f32 0.0, %v1217
    %v1219 = vpop.f32.mrb[0].mxu0
    %1220 = vmatprep.mubr.f32.mxu0 0.0
    %1221 = vmatmul.mubr.f32.gmra.mrb[0].mxu0 %v423
    %v1222 = vpop.f32.mrb[0].mxu0
    %v1223 = vadd.f32 0.0, %v1222
    %v1224 = vpop.f32.mrb[0].mxu0
    %1225 = vmatprep.mubr.f32.mxu0 0.0
    %1226 = vmatmul.mubr.f32.gmra.mrb[0].mxu0 %v426
    %v1227 = vpop.f32.mrb[0].mxu0
    %v1228 = vadd.f32 0.0, %v1227
    %v1229 = vpop.f32.mrb[0].mxu0
    %1230 = vmatprep.mubr.f32.mxu0 0.0
    %1231 = vmatmul.mubr.f32.gmra.mrb[0].mxu0 %v429
    %v1232 = vpop.f32.mrb[0].mxu0
    %v1233 = vadd.f32 0.0, %v1232
    %v1234 = vpop.f32.mrb[0].mxu0
    %1235 = vmatprep.mubr.f32.mxu0 0.0
    %1236 = vmatmul.mubr.f32.gmra.mrb[0].mxu0 %v432
    %v1237 = vpop.f32.mrb[0].mxu0
    %v1238 = vadd.f32 0.0, %v1237
    %v1239 = vpop.f32.mrb[0].mxu0
    %1240 = vdwg.mxu0
    %v1241 = vadd.f32 %v1098, %v1203
    %v1242 = vadd.f32 %v1103, %v1208
    %v1243 = vadd.f32 %v1108, %v1213
    %v1244 = vadd.f32 %v1113, %v1218
    %v1245 = vadd.f32 %v1118, %v1223
    %v1246 = vadd.f32 %v1123, %v1228
    %v1247 = vadd.f32 %v1128, %v1233
    %v1248 = vadd.f32 %v1133, %v1238
    %1257 = vrot.lane.b32.xlu0 %v978, 96
    %v1258 = vpop.permute.xlu0 %1257
    %1259 = vrot.lane.b32.xlu0 %v983, 96
    %v1260 = vpop.permute.xlu0 %1259
    %1261 = vrot.lane.b32.xlu0 %v988, 96
    %v1262 = vpop.permute.xlu0 %1261
    %1263 = vrot.lane.b32.xlu0 %v993, 96
    %v1264 = vpop.permute.xlu0 %1263
    %1265 = vrot.lane.b32.xlu0 %v998, 96
    %v1266 = vpop.permute.xlu0 %1265
    %1267 = vrot.lane.b32.xlu0 %v1003, 96
    %v1268 = vpop.permute.xlu0 %1267
    %1269 = vrot.lane.b32.xlu0 %v1008, 96
    %v1270 = vpop.permute.xlu0 %1269
    %1271 = vrot.lane.b32.xlu0 %v1013, 96
    %v1272 = vpop.permute.xlu0 %1271
    %1281 = vmatprep.subr.mxu0 0.0
    %1282 = vmatpush1.msra.mxu0 %v1258
    %1283 = vmatprep.subr.mxu0 0.0
    %1284 = vmatpush1.msra.mxu0 %v1260
    %1285 = vmatprep.subr.mxu0 0.0
    %1286 = vmatpush1.msra.mxu0 %v1262
    %1287 = vmatprep.subr.mxu0 0.0
    %1288 = vmatpush1.msra.mxu0 %v1264
    %1289 = vmatprep.subr.mxu0 0.0
    %1290 = vmatpush1.msra.mxu0 %v1266
    %1291 = vmatprep.subr.mxu0 0.0
    %1292 = vmatpush1.msra.mxu0 %v1268
    %1293 = vmatprep.subr.mxu0 0.0
    %1294 = vmatpush1.msra.mxu0 %v1270
    %1295 = vmatprep.subr.mxu0 0.0
    %1296 = vmatpush1.msra.mxu0 %v1272
    %1297 = vmatprep.subr.mxu0 0.0
    %1298 = vmatpush1.msra.mxu0 0.0
    %1299 = vmatprep.subr.mxu0 0.0
    %1300 = vmatpush1.msra.mxu0 0.0
    %1301 = vmatprep.subr.mxu0 0.0
    %1302 = vmatpush1.msra.mxu0 0.0
    %1303 = vmatprep.subr.mxu0 0.0
    %1304 = vmatpush1.msra.mxu0 0.0
    %1305 = vmatprep.subr.mxu0 0.0
    %1306 = vmatpush1.msra.mxu0 0.0
    %1307 = vmatprep.subr.mxu0 0.0
    %1308 = vmatpush1.msra.mxu0 0.0
    %1309 = vmatprep.subr.mxu0 0.0
    %1310 = vmatpush1.msra.mxu0 0.0
    %1311 = vmatprep.subr.mxu0 0.0
    %1312 = vmatpush1.msra.mxu0 0.0
    %1313 = vmatprep.subr.mxu0 0.0
    %1314 = vmatpush1.msra.mxu0 0.0
    %1315 = vmatprep.subr.mxu0 0.0
    %1316 = vmatpush1.msra.mxu0 0.0
    %1317 = vmatprep.subr.mxu0 0.0
    %1318 = vmatpush1.msra.mxu0 0.0
    %1319 = vmatprep.subr.mxu0 0.0
    %1320 = vmatpush1.msra.mxu0 0.0
    %1321 = vmatprep.subr.mxu0 0.0
    %1322 = vmatpush1.msra.mxu0 0.0
    %1323 = vmatprep.subr.mxu0 0.0
    %1324 = vmatpush1.msra.mxu0 0.0
    %1325 = vmatprep.subr.mxu0 0.0
    %1326 = vmatpush1.msra.mxu0 0.0
    %1327 = vmatprep.subr.mxu0 0.0
    %1328 = vmatpush1.msra.mxu0 0.0
    %1329 = vmatprep.subr.mxu0 0.0
    %1330 = vmatpush1.msra.mxu0 0.0
    %1331 = vmatprep.subr.mxu0 0.0
    %1332 = vmatpush1.msra.mxu0 0.0
    %1333 = vmatprep.subr.mxu0 0.0
    %1334 = vmatpush1.msra.mxu0 0.0
    %1335 = vmatprep.subr.mxu0 0.0
    %1336 = vmatpush1.msra.mxu0 0.0
    %1337 = vmatprep.subr.mxu0 0.0
    %1338 = vmatpush1.msra.mxu0 0.0
    %1339 = vmatprep.subr.mxu0 0.0
    %1340 = vmatpush1.msra.mxu0 0.0
    %1341 = vmatprep.subr.mxu0 0.0
    %1342 = vmatpush1.msra.mxu0 0.0
    %1343 = vmatprep.subr.mxu0 0.0
    %1344 = vmatpush1.msra.mxu0 0.0
    %1345 = vmatprep.mubr.f32.mxu0 0.0
    %1346 = vmatmul.mubr.f32.gmra.mrb[0].mxu0 %v589
    %v1347 = vpop.f32.mrb[0].mxu0
    %v1348 = vadd.f32 0.0, %v1347
    %v1349 = vpop.f32.mrb[0].mxu0
    %1350 = vmatprep.mubr.f32.mxu0 0.0
    %1351 = vmatmul.mubr.f32.gmra.mrb[0].mxu0 %v592
    %v1352 = vpop.f32.mrb[0].mxu0
    %v1353 = vadd.f32 0.0, %v1352
    %v1354 = vpop.f32.mrb[0].mxu0
    %1355 = vmatprep.mubr.f32.mxu0 0.0
    %1356 = vmatmul.mubr.f32.gmra.mrb[0].mxu0 %v595
    %v1357 = vpop.f32.mrb[0].mxu0
    %v1358 = vadd.f32 0.0, %v1357
    %v1359 = vpop.f32.mrb[0].mxu0
    %1360 = vmatprep.mubr.f32.mxu0 0.0
    %1361 = vmatmul.mubr.f32.gmra.mrb[0].mxu0 %v598
    %v1362 = vpop.f32.mrb[0].mxu0
    %v1363 = vadd.f32 0.0, %v1362
    %v1364 = vpop.f32.mrb[0].mxu0
    %1365 = vmatprep.mubr.f32.mxu0 0.0
    %1366 = vmatmul.mubr.f32.gmra.mrb[0].mxu0 %v601
    %v1367 = vpop.f32.mrb[0].mxu0
    %v1368 = vadd.f32 0.0, %v1367
    %v1369 = vpop.f32.mrb[0].mxu0
    %1370 = vmatprep.mubr.f32.mxu0 0.0
    %1371 = vmatmul.mubr.f32.gmra.mrb[0].mxu0 %v604
    %v1372 = vpop.f32.mrb[0].mxu0
    %v1373 = vadd.f32 0.0, %v1372
    %v1374 = vpop.f32.mrb[0].mxu0
    %1375 = vmatprep.mubr.f32.mxu0 0.0
    %1376 = vmatmul.mubr.f32.gmra.mrb[0].mxu0 %v607
    %v1377 = vpop.f32.mrb[0].mxu0
    %v1378 = vadd.f32 0.0, %v1377
    %v1379 = vpop.f32.mrb[0].mxu0
    %1380 = vmatprep.mubr.f32.mxu0 0.0
    %1381 = vmatmul.mubr.f32.gmra.mrb[0].mxu0 %v610
    %v1382 = vpop.f32.mrb[0].mxu0
    %v1383 = vadd.f32 0.0, %v1382
    %v1384 = vpop.f32.mrb[0].mxu0
    %1385 = vdwg.mxu0
    %v1386 = vadd.f32 %v1241, %v1348
    %v1387 = vadd.f32 %v1242, %v1353
    %v1388 = vadd.f32 %v1243, %v1358
    %v1389 = vadd.f32 %v1244, %v1363
    %v1390 = vadd.f32 %v1245, %v1368
    %v1391 = vadd.f32 %v1246, %v1373
    %v1392 = vadd.f32 %v1247, %v1378
    %v1393 = vadd.f32 %v1248, %v1383
    %1394 = vrot.lane.b32.xlu0 %v978, 64
    %v1395 = vpop.permute.xlu0 %1394
    %1396 = vrot.lane.b32.xlu0 %v983, 64
    %v1397 = vpop.permute.xlu0 %1396
    %1398 = vrot.lane.b32.xlu0 %v988, 64
    %v1399 = vpop.permute.xlu0 %1398
    %1400 = vrot.lane.b32.xlu0 %v993, 64
    %v1401 = vpop.permute.xlu0 %1400
    %1402 = vrot.lane.b32.xlu0 %v998, 64
    %v1403 = vpop.permute.xlu0 %1402
    %1404 = vrot.lane.b32.xlu0 %v1003, 64
    %v1405 = vpop.permute.xlu0 %1404
    %1406 = vrot.lane.b32.xlu0 %v1008, 64
    %v1407 = vpop.permute.xlu0 %1406
    %1408 = vrot.lane.b32.xlu0 %v1013, 64
    %v1409 = vpop.permute.xlu0 %1408
    %1418 = vmatprep.subr.mxu0 0.0
    %1419 = vmatpush1.msra.mxu0 %v1395
    %1420 = vmatprep.subr.mxu0 0.0
    %1421 = vmatpush1.msra.mxu0 %v1397
    %1422 = vmatprep.subr.mxu0 0.0
    %1423 = vmatpush1.msra.mxu0 %v1399
    %1424 = vmatprep.subr.mxu0 0.0
    %1425 = vmatpush1.msra.mxu0 %v1401
    %1426 = vmatprep.subr.mxu0 0.0
    %1427 = vmatpush1.msra.mxu0 %v1403
    %1428 = vmatprep.subr.mxu0 0.0
    %1429 = vmatpush1.msra.mxu0 %v1405
    %1430 = vmatprep.subr.mxu0 0.0
    %1431 = vmatpush1.msra.mxu0 %v1407
    %1432 = vmatprep.subr.mxu0 0.0
    %1433 = vmatpush1.msra.mxu0 %v1409
    %1434 = vmatprep.subr.mxu0 0.0
    %1435 = vmatpush1.msra.mxu0 0.0
    %1436 = vmatprep.subr.mxu0 0.0
    %1437 = vmatpush1.msra.mxu0 0.0
    %1438 = vmatprep.subr.mxu0 0.0
    %1439 = vmatpush1.msra.mxu0 0.0
    %1440 = vmatprep.subr.mxu0 0.0
    %1441 = vmatpush1.msra.mxu0 0.0
    %1442 = vmatprep.subr.mxu0 0.0
    %1443 = vmatpush1.msra.mxu0 0.0
    %1444 = vmatprep.subr.mxu0 0.0
    %1445 = vmatpush1.msra.mxu0 0.0
    %1446 = vmatprep.subr.mxu0 0.0
    %1447 = vmatpush1.msra.mxu0 0.0
    %1448 = vmatprep.subr.mxu0 0.0
    %1449 = vmatpush1.msra.mxu0 0.0
    %1450 = vmatprep.subr.mxu0 0.0
    %1451 = vmatpush1.msra.mxu0 0.0
    %1452 = vmatprep.subr.mxu0 0.0
    %1453 = vmatpush1.msra.mxu0 0.0
    %1454 = vmatprep.subr.mxu0 0.0
    %1455 = vmatpush1.msra.mxu0 0.0
    %1456 = vmatprep.subr.mxu0 0.0
    %1457 = vmatpush1.msra.mxu0 0.0
    %1458 = vmatprep.subr.mxu0 0.0
    %1459 = vmatpush1.msra.mxu0 0.0
    %1460 = vmatprep.subr.mxu0 0.0
    %1461 = vmatpush1.msra.mxu0 0.0
    %1462 = vmatprep.subr.mxu0 0.0
    %1463 = vmatpush1.msra.mxu0 0.0
    %1464 = vmatprep.subr.mxu0 0.0
    %1465 = vmatpush1.msra.mxu0 0.0
    %1466 = vmatprep.subr.mxu0 0.0
    %1467 = vmatpush1.msra.mxu0 0.0
    %1468 = vmatprep.subr.mxu0 0.0
    %1469 = vmatpush1.msra.mxu0 0.0
    %1470 = vmatprep.subr.mxu0 0.0
    %1471 = vmatpush1.msra.mxu0 0.0
    %1472 = vmatprep.subr.mxu0 0.0
    %1473 = vmatpush1.msra.mxu0 0.0
    %1474 = vmatprep.subr.mxu0 0.0
    %1475 = vmatpush1.msra.mxu0 0.0
    %1476 = vmatprep.subr.mxu0 0.0
    %1477 = vmatpush1.msra.mxu0 0.0
    %1478 = vmatprep.subr.mxu0 0.0
    %1479 = vmatpush1.msra.mxu0 0.0
    %1480 = vmatprep.subr.mxu0 0.0
    %1481 = vmatpush1.msra.mxu0 0.0
    %1482 = vmatprep.mubr.f32.mxu0 0.0
    %1483 = vmatmul.mubr.f32.gmra.mrb[0].mxu0 %v735
    %v1484 = vpop.f32.mrb[0].mxu0
    %v1485 = vadd.f32 0.0, %v1484
    %v1486 = vpop.f32.mrb[0].mxu0
    %1487 = vmatprep.mubr.f32.mxu0 0.0
    %1488 = vmatmul.mubr.f32.gmra.mrb[0].mxu0 %v738
    %v1489 = vpop.f32.mrb[0].mxu0
    %v1490 = vadd.f32 0.0, %v1489
    %v1491 = vpop.f32.mrb[0].mxu0
    %1492 = vmatprep.mubr.f32.mxu0 0.0
    %1493 = vmatmul.mubr.f32.gmra.mrb[0].mxu0 %v741
    %v1494 = vpop.f32.mrb[0].mxu0
    %v1495 = vadd.f32 0.0, %v1494
    %v1496 = vpop.f32.mrb[0].mxu0
    %1497 = vmatprep.mubr.f32.mxu0 0.0
    %1498 = vmatmul.mubr.f32.gmra.mrb[0].mxu0 %v744
    %v1499 = vpop.f32.mrb[0].mxu0
    %v1500 = vadd.f32 0.0, %v1499
    %v1501 = vpop.f32.mrb[0].mxu0
    %1502 = vmatprep.mubr.f32.mxu0 0.0
    %1503 = vmatmul.mubr.f32.gmra.mrb[0].mxu0 %v747
    %v1504 = vpop.f32.mrb[0].mxu0
    %v1505 = vadd.f32 0.0, %v1504
    %v1506 = vpop.f32.mrb[0].mxu0
    %1507 = vmatprep.mubr.f32.mxu0 0.0
    %1508 = vmatmul.mubr.f32.gmra.mrb[0].mxu0 %v750
    %v1509 = vpop.f32.mrb[0].mxu0
    %v1510 = vadd.f32 0.0, %v1509
    %v1511 = vpop.f32.mrb[0].mxu0
    %1512 = vmatprep.mubr.f32.mxu0 0.0
    %1513 = vmatmul.mubr.f32.gmra.mrb[0].mxu0 %v753
    %v1514 = vpop.f32.mrb[0].mxu0
    %v1515 = vadd.f32 0.0, %v1514
    %v1516 = vpop.f32.mrb[0].mxu0
    %1517 = vmatprep.mubr.f32.mxu0 0.0
    %1518 = vmatmul.mubr.f32.gmra.mrb[0].mxu0 %v756
    %v1519 = vpop.f32.mrb[0].mxu0
    %v1520 = vadd.f32 0.0, %v1519
    %v1521 = vpop.f32.mrb[0].mxu0
    %1522 = vdwg.mxu0
    %v1523 = vadd.f32 %v1386, %v1485
    %v1524 = vadd.f32 %v1387, %v1490
    %v1525 = vadd.f32 %v1388, %v1495
    %v1526 = vadd.f32 %v1389, %v1500
    %v1527 = vadd.f32 %v1390, %v1505
    %v1528 = vadd.f32 %v1391, %v1510
    %v1529 = vadd.f32 %v1392, %v1515
    %v1530 = vadd.f32 %v1393, %v1520
    %v1531 = vmax.f32 %v1523, 0.0
    %v1532 = vmax.f32 %v1524, 0.0
    %v1533 = vmax.f32 %v1525, 0.0
    %v1534 = vmax.f32 %v1526, 0.0
    %v1535 = vmax.f32 %v1527, 0.0
    %v1536 = vmax.f32 %v1528, 0.0
    %v1537 = vmax.f32 %v1529, 0.0
    %v1538 = vmax.f32 %v1530, 0.0
    %vm1539 = vcmask 15360
    %v1540 = vsel %vm1539, %v1531, -inf
    %1541 = vmax.xlane.f32.xlu0 %v1540
    %v1542 = vpop.xlane.xlu0 %1541
    %v1543 = vsel %vm1539, %v1532, -inf
    %1544 = vmax.xlane.f32.xlu0 %v1543
    %v1545 = vpop.xlane.xlu0 %1544
    %v1546 = vsel %vm1539, %v1533, -inf
    %1547 = vmax.xlane.f32.xlu0 %v1546
    %v1548 = vpop.xlane.xlu0 %1547
    %v1549 = vsel %vm1539, %v1534, -inf
    %1550 = vmax.xlane.f32.xlu0 %v1549
    %v1551 = vpop.xlane.xlu0 %1550
    %v1552 = vsel %vm1539, %v1535, -inf
    %1553 = vmax.xlane.f32.xlu0 %v1552
    %v1554 = vpop.xlane.xlu0 %1553
    %v1555 = vsel %vm1539, %v1536, -inf
    %1556 = vmax.xlane.f32.xlu0 %v1555
    %v1557 = vpop.xlane.xlu0 %1556
    %v1558 = vsel %vm1539, %v1537, -inf
    %1559 = vmax.xlane.f32.xlu0 %v1558
    %v1560 = vpop.xlane.xlu0 %1559
    %v1561 = vsel %vm1539, %v1538, -inf
    %1562 = vmax.xlane.f32.xlu0 %v1561
    %v1563 = vpop.xlane.xlu0 %1562
    %vm1564 = vcmask 31760
    %v1565 = vsel %vm1564, %v1531, -inf
    %1566 = vmax.xlane.f32.xlu0 %v1565
    %v1567 = vpop.xlane.xlu0 %1566
    %v1568 = vsel %vm1564, %v1532, -inf
    %1569 = vmax.xlane.f32.xlu0 %v1568
    %v1570 = vpop.xlane.xlu0 %1569
    %v1571 = vsel %vm1564, %v1533, -inf
    %1572 = vmax.xlane.f32.xlu0 %v1571
    %v1573 = vpop.xlane.xlu0 %1572
    %v1574 = vsel %vm1564, %v1534, -inf
    %1575 = vmax.xlane.f32.xlu0 %v1574
    %v1576 = vpop.xlane.xlu0 %1575
    %v1577 = vsel %vm1564, %v1535, -inf
    %1578 = vmax.xlane.f32.xlu0 %v1577
    %v1579 = vpop.xlane.xlu0 %1578
    %v1580 = vsel %vm1564, %v1536, -inf
    %1581 = vmax.xlane.f32.xlu0 %v1580
    %v1582 = vpop.xlane.xlu0 %1581
    %v1583 = vsel %vm1564, %v1537, -inf
    %1584 = vmax.xlane.f32.xlu0 %v1583
    %v1585 = vpop.xlane.xlu0 %1584
    %v1586 = vsel %vm1564, %v1538, -inf
    %1587 = vmax.xlane.f32.xlu0 %v1586
    %v1588 = vpop.xlane.xlu0 %1587
    %vm1589 = vcmask 48160
    %v1590 = vsel %vm1589, %v1531, -inf
    %1591 = vmax.xlane.f32.xlu0 %v1590
    %v1592 = vpop.xlane.xlu0 %1591
    %v1593 = vsel %vm1589, %v1532, -inf
    %1594 = vmax.xlane.f32.xlu0 %v1593
    %v1595 = vpop.xlane.xlu0 %1594
    %v1596 = vsel %vm1589, %v1533, -inf
    %1597 = vmax.xlane.f32.xlu0 %v1596
    %v1598 = vpop.xlane.xlu0 %1597
    %v1599 = vsel %vm1589, %v1534, -inf
    %1600 = vmax.xlane.f32.xlu0 %v1599
    %v1601 = vpop.xlane.xlu0 %1600
    %v1602 = vsel %vm1589, %v1535, -inf
    %1603 = vmax.xlane.f32.xlu0 %v1602
    %v1604 = vpop.xlane.xlu0 %1603
    %v1605 = vsel %vm1589, %v1536, -inf
    %1606 = vmax.xlane.f32.xlu0 %v1605
    %v1607 = vpop.xlane.xlu0 %1606
    %v1608 = vsel %vm1589, %v1537, -inf
    %1609 = vmax.xlane.f32.xlu0 %v1608
    %v1610 = vpop.xlane.xlu0 %1609
    %v1611 = vsel %vm1589, %v1538, -inf
    %1612 = vmax.xlane.f32.xlu0 %v1611
    %v1613 = vpop.xlane.xlu0 %1612
    %vm1614 = vcmask 64560
    %v1615 = vsel %vm1614, %v1531, -inf
    %1616 = vmax.xlane.f32.xlu0 %v1615
    %v1617 = vpop.xlane.xlu0 %1616
    %v1618 = vsel %vm1614, %v1532, -inf
    %1619 = vmax.xlane.f32.xlu0 %v1618
    %v1620 = vpop.xlane.xlu0 %1619
    %v1621 = vsel %vm1614, %v1533, -inf
    %1622 = vmax.xlane.f32.xlu0 %v1621
    %v1623 = vpop.xlane.xlu0 %1622
    %v1624 = vsel %vm1614, %v1534, -inf
    %1625 = vmax.xlane.f32.xlu0 %v1624
    %v1626 = vpop.xlane.xlu0 %1625
    %v1627 = vsel %vm1614, %v1535, -inf
    %1628 = vmax.xlane.f32.xlu0 %v1627
    %v1629 = vpop.xlane.xlu0 %1628
    %v1630 = vsel %vm1614, %v1536, -inf
    %1631 = vmax.xlane.f32.xlu0 %v1630
    %v1632 = vpop.xlane.xlu0 %1631
    %v1633 = vsel %vm1614, %v1537, -inf
    %1634 = vmax.xlane.f32.xlu0 %v1633
    %v1635 = vpop.xlane.xlu0 %1634
    %v1636 = vsel %vm1614, %v1538, -inf
    %1637 = vmax.xlane.f32.xlu0 %v1636
    %v1638 = vpop.xlane.xlu0 %1637
    %vm1639 = vcmask 80960
    %v1640 = vsel %vm1639, %v1531, -inf
    %1641 = vmax.xlane.f32.xlu0 %v1640
    %v1642 = vpop.xlane.xlu0 %1641
    %v1643 = vsel %vm1639, %v1532, -inf
    %1644 = vmax.xlane.f32.xlu0 %v1643
    %v1645 = vpop.xlane.xlu0 %1644
    %v1646 = vsel %vm1639, %v1533, -inf
    %1647 = vmax.xlane.f32.xlu0 %v1646
    %v1648 = vpop.xlane.xlu0 %1647
    %v1649 = vsel %vm1639, %v1534, -inf
    %1650 = vmax.xlane.f32.xlu0 %v1649
    %v1651 = vpop.xlane.xlu0 %1650
    %v1652 = vsel %vm1639, %v1535, -inf
    %1653 = vmax.xlane.f32.xlu0 %v1652
    %v1654 = vpop.xlane.xlu0 %1653
    %v1655 = vsel %vm1639, %v1536, -inf
    %1656 = vmax.xlane.f32.xlu0 %v1655
    %v1657 = vpop.xlane.xlu0 %1656
    %v1658 = vsel %vm1639, %v1537, -inf
    %1659 = vmax.xlane.f32.xlu0 %v1658
    %v1660 = vpop.xlane.xlu0 %1659
    %v1661 = vsel %vm1639, %v1538, -inf
    %1662 = vmax.xlane.f32.xlu0 %v1661
    %v1663 = vpop.xlane.xlu0 %1662
    %vm1664 = vcmask 97360
    %v1665 = vsel %vm1664, %v1531, -inf
    %1666 = vmax.xlane.f32.xlu0 %v1665
    %v1667 = vpop.xlane.xlu0 %1666
    %v1668 = vsel %vm1664, %v1532, -inf
    %1669 = vmax.xlane.f32.xlu0 %v1668
    %v1670 = vpop.xlane.xlu0 %1669
    %v1671 = vsel %vm1664, %v1533, -inf
    %1672 = vmax.xlane.f32.xlu0 %v1671
    %v1673 = vpop.xlane.xlu0 %1672
    %v1674 = vsel %vm1664, %v1534, -inf
    %1675 = vmax.xlane.f32.xlu0 %v1674
    %v1676 = vpop.xlane.xlu0 %1675
    %v1677 = vsel %vm1664, %v1535, -inf
    %1678 = vmax.xlane.f32.xlu0 %v1677
    %v1679 = vpop.xlane.xlu0 %1678
    %v1680 = vsel %vm1664, %v1536, -inf
    %1681 = vmax.xlane.f32.xlu0 %v1680
    %v1682 = vpop.xlane.xlu0 %1681
    %v1683 = vsel %vm1664, %v1537, -inf
    %1684 = vmax.xlane.f32.xlu0 %v1683
    %v1685 = vpop.xlane.xlu0 %1684
    %v1686 = vsel %vm1664, %v1538, -inf
    %1687 = vmax.xlane.f32.xlu0 %v1686
    %v1688 = vpop.xlane.xlu0 %1687
    %vm1689 = vcmask 113760
    %v1690 = vsel %vm1689, %v1531, -inf
    %1691 = vmax.xlane.f32.xlu0 %v1690
    %v1692 = vpop.xlane.xlu0 %1691
    %v1693 = vsel %vm1689, %v1532, -inf
    %1694 = vmax.xlane.f32.xlu0 %v1693
    %v1695 = vpop.xlane.xlu0 %1694
    %v1696 = vsel %vm1689, %v1533, -inf
    %1697 = vmax.xlane.f32.xlu0 %v1696
    %v1698 = vpop.xlane.xlu0 %1697
    %v1699 = vsel %vm1689, %v1534, -inf
    %1700 = vmax.xlane.f32.xlu0 %v1699
    %v1701 = vpop.xlane.xlu0 %1700
    %v1702 = vsel %vm1689, %v1535, -inf
    %1703 = vmax.xlane.f32.xlu0 %v1702
    %v1704 = vpop.xlane.xlu0 %1703
    %v1705 = vsel %vm1689, %v1536, -inf
    %1706 = vmax.xlane.f32.xlu0 %v1705
    %v1707 = vpop.xlane.xlu0 %1706
    %v1708 = vsel %vm1689, %v1537, -inf
    %1709 = vmax.xlane.f32.xlu0 %v1708
    %v1710 = vpop.xlane.xlu0 %1709
    %v1711 = vsel %vm1689, %v1538, -inf
    %1712 = vmax.xlane.f32.xlu0 %v1711
    %v1713 = vpop.xlane.xlu0 %1712
    %vm1714 = vcmask 130160
    %v1715 = vsel %vm1714, %v1531, -inf
    %1716 = vmax.xlane.f32.xlu0 %v1715
    %v1717 = vpop.xlane.xlu0 %1716
    %v1718 = vsel %vm1714, %v1532, -inf
    %1719 = vmax.xlane.f32.xlu0 %v1718
    %v1720 = vpop.xlane.xlu0 %1719
    %v1721 = vsel %vm1714, %v1533, -inf
    %1722 = vmax.xlane.f32.xlu0 %v1721
    %v1723 = vpop.xlane.xlu0 %1722
    %v1724 = vsel %vm1714, %v1534, -inf
    %1725 = vmax.xlane.f32.xlu0 %v1724
    %v1726 = vpop.xlane.xlu0 %1725
    %v1727 = vsel %vm1714, %v1535, -inf
    %1728 = vmax.xlane.f32.xlu0 %v1727
    %v1729 = vpop.xlane.xlu0 %1728
    %v1730 = vsel %vm1714, %v1536, -inf
    %1731 = vmax.xlane.f32.xlu0 %v1730
    %v1732 = vpop.xlane.xlu0 %1731
    %v1733 = vsel %vm1714, %v1537, -inf
    %1734 = vmax.xlane.f32.xlu0 %v1733
    %v1735 = vpop.xlane.xlu0 %1734
    %v1736 = vsel %vm1714, %v1538, -inf
    %1737 = vmax.xlane.f32.xlu0 %v1736
    %v1738 = vpop.xlane.xlu0 %1737
    %vm1739 = vcmask 146560
    %v1740 = vsel %vm1739, %v1531, -inf
    %1741 = vmax.xlane.f32.xlu0 %v1740
    %v1742 = vpop.xlane.xlu0 %1741
    %v1743 = vsel %vm1739, %v1532, -inf
    %1744 = vmax.xlane.f32.xlu0 %v1743
    %v1745 = vpop.xlane.xlu0 %1744
    %v1746 = vsel %vm1739, %v1533, -inf
    %1747 = vmax.xlane.f32.xlu0 %v1746
    %v1748 = vpop.xlane.xlu0 %1747
    %v1749 = vsel %vm1739, %v1534, -inf
    %1750 = vmax.xlane.f32.xlu0 %v1749
    %v1751 = vpop.xlane.xlu0 %1750
    %v1752 = vsel %vm1739, %v1535, -inf
    %1753 = vmax.xlane.f32.xlu0 %v1752
    %v1754 = vpop.xlane.xlu0 %1753
    %v1755 = vsel %vm1739, %v1536, -inf
    %1756 = vmax.xlane.f32.xlu0 %v1755
    %v1757 = vpop.xlane.xlu0 %1756
    %v1758 = vsel %vm1739, %v1537, -inf
    %1759 = vmax.xlane.f32.xlu0 %v1758
    %v1760 = vpop.xlane.xlu0 %1759
    %v1761 = vsel %vm1739, %v1538, -inf
    %1762 = vmax.xlane.f32.xlu0 %v1761
    %v1763 = vpop.xlane.xlu0 %1762
    %vm1764 = vcmask 162960
    %v1765 = vsel %vm1764, %v1531, -inf
    %1766 = vmax.xlane.f32.xlu0 %v1765
    %v1767 = vpop.xlane.xlu0 %1766
    %v1768 = vsel %vm1764, %v1532, -inf
    %1769 = vmax.xlane.f32.xlu0 %v1768
    %v1770 = vpop.xlane.xlu0 %1769
    %v1771 = vsel %vm1764, %v1533, -inf
    %1772 = vmax.xlane.f32.xlu0 %v1771
    %v1773 = vpop.xlane.xlu0 %1772
    %v1774 = vsel %vm1764, %v1534, -inf
    %1775 = vmax.xlane.f32.xlu0 %v1774
    %v1776 = vpop.xlane.xlu0 %1775
    %v1777 = vsel %vm1764, %v1535, -inf
    %1778 = vmax.xlane.f32.xlu0 %v1777
    %v1779 = vpop.xlane.xlu0 %1778
    %v1780 = vsel %vm1764, %v1536, -inf
    %1781 = vmax.xlane.f32.xlu0 %v1780
    %v1782 = vpop.xlane.xlu0 %1781
    %v1783 = vsel %vm1764, %v1537, -inf
    %1784 = vmax.xlane.f32.xlu0 %v1783
    %v1785 = vpop.xlane.xlu0 %1784
    %v1786 = vsel %vm1764, %v1538, -inf
    %1787 = vmax.xlane.f32.xlu0 %v1786
    %v1788 = vpop.xlane.xlu0 %1787
    %vm1789 = vcmask 179360
    %v1790 = vsel %vm1789, %v1531, -inf
    %1791 = vmax.xlane.f32.xlu0 %v1790
    %v1792 = vpop.xlane.xlu0 %1791
    %v1793 = vsel %vm1789, %v1532, -inf
    %1794 = vmax.xlane.f32.xlu0 %v1793
    %v1795 = vpop.xlane.xlu0 %1794
    %v1796 = vsel %vm1789, %v1533, -inf
    %1797 = vmax.xlane.f32.xlu0 %v1796
    %v1798 = vpop.xlane.xlu0 %1797
    %v1799 = vsel %vm1789, %v1534, -inf
    %1800 = vmax.xlane.f32.xlu0 %v1799
    %v1801 = vpop.xlane.xlu0 %1800
    %v1802 = vsel %vm1789, %v1535, -inf
    %1803 = vmax.xlane.f32.xlu0 %v1802
    %v1804 = vpop.xlane.xlu0 %1803
    %v1805 = vsel %vm1789, %v1536, -inf
    %1806 = vmax.xlane.f32.xlu0 %v1805
    %v1807 = vpop.xlane.xlu0 %1806
    %v1808 = vsel %vm1789, %v1537, -inf
    %1809 = vmax.xlane.f32.xlu0 %v1808
    %v1810 = vpop.xlane.xlu0 %1809
    %v1811 = vsel %vm1789, %v1538, -inf
    %1812 = vmax.xlane.f32.xlu0 %v1811
    %v1813 = vpop.xlane.xlu0 %1812
    %vm1814 = vcmask 195760
    %v1815 = vsel %vm1814, %v1531, -inf
    %1816 = vmax.xlane.f32.xlu0 %v1815
    %v1817 = vpop.xlane.xlu0 %1816
    %v1818 = vsel %vm1814, %v1532, -inf
    %1819 = vmax.xlane.f32.xlu0 %v1818
    %v1820 = vpop.xlane.xlu0 %1819
    %v1821 = vsel %vm1814, %v1533, -inf
    %1822 = vmax.xlane.f32.xlu0 %v1821
    %v1823 = vpop.xlane.xlu0 %1822
    %v1824 = vsel %vm1814, %v1534, -inf
    %1825 = vmax.xlane.f32.xlu0 %v1824
    %v1826 = vpop.xlane.xlu0 %1825
    %v1827 = vsel %vm1814, %v1535, -inf
    %1828 = vmax.xlane.f32.xlu0 %v1827
    %v1829 = vpop.xlane.xlu0 %1828
    %v1830 = vsel %vm1814, %v1536, -inf
    %1831 = vmax.xlane.f32.xlu0 %v1830
    %v1832 = vpop.xlane.xlu0 %1831
    %v1833 = vsel %vm1814, %v1537, -inf
    %1834 = vmax.xlane.f32.xlu0 %v1833
    %v1835 = vpop.xlane.xlu0 %1834
    %v1836 = vsel %vm1814, %v1538, -inf
    %1837 = vmax.xlane.f32.xlu0 %v1836
    %v1838 = vpop.xlane.xlu0 %1837
    %vm1839 = vcmask 212160
    %v1840 = vsel %vm1839, %v1531, -inf
    %1841 = vmax.xlane.f32.xlu0 %v1840
    %v1842 = vpop.xlane.xlu0 %1841
    %v1843 = vsel %vm1839, %v1532, -inf
    %1844 = vmax.xlane.f32.xlu0 %v1843
    %v1845 = vpop.xlane.xlu0 %1844
    %v1846 = vsel %vm1839, %v1533, -inf
    %1847 = vmax.xlane.f32.xlu0 %v1846
    %v1848 = vpop.xlane.xlu0 %1847
    %v1849 = vsel %vm1839, %v1534, -inf
    %1850 = vmax.xlane.f32.xlu0 %v1849
    %v1851 = vpop.xlane.xlu0 %1850
    %v1852 = vsel %vm1839, %v1535, -inf
    %1853 = vmax.xlane.f32.xlu0 %v1852
    %v1854 = vpop.xlane.xlu0 %1853
    %v1855 = vsel %vm1839, %v1536, -inf
    %1856 = vmax.xlane.f32.xlu0 %v1855
    %v1857 = vpop.xlane.xlu0 %1856
    %v1858 = vsel %vm1839, %v1537, -inf
    %1859 = vmax.xlane.f32.xlu0 %v1858
    %v1860 = vpop.xlane.xlu0 %1859
    %v1861 = vsel %vm1839, %v1538, -inf
    %1862 = vmax.xlane.f32.xlu0 %v1861
    %v1863 = vpop.xlane.xlu0 %1862
    %vm1864 = vcmask 228560
    %v1865 = vsel %vm1864, %v1531, -inf
    %1866 = vmax.xlane.f32.xlu0 %v1865
    %v1867 = vpop.xlane.xlu0 %1866
    %v1868 = vsel %vm1864, %v1532, -inf
    %1869 = vmax.xlane.f32.xlu0 %v1868
    %v1870 = vpop.xlane.xlu0 %1869
    %v1871 = vsel %vm1864, %v1533, -inf
    %1872 = vmax.xlane.f32.xlu0 %v1871
    %v1873 = vpop.xlane.xlu0 %1872
    %v1874 = vsel %vm1864, %v1534, -inf
    %1875 = vmax.xlane.f32.xlu0 %v1874
    %v1876 = vpop.xlane.xlu0 %1875
    %v1877 = vsel %vm1864, %v1535, -inf
    %1878 = vmax.xlane.f32.xlu0 %v1877
    %v1879 = vpop.xlane.xlu0 %1878
    %v1880 = vsel %vm1864, %v1536, -inf
    %1881 = vmax.xlane.f32.xlu0 %v1880
    %v1882 = vpop.xlane.xlu0 %1881
    %v1883 = vsel %vm1864, %v1537, -inf
    %1884 = vmax.xlane.f32.xlu0 %v1883
    %v1885 = vpop.xlane.xlu0 %1884
    %v1886 = vsel %vm1864, %v1538, -inf
    %1887 = vmax.xlane.f32.xlu0 %v1886
    %v1888 = vpop.xlane.xlu0 %1887
    %vm1889 = vcmask 244960
    %v1890 = vsel %vm1889, %v1531, -inf
    %1891 = vmax.xlane.f32.xlu0 %v1890
    %v1892 = vpop.xlane.xlu0 %1891
    %v1893 = vsel %vm1889, %v1532, -inf
    %1894 = vmax.xlane.f32.xlu0 %v1893
    %v1895 = vpop.xlane.xlu0 %1894
    %v1896 = vsel %vm1889, %v1533, -inf
    %1897 = vmax.xlane.f32.xlu0 %v1896
    %v1898 = vpop.xlane.xlu0 %1897
    %v1899 = vsel %vm1889, %v1534, -inf
    %1900 = vmax.xlane.f32.xlu0 %v1899
    %v1901 = vpop.xlane.xlu0 %1900
    %v1902 = vsel %vm1889, %v1535, -inf
    %1903 = vmax.xlane.f32.xlu0 %v1902
    %v1904 = vpop.xlane.xlu0 %1903
    %v1905 = vsel %vm1889, %v1536, -inf
    %1906 = vmax.xlane.f32.xlu0 %v1905
    %v1907 = vpop.xlane.xlu0 %1906
    %v1908 = vsel %vm1889, %v1537, -inf
    %1909 = vmax.xlane.f32.xlu0 %v1908
    %v1910 = vpop.xlane.xlu0 %1909
    %v1911 = vsel %vm1889, %v1538, -inf
    %1912 = vmax.xlane.f32.xlu0 %v1911
    %v1913 = vpop.xlane.xlu0 %1912
    %vm1914 = vcmask 261360
    %v1915 = vsel %vm1914, %v1531, -inf
    %1916 = vmax.xlane.f32.xlu0 %v1915
    %v1917 = vpop.xlane.xlu0 %1916
    %v1918 = vsel %vm1914, %v1532, -inf
    %1919 = vmax.xlane.f32.xlu0 %v1918
    %v1920 = vpop.xlane.xlu0 %1919
    %v1921 = vsel %vm1914, %v1533, -inf
    %1922 = vmax.xlane.f32.xlu0 %v1921
    %v1923 = vpop.xlane.xlu0 %1922
    %v1924 = vsel %vm1914, %v1534, -inf
    %1925 = vmax.xlane.f32.xlu0 %v1924
    %v1926 = vpop.xlane.xlu0 %1925
    %v1927 = vsel %vm1914, %v1535, -inf
    %1928 = vmax.xlane.f32.xlu0 %v1927
    %v1929 = vpop.xlane.xlu0 %1928
    %v1930 = vsel %vm1914, %v1536, -inf
    %1931 = vmax.xlane.f32.xlu0 %v1930
    %v1932 = vpop.xlane.xlu0 %1931
    %v1933 = vsel %vm1914, %v1537, -inf
    %1934 = vmax.xlane.f32.xlu0 %v1933
    %v1935 = vpop.xlane.xlu0 %1934
    %v1936 = vsel %vm1914, %v1538, -inf
    %1937 = vmax.xlane.f32.xlu0 %v1936
    %v1938 = vpop.xlane.xlu0 %1937
    %vm1939 = vcmask 7168
    %v1940 = vsel %vm1939, %v1542, %v1567
    %v1941 = vsel %vm1939, %v1545, %v1570
    %v1942 = vsel %vm1939, %v1548, %v1573
    %v1943 = vsel %vm1939, %v1551, %v1576
    %v1944 = vsel %vm1939, %v1554, %v1579
    %v1945 = vsel %vm1939, %v1557, %v1582
    %v1946 = vsel %vm1939, %v1560, %v1585
    %v1947 = vsel %vm1939, %v1563, %v1588
    %v1948 = vsel %vm1539, %v1940, %v1592
    %v1949 = vsel %vm1539, %v1941, %v1595
    %v1950 = vsel %vm1539, %v1942, %v1598
    %v1951 = vsel %vm1539, %v1943, %v1601
    %v1952 = vsel %vm1539, %v1944, %v1604
    %v1953 = vsel %vm1539, %v1945, %v1607
    %v1954 = vsel %vm1539, %v1946, %v1610
    %v1955 = vsel %vm1539, %v1947, %v1613
    %vm1956 = vcmask 23552
    %v1957 = vsel %vm1956, %v1948, %v1617
    %v1958 = vsel %vm1956, %v1949, %v1620
    %v1959 = vsel %vm1956, %v1950, %v1623
    %v1960 = vsel %vm1956, %v1951, %v1626
    %v1961 = vsel %vm1956, %v1952, %v1629
    %v1962 = vsel %vm1956, %v1953, %v1632
    %v1963 = vsel %vm1956, %v1954, %v1635
    %v1964 = vsel %vm1956, %v1955, %v1638
    %vm1965 = vcmask 31744
    %v1966 = vsel %vm1965, %v1957, %v1642
    %v1967 = vsel %vm1965, %v1958, %v1645
    %v1968 = vsel %vm1965, %v1959, %v1648
    %v1969 = vsel %vm1965, %v1960, %v1651
    %v1970 = vsel %vm1965, %v1961, %v1654
    %v1971 = vsel %vm1965, %v1962, %v1657
    %v1972 = vsel %vm1965, %v1963, %v1660
    %v1973 = vsel %vm1965, %v1964, %v1663
    %vm1974 = vcmask 39936
    %v1975 = vsel %vm1974, %v1966, %v1667
    %v1976 = vsel %vm1974, %v1967, %v1670
    %v1977 = vsel %vm1974, %v1968, %v1673
    %v1978 = vsel %vm1974, %v1969, %v1676
    %v1979 = vsel %vm1974, %v1970, %v1679
    %v1980 = vsel %vm1974, %v1971, %v1682
    %v1981 = vsel %vm1974, %v1972, %v1685
    %v1982 = vsel %vm1974, %v1973, %v1688
    %vm1983 = vcmask 48128
    %v1984 = vsel %vm1983, %v1975, %v1692
    %v1985 = vsel %vm1983, %v1976, %v1695
    %v1986 = vsel %vm1983, %v1977, %v1698
    %v1987 = vsel %vm1983, %v1978, %v1701
    %v1988 = vsel %vm1983, %v1979, %v1704
    %v1989 = vsel %vm1983, %v1980, %v1707
    %v1990 = vsel %vm1983, %v1981, %v1710
    %v1991 = vsel %vm1983, %v1982, %v1713
    %vm1992 = vcmask 56320
    %v1993 = vsel %vm1992, %v1984, %v1717
    %v1994 = vsel %vm1992, %v1985, %v1720
    %v1995 = vsel %vm1992, %v1986, %v1723
    %v1996 = vsel %vm1992, %v1987, %v1726
    %v1997 = vsel %vm1992, %v1988, %v1729
    %v1998 = vsel %vm1992, %v1989, %v1732
    %v1999 = vsel %vm1992, %v1990, %v1735
    %v2000 = vsel %vm1992, %v1991, %v1738
    %vm2001 = vcmask 64512
    %v2002 = vsel %vm2001, %v1993, %v1742
    %v2003 = vsel %vm2001, %v1994, %v1745
    %v2004 = vsel %vm2001, %v1995, %v1748
    %v2005 = vsel %vm2001, %v1996, %v1751
    %v2006 = vsel %vm2001, %v1997, %v1754
    %v2007 = vsel %vm2001, %v1998, %v1757
    %v2008 = vsel %vm2001, %v1999, %v1760
    %v2009 = vsel %vm2001, %v2000, %v1763
    %vm2010 = vcmask 72704
    %v2011 = vsel %vm2010, %v2002, %v1767
    %v2012 = vsel %vm2010, %v2003, %v1770
    %v2013 = vsel %vm2010, %v2004, %v1773
    %v2014 = vsel %vm2010, %v2005, %v1776
    %v2015 = vsel %vm2010, %v2006, %v1779
    %v2016 = vsel %vm2010, %v2007, %v1782
    %v2017 = vsel %vm2010, %v2008, %v1785
    %v2018 = vsel %vm2010, %v2009, %v1788
    %vm2019 = vcmask 80896
    %v2020 = vsel %vm2019, %v2011, %v1792
    %v2021 = vsel %vm2019, %v2012, %v1795
    %v2022 = vsel %vm2019, %v2013, %v1798
    %v2023 = vsel %vm2019, %v2014, %v1801
    %v2024 = vsel %vm2019, %v2015, %v1804
    %v2025 = vsel %vm2019, %v2016, %v1807
    %v2026 = vsel %vm2019, %v2017, %v1810
    %v2027 = vsel %vm2019, %v2018, %v1813
    %vm2028 = vcmask 89088
    %v2029 = vsel %vm2028, %v2020, %v1817
    %v2030 = vsel %vm2028, %v2021, %v1820
    %v2031 = vsel %vm2028, %v2022, %v1823
    %v2032 = vsel %vm2028, %v2023, %v1826
    %v2033 = vsel %vm2028, %v2024, %v1829
    %v2034 = vsel %vm2028, %v2025, %v1832
    %v2035 = vsel %vm2028, %v2026, %v1835
    %v2036 = vsel %vm2028, %v2027, %v1838
    %vm2037 = vcmask 97280
    %v2038 = vsel %vm2037, %v2029, %v1842
    %v2039 = vsel %vm2037, %v2030, %v1845
    %v2040 = vsel %vm2037, %v2031, %v1848
    %v2041 = vsel %vm2037, %v2032, %v1851
    %v2042 = vsel %vm2037, %v2033, %v1854
    %v2043 = vsel %vm2037, %v2034, %v1857
    %v2044 = vsel %vm2037, %v2035, %v1860
    %v2045 = vsel %vm2037, %v2036, %v1863
    %vm2046 = vcmask 105472
    %v2047 = vsel %vm2046, %v2038, %v1867
    %v2048 = vsel %vm2046, %v2039, %v1870
    %v2049 = vsel %vm2046, %v2040, %v1873
    %v2050 = vsel %vm2046, %v2041, %v1876
    %v2051 = vsel %vm2046, %v2042, %v1879
    %v2052 = vsel %vm2046, %v2043, %v1882
    %v2053 = vsel %vm2046, %v2044, %v1885
    %v2054 = vsel %vm2046, %v2045, %v1888
    %vm2055 = vcmask 113664
    %v2056 = vsel %vm2055, %v2047, %v1892
    %v2057 = vsel %vm2055, %v2048, %v1895
    %v2058 = vsel %vm2055, %v2049, %v1898
    %v2059 = vsel %vm2055, %v2050, %v1901
    %v2060 = vsel %vm2055, %v2051, %v1904
    %v2061 = vsel %vm2055, %v2052, %v1907
    %v2062 = vsel %vm2055, %v2053, %v1910
    %v2063 = vsel %vm2055, %v2054, %v1913
    %vm2064 = vcmask 121856
    %v2065 = vsel %vm2064, %v2056, %v1917
    %v2066 = vsel %vm2064, %v2057, %v1920
    %v2067 = vsel %vm2064, %v2058, %v1923
    %v2068 = vsel %vm2064, %v2059, %v1926
    %v2069 = vsel %vm2064, %v2060, %v1929
    %v2070 = vsel %vm2064, %v2061, %v1932
    %v2071 = vsel %vm2064, %v2062, %v1935
    %v2072 = vsel %vm2064, %v2063, %v1938
    %vm2073 = vcmask 130048
    %2074 = vst.msk [vmem:[%s8] sm:$0xff] %vm2073, %v2065
    %2075 = vst.msk [vmem:[%s8 + $0x8] sm:$0xff] %vm2073, %v2066
    %2076 = vst.msk [vmem:[%s8 + $0x10] sm:$0xff] %vm2073, %v2067
    %2077 = vst.msk [vmem:[%s8 + $0x18] sm:$0xff] %vm2073, %v2068
    %2078 = vst.msk [vmem:[%s8 + $0x20] sm:$0xff] %vm2073, %v2069
    %2079 = vst.msk [vmem:[%s8 + $0x28] sm:$0xff] %vm2073, %v2070
    %2080 = vst.msk [vmem:[%s8 + $0x30] sm:$0xff] %vm2073, %v2071
    %2081 = vst.msk [vmem:[%s8 + $0x38] sm:$0xff] %vm2073, %v2072
    // Predicated region
    $region62: #{model_forward.3} parent=1 // pred_check
      _
    $region63: #{model_forward.3} parent=1 // pred_check_branch
      %2083 = sbr.rel (0) target = $region65
    $region64: #{model_forward.3} parent=1 // pred_region
      _
    $region65: #{model_forward.3} parent=1 // pred_fallthru
      _
    // Predicated region
    $region66: #{model_forward.3} parent=1 // pred_check
      _
    $region67: #{model_forward.3} parent=1 // pred_check_branch
      %2085 = sbr.rel (0) target = $region69
    $region68: #{model_forward.3} parent=1 // pred_region
      _
    $region69: #{model_forward.3} parent=1 // pred_fallthru
      _
    %2086 = vsyncpa [#allocation3], 1
    %2087 = vsyncpa [#allocation5], 1
    %2088 = vsyncpa [#allocation8], 1
    %2089 = vsyncpa [#allocation11], 1

// kernel: model_forward.5
$region0: #{model_forward.5}
  #allocation0 [shape = 'u32[]', space=smem, size = 0x4, offset = 0x4, fixed_abs, tag = 'smem constant byte address 0x4 - core index']
  #allocation1 [shape = 'u32[144,128]{1,0:T(1,128)}', space=vmem, size = 0x12000, scoped, tag = 'internal scratch']
  %s0 = inlined_call_operand.vmem [shape: f32[1,1024], index: 0, kind: input, shape index: {}]
  %s1 = inlined_call_operand.vmem [shape: f32[1024,10], index: 1, kind: input, shape index: {}]
  %s2 = inlined_call_operand.vmem [shape: f32[1,10], index: 2, kind: input, shape index: {}]
  %s3 = inlined_call_operand.hbm [shape: f32[1,10], index: 3, kind: output, shape index: {}]
  %s4 = sld [smem:[#allocation0]]
  $region22: #{model_forward.5} parent=0
    _
  %s6 = ssub.s32 1, %s4
  %s7 = scalar_select 0, %s6, %s4
  $region1: #{model_forward.5} parent=0
    #allocation2 [shape = 'u8[512]{0}', space=vmem, size = 0x400, scoped, tag = 'output window, operand 0, single buffered']
    #allocation3 [shape = 's32[1]{0}', space=sflag, size = 0x4, scoped, tag = 'scoped memory for model_forward.5']
    %8 = vsyncpa [#allocation3], 0
    // Predicated region
    $region2: #{model_forward.5} parent=1 // pred_check
      _
    $region3: #{model_forward.5} parent=1 // pred_check_branch
      %10 = sbr.rel (0) target = $region5
    $region4: #{model_forward.5} parent=1 // pred_region
      _
    $region5: #{model_forward.5} parent=1 // pred_fallthru
      _
    // Predicated region
    $region6: #{model_forward.5} parent=1 // pred_check
      _
    $region7: #{model_forward.5} parent=1 // pred_check_branch
      %12 = sbr.rel (0) target = $region9
    $region8: #{model_forward.5} parent=1 // pred_region
      _
    $region9: #{model_forward.5} parent=1 // pred_fallthru
      _
    // Predicated region
    $region10: #{model_forward.5} parent=1 // pred_check
      _
    $region11: #{model_forward.5} parent=1 // pred_check_branch
      %14 = sbr.rel (0) target = $region13
    $region12: #{model_forward.5} parent=1 // pred_region
      _
    $region13: #{model_forward.5} parent=1 // pred_fallthru
      _
    %v15 = vld [vmem:[%s0] sm:$0xff]
    %v16 = vld [vmem:[%s1] sm:$0xff]
    %v17 = vld [vmem:[%s1 + $0x8] sm:$0xff]
    %v18 = vld [vmem:[%s1 + $0x10] sm:$0xff]
    %v19 = vld [vmem:[%s1 + $0x18] sm:$0xff]
    %v20 = vld [vmem:[%s1 + $0x20] sm:$0xff]
    %v21 = vld [vmem:[%s1 + $0x28] sm:$0xff]
    %v22 = vld [vmem:[%s1 + $0x30] sm:$0xff]
    %v23 = vld [vmem:[%s1 + $0x38] sm:$0xff]
    %v24 = vld [vmem:[%s1 + $0x40] sm:$0xff]
    %v25 = vld [vmem:[%s1 + $0x48] sm:$0xff]
    %v26 = vld [vmem:[%s1 + $0x50] sm:$0xff]
    %v27 = vld [vmem:[%s1 + $0x58] sm:$0xff]
    %v28 = vld [vmem:[%s1 + $0x60] sm:$0xff]
    %v29 = vld [vmem:[%s1 + $0x68] sm:$0xff]
    %v30 = vld [vmem:[%s1 + $0x70] sm:$0xff]
    %v31 = vld [vmem:[%s1 + $0x78] sm:$0xff]
    %v32 = vld [vmem:[%s1 + $0x80] sm:$0xff]
    %v33 = vld [vmem:[%s1 + $0x88] sm:$0xff]
    %v34 = vld [vmem:[%s1 + $0x90] sm:$0xff]
    %v35 = vld [vmem:[%s1 + $0x98] sm:$0xff]
    %v36 = vld [vmem:[%s1 + $0xa0] sm:$0xff]
    %v37 = vld [vmem:[%s1 + $0xa8] sm:$0xff]
    %v38 = vld [vmem:[%s1 + $0xb0] sm:$0xff]
    %v39 = vld [vmem:[%s1 + $0xb8] sm:$0xff]
    %v40 = vld [vmem:[%s1 + $0xc0] sm:$0xff]
    %v41 = vld [vmem:[%s1 + $0xc8] sm:$0xff]
    %v42 = vld [vmem:[%s1 + $0xd0] sm:$0xff]
    %v43 = vld [vmem:[%s1 + $0xd8] sm:$0xff]
    %v44 = vld [vmem:[%s1 + $0xe0] sm:$0xff]
    %v45 = vld [vmem:[%s1 + $0xe8] sm:$0xff]
    %v46 = vld [vmem:[%s1 + $0xf0] sm:$0xff]
    %v47 = vld [vmem:[%s1 + $0xf8] sm:$0xff]
    %v48 = vld [vmem:[%s1 + $0x100] sm:$0xff]
    %v49 = vld [vmem:[%s1 + $0x108] sm:$0xff]
    %v50 = vld [vmem:[%s1 + $0x110] sm:$0xff]
    %v51 = vld [vmem:[%s1 + $0x118] sm:$0xff]
    %v52 = vld [vmem:[%s1 + $0x120] sm:$0xff]
    %v53 = vld [vmem:[%s1 + $0x128] sm:$0xff]
    %v54 = vld [vmem:[%s1 + $0x130] sm:$0xff]
    %v55 = vld [vmem:[%s1 + $0x138] sm:$0xff]
    %v56 = vld [vmem:[%s1 + $0x140] sm:$0xff]
    %v57 = vld [vmem:[%s1 + $0x148] sm:$0xff]
    %v58 = vld [vmem:[%s1 + $0x150] sm:$0xff]
    %v59 = vld [vmem:[%s1 + $0x158] sm:$0xff]
    %v60 = vld [vmem:[%s1 + $0x160] sm:$0xff]
    %v61 = vld [vmem:[%s1 + $0x168] sm:$0xff]
    %v62 = vld [vmem:[%s1 + $0x170] sm:$0xff]
    %v63 = vld [vmem:[%s1 + $0x178] sm:$0xff]
    %v64 = vld [vmem:[%s1 + $0x180] sm:$0xff]
    %v65 = vld [vmem:[%s1 + $0x188] sm:$0xff]
    %v66 = vld [vmem:[%s1 + $0x190] sm:$0xff]
    %v67 = vld [vmem:[%s1 + $0x198] sm:$0xff]
    %v68 = vld [vmem:[%s1 + $0x1a0] sm:$0xff]
    %v69 = vld [vmem:[%s1 + $0x1a8] sm:$0xff]
    %v70 = vld [vmem:[%s1 + $0x1b0] sm:$0xff]
    %v71 = vld [vmem:[%s1 + $0x1b8] sm:$0xff]
    %v72 = vld [vmem:[%s1 + $0x1c0] sm:$0xff]
    %v73 = vld [vmem:[%s1 + $0x1c8] sm:$0xff]
    %v74 = vld [vmem:[%s1 + $0x1d0] sm:$0xff]
    %v75 = vld [vmem:[%s1 + $0x1d8] sm:$0xff]
    %v76 = vld [vmem:[%s1 + $0x1e0] sm:$0xff]
    %v77 = vld [vmem:[%s1 + $0x1e8] sm:$0xff]
    %v78 = vld [vmem:[%s1 + $0x1f0] sm:$0xff]
    %v79 = vld [vmem:[%s1 + $0x1f8] sm:$0xff]
    %v80 = vld [vmem:[%s1 + $0x200] sm:$0xff]
    %v81 = vld [vmem:[%s1 + $0x208] sm:$0xff]
    %v82 = vld [vmem:[%s1 + $0x210] sm:$0xff]
    %v83 = vld [vmem:[%s1 + $0x218] sm:$0xff]
    %v84 = vld [vmem:[%s1 + $0x220] sm:$0xff]
    %v85 = vld [vmem:[%s1 + $0x228] sm:$0xff]
    %v86 = vld [vmem:[%s1 + $0x230] sm:$0xff]
    %v87 = vld [vmem:[%s1 + $0x238] sm:$0xff]
    %v88 = vld [vmem:[%s1 + $0x240] sm:$0xff]
    %v89 = vld [vmem:[%s1 + $0x248] sm:$0xff]
    %v90 = vld [vmem:[%s1 + $0x250] sm:$0xff]
    %v91 = vld [vmem:[%s1 + $0x258] sm:$0xff]
    %v92 = vld [vmem:[%s1 + $0x260] sm:$0xff]
    %v93 = vld [vmem:[%s1 + $0x268] sm:$0xff]
    %v94 = vld [vmem:[%s1 + $0x270] sm:$0xff]
    %v95 = vld [vmem:[%s1 + $0x278] sm:$0xff]
    %v96 = vld [vmem:[%s1 + $0x280] sm:$0xff]
    %v97 = vld [vmem:[%s1 + $0x288] sm:$0xff]
    %v98 = vld [vmem:[%s1 + $0x290] sm:$0xff]
    %v99 = vld [vmem:[%s1 + $0x298] sm:$0xff]
    %v100 = vld [vmem:[%s1 + $0x2a0] sm:$0xff]
    %v101 = vld [vmem:[%s1 + $0x2a8] sm:$0xff]
    %v102 = vld [vmem:[%s1 + $0x2b0] sm:$0xff]
    %v103 = vld [vmem:[%s1 + $0x2b8] sm:$0xff]
    %v104 = vld [vmem:[%s1 + $0x2c0] sm:$0xff]
    %v105 = vld [vmem:[%s1 + $0x2c8] sm:$0xff]
    %v106 = vld [vmem:[%s1 + $0x2d0] sm:$0xff]
    %v107 = vld [vmem:[%s1 + $0x2d8] sm:$0xff]
    %v108 = vld [vmem:[%s1 + $0x2e0] sm:$0xff]
    %v109 = vld [vmem:[%s1 + $0x2e8] sm:$0xff]
    %v110 = vld [vmem:[%s1 + $0x2f0] sm:$0xff]
    %v111 = vld [vmem:[%s1 + $0x2f8] sm:$0xff]
    %v112 = vld [vmem:[%s1 + $0x300] sm:$0xff]
    %v113 = vld [vmem:[%s1 + $0x308] sm:$0xff]
    %v114 = vld [vmem:[%s1 + $0x310] sm:$0xff]
    %v115 = vld [vmem:[%s1 + $0x318] sm:$0xff]
    %v116 = vld [vmem:[%s1 + $0x320] sm:$0xff]
    %v117 = vld [vmem:[%s1 + $0x328] sm:$0xff]
    %v118 = vld [vmem:[%s1 + $0x330] sm:$0xff]
    %v119 = vld [vmem:[%s1 + $0x338] sm:$0xff]
    %v120 = vld [vmem:[%s1 + $0x340] sm:$0xff]
    %v121 = vld [vmem:[%s1 + $0x348] sm:$0xff]
    %v122 = vld [vmem:[%s1 + $0x350] sm:$0xff]
    %v123 = vld [vmem:[%s1 + $0x358] sm:$0xff]
    %v124 = vld [vmem:[%s1 + $0x360] sm:$0xff]
    %v125 = vld [vmem:[%s1 + $0x368] sm:$0xff]
    %v126 = vld [vmem:[%s1 + $0x370] sm:$0xff]
    %v127 = vld [vmem:[%s1 + $0x378] sm:$0xff]
    %v128 = vld [vmem:[%s1 + $0x380] sm:$0xff]
    %v129 = vld [vmem:[%s1 + $0x388] sm:$0xff]
    %v130 = vld [vmem:[%s1 + $0x390] sm:$0xff]
    %v131 = vld [vmem:[%s1 + $0x398] sm:$0xff]
    %v132 = vld [vmem:[%s1 + $0x3a0] sm:$0xff]
    %v133 = vld [vmem:[%s1 + $0x3a8] sm:$0xff]
    %v134 = vld [vmem:[%s1 + $0x3b0] sm:$0xff]
    %v135 = vld [vmem:[%s1 + $0x3b8] sm:$0xff]
    %v136 = vld [vmem:[%s1 + $0x3c0] sm:$0xff]
    %v137 = vld [vmem:[%s1 + $0x3c8] sm:$0xff]
    %v138 = vld [vmem:[%s1 + $0x3d0] sm:$0xff]
    %v139 = vld [vmem:[%s1 + $0x3d8] sm:$0xff]
    %v140 = vld [vmem:[%s1 + $0x3e0] sm:$0xff]
    %v141 = vld [vmem:[%s1 + $0x3e8] sm:$0xff]
    %v142 = vld [vmem:[%s1 + $0x3f0] sm:$0xff]
    %v143 = vld [vmem:[%s1 + $0x3f8] sm:$0xff]
    %v144 = vld [vmem:[%s2] sm:$0x1]
    %v146 = vlaneseq
    %v147 = vshrl.u32 %v146, 7
    %v148 = vsub.s32 0, %v147
    %v149 = vrot.slane %v15, %v148
    %v150 = vlaneseq
    %v151 = vshrl.u32 %v150, 7
    %v152 = vsub.s32 1, %v151
    %v153 = vrot.slane %v15, %v152
    %v154 = vlaneseq
    %v155 = vshrl.u32 %v154, 7
    %v156 = vsub.s32 2, %v155
    %v157 = vrot.slane %v15, %v156
    %v158 = vlaneseq
    %v159 = vshrl.u32 %v158, 7
    %v160 = vsub.s32 3, %v159
    %v161 = vrot.slane %v15, %v160
    %v162 = vlaneseq
    %v163 = vshrl.u32 %v162, 7
    %v164 = vsub.s32 4, %v163
    %v165 = vrot.slane %v15, %v164
    %v166 = vlaneseq
    %v167 = vshrl.u32 %v166, 7
    %v168 = vsub.s32 5, %v167
    %v169 = vrot.slane %v15, %v168
    %v170 = vlaneseq
    %v171 = vshrl.u32 %v170, 7
    %v172 = vsub.s32 6, %v171
    %v173 = vrot.slane %v15, %v172
    %v174 = vlaneseq
    %v175 = vshrl.u32 %v174, 7
    %v176 = vsub.s32 7, %v175
    %v177 = vrot.slane %v15, %v176
    %186 = vmatprep.subr.mxu0 0.0
    %187 = vmatpush1.msra.mxu0 %v16
    %188 = vmatprep.subr.mxu0 0.0
    %189 = vmatpush1.msra.mxu0 %v17
    %190 = vmatprep.subr.mxu0 0.0
    %191 = vmatpush1.msra.mxu0 %v18
    %192 = vmatprep.subr.mxu0 0.0
    %193 = vmatpush1.msra.mxu0 %v19
    %194 = vmatprep.subr.mxu0 0.0
    %195 = vmatpush1.msra.mxu0 %v20
    %196 = vmatprep.subr.mxu0 0.0
    %197 = vmatpush1.msra.mxu0 %v21
    %198 = vmatprep.subr.mxu0 0.0
    %199 = vmatpush1.msra.mxu0 %v22
    %200 = vmatprep.subr.mxu0 0.0
    %201 = vmatpush1.msra.mxu0 %v23
    %202 = vmatprep.subr.mxu0 0.0
    %203 = vmatpush1.msra.mxu0 %v24
    %204 = vmatprep.subr.mxu0 0.0
    %205 = vmatpush1.msra.mxu0 %v25
    %206 = vmatprep.subr.mxu0 0.0
    %207 = vmatpush1.msra.mxu0 %v26
    %208 = vmatprep.subr.mxu0 0.0
    %209 = vmatpush1.msra.mxu0 %v27
    %210 = vmatprep.subr.mxu0 0.0
    %211 = vmatpush1.msra.mxu0 %v28
    %212 = vmatprep.subr.mxu0 0.0
    %213 = vmatpush1.msra.mxu0 %v29
    %214 = vmatprep.subr.mxu0 0.0
    %215 = vmatpush1.msra.mxu0 %v30
    %216 = vmatprep.subr.mxu0 0.0
    %217 = vmatpush1.msra.mxu0 %v31
    %218 = vmatprep.subr.mxu0 0.0
    %219 = vmatpush1.msra.mxu0 %v32
    %220 = vmatprep.subr.mxu0 0.0
    %221 = vmatpush1.msra.mxu0 %v33
    %222 = vmatprep.subr.mxu0 0.0
    %223 = vmatpush1.msra.mxu0 %v34
    %224 = vmatprep.subr.mxu0 0.0
    %225 = vmatpush1.msra.mxu0 %v35
    %226 = vmatprep.subr.mxu0 0.0
    %227 = vmatpush1.msra.mxu0 %v36
    %228 = vmatprep.subr.mxu0 0.0
    %229 = vmatpush1.msra.mxu0 %v37
    %230 = vmatprep.subr.mxu0 0.0
    %231 = vmatpush1.msra.mxu0 %v38
    %232 = vmatprep.subr.mxu0 0.0
    %233 = vmatpush1.msra.mxu0 %v39
    %234 = vmatprep.subr.mxu0 0.0
    %235 = vmatpush1.msra.mxu0 %v40
    %236 = vmatprep.subr.mxu0 0.0
    %237 = vmatpush1.msra.mxu0 %v41
    %238 = vmatprep.subr.mxu0 0.0
    %239 = vmatpush1.msra.mxu0 %v42
    %240 = vmatprep.subr.mxu0 0.0
    %241 = vmatpush1.msra.mxu0 %v43
    %242 = vmatprep.subr.mxu0 0.0
    %243 = vmatpush1.msra.mxu0 %v44
    %244 = vmatprep.subr.mxu0 0.0
    %245 = vmatpush1.msra.mxu0 %v45
    %246 = vmatprep.subr.mxu0 0.0
    %247 = vmatpush1.msra.mxu0 %v46
    %248 = vmatprep.subr.mxu0 0.0
    %249 = vmatpush1.msra.mxu0 %v47
    %250 = vmatprep.mubr.f32.mxu0 %v153
    %251 = vmatmul.mubr.f32.gmra.mrb[0].mxu0 %v149
    %v252 = vpop.f32.mrb[0].mxu0
    %v253 = vadd.f32 %v144, %v252
    %v254 = vpop.f32.mrb[0].mxu0
    %255 = vdwg.mxu0
    %256 = vmatprep.subr.mxu0 0.0
    %257 = vmatpush1.msra.mxu0 %v48
    %258 = vmatprep.subr.mxu0 0.0
    %259 = vmatpush1.msra.mxu0 %v49
    %260 = vmatprep.subr.mxu0 0.0
    %261 = vmatpush1.msra.mxu0 %v50
    %262 = vmatprep.subr.mxu0 0.0
    %263 = vmatpush1.msra.mxu0 %v51
    %264 = vmatprep.subr.mxu0 0.0
    %265 = vmatpush1.msra.mxu0 %v52
    %266 = vmatprep.subr.mxu0 0.0
    %267 = vmatpush1.msra.mxu0 %v53
    %268 = vmatprep.subr.mxu0 0.0
    %269 = vmatpush1.msra.mxu0 %v54
    %270 = vmatprep.subr.mxu0 0.0
    %271 = vmatpush1.msra.mxu0 %v55
    %272 = vmatprep.subr.mxu0 0.0
    %273 = vmatpush1.msra.mxu0 %v56
    %274 = vmatprep.subr.mxu0 0.0
    %275 = vmatpush1.msra.mxu0 %v57
    %276 = vmatprep.subr.mxu0 0.0
    %277 = vmatpush1.msra.mxu0 %v58
    %278 = vmatprep.subr.mxu0 0.0
    %279 = vmatpush1.msra.mxu0 %v59
    %280 = vmatprep.subr.mxu0 0.0
    %281 = vmatpush1.msra.mxu0 %v60
    %282 = vmatprep.subr.mxu0 0.0
    %283 = vmatpush1.msra.mxu0 %v61
    %284 = vmatprep.subr.mxu0 0.0
    %285 = vmatpush1.msra.mxu0 %v62
    %286 = vmatprep.subr.mxu0 0.0
    %287 = vmatpush1.msra.mxu0 %v63
    %288 = vmatprep.subr.mxu0 0.0
    %289 = vmatpush1.msra.mxu0 %v64
    %290 = vmatprep.subr.mxu0 0.0
    %291 = vmatpush1.msra.mxu0 %v65
    %292 = vmatprep.subr.mxu0 0.0
    %293 = vmatpush1.msra.mxu0 %v66
    %294 = vmatprep.subr.mxu0 0.0
    %295 = vmatpush1.msra.mxu0 %v67
    %296 = vmatprep.subr.mxu0 0.0
    %297 = vmatpush1.msra.mxu0 %v68
    %298 = vmatprep.subr.mxu0 0.0
    %299 = vmatpush1.msra.mxu0 %v69
    %300 = vmatprep.subr.mxu0 0.0
    %301 = vmatpush1.msra.mxu0 %v70
    %302 = vmatprep.subr.mxu0 0.0
    %303 = vmatpush1.msra.mxu0 %v71
    %304 = vmatprep.subr.mxu0 0.0
    %305 = vmatpush1.msra.mxu0 %v72
    %306 = vmatprep.subr.mxu0 0.0
    %307 = vmatpush1.msra.mxu0 %v73
    %308 = vmatprep.subr.mxu0 0.0
    %309 = vmatpush1.msra.mxu0 %v74
    %310 = vmatprep.subr.mxu0 0.0
    %311 = vmatpush1.msra.mxu0 %v75
    %312 = vmatprep.subr.mxu0 0.0
    %313 = vmatpush1.msra.mxu0 %v76
    %314 = vmatprep.subr.mxu0 0.0
    %315 = vmatpush1.msra.mxu0 %v77
    %316 = vmatprep.subr.mxu0 0.0
    %317 = vmatpush1.msra.mxu0 %v78
    %318 = vmatprep.subr.mxu0 0.0
    %319 = vmatpush1.msra.mxu0 %v79
    %320 = vmatprep.mubr.f32.mxu0 %v161
    %321 = vmatmul.mubr.f32.gmra.mrb[0].mxu0 %v157
    %v322 = vpop.f32.mrb[0].mxu0
    %v323 = vadd.f32 %v253, %v322
    %v324 = vpop.f32.mrb[0].mxu0
    %325 = vdwg.mxu0
    %326 = vmatprep.subr.mxu0 0.0
    %327 = vmatpush1.msra.mxu0 %v80
    %328 = vmatprep.subr.mxu0 0.0
    %329 = vmatpush1.msra.mxu0 %v81
    %330 = vmatprep.subr.mxu0 0.0
    %331 = vmatpush1.msra.mxu0 %v82
    %332 = vmatprep.subr.mxu0 0.0
    %333 = vmatpush1.msra.mxu0 %v83
    %334 = vmatprep.subr.mxu0 0.0
    %335 = vmatpush1.msra.mxu0 %v84
    %336 = vmatprep.subr.mxu0 0.0
    %337 = vmatpush1.msra.mxu0 %v85
    %338 = vmatprep.subr.mxu0 0.0
    %339 = vmatpush1.msra.mxu0 %v86
    %340 = vmatprep.subr.mxu0 0.0
    %341 = vmatpush1.msra.mxu0 %v87
    %342 = vmatprep.subr.mxu0 0.0
    %343 = vmatpush1.msra.mxu0 %v88
    %344 = vmatprep.subr.mxu0 0.0
    %345 = vmatpush1.msra.mxu0 %v89
    %346 = vmatprep.subr.mxu0 0.0
    %347 = vmatpush1.msra.mxu0 %v90
    %348 = vmatprep.subr.mxu0 0.0
    %349 = vmatpush1.msra.mxu0 %v91
    %350 = vmatprep.subr.mxu0 0.0
    %351 = vmatpush1.msra.mxu0 %v92
    %352 = vmatprep.subr.mxu0 0.0
    %353 = vmatpush1.msra.mxu0 %v93
    %354 = vmatprep.subr.mxu0 0.0
    %355 = vmatpush1.msra.mxu0 %v94
    %356 = vmatprep.subr.mxu0 0.0
    %357 = vmatpush1.msra.mxu0 %v95
    %358 = vmatprep.subr.mxu0 0.0
    %359 = vmatpush1.msra.mxu0 %v96
    %360 = vmatprep.subr.mxu0 0.0
    %361 = vmatpush1.msra.mxu0 %v97
    %362 = vmatprep.subr.mxu0 0.0
    %363 = vmatpush1.msra.mxu0 %v98
    %364 = vmatprep.subr.mxu0 0.0
    %365 = vmatpush1.msra.mxu0 %v99
    %366 = vmatprep.subr.mxu0 0.0
    %367 = vmatpush1.msra.mxu0 %v100
    %368 = vmatprep.subr.mxu0 0.0
    %369 = vmatpush1.msra.mxu0 %v101
    %370 = vmatprep.subr.mxu0 0.0
    %371 = vmatpush1.msra.mxu0 %v102
    %372 = vmatprep.subr.mxu0 0.0
    %373 = vmatpush1.msra.mxu0 %v103
    %374 = vmatprep.subr.mxu0 0.0
    %375 = vmatpush1.msra.mxu0 %v104
    %376 = vmatprep.subr.mxu0 0.0
    %377 = vmatpush1.msra.mxu0 %v105
    %378 = vmatprep.subr.mxu0 0.0
    %379 = vmatpush1.msra.mxu0 %v106
    %380 = vmatprep.subr.mxu0 0.0
    %381 = vmatpush1.msra.mxu0 %v107
    %382 = vmatprep.subr.mxu0 0.0
    %383 = vmatpush1.msra.mxu0 %v108
    %384 = vmatprep.subr.mxu0 0.0
    %385 = vmatpush1.msra.mxu0 %v109
    %386 = vmatprep.subr.mxu0 0.0
    %387 = vmatpush1.msra.mxu0 %v110
    %388 = vmatprep.subr.mxu0 0.0
    %389 = vmatpush1.msra.mxu0 %v111
    %390 = vmatprep.mubr.f32.mxu0 %v169
    %391 = vmatmul.mubr.f32.gmra.mrb[0].mxu0 %v165
    %v392 = vpop.f32.mrb[0].mxu0
    %v393 = vadd.f32 %v323, %v392
    %v394 = vpop.f32.mrb[0].mxu0
    %395 = vdwg.mxu0
    %396 = vmatprep.subr.mxu0 0.0
    %397 = vmatpush1.msra.mxu0 %v112
    %398 = vmatprep.subr.mxu0 0.0
    %399 = vmatpush1.msra.mxu0 %v113
    %400 = vmatprep.subr.mxu0 0.0
    %401 = vmatpush1.msra.mxu0 %v114
    %402 = vmatprep.subr.mxu0 0.0
    %403 = vmatpush1.msra.mxu0 %v115
    %404 = vmatprep.subr.mxu0 0.0
    %405 = vmatpush1.msra.mxu0 %v116
    %406 = vmatprep.subr.mxu0 0.0
    %407 = vmatpush1.msra.mxu0 %v117
    %408 = vmatprep.subr.mxu0 0.0
    %409 = vmatpush1.msra.mxu0 %v118
    %410 = vmatprep.subr.mxu0 0.0
    %411 = vmatpush1.msra.mxu0 %v119
    %412 = vmatprep.subr.mxu0 0.0
    %413 = vmatpush1.msra.mxu0 %v120
    %414 = vmatprep.subr.mxu0 0.0
    %415 = vmatpush1.msra.mxu0 %v121
    %416 = vmatprep.subr.mxu0 0.0
    %417 = vmatpush1.msra.mxu0 %v122
    %418 = vmatprep.subr.mxu0 0.0
    %419 = vmatpush1.msra.mxu0 %v123
    %420 = vmatprep.subr.mxu0 0.0
    %421 = vmatpush1.msra.mxu0 %v124
    %422 = vmatprep.subr.mxu0 0.0
    %423 = vmatpush1.msra.mxu0 %v125
    %424 = vmatprep.subr.mxu0 0.0
    %425 = vmatpush1.msra.mxu0 %v126
    %426 = vmatprep.subr.mxu0 0.0
    %427 = vmatpush1.msra.mxu0 %v127
    %428 = vmatprep.subr.mxu0 0.0
    %429 = vmatpush1.msra.mxu0 %v128
    %430 = vmatprep.subr.mxu0 0.0
    %431 = vmatpush1.msra.mxu0 %v129
    %432 = vmatprep.subr.mxu0 0.0
    %433 = vmatpush1.msra.mxu0 %v130
    %434 = vmatprep.subr.mxu0 0.0
    %435 = vmatpush1.msra.mxu0 %v131
    %436 = vmatprep.subr.mxu0 0.0
    %437 = vmatpush1.msra.mxu0 %v132
    %438 = vmatprep.subr.mxu0 0.0
    %439 = vmatpush1.msra.mxu0 %v133
    %440 = vmatprep.subr.mxu0 0.0
    %441 = vmatpush1.msra.mxu0 %v134
    %442 = vmatprep.subr.mxu0 0.0
    %443 = vmatpush1.msra.mxu0 %v135
    %444 = vmatprep.subr.mxu0 0.0
    %445 = vmatpush1.msra.mxu0 %v136
    %446 = vmatprep.subr.mxu0 0.0
    %447 = vmatpush1.msra.mxu0 %v137
    %448 = vmatprep.subr.mxu0 0.0
    %449 = vmatpush1.msra.mxu0 %v138
    %450 = vmatprep.subr.mxu0 0.0
    %451 = vmatpush1.msra.mxu0 %v139
    %452 = vmatprep.subr.mxu0 0.0
    %453 = vmatpush1.msra.mxu0 %v140
    %454 = vmatprep.subr.mxu0 0.0
    %455 = vmatpush1.msra.mxu0 %v141
    %456 = vmatprep.subr.mxu0 0.0
    %457 = vmatpush1.msra.mxu0 %v142
    %458 = vmatprep.subr.mxu0 0.0
    %459 = vmatpush1.msra.mxu0 %v143
    %460 = vmatprep.mubr.f32.mxu0 %v177
    %461 = vmatmul.mubr.f32.gmra.mrb[0].mxu0 %v173
    %v462 = vpop.f32.mrb[0].mxu0
    %v463 = vadd.f32 %v393, %v462
    %v464 = vpop.f32.mrb[0].mxu0
    %465 = vdwg.mxu0
    %vm466 = vcmask 73728
    %467 = vst.msk [vmem:[#allocation2] sm:$0x1] %vm466, %v463
    // Predicated region
    $region14: #{model_forward.5} parent=1 // pred_check
      _
    $region15: #{model_forward.5} parent=1 // pred_check_branch
      %469 = sbr.rel (0) target = $region17
    $region16: #{model_forward.5} parent=1 // pred_region
      %s471 = ssub.s32 16, 16
      %472 = vsyncadd [#allocation3], %s471
      %s474 = sshll.u32 [#allocation2], 4
      %s475 = int_to_ptr.vmem [resolvable:$true] %s474
      %477 = dma.vmem_to_hbm [thread:$0]  %s475, 16, %s3, [#allocation3]
    $region17: #{model_forward.5} parent=1 // pred_fallthru
      _
    // Predicated region
    $region18: #{model_forward.5} parent=1 // pred_check
      _
    $region19: #{model_forward.5} parent=1 // pred_check_branch
      %479 = sbr.rel (0) target = $region21
    $region20: #{model_forward.5} parent=1 // pred_region
      %480 = dma.done [#allocation3], 16
    $region21: #{model_forward.5} parent=1 // pred_fallthru
      _
    %481 = vsyncpa [#allocation3], 1

// kernel: model_forward.4
$region0: #{model_forward.4}
  #allocation0 [shape = 'u32[]', space=smem, size = 0x4, offset = 0x4, fixed_abs, tag = 'smem constant byte address 0x4 - core index']
  #allocation1 [shape = 'u32[144,128]{1,0:T(1,128)}', space=vmem, size = 0x12000, scoped, tag = 'internal scratch']
  #allocation2 [shape = 'f32[1,1024]{1,0:T(1,128)}', space=vmem, size = 0x1000, scoped, tag = 'scratch operand']
  #allocation3 [shape = 'f32[1,1024]{1,0:T(1,128)}', space=vmem, size = 0x1000, scoped, tag = 'scratch operand']
  #allocation4 [shape = 'f32[1,1024]{1,0:T(1,128)}', space=vmem, size = 0x1000, scoped, tag = 'scratch operand']
  #allocation5 [shape = 'f32[1,1024]{1,0:T(1,128)}', space=vmem, size = 0x1000, scoped, tag = 'scratch operand']
  %s0 = inlined_call_operand.vmem [shape: f32[1,1024], index: 0, kind: input, shape index: {}]
  %s1 = inlined_call_operand.hbm [shape: bf16[6,6,1024,1024], index: 1, kind: input, shape index: {}]
  %s2 = inlined_call_operand.vmem [shape: f32[6,11,1024], index: 2, kind: input, shape index: {}]
  %s3 = inlined_call_operand.vmem [shape: f32[1,1024], index: 3, kind: output, shape index: {}]
  %s4 = sld [smem:[#allocation0]]
  $region81: #{model_forward.4} parent=0
    _
  %s6 = ssub.s32 1, %s4
  %s7 = scalar_select 0, %s6, %s4
  $region1: #{model_forward.4} parent=0
    #allocation6 [shape = 'u8[4194304]{0}', space=vmem, size = 0x400000, scoped, tag = 'input window, operand 1']
    #allocation7 [shape = 's32[2]{0}', space=sflag, size = 0x8, scoped, tag = 'scoped memory for model_forward.4']
    %8 = vsyncpa [#allocation7], 0
    %s9 = scalar_lea.sflag [#allocation7], 1
    %10 = vsyncpa %s9, 0
    loop: start=0, step=1, limit=38
    $region2: #{model_forward.4} parent=1 // loop_pre_header
      _
    $region3: #{model_forward.4} parent=1 // loop_header
      %s12 = sphi 0, %s16
      %p13 = scmp.ge.s32.totalorder %s12, 38
      %s19 = sphi 0, %s31
      %s20 = sphi 0, %s27
      %s21 = sphi 0, %s19
      %s22 = sphi 0, %s20
      %s23 = sphi 0, %s21
      %s24 = sphi 0, %s22
      %s32 = sphi 0, %s32
      %s34 = sphi 0, %s32
      %s35 = sphi 0, %s34
      %s49 = sphi 0, %s35
      %s57 = sphi 0, %s59
      %s60 = sphi 0, %s57
      %s61 = sphi 0, %s60
      %s77 = sphi 0, %s61
      %s83 = sphi 0, %s85
      %s86 = sphi 0, %s83
      %s87 = sphi 0, %s86
      %s103 = sphi 0, %s87
      %s107 = sphi 0, %s107
      %s109 = sphi 0, %s107
      %s110 = sphi 0, %s109
      %s124 = sphi 0, %s110
    $region4: #{model_forward.4} parent=1 // loop_header_branch
      %15 = sbr.rel (%p13) target = $region8
    $region5: #{model_forward.4} parent=1 // loop_body
      %s17 = ssub.s32 %s12, 1
      %s18 = ssub.s32 %s12, 2
      %s25 = sadd.s32 1, %s20
      %p26 = scmp.ge.s32.totalorder %s25, 6
      %s27 = scalar_select %p26, 0, %s25
      %s28 = sadd.s32 1, %s19
      %s29 = scalar_select %p26, %s28, %s19
      %p30 = scmp.ge.s32.totalorder %s29, 6
      %s31 = scalar_select %p30, 0, %s29
      %s33 = sadd.s32 %s32, 1
      %p36 = scmp.eq.s32.totalorder %s12, 35
      %p37 = scmp.ne.s32.totalorder %s32, %s34
      %p38 = scmp.eq.s32.totalorder %s12, 0
      %p39 = por %p37, %p38
      %p40 = scmp.ne.s32.totalorder %s32, %s34
      %p41 = scmp.eq.s32.totalorder %s17, 35
      %p42 = por %p40, %p41
      %p43 = scmp.ne.s32.totalorder %s34, %s35
      %p44 = scmp.eq.s32.totalorder %s17, 0
      %p45 = por %p43, %p44
      %p46 = scmp.ne.s32.totalorder %s34, %s35
      %p47 = scmp.eq.s32.totalorder %s18, 35
      %p48 = por %p46, %p47
      %p50 = scmp.ne.s32.totalorder %s35, %s49
      %p51 = scmp.eq.s32.totalorder %s18, 0
      %p52 = por %p50, %p51
      %s53 = ssub.s32 %s19, %s31
      %s54 = ssub.s32 %s20, %s27
      %s55 = sor.u32 %s53, %s54
      %p56 = scmp.eq.s32.totalorder %s55, 0
      %s58 = sadd.s32 %s57, 1
      %s59 = scalar_select %p56, %s57, %s58
      %p62 = pneg %p56
      %p63 = scmp.eq.s32.totalorder %s12, 35
      %p64 = por %p62, %p63
      %p65 = scmp.ne.s32.totalorder %s57, %s60
      %p66 = scmp.eq.s32.totalorder %s12, 0
      %p67 = por %p65, %p66
      %p68 = scmp.ne.s32.totalorder %s57, %s60
      %p69 = scmp.eq.s32.totalorder %s17, 35
      %p70 = por %p68, %p69
      %p71 = scmp.ne.s32.totalorder %s60, %s61
      %p72 = scmp.eq.s32.totalorder %s17, 0
      %p73 = por %p71, %p72
      %p74 = scmp.ne.s32.totalorder %s60, %s61
      %p75 = scmp.eq.s32.totalorder %s18, 35
      %p76 = por %p74, %p75
      %p78 = scmp.ne.s32.totalorder %s61, %s77
      %p79 = scmp.eq.s32.totalorder %s18, 0
      %p80 = por %p78, %p79
      %s81 = ssub.s32 %s19, %s31
      %p82 = scmp.eq.s32.totalorder %s81, 0
      %s84 = sadd.s32 %s83, 1
      %s85 = scalar_select %p82, %s83, %s84
      %p88 = pneg %p82
      %p89 = scmp.eq.s32.totalorder %s12, 35
      %p90 = por %p88, %p89
      %p91 = scmp.ne.s32.totalorder %s83, %s86
      %p92 = scmp.eq.s32.totalorder %s12, 0
      %p93 = por %p91, %p92
      %p94 = scmp.ne.s32.totalorder %s83, %s86
      %p95 = scmp.eq.s32.totalorder %s17, 35
      %p96 = por %p94, %p95
      %p97 = scmp.ne.s32.totalorder %s86, %s87
      %p98 = scmp.eq.s32.totalorder %s17, 0
      %p99 = por %p97, %p98
      %p100 = scmp.ne.s32.totalorder %s86, %s87
      %p101 = scmp.eq.s32.totalorder %s18, 35
      %p102 = por %p100, %p101
      %p104 = scmp.ne.s32.totalorder %s87, %s103
      %p105 = scmp.eq.s32.totalorder %s18, 0
      %p106 = por %p104, %p105
      %s108 = sadd.s32 %s107, 1
      %p111 = scmp.eq.s32.totalorder %s12, 35
      %p112 = scmp.ne.s32.totalorder %s107, %s109
      %p113 = scmp.eq.s32.totalorder %s12, 0
      %p114 = por %p112, %p113
      %p115 = scmp.ne.s32.totalorder %s107, %s109
      %p116 = scmp.eq.s32.totalorder %s17, 35
      %p117 = por %p115, %p116
      %p118 = scmp.ne.s32.totalorder %s109, %s110
      %p119 = scmp.eq.s32.totalorder %s17, 0
      %p120 = por %p118, %p119
      %p121 = scmp.ne.s32.totalorder %s109, %s110
      %p122 = scmp.eq.s32.totalorder %s18, 35
      %p123 = por %p121, %p122
      %p125 = scmp.ne.s32.totalorder %s110, %s124
      %p126 = scmp.eq.s32.totalorder %s18, 0
      %p127 = por %p125, %p126
      %p128 = scmp.le.s32.totalorder 1, %s12
      %p129 = scmp.lt.s32.totalorder %s12, 37
      %p130 = pnand %p128, %p129
      %p131 = pneg %p130
      // Predicated region
      $region9: #{model_forward.4} parent=5 // pred_check
        _
      $region10: #{model_forward.4} parent=5 // pred_check_branch
        %133 = sbr.rel (%p130) target = $region12
      $region11: #{model_forward.4} parent=5 // pred_region
        %s134 = ssub.s32 %s12, 1
        // Predicated region
        $region13: #{model_forward.4} parent=11 // pred_check
          %p135 = pneg %p45
        $region14: #{model_forward.4} parent=11 // pred_check_branch
          %137 = sbr.rel (%p135) target = $region16
        $region15: #{model_forward.4} parent=11 // pred_region
          _
        $region16: #{model_forward.4} parent=11 // pred_fallthru
          _
      $region12: #{model_forward.4} parent=5 // pred_fallthru
        _
      %p138 = scmp.lt.s32.totalorder %s12, 36
      // Predicated region
      $region17: #{model_forward.4} parent=5 // pred_check
        %p139 = pneg %p138
      $region18: #{model_forward.4} parent=5 // pred_check_branch
        %141 = sbr.rel (%p139) target = $region20
      $region19: #{model_forward.4} parent=5 // pred_region
        // Predicated region
        $region21: #{model_forward.4} parent=19 // pred_check
          %p142 = pneg %p67
        $region22: #{model_forward.4} parent=19 // pred_check_branch
          %144 = sbr.rel (%p142) target = $region24
        $region23: #{model_forward.4} parent=19 // pred_region
          %s145 = sand.u32 %s57, 1
          %s146 = scalar_lea.sflag [#allocation7], %s145
          %s147 = sand.u32 %s57, 1
          %s148 = smul.addr %s147, 4096
          %s149 = scalar_lea.vmem [#allocation6], %s148
          %s151 = ssub.s32 65536, 65536
          %152 = vsyncadd %s146, %s151
          %s153 = smul.addr %s20, 1024
          %s154 = smul.addr %s19, 6144
          %s155 = sadd.s32 %s153, %s154
          %s156 = smul.addr %s155, 64
          %s157 = scalar_lea.hbm %s1, %s156
          %s158 = sshll.u32 %s149, 4
          %s159 = int_to_ptr.vmem [resolvable:$true] %s158
          %164 = dma.hbm_to_vmem [thread:$0]  %s157, 65536, %s159, %s146, 512, 512, 32
        $region24: #{model_forward.4} parent=19 // pred_fallthru
          _
        // Predicated region
        $region25: #{model_forward.4} parent=19 // pred_check
          %p165 = pneg %p93
        $region26: #{model_forward.4} parent=19 // pred_check_branch
          %167 = sbr.rel (%p165) target = $region28
        $region27: #{model_forward.4} parent=19 // pred_region
          %p168 = scmp.lt.s32.totalorder %s19, 5
          %s169 = scalar_select %p168, %s19, 5
          %s170 = smul.addr %s169, 16
          %s171 = smul.addr %s170, 8
          %s172 = scalar_lea.vmem %s2, %s171
        $region28: #{model_forward.4} parent=19 // pred_fallthru
          _
      $region20: #{model_forward.4} parent=5 // pred_fallthru
        _
      %p173 = scmp.le.s32.totalorder 1, %s12
      %p174 = scmp.lt.s32.totalorder %s12, 37
      %p175 = pnand %p173, %p174
      %p176 = pneg %p175
      // Predicated region
      $region29: #{model_forward.4} parent=5 // pred_check
        _
      $region30: #{model_forward.4} parent=5 // pred_check_branch
        %178 = sbr.rel (%p175) target = $region32
      $region31: #{model_forward.4} parent=5 // pred_region
        %s179 = ssub.s32 %s12, 1
        %s180 = sand.u32 %s60, 1
        %s181 = scalar_lea.sflag [#allocation7], %s180
        %s182 = sand.u32 %s60, 1
        %s183 = smul.addr %s182, 4096
        %s184 = scalar_lea.vmem [#allocation6], %s183
        // Predicated region
        $region33: #{model_forward.4} parent=31 // pred_check
          %p185 = pneg %p73
        $region34: #{model_forward.4} parent=31 // pred_check_branch
          %187 = sbr.rel (%p185) target = $region36
        $region35: #{model_forward.4} parent=31 // pred_region
          %188 = dma.done %s181, 65536
        $region36: #{model_forward.4} parent=31 // pred_fallthru
          _
        %p189 = pneg %p45
        %p190 = pneg %p42
        %s191 = sand.u32 %s60, 1
        %s192 = scalar_lea.sflag [#allocation7], %s191
        %s193 = sand.u32 %s60, 1
        %s194 = smul.addr %s193, 4096
        %s195 = scalar_lea.vmem [#allocation6], %s194
        %p196 = pneg %p73
        %p197 = pneg %p70
        %p198 = scmp.lt.s32.totalorder %s21, 5
        %s199 = scalar_select %p198, %s21, 5
        %s200 = smul.addr %s199, 16
        %s201 = smul.addr %s200, 8
        %s202 = scalar_lea.vmem %s2, %s201
        %p203 = pneg %p99
        %p204 = pneg %p96
        %p205 = pneg %p120
        %p206 = pneg %p117
        %p207 = scmp.lt.s32.totalorder %s21, 5
        %s208 = scalar_select %p207, %s21, 5
        %s209 = smul.addr %s208, 16
        %s210 = smul.addr %s209, 8
        %s211 = scalar_lea.vmem %s2, %s210
        %p212 = scmp.eq.s32.totalorder %s21, 0
        %p213 = scmp.eq.s32.totalorder %s22, 0
        %p214 = pnand %p212, %p213
        %p215 = pneg %p214
        // Predicated region
        $region37: #{model_forward.4} parent=31 // pred_check
          _
        $region38: #{model_forward.4} parent=31 // pred_check_branch
          %217 = sbr.rel (%p214) target = $region40
        $region39: #{model_forward.4} parent=31 // pred_region
          %v218 = vld [vmem:[%s0] sm:$0xff]
          %219 = vst [vmem:[#allocation2] sm:$0xff] %v218
        $region40: #{model_forward.4} parent=31 // pred_fallthru
          _
        %v220 = vld [vmem:[#allocation2] sm:$0xff]
        %v221 = vld [vmem:[%s211] sm:$0xff]
        %v222 = vld [vmem:[%s211 + $0x8] sm:$0xff]
        %v223 = vld [vmem:[%s211 + $0x10] sm:$0xff]
        %v224 = vld [vmem:[%s211 + $0x18] sm:$0xff]
        %v225 = vld [vmem:[%s211 + $0x20] sm:$0xff]
        %v226 = vld [vmem:[%s211 + $0x28] sm:$0xff]
        %v227 = vld [vmem:[%s211 + $0x30] sm:$0xff]
        %v228 = vld [vmem:[%s211 + $0x38] sm:$0xff]
        %v229 = vld [vmem:[%s211 + $0x40] sm:$0x7]
        %v230 = vld [vmem:[%s211 + $0x48] sm:$0x7]
        %v231 = vld [vmem:[%s211 + $0x50] sm:$0x7]
        %v232 = vld [vmem:[%s211 + $0x58] sm:$0x7]
        %v233 = vld [vmem:[%s211 + $0x60] sm:$0x7]
        %v234 = vld [vmem:[%s211 + $0x68] sm:$0x7]
        %v235 = vld [vmem:[%s211 + $0x70] sm:$0x7]
        %v236 = vld [vmem:[%s211 + $0x78] sm:$0x7]
        %p237 = scmp.eq.s32.totalorder %s22, 1
        %v238 = vld [vmem:[%s0] sm:$0xff]
        %p239 = scmp.eq.s32.totalorder %s22, 4
        %v240 = vld [vmem:[#allocation3] sm:$0xff]
        %p241 = scmp.eq.s32.totalorder %s22, 5
        %v242 = vld [vmem:[#allocation4] sm:$0xff]
        %s243 = scalar_select %p241, 1, 0
        %v244 = vstv %s243
        %vm245 = vcmp.eq.s32.totalorder %v244, 1
        %v246 = vsel %vm245, %v242, %v220
        %s247 = scalar_select %p239, 1, 0
        %v248 = vstv %s247
        %vm249 = vcmp.eq.s32.totalorder %v248, 1
        %v250 = vsel %vm249, %v240, %v246
        %s251 = scalar_select %p237, 1, 0
        %v252 = vstv %s251
        %vm253 = vcmp.eq.s32.totalorder %v252, 1
        %v254 = vsel %vm253, %v238, %v250
        %v256 = vlaneseq
        %v257 = vshrl.u32 %v256, 7
        %v258 = vsub.s32 0, %v257
        %v259 = vrot.slane %v254, %v258
        %v260 = vlaneseq
        %v261 = vshrl.u32 %v260, 7
        %v262 = vsub.s32 1, %v261
        %v263 = vrot.slane %v254, %v262
        %v264 = vlaneseq
        %v265 = vshrl.u32 %v264, 7
        %v266 = vsub.s32 2, %v265
        %v267 = vrot.slane %v254, %v266
        %v268 = vlaneseq
        %v269 = vshrl.u32 %v268, 7
        %v270 = vsub.s32 3, %v269
        %v271 = vrot.slane %v254, %v270
        %v272 = vlaneseq
        %v273 = vshrl.u32 %v272, 7
        %v274 = vsub.s32 4, %v273
        %v275 = vrot.slane %v254, %v274
        %v276 = vlaneseq
        %v277 = vshrl.u32 %v276, 7
        %v278 = vsub.s32 5, %v277
        %v279 = vrot.slane %v254, %v278
        %v280 = vlaneseq
        %v281 = vshrl.u32 %v280, 7
        %v282 = vsub.s32 6, %v281
        %v283 = vrot.slane %v254, %v282
        %v284 = vlaneseq
        %v285 = vshrl.u32 %v284, 7
        %v286 = vsub.s32 7, %v285
        %v287 = vrot.slane %v254, %v286
        %v296 = vpack.c.bf16 %v259, %v259
        %v297 = vpack.c.bf16 %v263, %v263
        %v298 = vpack.c.bf16 %v267, %v267
        %v299 = vpack.c.bf16 %v271, %v271
        %v300 = vpack.c.bf16 %v275, %v275
        %v301 = vpack.c.bf16 %v279, %v279
        %v302 = vpack.c.bf16 %v283, %v283
        %v303 = vpack.c.bf16 %v287, %v287
        %v304 = vld [vmem:[%s184] sm:$0xff]
        %v305 = vld [vmem:[%s184 + $0x8] sm:$0xff]
        %v306 = vld [vmem:[%s184 + $0x10] sm:$0xff]
        %v307 = vld [vmem:[%s184 + $0x18] sm:$0xff]
        %v308 = vld [vmem:[%s184 + $0x20] sm:$0xff]
        %v309 = vld [vmem:[%s184 + $0x28] sm:$0xff]
        %v310 = vld [vmem:[%s184 + $0x30] sm:$0xff]
        %v311 = vld [vmem:[%s184 + $0x38] sm:$0xff]
        %v312 = vld [vmem:[%s184 + $0x40] sm:$0xff]
        %v313 = vld [vmem:[%s184 + $0x48] sm:$0xff]
        %v314 = vld [vmem:[%s184 + $0x50] sm:$0xff]
        %v315 = vld [vmem:[%s184 + $0x58] sm:$0xff]
        %v316 = vld [vmem:[%s184 + $0x60] sm:$0xff]
        %v317 = vld [vmem:[%s184 + $0x68] sm:$0xff]
        %v318 = vld [vmem:[%s184 + $0x70] sm:$0xff]
        %v319 = vld [vmem:[%s184 + $0x78] sm:$0xff]
        %v320 = vld [vmem:[%s184 + $0x80] sm:$0xff]
        %v321 = vld [vmem:[%s184 + $0x88] sm:$0xff]
        %v322 = vld [vmem:[%s184 + $0x90] sm:$0xff]
        %v323 = vld [vmem:[%s184 + $0x98] sm:$0xff]
        %v324 = vld [vmem:[%s184 + $0xa0] sm:$0xff]
        %v325 = vld [vmem:[%s184 + $0xa8] sm:$0xff]
        %v326 = vld [vmem:[%s184 + $0xb0] sm:$0xff]
        %v327 = vld [vmem:[%s184 + $0xb8] sm:$0xff]
        %v328 = vld [vmem:[%s184 + $0xc0] sm:$0xff]
        %v329 = vld [vmem:[%s184 + $0xc8] sm:$0xff]
        %v330 = vld [vmem:[%s184 + $0xd0] sm:$0xff]
        %v331 = vld [vmem:[%s184 + $0xd8] sm:$0xff]
        %v332 = vld [vmem:[%s184 + $0xe0] sm:$0xff]
        %v333 = vld [vmem:[%s184 + $0xe8] sm:$0xff]
        %v334 = vld [vmem:[%s184 + $0xf0] sm:$0xff]
        %v335 = vld [vmem:[%s184 + $0xf8] sm:$0xff]
        %v336 = vld [vmem:[%s184 + $0x100] sm:$0xff]
        %v337 = vld [vmem:[%s184 + $0x108] sm:$0xff]
        %v338 = vld [vmem:[%s184 + $0x110] sm:$0xff]
        %v339 = vld [vmem:[%s184 + $0x118] sm:$0xff]
        %v340 = vld [vmem:[%s184 + $0x120] sm:$0xff]
        %v341 = vld [vmem:[%s184 + $0x128] sm:$0xff]
        %v342 = vld [vmem:[%s184 + $0x130] sm:$0xff]
        %v343 = vld [vmem:[%s184 + $0x138] sm:$0xff]
        %v344 = vld [vmem:[%s184 + $0x140] sm:$0xff]
        %v345 = vld [vmem:[%s184 + $0x148] sm:$0xff]
        %v346 = vld [vmem:[%s184 + $0x150] sm:$0xff]
        %v347 = vld [vmem:[%s184 + $0x158] sm:$0xff]
        %v348 = vld [vmem:[%s184 + $0x160] sm:$0xff]
        %v349 = vld [vmem:[%s184 + $0x168] sm:$0xff]
        %v350 = vld [vmem:[%s184 + $0x170] sm:$0xff]
        %v351 = vld [vmem:[%s184 + $0x178] sm:$0xff]
        %v352 = vld [vmem:[%s184 + $0x180] sm:$0xff]
        %v353 = vld [vmem:[%s184 + $0x188] sm:$0xff]
        %v354 = vld [vmem:[%s184 + $0x190] sm:$0xff]
        %v355 = vld [vmem:[%s184 + $0x198] sm:$0xff]
        %v356 = vld [vmem:[%s184 + $0x1a0] sm:$0xff]
        %v357 = vld [vmem:[%s184 + $0x1a8] sm:$0xff]
        %v358 = vld [vmem:[%s184 + $0x1b0] sm:$0xff]
        %v359 = vld [vmem:[%s184 + $0x1b8] sm:$0xff]
        %v360 = vld [vmem:[%s184 + $0x1c0] sm:$0xff]
        %v361 = vld [vmem:[%s184 + $0x1c8] sm:$0xff]
        %v362 = vld [vmem:[%s184 + $0x1d0] sm:$0xff]
        %v363 = vld [vmem:[%s184 + $0x1d8] sm:$0xff]
        %v364 = vld [vmem:[%s184 + $0x1e0] sm:$0xff]
        %v365 = vld [vmem:[%s184 + $0x1e8] sm:$0xff]
        %v366 = vld [vmem:[%s184 + $0x1f0] sm:$0xff]
        %v367 = vld [vmem:[%s184 + $0x1f8] sm:$0xff]
        %v368 = vld [vmem:[%s184 + $0x200] sm:$0xff]
        %v369 = vld [vmem:[%s184 + $0x208] sm:$0xff]
        %v370 = vld [vmem:[%s184 + $0x210] sm:$0xff]
        %v371 = vld [vmem:[%s184 + $0x218] sm:$0xff]
        %v372 = vld [vmem:[%s184 + $0x220] sm:$0xff]
        %v373 = vld [vmem:[%s184 + $0x228] sm:$0xff]
        %v374 = vld [vmem:[%s184 + $0x230] sm:$0xff]
        %v375 = vld [vmem:[%s184 + $0x238] sm:$0xff]
        %v376 = vld [vmem:[%s184 + $0x240] sm:$0xff]
        %v377 = vld [vmem:[%s184 + $0x248] sm:$0xff]
        %v378 = vld [vmem:[%s184 + $0x250] sm:$0xff]
        %v379 = vld [vmem:[%s184 + $0x258] sm:$0xff]
        %v380 = vld [vmem:[%s184 + $0x260] sm:$0xff]
        %v381 = vld [vmem:[%s184 + $0x268] sm:$0xff]
        %v382 = vld [vmem:[%s184 + $0x270] sm:$0xff]
        %v383 = vld [vmem:[%s184 + $0x278] sm:$0xff]
        %v384 = vld [vmem:[%s184 + $0x280] sm:$0xff]
        %v385 = vld [vmem:[%s184 + $0x288] sm:$0xff]
        %v386 = vld [vmem:[%s184 + $0x290] sm:$0xff]
        %v387 = vld [vmem:[%s184 + $0x298] sm:$0xff]
        %v388 = vld [vmem:[%s184 + $0x2a0] sm:$0xff]
        %v389 = vld [vmem:[%s184 + $0x2a8] sm:$0xff]
        %v390 = vld [vmem:[%s184 + $0x2b0] sm:$0xff]
        %v391 = vld [vmem:[%s184 + $0x2b8] sm:$0xff]
        %v392 = vld [vmem:[%s184 + $0x2c0] sm:$0xff]
        %v393 = vld [vmem:[%s184 + $0x2c8] sm:$0xff]
        %v394 = vld [vmem:[%s184 + $0x2d0] sm:$0xff]
        %v395 = vld [vmem:[%s184 + $0x2d8] sm:$0xff]
        %v396 = vld [vmem:[%s184 + $0x2e0] sm:$0xff]
        %v397 = vld [vmem:[%s184 + $0x2e8] sm:$0xff]
        %v398 = vld [vmem:[%s184 + $0x2f0] sm:$0xff]
        %v399 = vld [vmem:[%s184 + $0x2f8] sm:$0xff]
        %v400 = vld [vmem:[%s184 + $0x300] sm:$0xff]
        %v401 = vld [vmem:[%s184 + $0x308] sm:$0xff]
        %v402 = vld [vmem:[%s184 + $0x310] sm:$0xff]
        %v403 = vld [vmem:[%s184 + $0x318] sm:$0xff]
        %v404 = vld [vmem:[%s184 + $0x320] sm:$0xff]
        %v405 = vld [vmem:[%s184 + $0x328] sm:$0xff]
        %v406 = vld [vmem:[%s184 + $0x330] sm:$0xff]
        %v407 = vld [vmem:[%s184 + $0x338] sm:$0xff]
        %v408 = vld [vmem:[%s184 + $0x340] sm:$0xff]
        %v409 = vld [vmem:[%s184 + $0x348] sm:$0xff]
        %v410 = vld [vmem:[%s184 + $0x350] sm:$0xff]
        %v411 = vld [vmem:[%s184 + $0x358] sm:$0xff]
        %v412 = vld [vmem:[%s184 + $0x360] sm:$0xff]
        %v413 = vld [vmem:[%s184 + $0x368] sm:$0xff]
        %v414 = vld [vmem:[%s184 + $0x370] sm:$0xff]
        %v415 = vld [vmem:[%s184 + $0x378] sm:$0xff]
        %v416 = vld [vmem:[%s184 + $0x380] sm:$0xff]
        %v417 = vld [vmem:[%s184 + $0x388] sm:$0xff]
        %v418 = vld [vmem:[%s184 + $0x390] sm:$0xff]
        %v419 = vld [vmem:[%s184 + $0x398] sm:$0xff]
        %v420 = vld [vmem:[%s184 + $0x3a0] sm:$0xff]
        %v421 = vld [vmem:[%s184 + $0x3a8] sm:$0xff]
        %v422 = vld [vmem:[%s184 + $0x3b0] sm:$0xff]
        %v423 = vld [vmem:[%s184 + $0x3b8] sm:$0xff]
        %v424 = vld [vmem:[%s184 + $0x3c0] sm:$0xff]
        %v425 = vld [vmem:[%s184 + $0x3c8] sm:$0xff]
        %v426 = vld [vmem:[%s184 + $0x3d0] sm:$0xff]
        %v427 = vld [vmem:[%s184 + $0x3d8] sm:$0xff]
        %v428 = vld [vmem:[%s184 + $0x3e0] sm:$0xff]
        %v429 = vld [vmem:[%s184 + $0x3e8] sm:$0xff]
        %v430 = vld [vmem:[%s184 + $0x3f0] sm:$0xff]
        %v431 = vld [vmem:[%s184 + $0x3f8] sm:$0xff]
        %v432 = vld [vmem:[%s184 + $0x400] sm:$0xff]
        %v433 = vld [vmem:[%s184 + $0x408] sm:$0xff]
        %v434 = vld [vmem:[%s184 + $0x410] sm:$0xff]
        %v435 = vld [vmem:[%s184 + $0x418] sm:$0xff]
        %v436 = vld [vmem:[%s184 + $0x420] sm:$0xff]
        %v437 = vld [vmem:[%s184 + $0x428] sm:$0xff]
        %v438 = vld [vmem:[%s184 + $0x430] sm:$0xff]
        %v439 = vld [vmem:[%s184 + $0x438] sm:$0xff]
        %v440 = vld [vmem:[%s184 + $0x440] sm:$0xff]
        %v441 = vld [vmem:[%s184 + $0x448] sm:$0xff]
        %v442 = vld [vmem:[%s184 + $0x450] sm:$0xff]
        %v443 = vld [vmem:[%s184 + $0x458] sm:$0xff]
        %v444 = vld [vmem:[%s184 + $0x460] sm:$0xff]
        %v445 = vld [vmem:[%s184 + $0x468] sm:$0xff]
        %v446 = vld [vmem:[%s184 + $0x470] sm:$0xff]
        %v447 = vld [vmem:[%s184 + $0x478] sm:$0xff]
        %v448 = vld [vmem:[%s184 + $0x480] sm:$0xff]
        %v449 = vld [vmem:[%s184 + $0x488] sm:$0xff]
        %v450 = vld [vmem:[%s184 + $0x490] sm:$0xff]
        %v451 = vld [vmem:[%s184 + $0x498] sm:$0xff]
        %v452 = vld [vmem:[%s184 + $0x4a0] sm:$0xff]
        %v453 = vld [vmem:[%s184 + $0x4a8] sm:$0xff]
        %v454 = vld [vmem:[%s184 + $0x4b0] sm:$0xff]
        %v455 = vld [vmem:[%s184 + $0x4b8] sm:$0xff]
        %v456 = vld [vmem:[%s184 + $0x4c0] sm:$0xff]
        %v457 = vld [vmem:[%s184 + $0x4c8] sm:$0xff]
        %v458 = vld [vmem:[%s184 + $0x4d0] sm:$0xff]
        %v459 = vld [vmem:[%s184 + $0x4d8] sm:$0xff]
        %v460 = vld [vmem:[%s184 + $0x4e0] sm:$0xff]
        %v461 = vld [vmem:[%s184 + $0x4e8] sm:$0xff]
        %v462 = vld [vmem:[%s184 + $0x4f0] sm:$0xff]
        %v463 = vld [vmem:[%s184 + $0x4f8] sm:$0xff]
        %v464 = vld [vmem:[%s184 + $0x500] sm:$0xff]
        %v465 = vld [vmem:[%s184 + $0x508] sm:$0xff]
        %v466 = vld [vmem:[%s184 + $0x510] sm:$0xff]
        %v467 = vld [vmem:[%s184 + $0x518] sm:$0xff]
        %v468 = vld [vmem:[%s184 + $0x520] sm:$0xff]
        %v469 = vld [vmem:[%s184 + $0x528] sm:$0xff]
        %v470 = vld [vmem:[%s184 + $0x530] sm:$0xff]
        %v471 = vld [vmem:[%s184 + $0x538] sm:$0xff]
        %v472 = vld [vmem:[%s184 + $0x540] sm:$0xff]
        %v473 = vld [vmem:[%s184 + $0x548] sm:$0xff]
        %v474 = vld [vmem:[%s184 + $0x550] sm:$0xff]
        %v475 = vld [vmem:[%s184 + $0x558] sm:$0xff]
        %v476 = vld [vmem:[%s184 + $0x560] sm:$0xff]
        %v477 = vld [vmem:[%s184 + $0x568] sm:$0xff]
        %v478 = vld [vmem:[%s184 + $0x570] sm:$0xff]
        %v479 = vld [vmem:[%s184 + $0x578] sm:$0xff]
        %v480 = vld [vmem:[%s184 + $0x580] sm:$0xff]
        %v481 = vld [vmem:[%s184 + $0x588] sm:$0xff]
        %v482 = vld [vmem:[%s184 + $0x590] sm:$0xff]
        %v483 = vld [vmem:[%s184 + $0x598] sm:$0xff]
        %v484 = vld [vmem:[%s184 + $0x5a0] sm:$0xff]
        %v485 = vld [vmem:[%s184 + $0x5a8] sm:$0xff]
        %v486 = vld [vmem:[%s184 + $0x5b0] sm:$0xff]
        %v487 = vld [vmem:[%s184 + $0x5b8] sm:$0xff]
        %v488 = vld [vmem:[%s184 + $0x5c0] sm:$0xff]
        %v489 = vld [vmem:[%s184 + $0x5c8] sm:$0xff]
        %v490 = vld [vmem:[%s184 + $0x5d0] sm:$0xff]
        %v491 = vld [vmem:[%s184 + $0x5d8] sm:$0xff]
        %v492 = vld [vmem:[%s184 + $0x5e0] sm:$0xff]
        %v493 = vld [vmem:[%s184 + $0x5e8] sm:$0xff]
        %v494 = vld [vmem:[%s184 + $0x5f0] sm:$0xff]
        %v495 = vld [vmem:[%s184 + $0x5f8] sm:$0xff]
        %v496 = vld [vmem:[%s184 + $0x600] sm:$0xff]
        %v497 = vld [vmem:[%s184 + $0x608] sm:$0xff]
        %v498 = vld [vmem:[%s184 + $0x610] sm:$0xff]
        %v499 = vld [vmem:[%s184 + $0x618] sm:$0xff]
        %v500 = vld [vmem:[%s184 + $0x620] sm:$0xff]
        %v501 = vld [vmem:[%s184 + $0x628] sm:$0xff]
        %v502 = vld [vmem:[%s184 + $0x630] sm:$0xff]
        %v503 = vld [vmem:[%s184 + $0x638] sm:$0xff]
        %v504 = vld [vmem:[%s184 + $0x640] sm:$0xff]
        %v505 = vld [vmem:[%s184 + $0x648] sm:$0xff]
        %v506 = vld [vmem:[%s184 + $0x650] sm:$0xff]
        %v507 = vld [vmem:[%s184 + $0x658] sm:$0xff]
        %v508 = vld [vmem:[%s184 + $0x660] sm:$0xff]
        %v509 = vld [vmem:[%s184 + $0x668] sm:$0xff]
        %v510 = vld [vmem:[%s184 + $0x670] sm:$0xff]
        %v511 = vld [vmem:[%s184 + $0x678] sm:$0xff]
        %v512 = vld [vmem:[%s184 + $0x680] sm:$0xff]
        %v513 = vld [vmem:[%s184 + $0x688] sm:$0xff]
        %v514 = vld [vmem:[%s184 + $0x690] sm:$0xff]
        %v515 = vld [vmem:[%s184 + $0x698] sm:$0xff]
        %v516 = vld [vmem:[%s184 + $0x6a0] sm:$0xff]
        %v517 = vld [vmem:[%s184 + $0x6a8] sm:$0xff]
        %v518 = vld [vmem:[%s184 + $0x6b0] sm:$0xff]
        %v519 = vld [vmem:[%s184 + $0x6b8] sm:$0xff]
        %v520 = vld [vmem:[%s184 + $0x6c0] sm:$0xff]
        %v521 = vld [vmem:[%s184 + $0x6c8] sm:$0xff]
        %v522 = vld [vmem:[%s184 + $0x6d0] sm:$0xff]
        %v523 = vld [vmem:[%s184 + $0x6d8] sm:$0xff]
        %v524 = vld [vmem:[%s184 + $0x6e0] sm:$0xff]
        %v525 = vld [vmem:[%s184 + $0x6e8] sm:$0xff]
        %v526 = vld [vmem:[%s184 + $0x6f0] sm:$0xff]
        %v527 = vld [vmem:[%s184 + $0x6f8] sm:$0xff]
        %v528 = vld [vmem:[%s184 + $0x700] sm:$0xff]
        %v529 = vld [vmem:[%s184 + $0x708] sm:$0xff]
        %v530 = vld [vmem:[%s184 + $0x710] sm:$0xff]
        %v531 = vld [vmem:[%s184 + $0x718] sm:$0xff]
        %v532 = vld [vmem:[%s184 + $0x720] sm:$0xff]
        %v533 = vld [vmem:[%s184 + $0x728] sm:$0xff]
        %v534 = vld [vmem:[%s184 + $0x730] sm:$0xff]
        %v535 = vld [vmem:[%s184 + $0x738] sm:$0xff]
        %v536 = vld [vmem:[%s184 + $0x740] sm:$0xff]
        %v537 = vld [vmem:[%s184 + $0x748] sm:$0xff]
        %v538 = vld [vmem:[%s184 + $0x750] sm:$0xff]
        %v539 = vld [vmem:[%s184 + $0x758] sm:$0xff]
        %v540 = vld [vmem:[%s184 + $0x760] sm:$0xff]
        %v541 = vld [vmem:[%s184 + $0x768] sm:$0xff]
        %v542 = vld [vmem:[%s184 + $0x770] sm:$0xff]
        %v543 = vld [vmem:[%s184 + $0x778] sm:$0xff]
        %v544 = vld [vmem:[%s184 + $0x780] sm:$0xff]
        %v545 = vld [vmem:[%s184 + $0x788] sm:$0xff]
        %v546 = vld [vmem:[%s184 + $0x790] sm:$0xff]
        %v547 = vld [vmem:[%s184 + $0x798] sm:$0xff]
        %v548 = vld [vmem:[%s184 + $0x7a0] sm:$0xff]
        %v549 = vld [vmem:[%s184 + $0x7a8] sm:$0xff]
        %v550 = vld [vmem:[%s184 + $0x7b0] sm:$0xff]
        %v551 = vld [vmem:[%s184 + $0x7b8] sm:$0xff]
        %v552 = vld [vmem:[%s184 + $0x7c0] sm:$0xff]
        %v553 = vld [vmem:[%s184 + $0x7c8] sm:$0xff]
        %v554 = vld [vmem:[%s184 + $0x7d0] sm:$0xff]
        %v555 = vld [vmem:[%s184 + $0x7d8] sm:$0xff]
        %v556 = vld [vmem:[%s184 + $0x7e0] sm:$0xff]
        %v557 = vld [vmem:[%s184 + $0x7e8] sm:$0xff]
        %v558 = vld [vmem:[%s184 + $0x7f0] sm:$0xff]
        %v559 = vld [vmem:[%s184 + $0x7f8] sm:$0xff]
        %v560 = vld [vmem:[%s184 + $0x800] sm:$0xff]
        %v561 = vld [vmem:[%s184 + $0x808] sm:$0xff]
        %v562 = vld [vmem:[%s184 + $0x810] sm:$0xff]
        %v563 = vld [vmem:[%s184 + $0x818] sm:$0xff]
        %v564 = vld [vmem:[%s184 + $0x820] sm:$0xff]
        %v565 = vld [vmem:[%s184 + $0x828] sm:$0xff]
        %v566 = vld [vmem:[%s184 + $0x830] sm:$0xff]
        %v567 = vld [vmem:[%s184 + $0x838] sm:$0xff]
        %v568 = vld [vmem:[%s184 + $0x840] sm:$0xff]
        %v569 = vld [vmem:[%s184 + $0x848] sm:$0xff]
        %v570 = vld [vmem:[%s184 + $0x850] sm:$0xff]
        %v571 = vld [vmem:[%s184 + $0x858] sm:$0xff]
        %v572 = vld [vmem:[%s184 + $0x860] sm:$0xff]
        %v573 = vld [vmem:[%s184 + $0x868] sm:$0xff]
        %v574 = vld [vmem:[%s184 + $0x870] sm:$0xff]
        %v575 = vld [vmem:[%s184 + $0x878] sm:$0xff]
        %v576 = vld [vmem:[%s184 + $0x880] sm:$0xff]
        %v577 = vld [vmem:[%s184 + $0x888] sm:$0xff]
        %v578 = vld [vmem:[%s184 + $0x890] sm:$0xff]
        %v579 = vld [vmem:[%s184 + $0x898] sm:$0xff]
        %v580 = vld [vmem:[%s184 + $0x8a0] sm:$0xff]
        %v581 = vld [vmem:[%s184 + $0x8a8] sm:$0xff]
        %v582 = vld [vmem:[%s184 + $0x8b0] sm:$0xff]
        %v583 = vld [vmem:[%s184 + $0x8b8] sm:$0xff]
        %v584 = vld [vmem:[%s184 + $0x8c0] sm:$0xff]
        %v585 = vld [vmem:[%s184 + $0x8c8] sm:$0xff]
        %v586 = vld [vmem:[%s184 + $0x8d0] sm:$0xff]
        %v587 = vld [vmem:[%s184 + $0x8d8] sm:$0xff]
        %v588 = vld [vmem:[%s184 + $0x8e0] sm:$0xff]
        %v589 = vld [vmem:[%s184 + $0x8e8] sm:$0xff]
        %v590 = vld [vmem:[%s184 + $0x8f0] sm:$0xff]
        %v591 = vld [vmem:[%s184 + $0x8f8] sm:$0xff]
        %v592 = vld [vmem:[%s184 + $0x900] sm:$0xff]
        %v593 = vld [vmem:[%s184 + $0x908] sm:$0xff]
        %v594 = vld [vmem:[%s184 + $0x910] sm:$0xff]
        %v595 = vld [vmem:[%s184 + $0x918] sm:$0xff]
        %v596 = vld [vmem:[%s184 + $0x920] sm:$0xff]
        %v597 = vld [vmem:[%s184 + $0x928] sm:$0xff]
        %v598 = vld [vmem:[%s184 + $0x930] sm:$0xff]
        %v599 = vld [vmem:[%s184 + $0x938] sm:$0xff]
        %v600 = vld [vmem:[%s184 + $0x940] sm:$0xff]
        %v601 = vld [vmem:[%s184 + $0x948] sm:$0xff]
        %v602 = vld [vmem:[%s184 + $0x950] sm:$0xff]
        %v603 = vld [vmem:[%s184 + $0x958] sm:$0xff]
        %v604 = vld [vmem:[%s184 + $0x960] sm:$0xff]
        %v605 = vld [vmem:[%s184 + $0x968] sm:$0xff]
        %v606 = vld [vmem:[%s184 + $0x970] sm:$0xff]
        %v607 = vld [vmem:[%s184 + $0x978] sm:$0xff]
        %v608 = vld [vmem:[%s184 + $0x980] sm:$0xff]
        %v609 = vld [vmem:[%s184 + $0x988] sm:$0xff]
        %v610 = vld [vmem:[%s184 + $0x990] sm:$0xff]
        %v611 = vld [vmem:[%s184 + $0x998] sm:$0xff]
        %v612 = vld [vmem:[%s184 + $0x9a0] sm:$0xff]
        %v613 = vld [vmem:[%s184 + $0x9a8] sm:$0xff]
        %v614 = vld [vmem:[%s184 + $0x9b0] sm:$0xff]
        %v615 = vld [vmem:[%s184 + $0x9b8] sm:$0xff]
        %v616 = vld [vmem:[%s184 + $0x9c0] sm:$0xff]
        %v617 = vld [vmem:[%s184 + $0x9c8] sm:$0xff]
        %v618 = vld [vmem:[%s184 + $0x9d0] sm:$0xff]
        %v619 = vld [vmem:[%s184 + $0x9d8] sm:$0xff]
        %v620 = vld [vmem:[%s184 + $0x9e0] sm:$0xff]
        %v621 = vld [vmem:[%s184 + $0x9e8] sm:$0xff]
        %v622 = vld [vmem:[%s184 + $0x9f0] sm:$0xff]
        %v623 = vld [vmem:[%s184 + $0x9f8] sm:$0xff]
        %v624 = vld [vmem:[%s184 + $0xa00] sm:$0xff]
        %v625 = vld [vmem:[%s184 + $0xa08] sm:$0xff]
        %v626 = vld [vmem:[%s184 + $0xa10] sm:$0xff]
        %v627 = vld [vmem:[%s184 + $0xa18] sm:$0xff]
        %v628 = vld [vmem:[%s184 + $0xa20] sm:$0xff]
        %v629 = vld [vmem:[%s184 + $0xa28] sm:$0xff]
        %v630 = vld [vmem:[%s184 + $0xa30] sm:$0xff]
        %v631 = vld [vmem:[%s184 + $0xa38] sm:$0xff]
        %v632 = vld [vmem:[%s184 + $0xa40] sm:$0xff]
        %v633 = vld [vmem:[%s184 + $0xa48] sm:$0xff]
        %v634 = vld [vmem:[%s184 + $0xa50] sm:$0xff]
        %v635 = vld [vmem:[%s184 + $0xa58] sm:$0xff]
        %v636 = vld [vmem:[%s184 + $0xa60] sm:$0xff]
        %v637 = vld [vmem:[%s184 + $0xa68] sm:$0xff]
        %v638 = vld [vmem:[%s184 + $0xa70] sm:$0xff]
        %v639 = vld [vmem:[%s184 + $0xa78] sm:$0xff]
        %v640 = vld [vmem:[%s184 + $0xa80] sm:$0xff]
        %v641 = vld [vmem:[%s184 + $0xa88] sm:$0xff]
        %v642 = vld [vmem:[%s184 + $0xa90] sm:$0xff]
        %v643 = vld [vmem:[%s184 + $0xa98] sm:$0xff]
        %v644 = vld [vmem:[%s184 + $0xaa0] sm:$0xff]
        %v645 = vld [vmem:[%s184 + $0xaa8] sm:$0xff]
        %v646 = vld [vmem:[%s184 + $0xab0] sm:$0xff]
        %v647 = vld [vmem:[%s184 + $0xab8] sm:$0xff]
        %v648 = vld [vmem:[%s184 + $0xac0] sm:$0xff]
        %v649 = vld [vmem:[%s184 + $0xac8] sm:$0xff]
        %v650 = vld [vmem:[%s184 + $0xad0] sm:$0xff]
        %v651 = vld [vmem:[%s184 + $0xad8] sm:$0xff]
        %v652 = vld [vmem:[%s184 + $0xae0] sm:$0xff]
        %v653 = vld [vmem:[%s184 + $0xae8] sm:$0xff]
        %v654 = vld [vmem:[%s184 + $0xaf0] sm:$0xff]
        %v655 = vld [vmem:[%s184 + $0xaf8] sm:$0xff]
        %v656 = vld [vmem:[%s184 + $0xb00] sm:$0xff]
        %v657 = vld [vmem:[%s184 + $0xb08] sm:$0xff]
        %v658 = vld [vmem:[%s184 + $0xb10] sm:$0xff]
        %v659 = vld [vmem:[%s184 + $0xb18] sm:$0xff]
        %v660 = vld [vmem:[%s184 + $0xb20] sm:$0xff]
        %v661 = vld [vmem:[%s184 + $0xb28] sm:$0xff]
        %v662 = vld [vmem:[%s184 + $0xb30] sm:$0xff]
        %v663 = vld [vmem:[%s184 + $0xb38] sm:$0xff]
        %v664 = vld [vmem:[%s184 + $0xb40] sm:$0xff]
        %v665 = vld [vmem:[%s184 + $0xb48] sm:$0xff]
        %v666 = vld [vmem:[%s184 + $0xb50] sm:$0xff]
        %v667 = vld [vmem:[%s184 + $0xb58] sm:$0xff]
        %v668 = vld [vmem:[%s184 + $0xb60] sm:$0xff]
        %v669 = vld [vmem:[%s184 + $0xb68] sm:$0xff]
        %v670 = vld [vmem:[%s184 + $0xb70] sm:$0xff]
        %v671 = vld [vmem:[%s184 + $0xb78] sm:$0xff]
        %v672 = vld [vmem:[%s184 + $0xb80] sm:$0xff]
        %v673 = vld [vmem:[%s184 + $0xb88] sm:$0xff]
        %v674 = vld [vmem:[%s184 + $0xb90] sm:$0xff]
        %v675 = vld [vmem:[%s184 + $0xb98] sm:$0xff]
        %v676 = vld [vmem:[%s184 + $0xba0] sm:$0xff]
        %v677 = vld [vmem:[%s184 + $0xba8] sm:$0xff]
        %v678 = vld [vmem:[%s184 + $0xbb0] sm:$0xff]
        %v679 = vld [vmem:[%s184 + $0xbb8] sm:$0xff]
        %v680 = vld [vmem:[%s184 + $0xbc0] sm:$0xff]
        %v681 = vld [vmem:[%s184 + $0xbc8] sm:$0xff]
        %v682 = vld [vmem:[%s184 + $0xbd0] sm:$0xff]
        %v683 = vld [vmem:[%s184 + $0xbd8] sm:$0xff]
        %v684 = vld [vmem:[%s184 + $0xbe0] sm:$0xff]
        %v685 = vld [vmem:[%s184 + $0xbe8] sm:$0xff]
        %v686 = vld [vmem:[%s184 + $0xbf0] sm:$0xff]
        %v687 = vld [vmem:[%s184 + $0xbf8] sm:$0xff]
        %v688 = vld [vmem:[%s184 + $0xc00] sm:$0xff]
        %v689 = vld [vmem:[%s184 + $0xc08] sm:$0xff]
        %v690 = vld [vmem:[%s184 + $0xc10] sm:$0xff]
        %v691 = vld [vmem:[%s184 + $0xc18] sm:$0xff]
        %v692 = vld [vmem:[%s184 + $0xc20] sm:$0xff]
        %v693 = vld [vmem:[%s184 + $0xc28] sm:$0xff]
        %v694 = vld [vmem:[%s184 + $0xc30] sm:$0xff]
        %v695 = vld [vmem:[%s184 + $0xc38] sm:$0xff]
        %v696 = vld [vmem:[%s184 + $0xc40] sm:$0xff]
        %v697 = vld [vmem:[%s184 + $0xc48] sm:$0xff]
        %v698 = vld [vmem:[%s184 + $0xc50] sm:$0xff]
        %v699 = vld [vmem:[%s184 + $0xc58] sm:$0xff]
        %v700 = vld [vmem:[%s184 + $0xc60] sm:$0xff]
        %v701 = vld [vmem:[%s184 + $0xc68] sm:$0xff]
        %v702 = vld [vmem:[%s184 + $0xc70] sm:$0xff]
        %v703 = vld [vmem:[%s184 + $0xc78] sm:$0xff]
        %v704 = vld [vmem:[%s184 + $0xc80] sm:$0xff]
        %v705 = vld [vmem:[%s184 + $0xc88] sm:$0xff]
        %v706 = vld [vmem:[%s184 + $0xc90] sm:$0xff]
        %v707 = vld [vmem:[%s184 + $0xc98] sm:$0xff]
        %v708 = vld [vmem:[%s184 + $0xca0] sm:$0xff]
        %v709 = vld [vmem:[%s184 + $0xca8] sm:$0xff]
        %v710 = vld [vmem:[%s184 + $0xcb0] sm:$0xff]
        %v711 = vld [vmem:[%s184 + $0xcb8] sm:$0xff]
        %v712 = vld [vmem:[%s184 + $0xcc0] sm:$0xff]
        %v713 = vld [vmem:[%s184 + $0xcc8] sm:$0xff]
        %v714 = vld [vmem:[%s184 + $0xcd0] sm:$0xff]
        %v715 = vld [vmem:[%s184 + $0xcd8] sm:$0xff]
        %v716 = vld [vmem:[%s184 + $0xce0] sm:$0xff]
        %v717 = vld [vmem:[%s184 + $0xce8] sm:$0xff]
        %v718 = vld [vmem:[%s184 + $0xcf0] sm:$0xff]
        %v719 = vld [vmem:[%s184 + $0xcf8] sm:$0xff]
        %v720 = vld [vmem:[%s184 + $0xd00] sm:$0xff]
        %v721 = vld [vmem:[%s184 + $0xd08] sm:$0xff]
        %v722 = vld [vmem:[%s184 + $0xd10] sm:$0xff]
        %v723 = vld [vmem:[%s184 + $0xd18] sm:$0xff]
        %v724 = vld [vmem:[%s184 + $0xd20] sm:$0xff]
        %v725 = vld [vmem:[%s184 + $0xd28] sm:$0xff]
        %v726 = vld [vmem:[%s184 + $0xd30] sm:$0xff]
        %v727 = vld [vmem:[%s184 + $0xd38] sm:$0xff]
        %v728 = vld [vmem:[%s184 + $0xd40] sm:$0xff]
        %v729 = vld [vmem:[%s184 + $0xd48] sm:$0xff]
        %v730 = vld [vmem:[%s184 + $0xd50] sm:$0xff]
        %v731 = vld [vmem:[%s184 + $0xd58] sm:$0xff]
        %v732 = vld [vmem:[%s184 + $0xd60] sm:$0xff]
        %v733 = vld [vmem:[%s184 + $0xd68] sm:$0xff]
        %v734 = vld [vmem:[%s184 + $0xd70] sm:$0xff]
        %v735 = vld [vmem:[%s184 + $0xd78] sm:$0xff]
        %v736 = vld [vmem:[%s184 + $0xd80] sm:$0xff]
        %v737 = vld [vmem:[%s184 + $0xd88] sm:$0xff]
        %v738 = vld [vmem:[%s184 + $0xd90] sm:$0xff]
        %v739 = vld [vmem:[%s184 + $0xd98] sm:$0xff]
        %v740 = vld [vmem:[%s184 + $0xda0] sm:$0xff]
        %v741 = vld [vmem:[%s184 + $0xda8] sm:$0xff]
        %v742 = vld [vmem:[%s184 + $0xdb0] sm:$0xff]
        %v743 = vld [vmem:[%s184 + $0xdb8] sm:$0xff]
        %v744 = vld [vmem:[%s184 + $0xdc0] sm:$0xff]
        %v745 = vld [vmem:[%s184 + $0xdc8] sm:$0xff]
        %v746 = vld [vmem:[%s184 + $0xdd0] sm:$0xff]
        %v747 = vld [vmem:[%s184 + $0xdd8] sm:$0xff]
        %v748 = vld [vmem:[%s184 + $0xde0] sm:$0xff]
        %v749 = vld [vmem:[%s184 + $0xde8] sm:$0xff]
        %v750 = vld [vmem:[%s184 + $0xdf0] sm:$0xff]
        %v751 = vld [vmem:[%s184 + $0xdf8] sm:$0xff]
        %v752 = vld [vmem:[%s184 + $0xe00] sm:$0xff]
        %v753 = vld [vmem:[%s184 + $0xe08] sm:$0xff]
        %v754 = vld [vmem:[%s184 + $0xe10] sm:$0xff]
        %v755 = vld [vmem:[%s184 + $0xe18] sm:$0xff]
        %v756 = vld [vmem:[%s184 + $0xe20] sm:$0xff]
        %v757 = vld [vmem:[%s184 + $0xe28] sm:$0xff]
        %v758 = vld [vmem:[%s184 + $0xe30] sm:$0xff]
        %v759 = vld [vmem:[%s184 + $0xe38] sm:$0xff]
        %v760 = vld [vmem:[%s184 + $0xe40] sm:$0xff]
        %v761 = vld [vmem:[%s184 + $0xe48] sm:$0xff]
        %v762 = vld [vmem:[%s184 + $0xe50] sm:$0xff]
        %v763 = vld [vmem:[%s184 + $0xe58] sm:$0xff]
        %v764 = vld [vmem:[%s184 + $0xe60] sm:$0xff]
        %v765 = vld [vmem:[%s184 + $0xe68] sm:$0xff]
        %v766 = vld [vmem:[%s184 + $0xe70] sm:$0xff]
        %v767 = vld [vmem:[%s184 + $0xe78] sm:$0xff]
        %v768 = vld [vmem:[%s184 + $0xe80] sm:$0xff]
        %v769 = vld [vmem:[%s184 + $0xe88] sm:$0xff]
        %v770 = vld [vmem:[%s184 + $0xe90] sm:$0xff]
        %v771 = vld [vmem:[%s184 + $0xe98] sm:$0xff]
        %v772 = vld [vmem:[%s184 + $0xea0] sm:$0xff]
        %v773 = vld [vmem:[%s184 + $0xea8] sm:$0xff]
        %v774 = vld [vmem:[%s184 + $0xeb0] sm:$0xff]
        %v775 = vld [vmem:[%s184 + $0xeb8] sm:$0xff]
        %v776 = vld [vmem:[%s184 + $0xec0] sm:$0xff]
        %v777 = vld [vmem:[%s184 + $0xec8] sm:$0xff]
        %v778 = vld [vmem:[%s184 + $0xed0] sm:$0xff]
        %v779 = vld [vmem:[%s184 + $0xed8] sm:$0xff]
        %v780 = vld [vmem:[%s184 + $0xee0] sm:$0xff]
        %v781 = vld [vmem:[%s184 + $0xee8] sm:$0xff]
        %v782 = vld [vmem:[%s184 + $0xef0] sm:$0xff]
        %v783 = vld [vmem:[%s184 + $0xef8] sm:$0xff]
        %v784 = vld [vmem:[%s184 + $0xf00] sm:$0xff]
        %v785 = vld [vmem:[%s184 + $0xf08] sm:$0xff]
        %v786 = vld [vmem:[%s184 + $0xf10] sm:$0xff]
        %v787 = vld [vmem:[%s184 + $0xf18] sm:$0xff]
        %v788 = vld [vmem:[%s184 + $0xf20] sm:$0xff]
        %v789 = vld [vmem:[%s184 + $0xf28] sm:$0xff]
        %v790 = vld [vmem:[%s184 + $0xf30] sm:$0xff]
        %v791 = vld [vmem:[%s184 + $0xf38] sm:$0xff]
        %v792 = vld [vmem:[%s184 + $0xf40] sm:$0xff]
        %v793 = vld [vmem:[%s184 + $0xf48] sm:$0xff]
        %v794 = vld [vmem:[%s184 + $0xf50] sm:$0xff]
        %v795 = vld [vmem:[%s184 + $0xf58] sm:$0xff]
        %v796 = vld [vmem:[%s184 + $0xf60] sm:$0xff]
        %v797 = vld [vmem:[%s184 + $0xf68] sm:$0xff]
        %v798 = vld [vmem:[%s184 + $0xf70] sm:$0xff]
        %v799 = vld [vmem:[%s184 + $0xf78] sm:$0xff]
        %v800 = vld [vmem:[%s184 + $0xf80] sm:$0xff]
        %v801 = vld [vmem:[%s184 + $0xf88] sm:$0xff]
        %v802 = vld [vmem:[%s184 + $0xf90] sm:$0xff]
        %v803 = vld [vmem:[%s184 + $0xf98] sm:$0xff]
        %v804 = vld [vmem:[%s184 + $0xfa0] sm:$0xff]
        %v805 = vld [vmem:[%s184 + $0xfa8] sm:$0xff]
        %v806 = vld [vmem:[%s184 + $0xfb0] sm:$0xff]
        %v807 = vld [vmem:[%s184 + $0xfb8] sm:$0xff]
        %v808 = vld [vmem:[%s184 + $0xfc0] sm:$0xff]
        %v809 = vld [vmem:[%s184 + $0xfc8] sm:$0xff]
        %v810 = vld [vmem:[%s184 + $0xfd0] sm:$0xff]
        %v811 = vld [vmem:[%s184 + $0xfd8] sm:$0xff]
        %v812 = vld [vmem:[%s184 + $0xfe0] sm:$0xff]
        %v813 = vld [vmem:[%s184 + $0xfe8] sm:$0xff]
        %v814 = vld [vmem:[%s184 + $0xff0] sm:$0xff]
        %v815 = vld [vmem:[%s184 + $0xff8] sm:$0xff]
        %v1328 = vunpack.c.l.b16 %v304
        %v1329 = vunpack.c.h.b16 %v304
        %v1330 = vunpack.c.l.b16 %v305
        %v1331 = vunpack.c.h.b16 %v305
        %v1332 = vunpack.c.l.b16 %v306
        %v1333 = vunpack.c.h.b16 %v306
        %v1334 = vunpack.c.l.b16 %v307
        %v1335 = vunpack.c.h.b16 %v307
        %v1336 = vunpack.c.l.b16 %v308
        %v1337 = vunpack.c.h.b16 %v308
        %v1338 = vunpack.c.l.b16 %v309
        %v1339 = vunpack.c.h.b16 %v309
        %v1340 = vunpack.c.l.b16 %v310
        %v1341 = vunpack.c.h.b16 %v310
        %v1342 = vunpack.c.l.b16 %v311
        %v1343 = vunpack.c.h.b16 %v311
        %v1344 = vunpack.c.l.b16 %v312
        %v1345 = vunpack.c.h.b16 %v312
        %v1346 = vunpack.c.l.b16 %v313
        %v1347 = vunpack.c.h.b16 %v313
        %v1348 = vunpack.c.l.b16 %v314
        %v1349 = vunpack.c.h.b16 %v314
        %v1350 = vunpack.c.l.b16 %v315
        %v1351 = vunpack.c.h.b16 %v315
        %v1352 = vunpack.c.l.b16 %v316
        %v1353 = vunpack.c.h.b16 %v316
        %v1354 = vunpack.c.l.b16 %v317
        %v1355 = vunpack.c.h.b16 %v317
        %v1356 = vunpack.c.l.b16 %v318
        %v1357 = vunpack.c.h.b16 %v318
        %v1358 = vunpack.c.l.b16 %v319
        %v1359 = vunpack.c.h.b16 %v319
        %v1360 = vunpack.c.l.b16 %v320
        %v1361 = vunpack.c.h.b16 %v320
        %v1362 = vunpack.c.l.b16 %v321
        %v1363 = vunpack.c.h.b16 %v321
        %v1364 = vunpack.c.l.b16 %v322
        %v1365 = vunpack.c.h.b16 %v322
        %v1366 = vunpack.c.l.b16 %v323
        %v1367 = vunpack.c.h.b16 %v323
        %v1368 = vunpack.c.l.b16 %v324
        %v1369 = vunpack.c.h.b16 %v324
        %v1370 = vunpack.c.l.b16 %v325
        %v1371 = vunpack.c.h.b16 %v325
        %v1372 = vunpack.c.l.b16 %v326
        %v1373 = vunpack.c.h.b16 %v326
        %v1374 = vunpack.c.l.b16 %v327
        %v1375 = vunpack.c.h.b16 %v327
        %v1376 = vunpack.c.l.b16 %v328
        %v1377 = vunpack.c.h.b16 %v328
        %v1378 = vunpack.c.l.b16 %v329
        %v1379 = vunpack.c.h.b16 %v329
        %v1380 = vunpack.c.l.b16 %v330
        %v1381 = vunpack.c.h.b16 %v330
        %v1382 = vunpack.c.l.b16 %v331
        %v1383 = vunpack.c.h.b16 %v331
        %v1384 = vunpack.c.l.b16 %v332
        %v1385 = vunpack.c.h.b16 %v332
        %v1386 = vunpack.c.l.b16 %v333
        %v1387 = vunpack.c.h.b16 %v333
        %v1388 = vunpack.c.l.b16 %v334
        %v1389 = vunpack.c.h.b16 %v334
        %v1390 = vunpack.c.l.b16 %v335
        %v1391 = vunpack.c.h.b16 %v335
        %v1392 = vunpack.c.l.b16 %v336
        %v1393 = vunpack.c.h.b16 %v336
        %v1394 = vunpack.c.l.b16 %v337
        %v1395 = vunpack.c.h.b16 %v337
        %v1396 = vunpack.c.l.b16 %v338
        %v1397 = vunpack.c.h.b16 %v338
        %v1398 = vunpack.c.l.b16 %v339
        %v1399 = vunpack.c.h.b16 %v339
        %v1400 = vunpack.c.l.b16 %v340
        %v1401 = vunpack.c.h.b16 %v340
        %v1402 = vunpack.c.l.b16 %v341
        %v1403 = vunpack.c.h.b16 %v341
        %v1404 = vunpack.c.l.b16 %v342
        %v1405 = vunpack.c.h.b16 %v342
        %v1406 = vunpack.c.l.b16 %v343
        %v1407 = vunpack.c.h.b16 %v343
        %v1408 = vunpack.c.l.b16 %v344
        %v1409 = vunpack.c.h.b16 %v344
        %v1410 = vunpack.c.l.b16 %v345
        %v1411 = vunpack.c.h.b16 %v345
        %v1412 = vunpack.c.l.b16 %v346
        %v1413 = vunpack.c.h.b16 %v346
        %v1414 = vunpack.c.l.b16 %v347
        %v1415 = vunpack.c.h.b16 %v347
        %v1416 = vunpack.c.l.b16 %v348
        %v1417 = vunpack.c.h.b16 %v348
        %v1418 = vunpack.c.l.b16 %v349
        %v1419 = vunpack.c.h.b16 %v349
        %v1420 = vunpack.c.l.b16 %v350
        %v1421 = vunpack.c.h.b16 %v350
        %v1422 = vunpack.c.l.b16 %v351
        %v1423 = vunpack.c.h.b16 %v351
        %v1424 = vunpack.c.l.b16 %v352
        %v1425 = vunpack.c.h.b16 %v352
        %v1426 = vunpack.c.l.b16 %v353
        %v1427 = vunpack.c.h.b16 %v353
        %v1428 = vunpack.c.l.b16 %v354
        %v1429 = vunpack.c.h.b16 %v354
        %v1430 = vunpack.c.l.b16 %v355
        %v1431 = vunpack.c.h.b16 %v355
        %v1432 = vunpack.c.l.b16 %v356
        %v1433 = vunpack.c.h.b16 %v356
        %v1434 = vunpack.c.l.b16 %v357
        %v1435 = vunpack.c.h.b16 %v357
        %v1436 = vunpack.c.l.b16 %v358
        %v1437 = vunpack.c.h.b16 %v358
        %v1438 = vunpack.c.l.b16 %v359
        %v1439 = vunpack.c.h.b16 %v359
        %v1440 = vunpack.c.l.b16 %v360
        %v1441 = vunpack.c.h.b16 %v360
        %v1442 = vunpack.c.l.b16 %v361
        %v1443 = vunpack.c.h.b16 %v361
        %v1444 = vunpack.c.l.b16 %v362
        %v1445 = vunpack.c.h.b16 %v362
        %v1446 = vunpack.c.l.b16 %v363
        %v1447 = vunpack.c.h.b16 %v363
        %v1448 = vunpack.c.l.b16 %v364
        %v1449 = vunpack.c.h.b16 %v364
        %v1450 = vunpack.c.l.b16 %v365
        %v1451 = vunpack.c.h.b16 %v365
        %v1452 = vunpack.c.l.b16 %v366
        %v1453 = vunpack.c.h.b16 %v366
        %v1454 = vunpack.c.l.b16 %v367
        %v1455 = vunpack.c.h.b16 %v367
        %v1456 = vunpack.c.l.b16 %v368
        %v1457 = vunpack.c.h.b16 %v368
        %v1458 = vunpack.c.l.b16 %v369
        %v1459 = vunpack.c.h.b16 %v369
        %v1460 = vunpack.c.l.b16 %v370
        %v1461 = vunpack.c.h.b16 %v370
        %v1462 = vunpack.c.l.b16 %v371
        %v1463 = vunpack.c.h.b16 %v371
        %v1464 = vunpack.c.l.b16 %v372
        %v1465 = vunpack.c.h.b16 %v372
        %v1466 = vunpack.c.l.b16 %v373
        %v1467 = vunpack.c.h.b16 %v373
        %v1468 = vunpack.c.l.b16 %v374
        %v1469 = vunpack.c.h.b16 %v374
        %v1470 = vunpack.c.l.b16 %v375
        %v1471 = vunpack.c.h.b16 %v375
        %v1472 = vunpack.c.l.b16 %v376
        %v1473 = vunpack.c.h.b16 %v376
        %v1474 = vunpack.c.l.b16 %v377
        %v1475 = vunpack.c.h.b16 %v377
        %v1476 = vunpack.c.l.b16 %v378
        %v1477 = vunpack.c.h.b16 %v378
        %v1478 = vunpack.c.l.b16 %v379
        %v1479 = vunpack.c.h.b16 %v379
        %v1480 = vunpack.c.l.b16 %v380
        %v1481 = vunpack.c.h.b16 %v380
        %v1482 = vunpack.c.l.b16 %v381
        %v1483 = vunpack.c.h.b16 %v381
        %v1484 = vunpack.c.l.b16 %v382
        %v1485 = vunpack.c.h.b16 %v382
        %v1486 = vunpack.c.l.b16 %v383
        %v1487 = vunpack.c.h.b16 %v383
        %v1488 = vunpack.c.l.b16 %v384
        %v1489 = vunpack.c.h.b16 %v384
        %v1490 = vunpack.c.l.b16 %v385
        %v1491 = vunpack.c.h.b16 %v385
        %v1492 = vunpack.c.l.b16 %v386
        %v1493 = vunpack.c.h.b16 %v386
        %v1494 = vunpack.c.l.b16 %v387
        %v1495 = vunpack.c.h.b16 %v387
        %v1496 = vunpack.c.l.b16 %v388
        %v1497 = vunpack.c.h.b16 %v388
        %v1498 = vunpack.c.l.b16 %v389
        %v1499 = vunpack.c.h.b16 %v389
        %v1500 = vunpack.c.l.b16 %v390
        %v1501 = vunpack.c.h.b16 %v390
        %v1502 = vunpack.c.l.b16 %v391
        %v1503 = vunpack.c.h.b16 %v391
        %v1504 = vunpack.c.l.b16 %v392
        %v1505 = vunpack.c.h.b16 %v392
        %v1506 = vunpack.c.l.b16 %v393
        %v1507 = vunpack.c.h.b16 %v393
        %v1508 = vunpack.c.l.b16 %v394
        %v1509 = vunpack.c.h.b16 %v394
        %v1510 = vunpack.c.l.b16 %v395
        %v1511 = vunpack.c.h.b16 %v395
        %v1512 = vunpack.c.l.b16 %v396
        %v1513 = vunpack.c.h.b16 %v396
        %v1514 = vunpack.c.l.b16 %v397
        %v1515 = vunpack.c.h.b16 %v397
        %v1516 = vunpack.c.l.b16 %v398
        %v1517 = vunpack.c.h.b16 %v398
        %v1518 = vunpack.c.l.b16 %v399
        %v1519 = vunpack.c.h.b16 %v399
        %v1520 = vunpack.c.l.b16 %v400
        %v1521 = vunpack.c.h.b16 %v400
        %v1522 = vunpack.c.l.b16 %v401
        %v1523 = vunpack.c.h.b16 %v401
        %v1524 = vunpack.c.l.b16 %v402
        %v1525 = vunpack.c.h.b16 %v402
        %v1526 = vunpack.c.l.b16 %v403
        %v1527 = vunpack.c.h.b16 %v403
        %v1528 = vunpack.c.l.b16 %v404
        %v1529 = vunpack.c.h.b16 %v404
        %v1530 = vunpack.c.l.b16 %v405
        %v1531 = vunpack.c.h.b16 %v405
        %v1532 = vunpack.c.l.b16 %v406
        %v1533 = vunpack.c.h.b16 %v406
        %v1534 = vunpack.c.l.b16 %v407
        %v1535 = vunpack.c.h.b16 %v407
        %v1536 = vunpack.c.l.b16 %v408
        %v1537 = vunpack.c.h.b16 %v408
        %v1538 = vunpack.c.l.b16 %v409
        %v1539 = vunpack.c.h.b16 %v409
        %v1540 = vunpack.c.l.b16 %v410
        %v1541 = vunpack.c.h.b16 %v410
        %v1542 = vunpack.c.l.b16 %v411
        %v1543 = vunpack.c.h.b16 %v411
        %v1544 = vunpack.c.l.b16 %v412
        %v1545 = vunpack.c.h.b16 %v412
        %v1546 = vunpack.c.l.b16 %v413
        %v1547 = vunpack.c.h.b16 %v413
        %v1548 = vunpack.c.l.b16 %v414
        %v1549 = vunpack.c.h.b16 %v414
        %v1550 = vunpack.c.l.b16 %v415
        %v1551 = vunpack.c.h.b16 %v415
        %v1552 = vunpack.c.l.b16 %v416
        %v1553 = vunpack.c.h.b16 %v416
        %v1554 = vunpack.c.l.b16 %v417
        %v1555 = vunpack.c.h.b16 %v417
        %v1556 = vunpack.c.l.b16 %v418
        %v1557 = vunpack.c.h.b16 %v418
        %v1558 = vunpack.c.l.b16 %v419
        %v1559 = vunpack.c.h.b16 %v419
        %v1560 = vunpack.c.l.b16 %v420
        %v1561 = vunpack.c.h.b16 %v420
        %v1562 = vunpack.c.l.b16 %v421
        %v1563 = vunpack.c.h.b16 %v421
        %v1564 = vunpack.c.l.b16 %v422
        %v1565 = vunpack.c.h.b16 %v422
        %v1566 = vunpack.c.l.b16 %v423
        %v1567 = vunpack.c.h.b16 %v423
        %v1568 = vunpack.c.l.b16 %v424
        %v1569 = vunpack.c.h.b16 %v424
        %v1570 = vunpack.c.l.b16 %v425
        %v1571 = vunpack.c.h.b16 %v425
        %v1572 = vunpack.c.l.b16 %v426
        %v1573 = vunpack.c.h.b16 %v426
        %v1574 = vunpack.c.l.b16 %v427
        %v1575 = vunpack.c.h.b16 %v427
        %v1576 = vunpack.c.l.b16 %v428
        %v1577 = vunpack.c.h.b16 %v428
        %v1578 = vunpack.c.l.b16 %v429
        %v1579 = vunpack.c.h.b16 %v429
        %v1580 = vunpack.c.l.b16 %v430
        %v1581 = vunpack.c.h.b16 %v430
        %v1582 = vunpack.c.l.b16 %v431
        %v1583 = vunpack.c.h.b16 %v431
        %v1584 = vunpack.c.l.b16 %v432
        %v1585 = vunpack.c.h.b16 %v432
        %v1586 = vunpack.c.l.b16 %v433
        %v1587 = vunpack.c.h.b16 %v433
        %v1588 = vunpack.c.l.b16 %v434
        %v1589 = vunpack.c.h.b16 %v434
        %v1590 = vunpack.c.l.b16 %v435
        %v1591 = vunpack.c.h.b16 %v435
        %v1592 = vunpack.c.l.b16 %v436
        %v1593 = vunpack.c.h.b16 %v436
        %v1594 = vunpack.c.l.b16 %v437
        %v1595 = vunpack.c.h.b16 %v437
        %v1596 = vunpack.c.l.b16 %v438
        %v1597 = vunpack.c.h.b16 %v438
        %v1598 = vunpack.c.l.b16 %v439
        %v1599 = vunpack.c.h.b16 %v439
        %v1600 = vunpack.c.l.b16 %v440
        %v1601 = vunpack.c.h.b16 %v440
        %v1602 = vunpack.c.l.b16 %v441
        %v1603 = vunpack.c.h.b16 %v441
        %v1604 = vunpack.c.l.b16 %v442
        %v1605 = vunpack.c.h.b16 %v442
        %v1606 = vunpack.c.l.b16 %v443
        %v1607 = vunpack.c.h.b16 %v443
        %v1608 = vunpack.c.l.b16 %v444
        %v1609 = vunpack.c.h.b16 %v444
        %v1610 = vunpack.c.l.b16 %v445
        %v1611 = vunpack.c.h.b16 %v445
        %v1612 = vunpack.c.l.b16 %v446
        %v1613 = vunpack.c.h.b16 %v446
        %v1614 = vunpack.c.l.b16 %v447
        %v1615 = vunpack.c.h.b16 %v447
        %v1616 = vunpack.c.l.b16 %v448
        %v1617 = vunpack.c.h.b16 %v448
        %v1618 = vunpack.c.l.b16 %v449
        %v1619 = vunpack.c.h.b16 %v449
        %v1620 = vunpack.c.l.b16 %v450
        %v1621 = vunpack.c.h.b16 %v450
        %v1622 = vunpack.c.l.b16 %v451
        %v1623 = vunpack.c.h.b16 %v451
        %v1624 = vunpack.c.l.b16 %v452
        %v1625 = vunpack.c.h.b16 %v452
        %v1626 = vunpack.c.l.b16 %v453
        %v1627 = vunpack.c.h.b16 %v453
        %v1628 = vunpack.c.l.b16 %v454
        %v1629 = vunpack.c.h.b16 %v454
        %v1630 = vunpack.c.l.b16 %v455
        %v1631 = vunpack.c.h.b16 %v455
        %v1632 = vunpack.c.l.b16 %v456
        %v1633 = vunpack.c.h.b16 %v456
        %v1634 = vunpack.c.l.b16 %v457
        %v1635 = vunpack.c.h.b16 %v457
        %v1636 = vunpack.c.l.b16 %v458
        %v1637 = vunpack.c.h.b16 %v458
        %v1638 = vunpack.c.l.b16 %v459
        %v1639 = vunpack.c.h.b16 %v459
        %v1640 = vunpack.c.l.b16 %v460
        %v1641 = vunpack.c.h.b16 %v460
        %v1642 = vunpack.c.l.b16 %v461
        %v1643 = vunpack.c.h.b16 %v461
        %v1644 = vunpack.c.l.b16 %v462
        %v1645 = vunpack.c.h.b16 %v462
        %v1646 = vunpack.c.l.b16 %v463
        %v1647 = vunpack.c.h.b16 %v463
        %v1648 = vunpack.c.l.b16 %v464
        %v1649 = vunpack.c.h.b16 %v464
        %v1650 = vunpack.c.l.b16 %v465
        %v1651 = vunpack.c.h.b16 %v465
        %v1652 = vunpack.c.l.b16 %v466
        %v1653 = vunpack.c.h.b16 %v466
        %v1654 = vunpack.c.l.b16 %v467
        %v1655 = vunpack.c.h.b16 %v467
        %v1656 = vunpack.c.l.b16 %v468
        %v1657 = vunpack.c.h.b16 %v468
        %v1658 = vunpack.c.l.b16 %v469
        %v1659 = vunpack.c.h.b16 %v469
        %v1660 = vunpack.c.l.b16 %v470
        %v1661 = vunpack.c.h.b16 %v470
        %v1662 = vunpack.c.l.b16 %v471
        %v1663 = vunpack.c.h.b16 %v471
        %v1664 = vunpack.c.l.b16 %v472
        %v1665 = vunpack.c.h.b16 %v472
        %v1666 = vunpack.c.l.b16 %v473
        %v1667 = vunpack.c.h.b16 %v473
        %v1668 = vunpack.c.l.b16 %v474
        %v1669 = vunpack.c.h.b16 %v474
        %v1670 = vunpack.c.l.b16 %v475
        %v1671 = vunpack.c.h.b16 %v475
        %v1672 = vunpack.c.l.b16 %v476
        %v1673 = vunpack.c.h.b16 %v476
        %v1674 = vunpack.c.l.b16 %v477
        %v1675 = vunpack.c.h.b16 %v477
        %v1676 = vunpack.c.l.b16 %v478
        %v1677 = vunpack.c.h.b16 %v478
        %v1678 = vunpack.c.l.b16 %v479
        %v1679 = vunpack.c.h.b16 %v479
        %v1680 = vunpack.c.l.b16 %v480
        %v1681 = vunpack.c.h.b16 %v480
        %v1682 = vunpack.c.l.b16 %v481
        %v1683 = vunpack.c.h.b16 %v481
        %v1684 = vunpack.c.l.b16 %v482
        %v1685 = vunpack.c.h.b16 %v482
        %v1686 = vunpack.c.l.b16 %v483
        %v1687 = vunpack.c.h.b16 %v483
        %v1688 = vunpack.c.l.b16 %v484
        %v1689 = vunpack.c.h.b16 %v484
        %v1690 = vunpack.c.l.b16 %v485
        %v1691 = vunpack.c.h.b16 %v485
        %v1692 = vunpack.c.l.b16 %v486
        %v1693 = vunpack.c.h.b16 %v486
        %v1694 = vunpack.c.l.b16 %v487
        %v1695 = vunpack.c.h.b16 %v487
        %v1696 = vunpack.c.l.b16 %v488
        %v1697 = vunpack.c.h.b16 %v488
        %v1698 = vunpack.c.l.b16 %v489
        %v1699 = vunpack.c.h.b16 %v489
        %v1700 = vunpack.c.l.b16 %v490
        %v1701 = vunpack.c.h.b16 %v490
        %v1702 = vunpack.c.l.b16 %v491
        %v1703 = vunpack.c.h.b16 %v491
        %v1704 = vunpack.c.l.b16 %v492
        %v1705 = vunpack.c.h.b16 %v492
        %v1706 = vunpack.c.l.b16 %v493
        %v1707 = vunpack.c.h.b16 %v493
        %v1708 = vunpack.c.l.b16 %v494
        %v1709 = vunpack.c.h.b16 %v494
        %v1710 = vunpack.c.l.b16 %v495
        %v1711 = vunpack.c.h.b16 %v495
        %v1712 = vunpack.c.l.b16 %v496
        %v1713 = vunpack.c.h.b16 %v496
        %v1714 = vunpack.c.l.b16 %v497
        %v1715 = vunpack.c.h.b16 %v497
        %v1716 = vunpack.c.l.b16 %v498
        %v1717 = vunpack.c.h.b16 %v498
        %v1718 = vunpack.c.l.b16 %v499
        %v1719 = vunpack.c.h.b16 %v499
        %v1720 = vunpack.c.l.b16 %v500
        %v1721 = vunpack.c.h.b16 %v500
        %v1722 = vunpack.c.l.b16 %v501
        %v1723 = vunpack.c.h.b16 %v501
        %v1724 = vunpack.c.l.b16 %v502
        %v1725 = vunpack.c.h.b16 %v502
        %v1726 = vunpack.c.l.b16 %v503
        %v1727 = vunpack.c.h.b16 %v503
        %v1728 = vunpack.c.l.b16 %v504
        %v1729 = vunpack.c.h.b16 %v504
        %v1730 = vunpack.c.l.b16 %v505
        %v1731 = vunpack.c.h.b16 %v505
        %v1732 = vunpack.c.l.b16 %v506
        %v1733 = vunpack.c.h.b16 %v506
        %v1734 = vunpack.c.l.b16 %v507
        %v1735 = vunpack.c.h.b16 %v507
        %v1736 = vunpack.c.l.b16 %v508
        %v1737 = vunpack.c.h.b16 %v508
        %v1738 = vunpack.c.l.b16 %v509
        %v1739 = vunpack.c.h.b16 %v509
        %v1740 = vunpack.c.l.b16 %v510
        %v1741 = vunpack.c.h.b16 %v510
        %v1742 = vunpack.c.l.b16 %v511
        %v1743 = vunpack.c.h.b16 %v511
        %v1744 = vunpack.c.l.b16 %v512
        %v1745 = vunpack.c.h.b16 %v512
        %v1746 = vunpack.c.l.b16 %v513
        %v1747 = vunpack.c.h.b16 %v513
        %v1748 = vunpack.c.l.b16 %v514
        %v1749 = vunpack.c.h.b16 %v514
        %v1750 = vunpack.c.l.b16 %v515
        %v1751 = vunpack.c.h.b16 %v515
        %v1752 = vunpack.c.l.b16 %v516
        %v1753 = vunpack.c.h.b16 %v516
        %v1754 = vunpack.c.l.b16 %v517
        %v1755 = vunpack.c.h.b16 %v517
        %v1756 = vunpack.c.l.b16 %v518
        %v1757 = vunpack.c.h.b16 %v518
        %v1758 = vunpack.c.l.b16 %v519
        %v1759 = vunpack.c.h.b16 %v519
        %v1760 = vunpack.c.l.b16 %v520
        %v1761 = vunpack.c.h.b16 %v520
        %v1762 = vunpack.c.l.b16 %v521
        %v1763 = vunpack.c.h.b16 %v521
        %v1764 = vunpack.c.l.b16 %v522
        %v1765 = vunpack.c.h.b16 %v522
        %v1766 = vunpack.c.l.b16 %v523
        %v1767 = vunpack.c.h.b16 %v523
        %v1768 = vunpack.c.l.b16 %v524
        %v1769 = vunpack.c.h.b16 %v524
        %v1770 = vunpack.c.l.b16 %v525
        %v1771 = vunpack.c.h.b16 %v525
        %v1772 = vunpack.c.l.b16 %v526
        %v1773 = vunpack.c.h.b16 %v526
        %v1774 = vunpack.c.l.b16 %v527
        %v1775 = vunpack.c.h.b16 %v527
        %v1776 = vunpack.c.l.b16 %v528
        %v1777 = vunpack.c.h.b16 %v528
        %v1778 = vunpack.c.l.b16 %v529
        %v1779 = vunpack.c.h.b16 %v529
        %v1780 = vunpack.c.l.b16 %v530
        %v1781 = vunpack.c.h.b16 %v530
        %v1782 = vunpack.c.l.b16 %v531
        %v1783 = vunpack.c.h.b16 %v531
        %v1784 = vunpack.c.l.b16 %v532
        %v1785 = vunpack.c.h.b16 %v532
        %v1786 = vunpack.c.l.b16 %v533
        %v1787 = vunpack.c.h.b16 %v533
        %v1788 = vunpack.c.l.b16 %v534
        %v1789 = vunpack.c.h.b16 %v534
        %v1790 = vunpack.c.l.b16 %v535
        %v1791 = vunpack.c.h.b16 %v535
        %v1792 = vunpack.c.l.b16 %v536
        %v1793 = vunpack.c.h.b16 %v536
        %v1794 = vunpack.c.l.b16 %v537
        %v1795 = vunpack.c.h.b16 %v537
        %v1796 = vunpack.c.l.b16 %v538
        %v1797 = vunpack.c.h.b16 %v538
        %v1798 = vunpack.c.l.b16 %v539
        %v1799 = vunpack.c.h.b16 %v539
        %v1800 = vunpack.c.l.b16 %v540
        %v1801 = vunpack.c.h.b16 %v540
        %v1802 = vunpack.c.l.b16 %v541
        %v1803 = vunpack.c.h.b16 %v541
        %v1804 = vunpack.c.l.b16 %v542
        %v1805 = vunpack.c.h.b16 %v542
        %v1806 = vunpack.c.l.b16 %v543
        %v1807 = vunpack.c.h.b16 %v543
        %v1808 = vunpack.c.l.b16 %v544
        %v1809 = vunpack.c.h.b16 %v544
        %v1810 = vunpack.c.l.b16 %v545
        %v1811 = vunpack.c.h.b16 %v545
        %v1812 = vunpack.c.l.b16 %v546
        %v1813 = vunpack.c.h.b16 %v546
        %v1814 = vunpack.c.l.b16 %v547
        %v1815 = vunpack.c.h.b16 %v547
        %v1816 = vunpack.c.l.b16 %v548
        %v1817 = vunpack.c.h.b16 %v548
        %v1818 = vunpack.c.l.b16 %v549
        %v1819 = vunpack.c.h.b16 %v549
        %v1820 = vunpack.c.l.b16 %v550
        %v1821 = vunpack.c.h.b16 %v550
        %v1822 = vunpack.c.l.b16 %v551
        %v1823 = vunpack.c.h.b16 %v551
        %v1824 = vunpack.c.l.b16 %v552
        %v1825 = vunpack.c.h.b16 %v552
        %v1826 = vunpack.c.l.b16 %v553
        %v1827 = vunpack.c.h.b16 %v553
        %v1828 = vunpack.c.l.b16 %v554
        %v1829 = vunpack.c.h.b16 %v554
        %v1830 = vunpack.c.l.b16 %v555
        %v1831 = vunpack.c.h.b16 %v555
        %v1832 = vunpack.c.l.b16 %v556
        %v1833 = vunpack.c.h.b16 %v556
        %v1834 = vunpack.c.l.b16 %v557
        %v1835 = vunpack.c.h.b16 %v557
        %v1836 = vunpack.c.l.b16 %v558
        %v1837 = vunpack.c.h.b16 %v558
        %v1838 = vunpack.c.l.b16 %v559
        %v1839 = vunpack.c.h.b16 %v559
        %v1840 = vunpack.c.l.b16 %v560
        %v1841 = vunpack.c.h.b16 %v560
        %v1842 = vunpack.c.l.b16 %v561
        %v1843 = vunpack.c.h.b16 %v561
        %v1844 = vunpack.c.l.b16 %v562
        %v1845 = vunpack.c.h.b16 %v562
        %v1846 = vunpack.c.l.b16 %v563
        %v1847 = vunpack.c.h.b16 %v563
        %v1848 = vunpack.c.l.b16 %v564
        %v1849 = vunpack.c.h.b16 %v564
        %v1850 = vunpack.c.l.b16 %v565
        %v1851 = vunpack.c.h.b16 %v565
        %v1852 = vunpack.c.l.b16 %v566
        %v1853 = vunpack.c.h.b16 %v566
        %v1854 = vunpack.c.l.b16 %v567
        %v1855 = vunpack.c.h.b16 %v567
        %v1856 = vunpack.c.l.b16 %v568
        %v1857 = vunpack.c.h.b16 %v568
        %v1858 = vunpack.c.l.b16 %v569
        %v1859 = vunpack.c.h.b16 %v569
        %v1860 = vunpack.c.l.b16 %v570
        %v1861 = vunpack.c.h.b16 %v570
        %v1862 = vunpack.c.l.b16 %v571
        %v1863 = vunpack.c.h.b16 %v571
        %v1864 = vunpack.c.l.b16 %v572
        %v1865 = vunpack.c.h.b16 %v572
        %v1866 = vunpack.c.l.b16 %v573
        %v1867 = vunpack.c.h.b16 %v573
        %v1868 = vunpack.c.l.b16 %v574
        %v1869 = vunpack.c.h.b16 %v574
        %v1870 = vunpack.c.l.b16 %v575
        %v1871 = vunpack.c.h.b16 %v575
        %v1872 = vunpack.c.l.b16 %v576
        %v1873 = vunpack.c.h.b16 %v576
        %v1874 = vunpack.c.l.b16 %v577
        %v1875 = vunpack.c.h.b16 %v577
        %v1876 = vunpack.c.l.b16 %v578
        %v1877 = vunpack.c.h.b16 %v578
        %v1878 = vunpack.c.l.b16 %v579
        %v1879 = vunpack.c.h.b16 %v579
        %v1880 = vunpack.c.l.b16 %v580
        %v1881 = vunpack.c.h.b16 %v580
        %v1882 = vunpack.c.l.b16 %v581
        %v1883 = vunpack.c.h.b16 %v581
        %v1884 = vunpack.c.l.b16 %v582
        %v1885 = vunpack.c.h.b16 %v582
        %v1886 = vunpack.c.l.b16 %v583
        %v1887 = vunpack.c.h.b16 %v583
        %v1888 = vunpack.c.l.b16 %v584
        %v1889 = vunpack.c.h.b16 %v584
        %v1890 = vunpack.c.l.b16 %v585
        %v1891 = vunpack.c.h.b16 %v585
        %v1892 = vunpack.c.l.b16 %v586
        %v1893 = vunpack.c.h.b16 %v586
        %v1894 = vunpack.c.l.b16 %v587
        %v1895 = vunpack.c.h.b16 %v587
        %v1896 = vunpack.c.l.b16 %v588
        %v1897 = vunpack.c.h.b16 %v588
        %v1898 = vunpack.c.l.b16 %v589
        %v1899 = vunpack.c.h.b16 %v589
        %v1900 = vunpack.c.l.b16 %v590
        %v1901 = vunpack.c.h.b16 %v590
        %v1902 = vunpack.c.l.b16 %v591
        %v1903 = vunpack.c.h.b16 %v591
        %v1904 = vunpack.c.l.b16 %v592
        %v1905 = vunpack.c.h.b16 %v592
        %v1906 = vunpack.c.l.b16 %v593
        %v1907 = vunpack.c.h.b16 %v593
        %v1908 = vunpack.c.l.b16 %v594
        %v1909 = vunpack.c.h.b16 %v594
        %v1910 = vunpack.c.l.b16 %v595
        %v1911 = vunpack.c.h.b16 %v595
        %v1912 = vunpack.c.l.b16 %v596
        %v1913 = vunpack.c.h.b16 %v596
        %v1914 = vunpack.c.l.b16 %v597
        %v1915 = vunpack.c.h.b16 %v597
        %v1916 = vunpack.c.l.b16 %v598
        %v1917 = vunpack.c.h.b16 %v598
        %v1918 = vunpack.c.l.b16 %v599
        %v1919 = vunpack.c.h.b16 %v599
        %v1920 = vunpack.c.l.b16 %v600
        %v1921 = vunpack.c.h.b16 %v600
        %v1922 = vunpack.c.l.b16 %v601
        %v1923 = vunpack.c.h.b16 %v601
        %v1924 = vunpack.c.l.b16 %v602
        %v1925 = vunpack.c.h.b16 %v602
        %v1926 = vunpack.c.l.b16 %v603
        %v1927 = vunpack.c.h.b16 %v603
        %v1928 = vunpack.c.l.b16 %v604
        %v1929 = vunpack.c.h.b16 %v604
        %v1930 = vunpack.c.l.b16 %v605
        %v1931 = vunpack.c.h.b16 %v605
        %v1932 = vunpack.c.l.b16 %v606
        %v1933 = vunpack.c.h.b16 %v606
        %v1934 = vunpack.c.l.b16 %v607
        %v1935 = vunpack.c.h.b16 %v607
        %v1936 = vunpack.c.l.b16 %v608
        %v1937 = vunpack.c.h.b16 %v608
        %v1938 = vunpack.c.l.b16 %v609
        %v1939 = vunpack.c.h.b16 %v609
        %v1940 = vunpack.c.l.b16 %v610
        %v1941 = vunpack.c.h.b16 %v610
        %v1942 = vunpack.c.l.b16 %v611
        %v1943 = vunpack.c.h.b16 %v611
        %v1944 = vunpack.c.l.b16 %v612
        %v1945 = vunpack.c.h.b16 %v612
        %v1946 = vunpack.c.l.b16 %v613
        %v1947 = vunpack.c.h.b16 %v613
        %v1948 = vunpack.c.l.b16 %v614
        %v1949 = vunpack.c.h.b16 %v614
        %v1950 = vunpack.c.l.b16 %v615
        %v1951 = vunpack.c.h.b16 %v615
        %v1952 = vunpack.c.l.b16 %v616
        %v1953 = vunpack.c.h.b16 %v616
        %v1954 = vunpack.c.l.b16 %v617
        %v1955 = vunpack.c.h.b16 %v617
        %v1956 = vunpack.c.l.b16 %v618
        %v1957 = vunpack.c.h.b16 %v618
        %v1958 = vunpack.c.l.b16 %v619
        %v1959 = vunpack.c.h.b16 %v619
        %v1960 = vunpack.c.l.b16 %v620
        %v1961 = vunpack.c.h.b16 %v620
        %v1962 = vunpack.c.l.b16 %v621
        %v1963 = vunpack.c.h.b16 %v621
        %v1964 = vunpack.c.l.b16 %v622
        %v1965 = vunpack.c.h.b16 %v622
        %v1966 = vunpack.c.l.b16 %v623
        %v1967 = vunpack.c.h.b16 %v623
        %v1968 = vunpack.c.l.b16 %v624
        %v1969 = vunpack.c.h.b16 %v624
        %v1970 = vunpack.c.l.b16 %v625
        %v1971 = vunpack.c.h.b16 %v625
        %v1972 = vunpack.c.l.b16 %v626
        %v1973 = vunpack.c.h.b16 %v626
        %v1974 = vunpack.c.l.b16 %v627
        %v1975 = vunpack.c.h.b16 %v627
        %v1976 = vunpack.c.l.b16 %v628
        %v1977 = vunpack.c.h.b16 %v628
        %v1978 = vunpack.c.l.b16 %v629
        %v1979 = vunpack.c.h.b16 %v629
        %v1980 = vunpack.c.l.b16 %v630
        %v1981 = vunpack.c.h.b16 %v630
        %v1982 = vunpack.c.l.b16 %v631
        %v1983 = vunpack.c.h.b16 %v631
        %v1984 = vunpack.c.l.b16 %v632
        %v1985 = vunpack.c.h.b16 %v632
        %v1986 = vunpack.c.l.b16 %v633
        %v1987 = vunpack.c.h.b16 %v633
        %v1988 = vunpack.c.l.b16 %v634
        %v1989 = vunpack.c.h.b16 %v634
        %v1990 = vunpack.c.l.b16 %v635
        %v1991 = vunpack.c.h.b16 %v635
        %v1992 = vunpack.c.l.b16 %v636
        %v1993 = vunpack.c.h.b16 %v636
        %v1994 = vunpack.c.l.b16 %v637
        %v1995 = vunpack.c.h.b16 %v637
        %v1996 = vunpack.c.l.b16 %v638
        %v1997 = vunpack.c.h.b16 %v638
        %v1998 = vunpack.c.l.b16 %v639
        %v1999 = vunpack.c.h.b16 %v639
        %v2000 = vunpack.c.l.b16 %v640
        %v2001 = vunpack.c.h.b16 %v640
        %v2002 = vunpack.c.l.b16 %v641
        %v2003 = vunpack.c.h.b16 %v641
        %v2004 = vunpack.c.l.b16 %v642
        %v2005 = vunpack.c.h.b16 %v642
        %v2006 = vunpack.c.l.b16 %v643
        %v2007 = vunpack.c.h.b16 %v643
        %v2008 = vunpack.c.l.b16 %v644
        %v2009 = vunpack.c.h.b16 %v644
        %v2010 = vunpack.c.l.b16 %v645
        %v2011 = vunpack.c.h.b16 %v645
        %v2012 = vunpack.c.l.b16 %v646
        %v2013 = vunpack.c.h.b16 %v646
        %v2014 = vunpack.c.l.b16 %v647
        %v2015 = vunpack.c.h.b16 %v647
        %v2016 = vunpack.c.l.b16 %v648
        %v2017 = vunpack.c.h.b16 %v648
        %v2018 = vunpack.c.l.b16 %v649
        %v2019 = vunpack.c.h.b16 %v649
        %v2020 = vunpack.c.l.b16 %v650
        %v2021 = vunpack.c.h.b16 %v650
        %v2022 = vunpack.c.l.b16 %v651
        %v2023 = vunpack.c.h.b16 %v651
        %v2024 = vunpack.c.l.b16 %v652
        %v2025 = vunpack.c.h.b16 %v652
        %v2026 = vunpack.c.l.b16 %v653
        %v2027 = vunpack.c.h.b16 %v653
        %v2028 = vunpack.c.l.b16 %v654
        %v2029 = vunpack.c.h.b16 %v654
        %v2030 = vunpack.c.l.b16 %v655
        %v2031 = vunpack.c.h.b16 %v655
        %v2032 = vunpack.c.l.b16 %v656
        %v2033 = vunpack.c.h.b16 %v656
        %v2034 = vunpack.c.l.b16 %v657
        %v2035 = vunpack.c.h.b16 %v657
        %v2036 = vunpack.c.l.b16 %v658
        %v2037 = vunpack.c.h.b16 %v658
        %v2038 = vunpack.c.l.b16 %v659
        %v2039 = vunpack.c.h.b16 %v659
        %v2040 = vunpack.c.l.b16 %v660
        %v2041 = vunpack.c.h.b16 %v660
        %v2042 = vunpack.c.l.b16 %v661
        %v2043 = vunpack.c.h.b16 %v661
        %v2044 = vunpack.c.l.b16 %v662
        %v2045 = vunpack.c.h.b16 %v662
        %v2046 = vunpack.c.l.b16 %v663
        %v2047 = vunpack.c.h.b16 %v663
        %v2048 = vunpack.c.l.b16 %v664
        %v2049 = vunpack.c.h.b16 %v664
        %v2050 = vunpack.c.l.b16 %v665
        %v2051 = vunpack.c.h.b16 %v665
        %v2052 = vunpack.c.l.b16 %v666
        %v2053 = vunpack.c.h.b16 %v666
        %v2054 = vunpack.c.l.b16 %v667
        %v2055 = vunpack.c.h.b16 %v667
        %v2056 = vunpack.c.l.b16 %v668
        %v2057 = vunpack.c.h.b16 %v668
        %v2058 = vunpack.c.l.b16 %v669
        %v2059 = vunpack.c.h.b16 %v669
        %v2060 = vunpack.c.l.b16 %v670
        %v2061 = vunpack.c.h.b16 %v670
        %v2062 = vunpack.c.l.b16 %v671
        %v2063 = vunpack.c.h.b16 %v671
        %v2064 = vunpack.c.l.b16 %v672
        %v2065 = vunpack.c.h.b16 %v672
        %v2066 = vunpack.c.l.b16 %v673
        %v2067 = vunpack.c.h.b16 %v673
        %v2068 = vunpack.c.l.b16 %v674
        %v2069 = vunpack.c.h.b16 %v674
        %v2070 = vunpack.c.l.b16 %v675
        %v2071 = vunpack.c.h.b16 %v675
        %v2072 = vunpack.c.l.b16 %v676
        %v2073 = vunpack.c.h.b16 %v676
        %v2074 = vunpack.c.l.b16 %v677
        %v2075 = vunpack.c.h.b16 %v677
        %v2076 = vunpack.c.l.b16 %v678
        %v2077 = vunpack.c.h.b16 %v678
        %v2078 = vunpack.c.l.b16 %v679
        %v2079 = vunpack.c.h.b16 %v679
        %v2080 = vunpack.c.l.b16 %v680
        %v2081 = vunpack.c.h.b16 %v680
        %v2082 = vunpack.c.l.b16 %v681
        %v2083 = vunpack.c.h.b16 %v681
        %v2084 = vunpack.c.l.b16 %v682
        %v2085 = vunpack.c.h.b16 %v682
        %v2086 = vunpack.c.l.b16 %v683
        %v2087 = vunpack.c.h.b16 %v683
        %v2088 = vunpack.c.l.b16 %v684
        %v2089 = vunpack.c.h.b16 %v684
        %v2090 = vunpack.c.l.b16 %v685
        %v2091 = vunpack.c.h.b16 %v685
        %v2092 = vunpack.c.l.b16 %v686
        %v2093 = vunpack.c.h.b16 %v686
        %v2094 = vunpack.c.l.b16 %v687
        %v2095 = vunpack.c.h.b16 %v687
        %v2096 = vunpack.c.l.b16 %v688
        %v2097 = vunpack.c.h.b16 %v688
        %v2098 = vunpack.c.l.b16 %v689
        %v2099 = vunpack.c.h.b16 %v689
        %v2100 = vunpack.c.l.b16 %v690
        %v2101 = vunpack.c.h.b16 %v690
        %v2102 = vunpack.c.l.b16 %v691
        %v2103 = vunpack.c.h.b16 %v691
        %v2104 = vunpack.c.l.b16 %v692
        %v2105 = vunpack.c.h.b16 %v692
        %v2106 = vunpack.c.l.b16 %v693
        %v2107 = vunpack.c.h.b16 %v693
        %v2108 = vunpack.c.l.b16 %v694
        %v2109 = vunpack.c.h.b16 %v694
        %v2110 = vunpack.c.l.b16 %v695
        %v2111 = vunpack.c.h.b16 %v695
        %v2112 = vunpack.c.l.b16 %v696
        %v2113 = vunpack.c.h.b16 %v696
        %v2114 = vunpack.c.l.b16 %v697
        %v2115 = vunpack.c.h.b16 %v697
        %v2116 = vunpack.c.l.b16 %v698
        %v2117 = vunpack.c.h.b16 %v698
        %v2118 = vunpack.c.l.b16 %v699
        %v2119 = vunpack.c.h.b16 %v699
        %v2120 = vunpack.c.l.b16 %v700
        %v2121 = vunpack.c.h.b16 %v700
        %v2122 = vunpack.c.l.b16 %v701
        %v2123 = vunpack.c.h.b16 %v701
        %v2124 = vunpack.c.l.b16 %v702
        %v2125 = vunpack.c.h.b16 %v702
        %v2126 = vunpack.c.l.b16 %v703
        %v2127 = vunpack.c.h.b16 %v703
        %v2128 = vunpack.c.l.b16 %v704
        %v2129 = vunpack.c.h.b16 %v704
        %v2130 = vunpack.c.l.b16 %v705
        %v2131 = vunpack.c.h.b16 %v705
        %v2132 = vunpack.c.l.b16 %v706
        %v2133 = vunpack.c.h.b16 %v706
        %v2134 = vunpack.c.l.b16 %v707
        %v2135 = vunpack.c.h.b16 %v707
        %v2136 = vunpack.c.l.b16 %v708
        %v2137 = vunpack.c.h.b16 %v708
        %v2138 = vunpack.c.l.b16 %v709
        %v2139 = vunpack.c.h.b16 %v709
        %v2140 = vunpack.c.l.b16 %v710
        %v2141 = vunpack.c.h.b16 %v710
        %v2142 = vunpack.c.l.b16 %v711
        %v2143 = vunpack.c.h.b16 %v711
        %v2144 = vunpack.c.l.b16 %v712
        %v2145 = vunpack.c.h.b16 %v712
        %v2146 = vunpack.c.l.b16 %v713
        %v2147 = vunpack.c.h.b16 %v713
        %v2148 = vunpack.c.l.b16 %v714
        %v2149 = vunpack.c.h.b16 %v714
        %v2150 = vunpack.c.l.b16 %v715
        %v2151 = vunpack.c.h.b16 %v715
        %v2152 = vunpack.c.l.b16 %v716
        %v2153 = vunpack.c.h.b16 %v716
        %v2154 = vunpack.c.l.b16 %v717
        %v2155 = vunpack.c.h.b16 %v717
        %v2156 = vunpack.c.l.b16 %v718
        %v2157 = vunpack.c.h.b16 %v718
        %v2158 = vunpack.c.l.b16 %v719
        %v2159 = vunpack.c.h.b16 %v719
        %v2160 = vunpack.c.l.b16 %v720
        %v2161 = vunpack.c.h.b16 %v720
        %v2162 = vunpack.c.l.b16 %v721
        %v2163 = vunpack.c.h.b16 %v721
        %v2164 = vunpack.c.l.b16 %v722
        %v2165 = vunpack.c.h.b16 %v722
        %v2166 = vunpack.c.l.b16 %v723
        %v2167 = vunpack.c.h.b16 %v723
        %v2168 = vunpack.c.l.b16 %v724
        %v2169 = vunpack.c.h.b16 %v724
        %v2170 = vunpack.c.l.b16 %v725
        %v2171 = vunpack.c.h.b16 %v725
        %v2172 = vunpack.c.l.b16 %v726
        %v2173 = vunpack.c.h.b16 %v726
        %v2174 = vunpack.c.l.b16 %v727
        %v2175 = vunpack.c.h.b16 %v727
        %v2176 = vunpack.c.l.b16 %v728
        %v2177 = vunpack.c.h.b16 %v728
        %v2178 = vunpack.c.l.b16 %v729
        %v2179 = vunpack.c.h.b16 %v729
        %v2180 = vunpack.c.l.b16 %v730
        %v2181 = vunpack.c.h.b16 %v730
        %v2182 = vunpack.c.l.b16 %v731
        %v2183 = vunpack.c.h.b16 %v731
        %v2184 = vunpack.c.l.b16 %v732
        %v2185 = vunpack.c.h.b16 %v732
        %v2186 = vunpack.c.l.b16 %v733
        %v2187 = vunpack.c.h.b16 %v733
        %v2188 = vunpack.c.l.b16 %v734
        %v2189 = vunpack.c.h.b16 %v734
        %v2190 = vunpack.c.l.b16 %v735
        %v2191 = vunpack.c.h.b16 %v735
        %v2192 = vunpack.c.l.b16 %v736
        %v2193 = vunpack.c.h.b16 %v736
        %v2194 = vunpack.c.l.b16 %v737
        %v2195 = vunpack.c.h.b16 %v737
        %v2196 = vunpack.c.l.b16 %v738
        %v2197 = vunpack.c.h.b16 %v738
        %v2198 = vunpack.c.l.b16 %v739
        %v2199 = vunpack.c.h.b16 %v739
        %v2200 = vunpack.c.l.b16 %v740
        %v2201 = vunpack.c.h.b16 %v740
        %v2202 = vunpack.c.l.b16 %v741
        %v2203 = vunpack.c.h.b16 %v741
        %v2204 = vunpack.c.l.b16 %v742
        %v2205 = vunpack.c.h.b16 %v742
        %v2206 = vunpack.c.l.b16 %v743
        %v2207 = vunpack.c.h.b16 %v743
        %v2208 = vunpack.c.l.b16 %v744
        %v2209 = vunpack.c.h.b16 %v744
        %v2210 = vunpack.c.l.b16 %v745
        %v2211 = vunpack.c.h.b16 %v745
        %v2212 = vunpack.c.l.b16 %v746
        %v2213 = vunpack.c.h.b16 %v746
        %v2214 = vunpack.c.l.b16 %v747
        %v2215 = vunpack.c.h.b16 %v747
        %v2216 = vunpack.c.l.b16 %v748
        %v2217 = vunpack.c.h.b16 %v748
        %v2218 = vunpack.c.l.b16 %v749
        %v2219 = vunpack.c.h.b16 %v749
        %v2220 = vunpack.c.l.b16 %v750
        %v2221 = vunpack.c.h.b16 %v750
        %v2222 = vunpack.c.l.b16 %v751
        %v2223 = vunpack.c.h.b16 %v751
        %v2224 = vunpack.c.l.b16 %v752
        %v2225 = vunpack.c.h.b16 %v752
        %v2226 = vunpack.c.l.b16 %v753
        %v2227 = vunpack.c.h.b16 %v753
        %v2228 = vunpack.c.l.b16 %v754
        %v2229 = vunpack.c.h.b16 %v754
        %v2230 = vunpack.c.l.b16 %v755
        %v2231 = vunpack.c.h.b16 %v755
        %v2232 = vunpack.c.l.b16 %v756
        %v2233 = vunpack.c.h.b16 %v756
        %v2234 = vunpack.c.l.b16 %v757
        %v2235 = vunpack.c.h.b16 %v757
        %v2236 = vunpack.c.l.b16 %v758
        %v2237 = vunpack.c.h.b16 %v758
        %v2238 = vunpack.c.l.b16 %v759
        %v2239 = vunpack.c.h.b16 %v759
        %v2240 = vunpack.c.l.b16 %v760
        %v2241 = vunpack.c.h.b16 %v760
        %v2242 = vunpack.c.l.b16 %v761
        %v2243 = vunpack.c.h.b16 %v761
        %v2244 = vunpack.c.l.b16 %v762
        %v2245 = vunpack.c.h.b16 %v762
        %v2246 = vunpack.c.l.b16 %v763
        %v2247 = vunpack.c.h.b16 %v763
        %v2248 = vunpack.c.l.b16 %v764
        %v2249 = vunpack.c.h.b16 %v764
        %v2250 = vunpack.c.l.b16 %v765
        %v2251 = vunpack.c.h.b16 %v765
        %v2252 = vunpack.c.l.b16 %v766
        %v2253 = vunpack.c.h.b16 %v766
        %v2254 = vunpack.c.l.b16 %v767
        %v2255 = vunpack.c.h.b16 %v767
        %v2256 = vunpack.c.l.b16 %v768
        %v2257 = vunpack.c.h.b16 %v768
        %v2258 = vunpack.c.l.b16 %v769
        %v2259 = vunpack.c.h.b16 %v769
        %v2260 = vunpack.c.l.b16 %v770
        %v2261 = vunpack.c.h.b16 %v770
        %v2262 = vunpack.c.l.b16 %v771
        %v2263 = vunpack.c.h.b16 %v771
        %v2264 = vunpack.c.l.b16 %v772
        %v2265 = vunpack.c.h.b16 %v772
        %v2266 = vunpack.c.l.b16 %v773
        %v2267 = vunpack.c.h.b16 %v773
        %v2268 = vunpack.c.l.b16 %v774
        %v2269 = vunpack.c.h.b16 %v774
        %v2270 = vunpack.c.l.b16 %v775
        %v2271 = vunpack.c.h.b16 %v775
        %v2272 = vunpack.c.l.b16 %v776
        %v2273 = vunpack.c.h.b16 %v776
        %v2274 = vunpack.c.l.b16 %v777
        %v2275 = vunpack.c.h.b16 %v777
        %v2276 = vunpack.c.l.b16 %v778
        %v2277 = vunpack.c.h.b16 %v778
        %v2278 = vunpack.c.l.b16 %v779
        %v2279 = vunpack.c.h.b16 %v779
        %v2280 = vunpack.c.l.b16 %v780
        %v2281 = vunpack.c.h.b16 %v780
        %v2282 = vunpack.c.l.b16 %v781
        %v2283 = vunpack.c.h.b16 %v781
        %v2284 = vunpack.c.l.b16 %v782
        %v2285 = vunpack.c.h.b16 %v782
        %v2286 = vunpack.c.l.b16 %v783
        %v2287 = vunpack.c.h.b16 %v783
        %v2288 = vunpack.c.l.b16 %v784
        %v2289 = vunpack.c.h.b16 %v784
        %v2290 = vunpack.c.l.b16 %v785
        %v2291 = vunpack.c.h.b16 %v785
        %v2292 = vunpack.c.l.b16 %v786
        %v2293 = vunpack.c.h.b16 %v786
        %v2294 = vunpack.c.l.b16 %v787
        %v2295 = vunpack.c.h.b16 %v787
        %v2296 = vunpack.c.l.b16 %v788
        %v2297 = vunpack.c.h.b16 %v788
        %v2298 = vunpack.c.l.b16 %v789
        %v2299 = vunpack.c.h.b16 %v789
        %v2300 = vunpack.c.l.b16 %v790
        %v2301 = vunpack.c.h.b16 %v790
        %v2302 = vunpack.c.l.b16 %v791
        %v2303 = vunpack.c.h.b16 %v791
        %v2304 = vunpack.c.l.b16 %v792
        %v2305 = vunpack.c.h.b16 %v792
        %v2306 = vunpack.c.l.b16 %v793
        %v2307 = vunpack.c.h.b16 %v793
        %v2308 = vunpack.c.l.b16 %v794
        %v2309 = vunpack.c.h.b16 %v794
        %v2310 = vunpack.c.l.b16 %v795
        %v2311 = vunpack.c.h.b16 %v795
        %v2312 = vunpack.c.l.b16 %v796
        %v2313 = vunpack.c.h.b16 %v796
        %v2314 = vunpack.c.l.b16 %v797
        %v2315 = vunpack.c.h.b16 %v797
        %v2316 = vunpack.c.l.b16 %v798
        %v2317 = vunpack.c.h.b16 %v798
        %v2318 = vunpack.c.l.b16 %v799
        %v2319 = vunpack.c.h.b16 %v799
        %v2320 = vunpack.c.l.b16 %v800
        %v2321 = vunpack.c.h.b16 %v800
        %v2322 = vunpack.c.l.b16 %v801
        %v2323 = vunpack.c.h.b16 %v801
        %v2324 = vunpack.c.l.b16 %v802
        %v2325 = vunpack.c.h.b16 %v802
        %v2326 = vunpack.c.l.b16 %v803
        %v2327 = vunpack.c.h.b16 %v803
        %v2328 = vunpack.c.l.b16 %v804
        %v2329 = vunpack.c.h.b16 %v804
        %v2330 = vunpack.c.l.b16 %v805
        %v2331 = vunpack.c.h.b16 %v805
        %v2332 = vunpack.c.l.b16 %v806
        %v2333 = vunpack.c.h.b16 %v806
        %v2334 = vunpack.c.l.b16 %v807
        %v2335 = vunpack.c.h.b16 %v807
        %v2336 = vunpack.c.l.b16 %v808
        %v2337 = vunpack.c.h.b16 %v808
        %v2338 = vunpack.c.l.b16 %v809
        %v2339 = vunpack.c.h.b16 %v809
        %v2340 = vunpack.c.l.b16 %v810
        %v2341 = vunpack.c.h.b16 %v810
        %v2342 = vunpack.c.l.b16 %v811
        %v2343 = vunpack.c.h.b16 %v811
        %v2344 = vunpack.c.l.b16 %v812
        %v2345 = vunpack.c.h.b16 %v812
        %v2346 = vunpack.c.l.b16 %v813
        %v2347 = vunpack.c.h.b16 %v813
        %v2348 = vunpack.c.l.b16 %v814
        %v2349 = vunpack.c.h.b16 %v814
        %v2350 = vunpack.c.l.b16 %v815
        %v2351 = vunpack.c.h.b16 %v815
        %v2352 = vpack.c.b16 %v1336, %v1328
        %v2353 = vpack.c.b16 %v1337, %v1329
        %v2354 = vpack.c.b16 %v1338, %v1330
        %v2355 = vpack.c.b16 %v1339, %v1331
        %v2356 = vpack.c.b16 %v1340, %v1332
        %v2357 = vpack.c.b16 %v1341, %v1333
        %v2358 = vpack.c.b16 %v1342, %v1334
        %v2359 = vpack.c.b16 %v1343, %v1335
        %v2360 = vpack.c.b16 %v1352, %v1344
        %v2361 = vpack.c.b16 %v1353, %v1345
        %v2362 = vpack.c.b16 %v1354, %v1346
        %v2363 = vpack.c.b16 %v1355, %v1347
        %v2364 = vpack.c.b16 %v1356, %v1348
        %v2365 = vpack.c.b16 %v1357, %v1349
        %v2366 = vpack.c.b16 %v1358, %v1350
        %v2367 = vpack.c.b16 %v1359, %v1351
        %v2368 = vpack.c.b16 %v1368, %v1360
        %v2369 = vpack.c.b16 %v1369, %v1361
        %v2370 = vpack.c.b16 %v1370, %v1362
        %v2371 = vpack.c.b16 %v1371, %v1363
        %v2372 = vpack.c.b16 %v1372, %v1364
        %v2373 = vpack.c.b16 %v1373, %v1365
        %v2374 = vpack.c.b16 %v1374, %v1366
        %v2375 = vpack.c.b16 %v1375, %v1367
        %v2376 = vpack.c.b16 %v1384, %v1376
        %v2377 = vpack.c.b16 %v1385, %v1377
        %v2378 = vpack.c.b16 %v1386, %v1378
        %v2379 = vpack.c.b16 %v1387, %v1379
        %v2380 = vpack.c.b16 %v1388, %v1380
        %v2381 = vpack.c.b16 %v1389, %v1381
        %v2382 = vpack.c.b16 %v1390, %v1382
        %v2383 = vpack.c.b16 %v1391, %v1383
        %v2384 = vpack.c.b16 %v1400, %v1392
        %v2385 = vpack.c.b16 %v1401, %v1393
        %v2386 = vpack.c.b16 %v1402, %v1394
        %v2387 = vpack.c.b16 %v1403, %v1395
        %v2388 = vpack.c.b16 %v1404, %v1396
        %v2389 = vpack.c.b16 %v1405, %v1397
        %v2390 = vpack.c.b16 %v1406, %v1398
        %v2391 = vpack.c.b16 %v1407, %v1399
        %v2392 = vpack.c.b16 %v1416, %v1408
        %v2393 = vpack.c.b16 %v1417, %v1409
        %v2394 = vpack.c.b16 %v1418, %v1410
        %v2395 = vpack.c.b16 %v1419, %v1411
        %v2396 = vpack.c.b16 %v1420, %v1412
        %v2397 = vpack.c.b16 %v1421, %v1413
        %v2398 = vpack.c.b16 %v1422, %v1414
        %v2399 = vpack.c.b16 %v1423, %v1415
        %v2400 = vpack.c.b16 %v1432, %v1424
        %v2401 = vpack.c.b16 %v1433, %v1425
        %v2402 = vpack.c.b16 %v1434, %v1426
        %v2403 = vpack.c.b16 %v1435, %v1427
        %v2404 = vpack.c.b16 %v1436, %v1428
        %v2405 = vpack.c.b16 %v1437, %v1429
        %v2406 = vpack.c.b16 %v1438, %v1430
        %v2407 = vpack.c.b16 %v1439, %v1431
        %v2408 = vpack.c.b16 %v1448, %v1440
        %v2409 = vpack.c.b16 %v1449, %v1441
        %v2410 = vpack.c.b16 %v1450, %v1442
        %v2411 = vpack.c.b16 %v1451, %v1443
        %v2412 = vpack.c.b16 %v1452, %v1444
        %v2413 = vpack.c.b16 %v1453, %v1445
        %v2414 = vpack.c.b16 %v1454, %v1446
        %v2415 = vpack.c.b16 %v1455, %v1447
        %v2416 = vpack.c.b16 %v1464, %v1456
        %v2417 = vpack.c.b16 %v1465, %v1457
        %v2418 = vpack.c.b16 %v1466, %v1458
        %v2419 = vpack.c.b16 %v1467, %v1459
        %v2420 = vpack.c.b16 %v1468, %v1460
        %v2421 = vpack.c.b16 %v1469, %v1461
        %v2422 = vpack.c.b16 %v1470, %v1462
        %v2423 = vpack.c.b16 %v1471, %v1463
        %v2424 = vpack.c.b16 %v1480, %v1472
        %v2425 = vpack.c.b16 %v1481, %v1473
        %v2426 = vpack.c.b16 %v1482, %v1474
        %v2427 = vpack.c.b16 %v1483, %v1475
        %v2428 = vpack.c.b16 %v1484, %v1476
        %v2429 = vpack.c.b16 %v1485, %v1477
        %v2430 = vpack.c.b16 %v1486, %v1478
        %v2431 = vpack.c.b16 %v1487, %v1479
        %v2432 = vpack.c.b16 %v1496, %v1488
        %v2433 = vpack.c.b16 %v1497, %v1489
        %v2434 = vpack.c.b16 %v1498, %v1490
        %v2435 = vpack.c.b16 %v1499, %v1491
        %v2436 = vpack.c.b16 %v1500, %v1492
        %v2437 = vpack.c.b16 %v1501, %v1493
        %v2438 = vpack.c.b16 %v1502, %v1494
        %v2439 = vpack.c.b16 %v1503, %v1495
        %v2440 = vpack.c.b16 %v1512, %v1504
        %v2441 = vpack.c.b16 %v1513, %v1505
        %v2442 = vpack.c.b16 %v1514, %v1506
        %v2443 = vpack.c.b16 %v1515, %v1507
        %v2444 = vpack.c.b16 %v1516, %v1508
        %v2445 = vpack.c.b16 %v1517, %v1509
        %v2446 = vpack.c.b16 %v1518, %v1510
        %v2447 = vpack.c.b16 %v1519, %v1511
        %v2448 = vpack.c.b16 %v1528, %v1520
        %v2449 = vpack.c.b16 %v1529, %v1521
        %v2450 = vpack.c.b16 %v1530, %v1522
        %v2451 = vpack.c.b16 %v1531, %v1523
        %v2452 = vpack.c.b16 %v1532, %v1524
        %v2453 = vpack.c.b16 %v1533, %v1525
        %v2454 = vpack.c.b16 %v1534, %v1526
        %v2455 = vpack.c.b16 %v1535, %v1527
        %v2456 = vpack.c.b16 %v1544, %v1536
        %v2457 = vpack.c.b16 %v1545, %v1537
        %v2458 = vpack.c.b16 %v1546, %v1538
        %v2459 = vpack.c.b16 %v1547, %v1539
        %v2460 = vpack.c.b16 %v1548, %v1540
        %v2461 = vpack.c.b16 %v1549, %v1541
        %v2462 = vpack.c.b16 %v1550, %v1542
        %v2463 = vpack.c.b16 %v1551, %v1543
        %v2464 = vpack.c.b16 %v1560, %v1552
        %v2465 = vpack.c.b16 %v1561, %v1553
        %v2466 = vpack.c.b16 %v1562, %v1554
        %v2467 = vpack.c.b16 %v1563, %v1555
        %v2468 = vpack.c.b16 %v1564, %v1556
        %v2469 = vpack.c.b16 %v1565, %v1557
        %v2470 = vpack.c.b16 %v1566, %v1558
        %v2471 = vpack.c.b16 %v1567, %v1559
        %v2472 = vpack.c.b16 %v1576, %v1568
        %v2473 = vpack.c.b16 %v1577, %v1569
        %v2474 = vpack.c.b16 %v1578, %v1570
        %v2475 = vpack.c.b16 %v1579, %v1571
        %v2476 = vpack.c.b16 %v1580, %v1572
        %v2477 = vpack.c.b16 %v1581, %v1573
        %v2478 = vpack.c.b16 %v1582, %v1574
        %v2479 = vpack.c.b16 %v1583, %v1575
        %v2480 = vpack.c.b16 %v1592, %v1584
        %v2481 = vpack.c.b16 %v1593, %v1585
        %v2482 = vpack.c.b16 %v1594, %v1586
        %v2483 = vpack.c.b16 %v1595, %v1587
        %v2484 = vpack.c.b16 %v1596, %v1588
        %v2485 = vpack.c.b16 %v1597, %v1589
        %v2486 = vpack.c.b16 %v1598, %v1590
        %v2487 = vpack.c.b16 %v1599, %v1591
        %v2488 = vpack.c.b16 %v1608, %v1600
        %v2489 = vpack.c.b16 %v1609, %v1601
        %v2490 = vpack.c.b16 %v1610, %v1602
        %v2491 = vpack.c.b16 %v1611, %v1603
        %v2492 = vpack.c.b16 %v1612, %v1604
        %v2493 = vpack.c.b16 %v1613, %v1605
        %v2494 = vpack.c.b16 %v1614, %v1606
        %v2495 = vpack.c.b16 %v1615, %v1607
        %v2496 = vpack.c.b16 %v1624, %v1616
        %v2497 = vpack.c.b16 %v1625, %v1617
        %v2498 = vpack.c.b16 %v1626, %v1618
        %v2499 = vpack.c.b16 %v1627, %v1619
        %v2500 = vpack.c.b16 %v1628, %v1620
        %v2501 = vpack.c.b16 %v1629, %v1621
        %v2502 = vpack.c.b16 %v1630, %v1622
        %v2503 = vpack.c.b16 %v1631, %v1623
        %v2504 = vpack.c.b16 %v1640, %v1632
        %v2505 = vpack.c.b16 %v1641, %v1633
        %v2506 = vpack.c.b16 %v1642, %v1634
        %v2507 = vpack.c.b16 %v1643, %v1635
        %v2508 = vpack.c.b16 %v1644, %v1636
        %v2509 = vpack.c.b16 %v1645, %v1637
        %v2510 = vpack.c.b16 %v1646, %v1638
        %v2511 = vpack.c.b16 %v1647, %v1639
        %v2512 = vpack.c.b16 %v1656, %v1648
        %v2513 = vpack.c.b16 %v1657, %v1649
        %v2514 = vpack.c.b16 %v1658, %v1650
        %v2515 = vpack.c.b16 %v1659, %v1651
        %v2516 = vpack.c.b16 %v1660, %v1652
        %v2517 = vpack.c.b16 %v1661, %v1653
        %v2518 = vpack.c.b16 %v1662, %v1654
        %v2519 = vpack.c.b16 %v1663, %v1655
        %v2520 = vpack.c.b16 %v1672, %v1664
        %v2521 = vpack.c.b16 %v1673, %v1665
        %v2522 = vpack.c.b16 %v1674, %v1666
        %v2523 = vpack.c.b16 %v1675, %v1667
        %v2524 = vpack.c.b16 %v1676, %v1668
        %v2525 = vpack.c.b16 %v1677, %v1669
        %v2526 = vpack.c.b16 %v1678, %v1670
        %v2527 = vpack.c.b16 %v1679, %v1671
        %v2528 = vpack.c.b16 %v1688, %v1680
        %v2529 = vpack.c.b16 %v1689, %v1681
        %v2530 = vpack.c.b16 %v1690, %v1682
        %v2531 = vpack.c.b16 %v1691, %v1683
        %v2532 = vpack.c.b16 %v1692, %v1684
        %v2533 = vpack.c.b16 %v1693, %v1685
        %v2534 = vpack.c.b16 %v1694, %v1686
        %v2535 = vpack.c.b16 %v1695, %v1687
        %v2536 = vpack.c.b16 %v1704, %v1696
        %v2537 = vpack.c.b16 %v1705, %v1697
        %v2538 = vpack.c.b16 %v1706, %v1698
        %v2539 = vpack.c.b16 %v1707, %v1699
        %v2540 = vpack.c.b16 %v1708, %v1700
        %v2541 = vpack.c.b16 %v1709, %v1701
        %v2542 = vpack.c.b16 %v1710, %v1702
        %v2543 = vpack.c.b16 %v1711, %v1703
        %v2544 = vpack.c.b16 %v1720, %v1712
        %v2545 = vpack.c.b16 %v1721, %v1713
        %v2546 = vpack.c.b16 %v1722, %v1714
        %v2547 = vpack.c.b16 %v1723, %v1715
        %v2548 = vpack.c.b16 %v1724, %v1716
        %v2549 = vpack.c.b16 %v1725, %v1717
        %v2550 = vpack.c.b16 %v1726, %v1718
        %v2551 = vpack.c.b16 %v1727, %v1719
        %v2552 = vpack.c.b16 %v1736, %v1728
        %v2553 = vpack.c.b16 %v1737, %v1729
        %v2554 = vpack.c.b16 %v1738, %v1730
        %v2555 = vpack.c.b16 %v1739, %v1731
        %v2556 = vpack.c.b16 %v1740, %v1732
        %v2557 = vpack.c.b16 %v1741, %v1733
        %v2558 = vpack.c.b16 %v1742, %v1734
        %v2559 = vpack.c.b16 %v1743, %v1735
        %v2560 = vpack.c.b16 %v1752, %v1744
        %v2561 = vpack.c.b16 %v1753, %v1745
        %v2562 = vpack.c.b16 %v1754, %v1746
        %v2563 = vpack.c.b16 %v1755, %v1747
        %v2564 = vpack.c.b16 %v1756, %v1748
        %v2565 = vpack.c.b16 %v1757, %v1749
        %v2566 = vpack.c.b16 %v1758, %v1750
        %v2567 = vpack.c.b16 %v1759, %v1751
        %v2568 = vpack.c.b16 %v1768, %v1760
        %v2569 = vpack.c.b16 %v1769, %v1761
        %v2570 = vpack.c.b16 %v1770, %v1762
        %v2571 = vpack.c.b16 %v1771, %v1763
        %v2572 = vpack.c.b16 %v1772, %v1764
        %v2573 = vpack.c.b16 %v1773, %v1765
        %v2574 = vpack.c.b16 %v1774, %v1766
        %v2575 = vpack.c.b16 %v1775, %v1767
        %v2576 = vpack.c.b16 %v1784, %v1776
        %v2577 = vpack.c.b16 %v1785, %v1777
        %v2578 = vpack.c.b16 %v1786, %v1778
        %v2579 = vpack.c.b16 %v1787, %v1779
        %v2580 = vpack.c.b16 %v1788, %v1780
        %v2581 = vpack.c.b16 %v1789, %v1781
        %v2582 = vpack.c.b16 %v1790, %v1782
        %v2583 = vpack.c.b16 %v1791, %v1783
        %v2584 = vpack.c.b16 %v1800, %v1792
        %v2585 = vpack.c.b16 %v1801, %v1793
        %v2586 = vpack.c.b16 %v1802, %v1794
        %v2587 = vpack.c.b16 %v1803, %v1795
        %v2588 = vpack.c.b16 %v1804, %v1796
        %v2589 = vpack.c.b16 %v1805, %v1797
        %v2590 = vpack.c.b16 %v1806, %v1798
        %v2591 = vpack.c.b16 %v1807, %v1799
        %v2592 = vpack.c.b16 %v1816, %v1808
        %v2593 = vpack.c.b16 %v1817, %v1809
        %v2594 = vpack.c.b16 %v1818, %v1810
        %v2595 = vpack.c.b16 %v1819, %v1811
        %v2596 = vpack.c.b16 %v1820, %v1812
        %v2597 = vpack.c.b16 %v1821, %v1813
        %v2598 = vpack.c.b16 %v1822, %v1814
        %v2599 = vpack.c.b16 %v1823, %v1815
        %v2600 = vpack.c.b16 %v1832, %v1824
        %v2601 = vpack.c.b16 %v1833, %v1825
        %v2602 = vpack.c.b16 %v1834, %v1826
        %v2603 = vpack.c.b16 %v1835, %v1827
        %v2604 = vpack.c.b16 %v1836, %v1828
        %v2605 = vpack.c.b16 %v1837, %v1829
        %v2606 = vpack.c.b16 %v1838, %v1830
        %v2607 = vpack.c.b16 %v1839, %v1831
        %v2608 = vpack.c.b16 %v1848, %v1840
        %v2609 = vpack.c.b16 %v1849, %v1841
        %v2610 = vpack.c.b16 %v1850, %v1842
        %v2611 = vpack.c.b16 %v1851, %v1843
        %v2612 = vpack.c.b16 %v1852, %v1844
        %v2613 = vpack.c.b16 %v1853, %v1845
        %v2614 = vpack.c.b16 %v1854, %v1846
        %v2615 = vpack.c.b16 %v1855, %v1847
        %v2616 = vpack.c.b16 %v1864, %v1856
        %v2617 = vpack.c.b16 %v1865, %v1857
        %v2618 = vpack.c.b16 %v1866, %v1858
        %v2619 = vpack.c.b16 %v1867, %v1859
        %v2620 = vpack.c.b16 %v1868, %v1860
        %v2621 = vpack.c.b16 %v1869, %v1861
        %v2622 = vpack.c.b16 %v1870, %v1862
        %v2623 = vpack.c.b16 %v1871, %v1863
        %v2624 = vpack.c.b16 %v1880, %v1872
        %v2625 = vpack.c.b16 %v1881, %v1873
        %v2626 = vpack.c.b16 %v1882, %v1874
        %v2627 = vpack.c.b16 %v1883, %v1875
        %v2628 = vpack.c.b16 %v1884, %v1876
        %v2629 = vpack.c.b16 %v1885, %v1877
        %v2630 = vpack.c.b16 %v1886, %v1878
        %v2631 = vpack.c.b16 %v1887, %v1879
        %v2632 = vpack.c.b16 %v1896, %v1888
        %v2633 = vpack.c.b16 %v1897, %v1889
        %v2634 = vpack.c.b16 %v1898, %v1890
        %v2635 = vpack.c.b16 %v1899, %v1891
        %v2636 = vpack.c.b16 %v1900, %v1892
        %v2637 = vpack.c.b16 %v1901, %v1893
        %v2638 = vpack.c.b16 %v1902, %v1894
        %v2639 = vpack.c.b16 %v1903, %v1895
        %v2640 = vpack.c.b16 %v1912, %v1904
        %v2641 = vpack.c.b16 %v1913, %v1905
        %v2642 = vpack.c.b16 %v1914, %v1906
        %v2643 = vpack.c.b16 %v1915, %v1907
        %v2644 = vpack.c.b16 %v1916, %v1908
        %v2645 = vpack.c.b16 %v1917, %v1909
        %v2646 = vpack.c.b16 %v1918, %v1910
        %v2647 = vpack.c.b16 %v1919, %v1911
        %v2648 = vpack.c.b16 %v1928, %v1920
        %v2649 = vpack.c.b16 %v1929, %v1921
        %v2650 = vpack.c.b16 %v1930, %v1922
        %v2651 = vpack.c.b16 %v1931, %v1923
        %v2652 = vpack.c.b16 %v1932, %v1924
        %v2653 = vpack.c.b16 %v1933, %v1925
        %v2654 = vpack.c.b16 %v1934, %v1926
        %v2655 = vpack.c.b16 %v1935, %v1927
        %v2656 = vpack.c.b16 %v1944, %v1936
        %v2657 = vpack.c.b16 %v1945, %v1937
        %v2658 = vpack.c.b16 %v1946, %v1938
        %v2659 = vpack.c.b16 %v1947, %v1939
        %v2660 = vpack.c.b16 %v1948, %v1940
        %v2661 = vpack.c.b16 %v1949, %v1941
        %v2662 = vpack.c.b16 %v1950, %v1942
        %v2663 = vpack.c.b16 %v1951, %v1943
        %v2664 = vpack.c.b16 %v1960, %v1952
        %v2665 = vpack.c.b16 %v1961, %v1953
        %v2666 = vpack.c.b16 %v1962, %v1954
        %v2667 = vpack.c.b16 %v1963, %v1955
        %v2668 = vpack.c.b16 %v1964, %v1956
        %v2669 = vpack.c.b16 %v1965, %v1957
        %v2670 = vpack.c.b16 %v1966, %v1958
        %v2671 = vpack.c.b16 %v1967, %v1959
        %v2672 = vpack.c.b16 %v1976, %v1968
        %v2673 = vpack.c.b16 %v1977, %v1969
        %v2674 = vpack.c.b16 %v1978, %v1970
        %v2675 = vpack.c.b16 %v1979, %v1971
        %v2676 = vpack.c.b16 %v1980, %v1972
        %v2677 = vpack.c.b16 %v1981, %v1973
        %v2678 = vpack.c.b16 %v1982, %v1974
        %v2679 = vpack.c.b16 %v1983, %v1975
        %v2680 = vpack.c.b16 %v1992, %v1984
        %v2681 = vpack.c.b16 %v1993, %v1985
        %v2682 = vpack.c.b16 %v1994, %v1986
        %v2683 = vpack.c.b16 %v1995, %v1987
        %v2684 = vpack.c.b16 %v1996, %v1988
        %v2685 = vpack.c.b16 %v1997, %v1989
        %v2686 = vpack.c.b16 %v1998, %v1990
        %v2687 = vpack.c.b16 %v1999, %v1991
        %v2688 = vpack.c.b16 %v2008, %v2000
        %v2689 = vpack.c.b16 %v2009, %v2001
        %v2690 = vpack.c.b16 %v2010, %v2002
        %v2691 = vpack.c.b16 %v2011, %v2003
        %v2692 = vpack.c.b16 %v2012, %v2004
        %v2693 = vpack.c.b16 %v2013, %v2005
        %v2694 = vpack.c.b16 %v2014, %v2006
        %v2695 = vpack.c.b16 %v2015, %v2007
        %v2696 = vpack.c.b16 %v2024, %v2016
        %v2697 = vpack.c.b16 %v2025, %v2017
        %v2698 = vpack.c.b16 %v2026, %v2018
        %v2699 = vpack.c.b16 %v2027, %v2019
        %v2700 = vpack.c.b16 %v2028, %v2020
        %v2701 = vpack.c.b16 %v2029, %v2021
        %v2702 = vpack.c.b16 %v2030, %v2022
        %v2703 = vpack.c.b16 %v2031, %v2023
        %v2704 = vpack.c.b16 %v2040, %v2032
        %v2705 = vpack.c.b16 %v2041, %v2033
        %v2706 = vpack.c.b16 %v2042, %v2034
        %v2707 = vpack.c.b16 %v2043, %v2035
        %v2708 = vpack.c.b16 %v2044, %v2036
        %v2709 = vpack.c.b16 %v2045, %v2037
        %v2710 = vpack.c.b16 %v2046, %v2038
        %v2711 = vpack.c.b16 %v2047, %v2039
        %v2712 = vpack.c.b16 %v2056, %v2048
        %v2713 = vpack.c.b16 %v2057, %v2049
        %v2714 = vpack.c.b16 %v2058, %v2050
        %v2715 = vpack.c.b16 %v2059, %v2051
        %v2716 = vpack.c.b16 %v2060, %v2052
        %v2717 = vpack.c.b16 %v2061, %v2053
        %v2718 = vpack.c.b16 %v2062, %v2054
        %v2719 = vpack.c.b16 %v2063, %v2055
        %v2720 = vpack.c.b16 %v2072, %v2064
        %v2721 = vpack.c.b16 %v2073, %v2065
        %v2722 = vpack.c.b16 %v2074, %v2066
        %v2723 = vpack.c.b16 %v2075, %v2067
        %v2724 = vpack.c.b16 %v2076, %v2068
        %v2725 = vpack.c.b16 %v2077, %v2069
        %v2726 = vpack.c.b16 %v2078, %v2070
        %v2727 = vpack.c.b16 %v2079, %v2071
        %v2728 = vpack.c.b16 %v2088, %v2080
        %v2729 = vpack.c.b16 %v2089, %v2081
        %v2730 = vpack.c.b16 %v2090, %v2082
        %v2731 = vpack.c.b16 %v2091, %v2083
        %v2732 = vpack.c.b16 %v2092, %v2084
        %v2733 = vpack.c.b16 %v2093, %v2085
        %v2734 = vpack.c.b16 %v2094, %v2086
        %v2735 = vpack.c.b16 %v2095, %v2087
        %v2736 = vpack.c.b16 %v2104, %v2096
        %v2737 = vpack.c.b16 %v2105, %v2097
        %v2738 = vpack.c.b16 %v2106, %v2098
        %v2739 = vpack.c.b16 %v2107, %v2099
        %v2740 = vpack.c.b16 %v2108, %v2100
        %v2741 = vpack.c.b16 %v2109, %v2101
        %v2742 = vpack.c.b16 %v2110, %v2102
        %v2743 = vpack.c.b16 %v2111, %v2103
        %v2744 = vpack.c.b16 %v2120, %v2112
        %v2745 = vpack.c.b16 %v2121, %v2113
        %v2746 = vpack.c.b16 %v2122, %v2114
        %v2747 = vpack.c.b16 %v2123, %v2115
        %v2748 = vpack.c.b16 %v2124, %v2116
        %v2749 = vpack.c.b16 %v2125, %v2117
        %v2750 = vpack.c.b16 %v2126, %v2118
        %v2751 = vpack.c.b16 %v2127, %v2119
        %v2752 = vpack.c.b16 %v2136, %v2128
        %v2753 = vpack.c.b16 %v2137, %v2129
        %v2754 = vpack.c.b16 %v2138, %v2130
        %v2755 = vpack.c.b16 %v2139, %v2131
        %v2756 = vpack.c.b16 %v2140, %v2132
        %v2757 = vpack.c.b16 %v2141, %v2133
        %v2758 = vpack.c.b16 %v2142, %v2134
        %v2759 = vpack.c.b16 %v2143, %v2135
        %v2760 = vpack.c.b16 %v2152, %v2144
        %v2761 = vpack.c.b16 %v2153, %v2145
        %v2762 = vpack.c.b16 %v2154, %v2146
        %v2763 = vpack.c.b16 %v2155, %v2147
        %v2764 = vpack.c.b16 %v2156, %v2148
        %v2765 = vpack.c.b16 %v2157, %v2149
        %v2766 = vpack.c.b16 %v2158, %v2150
        %v2767 = vpack.c.b16 %v2159, %v2151
        %v2768 = vpack.c.b16 %v2168, %v2160
        %v2769 = vpack.c.b16 %v2169, %v2161
        %v2770 = vpack.c.b16 %v2170, %v2162
        %v2771 = vpack.c.b16 %v2171, %v2163
        %v2772 = vpack.c.b16 %v2172, %v2164
        %v2773 = vpack.c.b16 %v2173, %v2165
        %v2774 = vpack.c.b16 %v2174, %v2166
        %v2775 = vpack.c.b16 %v2175, %v2167
        %v2776 = vpack.c.b16 %v2184, %v2176
        %v2777 = vpack.c.b16 %v2185, %v2177
        %v2778 = vpack.c.b16 %v2186, %v2178
        %v2779 = vpack.c.b16 %v2187, %v2179
        %v2780 = vpack.c.b16 %v2188, %v2180
        %v2781 = vpack.c.b16 %v2189, %v2181
        %v2782 = vpack.c.b16 %v2190, %v2182
        %v2783 = vpack.c.b16 %v2191, %v2183
        %v2784 = vpack.c.b16 %v2200, %v2192
        %v2785 = vpack.c.b16 %v2201, %v2193
        %v2786 = vpack.c.b16 %v2202, %v2194
        %v2787 = vpack.c.b16 %v2203, %v2195
        %v2788 = vpack.c.b16 %v2204, %v2196
        %v2789 = vpack.c.b16 %v2205, %v2197
        %v2790 = vpack.c.b16 %v2206, %v2198
        %v2791 = vpack.c.b16 %v2207, %v2199
        %v2792 = vpack.c.b16 %v2216, %v2208
        %v2793 = vpack.c.b16 %v2217, %v2209
        %v2794 = vpack.c.b16 %v2218, %v2210
        %v2795 = vpack.c.b16 %v2219, %v2211
        %v2796 = vpack.c.b16 %v2220, %v2212
        %v2797 = vpack.c.b16 %v2221, %v2213
        %v2798 = vpack.c.b16 %v2222, %v2214
        %v2799 = vpack.c.b16 %v2223, %v2215
        %v2800 = vpack.c.b16 %v2232, %v2224
        %v2801 = vpack.c.b16 %v2233, %v2225
        %v2802 = vpack.c.b16 %v2234, %v2226
        %v2803 = vpack.c.b16 %v2235, %v2227
        %v2804 = vpack.c.b16 %v2236, %v2228
        %v2805 = vpack.c.b16 %v2237, %v2229
        %v2806 = vpack.c.b16 %v2238, %v2230
        %v2807 = vpack.c.b16 %v2239, %v2231
        %v2808 = vpack.c.b16 %v2248, %v2240
        %v2809 = vpack.c.b16 %v2249, %v2241
        %v2810 = vpack.c.b16 %v2250, %v2242
        %v2811 = vpack.c.b16 %v2251, %v2243
        %v2812 = vpack.c.b16 %v2252, %v2244
        %v2813 = vpack.c.b16 %v2253, %v2245
        %v2814 = vpack.c.b16 %v2254, %v2246
        %v2815 = vpack.c.b16 %v2255, %v2247
        %v2816 = vpack.c.b16 %v2264, %v2256
        %v2817 = vpack.c.b16 %v2265, %v2257
        %v2818 = vpack.c.b16 %v2266, %v2258
        %v2819 = vpack.c.b16 %v2267, %v2259
        %v2820 = vpack.c.b16 %v2268, %v2260
        %v2821 = vpack.c.b16 %v2269, %v2261
        %v2822 = vpack.c.b16 %v2270, %v2262
        %v2823 = vpack.c.b16 %v2271, %v2263
        %v2824 = vpack.c.b16 %v2280, %v2272
        %v2825 = vpack.c.b16 %v2281, %v2273
        %v2826 = vpack.c.b16 %v2282, %v2274
        %v2827 = vpack.c.b16 %v2283, %v2275
        %v2828 = vpack.c.b16 %v2284, %v2276
        %v2829 = vpack.c.b16 %v2285, %v2277
        %v2830 = vpack.c.b16 %v2286, %v2278
        %v2831 = vpack.c.b16 %v2287, %v2279
        %v2832 = vpack.c.b16 %v2296, %v2288
        %v2833 = vpack.c.b16 %v2297, %v2289
        %v2834 = vpack.c.b16 %v2298, %v2290
        %v2835 = vpack.c.b16 %v2299, %v2291
        %v2836 = vpack.c.b16 %v2300, %v2292
        %v2837 = vpack.c.b16 %v2301, %v2293
        %v2838 = vpack.c.b16 %v2302, %v2294
        %v2839 = vpack.c.b16 %v2303, %v2295
        %v2840 = vpack.c.b16 %v2312, %v2304
        %v2841 = vpack.c.b16 %v2313, %v2305
        %v2842 = vpack.c.b16 %v2314, %v2306
        %v2843 = vpack.c.b16 %v2315, %v2307
        %v2844 = vpack.c.b16 %v2316, %v2308
        %v2845 = vpack.c.b16 %v2317, %v2309
        %v2846 = vpack.c.b16 %v2318, %v2310
        %v2847 = vpack.c.b16 %v2319, %v2311
        %v2848 = vpack.c.b16 %v2328, %v2320
        %v2849 = vpack.c.b16 %v2329, %v2321
        %v2850 = vpack.c.b16 %v2330, %v2322
        %v2851 = vpack.c.b16 %v2331, %v2323
        %v2852 = vpack.c.b16 %v2332, %v2324
        %v2853 = vpack.c.b16 %v2333, %v2325
        %v2854 = vpack.c.b16 %v2334, %v2326
        %v2855 = vpack.c.b16 %v2335, %v2327
        %v2856 = vpack.c.b16 %v2344, %v2336
        %v2857 = vpack.c.b16 %v2345, %v2337
        %v2858 = vpack.c.b16 %v2346, %v2338
        %v2859 = vpack.c.b16 %v2347, %v2339
        %v2860 = vpack.c.b16 %v2348, %v2340
        %v2861 = vpack.c.b16 %v2349, %v2341
        %v2862 = vpack.c.b16 %v2350, %v2342
        %v2863 = vpack.c.b16 %v2351, %v2343
        %3376 = vmatprep.subr.bf16.mxu0 %v2353
        %3377 = vmatpush1.bf16.msra.mxu0 %v2352
        %3378 = vmatprep.subr.bf16.mxu0 %v2361
        %3379 = vmatpush1.bf16.msra.mxu0 %v2360
        %3380 = vmatprep.subr.bf16.mxu0 %v2369
        %3381 = vmatpush1.bf16.msra.mxu0 %v2368
        %3382 = vmatprep.subr.bf16.mxu0 %v2377
        %3383 = vmatpush1.bf16.msra.mxu0 %v2376
        %3384 = vmatprep.subr.bf16.mxu0 %v2385
        %3385 = vmatpush1.bf16.msra.mxu0 %v2384
        %3386 = vmatprep.subr.bf16.mxu0 %v2393
        %3387 = vmatpush1.bf16.msra.mxu0 %v2392
        %3388 = vmatprep.subr.bf16.mxu0 %v2401
        %3389 = vmatpush1.bf16.msra.mxu0 %v2400
        %3390 = vmatprep.subr.bf16.mxu0 %v2409
        %3391 = vmatpush1.bf16.msra.mxu0 %v2408
        %3392 = vmatprep.subr.bf16.mxu0 %v2417
        %3393 = vmatpush1.bf16.msra.mxu0 %v2416
        %3394 = vmatprep.subr.bf16.mxu0 %v2425
        %3395 = vmatpush1.bf16.msra.mxu0 %v2424
        %3396 = vmatprep.subr.bf16.mxu0 %v2433
        %3397 = vmatpush1.bf16.msra.mxu0 %v2432
        %3398 = vmatprep.subr.bf16.mxu0 %v2441
        %3399 = vmatpush1.bf16.msra.mxu0 %v2440
        %3400 = vmatprep.subr.bf16.mxu0 %v2449
        %3401 = vmatpush1.bf16.msra.mxu0 %v2448
        %3402 = vmatprep.subr.bf16.mxu0 %v2457
        %3403 = vmatpush1.bf16.msra.mxu0 %v2456
        %3404 = vmatprep.subr.bf16.mxu0 %v2465
        %3405 = vmatpush1.bf16.msra.mxu0 %v2464
        %3406 = vmatprep.subr.bf16.mxu0 %v2473
        %3407 = vmatpush1.bf16.msra.mxu0 %v2472
        %3408 = vmatprep.mubr.bf16.mxu0 %v297
        %3409 = vmatmul.mubr.bf16.gmra.mrb[0].mxu0 %v296
        %v3410 = vpop.f32.mrb[0].mxu0
        %v3411 = vadd.f32 0.0, %v3410
        %v3412 = vpop.f32.mrb[0].mxu0
        %v3413 = vadd.f32 0.0, %v3412
        %v3414 = vpop.f32.mrb[0].mxu0
        %v3415 = vpop.f32.mrb[0].mxu0
        %3416 = vdwg.mxu0
        %3417 = vmatprep.subr.bf16.mxu0 %v2481
        %3418 = vmatpush1.bf16.msra.mxu0 %v2480
        %3419 = vmatprep.subr.bf16.mxu0 %v2489
        %3420 = vmatpush1.bf16.msra.mxu0 %v2488
        %3421 = vmatprep.subr.bf16.mxu0 %v2497
        %3422 = vmatpush1.bf16.msra.mxu0 %v2496
        %3423 = vmatprep.subr.bf16.mxu0 %v2505
        %3424 = vmatpush1.bf16.msra.mxu0 %v2504
        %3425 = vmatprep.subr.bf16.mxu0 %v2513
        %3426 = vmatpush1.bf16.msra.mxu0 %v2512
        %3427 = vmatprep.subr.bf16.mxu0 %v2521
        %3428 = vmatpush1.bf16.msra.mxu0 %v2520
        %3429 = vmatprep.subr.bf16.mxu0 %v2529
        %3430 = vmatpush1.bf16.msra.mxu0 %v2528
        %3431 = vmatprep.subr.bf16.mxu0 %v2537
        %3432 = vmatpush1.bf16.msra.mxu0 %v2536
        %3433 = vmatprep.subr.bf16.mxu0 %v2545
        %3434 = vmatpush1.bf16.msra.mxu0 %v2544
        %3435 = vmatprep.subr.bf16.mxu0 %v2553
        %3436 = vmatpush1.bf16.msra.mxu0 %v2552
        %3437 = vmatprep.subr.bf16.mxu0 %v2561
        %3438 = vmatpush1.bf16.msra.mxu0 %v2560
        %3439 = vmatprep.subr.bf16.mxu0 %v2569
        %3440 = vmatpush1.bf16.msra.mxu0 %v2568
        %3441 = vmatprep.subr.bf16.mxu0 %v2577
        %3442 = vmatpush1.bf16.msra.mxu0 %v2576
        %3443 = vmatprep.subr.bf16.mxu0 %v2585
        %3444 = vmatpush1.bf16.msra.mxu0 %v2584
        %3445 = vmatprep.subr.bf16.mxu0 %v2593
        %3446 = vmatpush1.bf16.msra.mxu0 %v2592
        %3447 = vmatprep.subr.bf16.mxu0 %v2601
        %3448 = vmatpush1.bf16.msra.mxu0 %v2600
        %3449 = vmatprep.mubr.bf16.mxu0 %v299
        %3450 = vmatmul.mubr.bf16.gmra.mrb[0].mxu0 %v298
        %v3451 = vpop.f32.mrb[0].mxu0
        %v3452 = vadd.f32 %v3411, %v3451
        %v3453 = vpop.f32.mrb[0].mxu0
        %v3454 = vadd.f32 %v3413, %v3453
        %v3455 = vpop.f32.mrb[0].mxu0
        %v3456 = vpop.f32.mrb[0].mxu0
        %3457 = vdwg.mxu0
        %3458 = vmatprep.subr.bf16.mxu0 %v2609
        %3459 = vmatpush1.bf16.msra.mxu0 %v2608
        %3460 = vmatprep.subr.bf16.mxu0 %v2617
        %3461 = vmatpush1.bf16.msra.mxu0 %v2616
        %3462 = vmatprep.subr.bf16.mxu0 %v2625
        %3463 = vmatpush1.bf16.msra.mxu0 %v2624
        %3464 = vmatprep.subr.bf16.mxu0 %v2633
        %3465 = vmatpush1.bf16.msra.mxu0 %v2632
        %3466 = vmatprep.subr.bf16.mxu0 %v2641
        %3467 = vmatpush1.bf16.msra.mxu0 %v2640
        %3468 = vmatprep.subr.bf16.mxu0 %v2649
        %3469 = vmatpush1.bf16.msra.mxu0 %v2648
        %3470 = vmatprep.subr.bf16.mxu0 %v2657
        %3471 = vmatpush1.bf16.msra.mxu0 %v2656
        %3472 = vmatprep.subr.bf16.mxu0 %v2665
        %3473 = vmatpush1.bf16.msra.mxu0 %v2664
        %3474 = vmatprep.subr.bf16.mxu0 %v2673
        %3475 = vmatpush1.bf16.msra.mxu0 %v2672
        %3476 = vmatprep.subr.bf16.mxu0 %v2681
        %3477 = vmatpush1.bf16.msra.mxu0 %v2680
        %3478 = vmatprep.subr.bf16.mxu0 %v2689
        %3479 = vmatpush1.bf16.msra.mxu0 %v2688
        %3480 = vmatprep.subr.bf16.mxu0 %v2697
        %3481 = vmatpush1.bf16.msra.mxu0 %v2696
        %3482 = vmatprep.subr.bf16.mxu0 %v2705
        %3483 = vmatpush1.bf16.msra.mxu0 %v2704
        %3484 = vmatprep.subr.bf16.mxu0 %v2713
        %3485 = vmatpush1.bf16.msra.mxu0 %v2712
        %3486 = vmatprep.subr.bf16.mxu0 %v2721
        %3487 = vmatpush1.bf16.msra.mxu0 %v2720
        %3488 = vmatprep.subr.bf16.mxu0 %v2729
        %3489 = vmatpush1.bf16.msra.mxu0 %v2728
        %3490 = vmatprep.mubr.bf16.mxu0 %v301
        %3491 = vmatmul.mubr.bf16.gmra.mrb[0].mxu0 %v300
        %v3492 = vpop.f32.mrb[0].mxu0
        %v3493 = vadd.f32 %v3452, %v3492
        %v3494 = vpop.f32.mrb[0].mxu0
        %v3495 = vadd.f32 %v3454, %v3494
        %v3496 = vpop.f32.mrb[0].mxu0
        %v3497 = vpop.f32.mrb[0].mxu0
        %3498 = vdwg.mxu0
        %3499 = vmatprep.subr.bf16.mxu0 %v2737
        %3500 = vmatpush1.bf16.msra.mxu0 %v2736
        %3501 = vmatprep.subr.bf16.mxu0 %v2745
        %3502 = vmatpush1.bf16.msra.mxu0 %v2744
        %3503 = vmatprep.subr.bf16.mxu0 %v2753
        %3504 = vmatpush1.bf16.msra.mxu0 %v2752
        %3505 = vmatprep.subr.bf16.mxu0 %v2761
        %3506 = vmatpush1.bf16.msra.mxu0 %v2760
        %3507 = vmatprep.subr.bf16.mxu0 %v2769
        %3508 = vmatpush1.bf16.msra.mxu0 %v2768
        %3509 = vmatprep.subr.bf16.mxu0 %v2777
        %3510 = vmatpush1.bf16.msra.mxu0 %v2776
        %3511 = vmatprep.subr.bf16.mxu0 %v2785
        %3512 = vmatpush1.bf16.msra.mxu0 %v2784
        %3513 = vmatprep.subr.bf16.mxu0 %v2793
        %3514 = vmatpush1.bf16.msra.mxu0 %v2792
        %3515 = vmatprep.subr.bf16.mxu0 %v2801
        %3516 = vmatpush1.bf16.msra.mxu0 %v2800
        %3517 = vmatprep.subr.bf16.mxu0 %v2809
        %3518 = vmatpush1.bf16.msra.mxu0 %v2808
        %3519 = vmatprep.subr.bf16.mxu0 %v2817
        %3520 = vmatpush1.bf16.msra.mxu0 %v2816
        %3521 = vmatprep.subr.bf16.mxu0 %v2825
        %3522 = vmatpush1.bf16.msra.mxu0 %v2824
        %3523 = vmatprep.subr.bf16.mxu0 %v2833
        %3524 = vmatpush1.bf16.msra.mxu0 %v2832
        %3525 = vmatprep.subr.bf16.mxu0 %v2841
        %3526 = vmatpush1.bf16.msra.mxu0 %v2840
        %3527 = vmatprep.subr.bf16.mxu0 %v2849
        %3528 = vmatpush1.bf16.msra.mxu0 %v2848
        %3529 = vmatprep.subr.bf16.mxu0 %v2857
        %3530 = vmatpush1.bf16.msra.mxu0 %v2856
        %3531 = vmatprep.mubr.bf16.mxu0 %v303
        %3532 = vmatmul.mubr.bf16.gmra.mrb[0].mxu0 %v302
        %v3533 = vpop.f32.mrb[0].mxu0
        %v3534 = vadd.f32 %v3493, %v3533
        %v3535 = vpop.f32.mrb[0].mxu0
        %v3536 = vadd.f32 %v3495, %v3535
        %v3537 = vpop.f32.mrb[0].mxu0
        %v3538 = vpop.f32.mrb[0].mxu0
        %3539 = vdwg.mxu0
        %3540 = vmatprep.subr.bf16.mxu0 %v2355
        %3541 = vmatpush1.bf16.msra.mxu0 %v2354
        %3542 = vmatprep.subr.bf16.mxu0 %v2363
        %3543 = vmatpush1.bf16.msra.mxu0 %v2362
        %3544 = vmatprep.subr.bf16.mxu0 %v2371
        %3545 = vmatpush1.bf16.msra.mxu0 %v2370
        %3546 = vmatprep.subr.bf16.mxu0 %v2379
        %3547 = vmatpush1.bf16.msra.mxu0 %v2378
        %3548 = vmatprep.subr.bf16.mxu0 %v2387
        %3549 = vmatpush1.bf16.msra.mxu0 %v2386
        %3550 = vmatprep.subr.bf16.mxu0 %v2395
        %3551 = vmatpush1.bf16.msra.mxu0 %v2394
        %3552 = vmatprep.subr.bf16.mxu0 %v2403
        %3553 = vmatpush1.bf16.msra.mxu0 %v2402
        %3554 = vmatprep.subr.bf16.mxu0 %v2411
        %3555 = vmatpush1.bf16.msra.mxu0 %v2410
        %3556 = vmatprep.subr.bf16.mxu0 %v2419
        %3557 = vmatpush1.bf16.msra.mxu0 %v2418
        %3558 = vmatprep.subr.bf16.mxu0 %v2427
        %3559 = vmatpush1.bf16.msra.mxu0 %v2426
        %3560 = vmatprep.subr.bf16.mxu0 %v2435
        %3561 = vmatpush1.bf16.msra.mxu0 %v2434
        %3562 = vmatprep.subr.bf16.mxu0 %v2443
        %3563 = vmatpush1.bf16.msra.mxu0 %v2442
        %3564 = vmatprep.subr.bf16.mxu0 %v2451
        %3565 = vmatpush1.bf16.msra.mxu0 %v2450
        %3566 = vmatprep.subr.bf16.mxu0 %v2459
        %3567 = vmatpush1.bf16.msra.mxu0 %v2458
        %3568 = vmatprep.subr.bf16.mxu0 %v2467
        %3569 = vmatpush1.bf16.msra.mxu0 %v2466
        %3570 = vmatprep.subr.bf16.mxu0 %v2475
        %3571 = vmatpush1.bf16.msra.mxu0 %v2474
        %3572 = vmatprep.mubr.bf16.mxu0 %v297
        %3573 = vmatmul.mubr.bf16.gmra.mrb[0].mxu0 %v296
        %v3574 = vpop.f32.mrb[0].mxu0
        %v3575 = vadd.f32 0.0, %v3574
        %v3576 = vpop.f32.mrb[0].mxu0
        %v3577 = vadd.f32 0.0, %v3576
        %v3578 = vpop.f32.mrb[0].mxu0
        %v3579 = vpop.f32.mrb[0].mxu0
        %3580 = vdwg.mxu0
        %3581 = vmatprep.subr.bf16.mxu0 %v2483
        %3582 = vmatpush1.bf16.msra.mxu0 %v2482
        %3583 = vmatprep.subr.bf16.mxu0 %v2491
        %3584 = vmatpush1.bf16.msra.mxu0 %v2490
        %3585 = vmatprep.subr.bf16.mxu0 %v2499
        %3586 = vmatpush1.bf16.msra.mxu0 %v2498
        %3587 = vmatprep.subr.bf16.mxu0 %v2507
        %3588 = vmatpush1.bf16.msra.mxu0 %v2506
        %3589 = vmatprep.subr.bf16.mxu0 %v2515
        %3590 = vmatpush1.bf16.msra.mxu0 %v2514
        %3591 = vmatprep.subr.bf16.mxu0 %v2523
        %3592 = vmatpush1.bf16.msra.mxu0 %v2522
        %3593 = vmatprep.subr.bf16.mxu0 %v2531
        %3594 = vmatpush1.bf16.msra.mxu0 %v2530
        %3595 = vmatprep.subr.bf16.mxu0 %v2539
        %3596 = vmatpush1.bf16.msra.mxu0 %v2538
        %3597 = vmatprep.subr.bf16.mxu0 %v2547
        %3598 = vmatpush1.bf16.msra.mxu0 %v2546
        %3599 = vmatprep.subr.bf16.mxu0 %v2555
        %3600 = vmatpush1.bf16.msra.mxu0 %v2554
        %3601 = vmatprep.subr.bf16.mxu0 %v2563
        %3602 = vmatpush1.bf16.msra.mxu0 %v2562
        %3603 = vmatprep.subr.bf16.mxu0 %v2571
        %3604 = vmatpush1.bf16.msra.mxu0 %v2570
        %3605 = vmatprep.subr.bf16.mxu0 %v2579
        %3606 = vmatpush1.bf16.msra.mxu0 %v2578
        %3607 = vmatprep.subr.bf16.mxu0 %v2587
        %3608 = vmatpush1.bf16.msra.mxu0 %v2586
        %3609 = vmatprep.subr.bf16.mxu0 %v2595
        %3610 = vmatpush1.bf16.msra.mxu0 %v2594
        %3611 = vmatprep.subr.bf16.mxu0 %v2603
        %3612 = vmatpush1.bf16.msra.mxu0 %v2602
        %3613 = vmatprep.mubr.bf16.mxu0 %v299
        %3614 = vmatmul.mubr.bf16.gmra.mrb[0].mxu0 %v298
        %v3615 = vpop.f32.mrb[0].mxu0
        %v3616 = vadd.f32 %v3575, %v3615
        %v3617 = vpop.f32.mrb[0].mxu0
        %v3618 = vadd.f32 %v3577, %v3617
        %v3619 = vpop.f32.mrb[0].mxu0
        %v3620 = vpop.f32.mrb[0].mxu0
        %3621 = vdwg.mxu0
        %3622 = vmatprep.subr.bf16.mxu0 %v2611
        %3623 = vmatpush1.bf16.msra.mxu0 %v2610
        %3624 = vmatprep.subr.bf16.mxu0 %v2619
        %3625 = vmatpush1.bf16.msra.mxu0 %v2618
        %3626 = vmatprep.subr.bf16.mxu0 %v2627
        %3627 = vmatpush1.bf16.msra.mxu0 %v2626
        %3628 = vmatprep.subr.bf16.mxu0 %v2635
        %3629 = vmatpush1.bf16.msra.mxu0 %v2634
        %3630 = vmatprep.subr.bf16.mxu0 %v2643
        %3631 = vmatpush1.bf16.msra.mxu0 %v2642
        %3632 = vmatprep.subr.bf16.mxu0 %v2651
        %3633 = vmatpush1.bf16.msra.mxu0 %v2650
        %3634 = vmatprep.subr.bf16.mxu0 %v2659
        %3635 = vmatpush1.bf16.msra.mxu0 %v2658
        %3636 = vmatprep.subr.bf16.mxu0 %v2667
        %3637 = vmatpush1.bf16.msra.mxu0 %v2666
        %3638 = vmatprep.subr.bf16.mxu0 %v2675
        %3639 = vmatpush1.bf16.msra.mxu0 %v2674
        %3640 = vmatprep.subr.bf16.mxu0 %v2683
        %3641 = vmatpush1.bf16.msra.mxu0 %v2682
        %3642 = vmatprep.subr.bf16.mxu0 %v2691
        %3643 = vmatpush1.bf16.msra.mxu0 %v2690
        %3644 = vmatprep.subr.bf16.mxu0 %v2699
        %3645 = vmatpush1.bf16.msra.mxu0 %v2698
        %3646 = vmatprep.subr.bf16.mxu0 %v2707
        %3647 = vmatpush1.bf16.msra.mxu0 %v2706
        %3648 = vmatprep.subr.bf16.mxu0 %v2715
        %3649 = vmatpush1.bf16.msra.mxu0 %v2714
        %3650 = vmatprep.subr.bf16.mxu0 %v2723
        %3651 = vmatpush1.bf16.msra.mxu0 %v2722
        %3652 = vmatprep.subr.bf16.mxu0 %v2731
        %3653 = vmatpush1.bf16.msra.mxu0 %v2730
        %3654 = vmatprep.mubr.bf16.mxu0 %v301
        %3655 = vmatmul.mubr.bf16.gmra.mrb[0].mxu0 %v300
        %v3656 = vpop.f32.mrb[0].mxu0
        %v3657 = vadd.f32 %v3616, %v3656
        %v3658 = vpop.f32.mrb[0].mxu0
        %v3659 = vadd.f32 %v3618, %v3658
        %v3660 = vpop.f32.mrb[0].mxu0
        %v3661 = vpop.f32.mrb[0].mxu0
        %3662 = vdwg.mxu0
        %3663 = vmatprep.subr.bf16.mxu0 %v2739
        %3664 = vmatpush1.bf16.msra.mxu0 %v2738
        %3665 = vmatprep.subr.bf16.mxu0 %v2747
        %3666 = vmatpush1.bf16.msra.mxu0 %v2746
        %3667 = vmatprep.subr.bf16.mxu0 %v2755
        %3668 = vmatpush1.bf16.msra.mxu0 %v2754
        %3669 = vmatprep.subr.bf16.mxu0 %v2763
        %3670 = vmatpush1.bf16.msra.mxu0 %v2762
        %3671 = vmatprep.subr.bf16.mxu0 %v2771
        %3672 = vmatpush1.bf16.msra.mxu0 %v2770
        %3673 = vmatprep.subr.bf16.mxu0 %v2779
        %3674 = vmatpush1.bf16.msra.mxu0 %v2778
        %3675 = vmatprep.subr.bf16.mxu0 %v2787
        %3676 = vmatpush1.bf16.msra.mxu0 %v2786
        %3677 = vmatprep.subr.bf16.mxu0 %v2795
        %3678 = vmatpush1.bf16.msra.mxu0 %v2794
        %3679 = vmatprep.subr.bf16.mxu0 %v2803
        %3680 = vmatpush1.bf16.msra.mxu0 %v2802
        %3681 = vmatprep.subr.bf16.mxu0 %v2811
        %3682 = vmatpush1.bf16.msra.mxu0 %v2810
        %3683 = vmatprep.subr.bf16.mxu0 %v2819
        %3684 = vmatpush1.bf16.msra.mxu0 %v2818
        %3685 = vmatprep.subr.bf16.mxu0 %v2827
        %3686 = vmatpush1.bf16.msra.mxu0 %v2826
        %3687 = vmatprep.subr.bf16.mxu0 %v2835
        %3688 = vmatpush1.bf16.msra.mxu0 %v2834
        %3689 = vmatprep.subr.bf16.mxu0 %v2843
        %3690 = vmatpush1.bf16.msra.mxu0 %v2842
        %3691 = vmatprep.subr.bf16.mxu0 %v2851
        %3692 = vmatpush1.bf16.msra.mxu0 %v2850
        %3693 = vmatprep.subr.bf16.mxu0 %v2859
        %3694 = vmatpush1.bf16.msra.mxu0 %v2858
        %3695 = vmatprep.mubr.bf16.mxu0 %v303
        %3696 = vmatmul.mubr.bf16.gmra.mrb[0].mxu0 %v302
        %v3697 = vpop.f32.mrb[0].mxu0
        %v3698 = vadd.f32 %v3657, %v3697
        %v3699 = vpop.f32.mrb[0].mxu0
        %v3700 = vadd.f32 %v3659, %v3699
        %v3701 = vpop.f32.mrb[0].mxu0
        %v3702 = vpop.f32.mrb[0].mxu0
        %3703 = vdwg.mxu0
        %3704 = vmatprep.subr.bf16.mxu0 %v2357
        %3705 = vmatpush1.bf16.msra.mxu0 %v2356
        %3706 = vmatprep.subr.bf16.mxu0 %v2365
        %3707 = vmatpush1.bf16.msra.mxu0 %v2364
        %3708 = vmatprep.subr.bf16.mxu0 %v2373
        %3709 = vmatpush1.bf16.msra.mxu0 %v2372
        %3710 = vmatprep.subr.bf16.mxu0 %v2381
        %3711 = vmatpush1.bf16.msra.mxu0 %v2380
        %3712 = vmatprep.subr.bf16.mxu0 %v2389
        %3713 = vmatpush1.bf16.msra.mxu0 %v2388
        %3714 = vmatprep.subr.bf16.mxu0 %v2397
        %3715 = vmatpush1.bf16.msra.mxu0 %v2396
        %3716 = vmatprep.subr.bf16.mxu0 %v2405
        %3717 = vmatpush1.bf16.msra.mxu0 %v2404
        %3718 = vmatprep.subr.bf16.mxu0 %v2413
        %3719 = vmatpush1.bf16.msra.mxu0 %v2412
        %3720 = vmatprep.subr.bf16.mxu0 %v2421
        %3721 = vmatpush1.bf16.msra.mxu0 %v2420
        %3722 = vmatprep.subr.bf16.mxu0 %v2429
        %3723 = vmatpush1.bf16.msra.mxu0 %v2428
        %3724 = vmatprep.subr.bf16.mxu0 %v2437
        %3725 = vmatpush1.bf16.msra.mxu0 %v2436
        %3726 = vmatprep.subr.bf16.mxu0 %v2445
        %3727 = vmatpush1.bf16.msra.mxu0 %v2444
        %3728 = vmatprep.subr.bf16.mxu0 %v2453
        %3729 = vmatpush1.bf16.msra.mxu0 %v2452
        %3730 = vmatprep.subr.bf16.mxu0 %v2461
        %3731 = vmatpush1.bf16.msra.mxu0 %v2460
        %3732 = vmatprep.subr.bf16.mxu0 %v2469
        %3733 = vmatpush1.bf16.msra.mxu0 %v2468
        %3734 = vmatprep.subr.bf16.mxu0 %v2477
        %3735 = vmatpush1.bf16.msra.mxu0 %v2476
        %3736 = vmatprep.mubr.bf16.mxu0 %v297
        %3737 = vmatmul.mubr.bf16.gmra.mrb[0].mxu0 %v296
        %v3738 = vpop.f32.mrb[0].mxu0
        %v3739 = vadd.f32 0.0, %v3738
        %v3740 = vpop.f32.mrb[0].mxu0
        %v3741 = vadd.f32 0.0, %v3740
        %v3742 = vpop.f32.mrb[0].mxu0
        %v3743 = vpop.f32.mrb[0].mxu0
        %3744 = vdwg.mxu0
        %3745 = vmatprep.subr.bf16.mxu0 %v2485
        %3746 = vmatpush1.bf16.msra.mxu0 %v2484
        %3747 = vmatprep.subr.bf16.mxu0 %v2493
        %3748 = vmatpush1.bf16.msra.mxu0 %v2492
        %3749 = vmatprep.subr.bf16.mxu0 %v2501
        %3750 = vmatpush1.bf16.msra.mxu0 %v2500
        %3751 = vmatprep.subr.bf16.mxu0 %v2509
        %3752 = vmatpush1.bf16.msra.mxu0 %v2508
        %3753 = vmatprep.subr.bf16.mxu0 %v2517
        %3754 = vmatpush1.bf16.msra.mxu0 %v2516
        %3755 = vmatprep.subr.bf16.mxu0 %v2525
        %3756 = vmatpush1.bf16.msra.mxu0 %v2524
        %3757 = vmatprep.subr.bf16.mxu0 %v2533
        %3758 = vmatpush1.bf16.msra.mxu0 %v2532
        %3759 = vmatprep.subr.bf16.mxu0 %v2541
        %3760 = vmatpush1.bf16.msra.mxu0 %v2540
        %3761 = vmatprep.subr.bf16.mxu0 %v2549
        %3762 = vmatpush1.bf16.msra.mxu0 %v2548
        %3763 = vmatprep.subr.bf16.mxu0 %v2557
        %3764 = vmatpush1.bf16.msra.mxu0 %v2556
        %3765 = vmatprep.subr.bf16.mxu0 %v2565
        %3766 = vmatpush1.bf16.msra.mxu0 %v2564
        %3767 = vmatprep.subr.bf16.mxu0 %v2573
        %3768 = vmatpush1.bf16.msra.mxu0 %v2572
        %3769 = vmatprep.subr.bf16.mxu0 %v2581
        %3770 = vmatpush1.bf16.msra.mxu0 %v2580
        %3771 = vmatprep.subr.bf16.mxu0 %v2589
        %3772 = vmatpush1.bf16.msra.mxu0 %v2588
        %3773 = vmatprep.subr.bf16.mxu0 %v2597
        %3774 = vmatpush1.bf16.msra.mxu0 %v2596
        %3775 = vmatprep.subr.bf16.mxu0 %v2605
        %3776 = vmatpush1.bf16.msra.mxu0 %v2604
        %3777 = vmatprep.mubr.bf16.mxu0 %v299
        %3778 = vmatmul.mubr.bf16.gmra.mrb[0].mxu0 %v298
        %v3779 = vpop.f32.mrb[0].mxu0
        %v3780 = vadd.f32 %v3739, %v3779
        %v3781 = vpop.f32.mrb[0].mxu0
        %v3782 = vadd.f32 %v3741, %v3781
        %v3783 = vpop.f32.mrb[0].mxu0
        %v3784 = vpop.f32.mrb[0].mxu0
        %3785 = vdwg.mxu0
        %3786 = vmatprep.subr.bf16.mxu0 %v2613
        %3787 = vmatpush1.bf16.msra.mxu0 %v2612
        %3788 = vmatprep.subr.bf16.mxu0 %v2621
        %3789 = vmatpush1.bf16.msra.mxu0 %v2620
        %3790 = vmatprep.subr.bf16.mxu0 %v2629
        %3791 = vmatpush1.bf16.msra.mxu0 %v2628
        %3792 = vmatprep.subr.bf16.mxu0 %v2637
        %3793 = vmatpush1.bf16.msra.mxu0 %v2636
        %3794 = vmatprep.subr.bf16.mxu0 %v2645
        %3795 = vmatpush1.bf16.msra.mxu0 %v2644
        %3796 = vmatprep.subr.bf16.mxu0 %v2653
        %3797 = vmatpush1.bf16.msra.mxu0 %v2652
        %3798 = vmatprep.subr.bf16.mxu0 %v2661
        %3799 = vmatpush1.bf16.msra.mxu0 %v2660
        %3800 = vmatprep.subr.bf16.mxu0 %v2669
        %3801 = vmatpush1.bf16.msra.mxu0 %v2668
        %3802 = vmatprep.subr.bf16.mxu0 %v2677
        %3803 = vmatpush1.bf16.msra.mxu0 %v2676
        %3804 = vmatprep.subr.bf16.mxu0 %v2685
        %3805 = vmatpush1.bf16.msra.mxu0 %v2684
        %3806 = vmatprep.subr.bf16.mxu0 %v2693
        %3807 = vmatpush1.bf16.msra.mxu0 %v2692
        %3808 = vmatprep.subr.bf16.mxu0 %v2701
        %3809 = vmatpush1.bf16.msra.mxu0 %v2700
        %3810 = vmatprep.subr.bf16.mxu0 %v2709
        %3811 = vmatpush1.bf16.msra.mxu0 %v2708
        %3812 = vmatprep.subr.bf16.mxu0 %v2717
        %3813 = vmatpush1.bf16.msra.mxu0 %v2716
        %3814 = vmatprep.subr.bf16.mxu0 %v2725
        %3815 = vmatpush1.bf16.msra.mxu0 %v2724
        %3816 = vmatprep.subr.bf16.mxu0 %v2733
        %3817 = vmatpush1.bf16.msra.mxu0 %v2732
        %3818 = vmatprep.mubr.bf16.mxu0 %v301
        %3819 = vmatmul.mubr.bf16.gmra.mrb[0].mxu0 %v300
        %v3820 = vpop.f32.mrb[0].mxu0
        %v3821 = vadd.f32 %v3780, %v3820
        %v3822 = vpop.f32.mrb[0].mxu0
        %v3823 = vadd.f32 %v3782, %v3822
        %v3824 = vpop.f32.mrb[0].mxu0
        %v3825 = vpop.f32.mrb[0].mxu0
        %3826 = vdwg.mxu0
        %3827 = vmatprep.subr.bf16.mxu0 %v2741
        %3828 = vmatpush1.bf16.msra.mxu0 %v2740
        %3829 = vmatprep.subr.bf16.mxu0 %v2749
        %3830 = vmatpush1.bf16.msra.mxu0 %v2748
        %3831 = vmatprep.subr.bf16.mxu0 %v2757
        %3832 = vmatpush1.bf16.msra.mxu0 %v2756
        %3833 = vmatprep.subr.bf16.mxu0 %v2765
        %3834 = vmatpush1.bf16.msra.mxu0 %v2764
        %3835 = vmatprep.subr.bf16.mxu0 %v2773
        %3836 = vmatpush1.bf16.msra.mxu0 %v2772
        %3837 = vmatprep.subr.bf16.mxu0 %v2781
        %3838 = vmatpush1.bf16.msra.mxu0 %v2780
        %3839 = vmatprep.subr.bf16.mxu0 %v2789
        %3840 = vmatpush1.bf16.msra.mxu0 %v2788
        %3841 = vmatprep.subr.bf16.mxu0 %v2797
        %3842 = vmatpush1.bf16.msra.mxu0 %v2796
        %3843 = vmatprep.subr.bf16.mxu0 %v2805
        %3844 = vmatpush1.bf16.msra.mxu0 %v2804
        %3845 = vmatprep.subr.bf16.mxu0 %v2813
        %3846 = vmatpush1.bf16.msra.mxu0 %v2812
        %3847 = vmatprep.subr.bf16.mxu0 %v2821
        %3848 = vmatpush1.bf16.msra.mxu0 %v2820
        %3849 = vmatprep.subr.bf16.mxu0 %v2829
        %3850 = vmatpush1.bf16.msra.mxu0 %v2828
        %3851 = vmatprep.subr.bf16.mxu0 %v2837
        %3852 = vmatpush1.bf16.msra.mxu0 %v2836
        %3853 = vmatprep.subr.bf16.mxu0 %v2845
        %3854 = vmatpush1.bf16.msra.mxu0 %v2844
        %3855 = vmatprep.subr.bf16.mxu0 %v2853
        %3856 = vmatpush1.bf16.msra.mxu0 %v2852
        %3857 = vmatprep.subr.bf16.mxu0 %v2861
        %3858 = vmatpush1.bf16.msra.mxu0 %v2860
        %3859 = vmatprep.mubr.bf16.mxu0 %v303
        %3860 = vmatmul.mubr.bf16.gmra.mrb[0].mxu0 %v302
        %v3861 = vpop.f32.mrb[0].mxu0
        %v3862 = vadd.f32 %v3821, %v3861
        %v3863 = vpop.f32.mrb[0].mxu0
        %v3864 = vadd.f32 %v3823, %v3863
        %v3865 = vpop.f32.mrb[0].mxu0
        %v3866 = vpop.f32.mrb[0].mxu0
        %3867 = vdwg.mxu0
        %3868 = vmatprep.subr.bf16.mxu0 %v2359
        %3869 = vmatpush1.bf16.msra.mxu0 %v2358
        %3870 = vmatprep.subr.bf16.mxu0 %v2367
        %3871 = vmatpush1.bf16.msra.mxu0 %v2366
        %3872 = vmatprep.subr.bf16.mxu0 %v2375
        %3873 = vmatpush1.bf16.msra.mxu0 %v2374
        %3874 = vmatprep.subr.bf16.mxu0 %v2383
        %3875 = vmatpush1.bf16.msra.mxu0 %v2382
        %3876 = vmatprep.subr.bf16.mxu0 %v2391
        %3877 = vmatpush1.bf16.msra.mxu0 %v2390
        %3878 = vmatprep.subr.bf16.mxu0 %v2399
        %3879 = vmatpush1.bf16.msra.mxu0 %v2398
        %3880 = vmatprep.subr.bf16.mxu0 %v2407
        %3881 = vmatpush1.bf16.msra.mxu0 %v2406
        %3882 = vmatprep.subr.bf16.mxu0 %v2415
        %3883 = vmatpush1.bf16.msra.mxu0 %v2414
        %3884 = vmatprep.subr.bf16.mxu0 %v2423
        %3885 = vmatpush1.bf16.msra.mxu0 %v2422
        %3886 = vmatprep.subr.bf16.mxu0 %v2431
        %3887 = vmatpush1.bf16.msra.mxu0 %v2430
        %3888 = vmatprep.subr.bf16.mxu0 %v2439
        %3889 = vmatpush1.bf16.msra.mxu0 %v2438
        %3890 = vmatprep.subr.bf16.mxu0 %v2447
        %3891 = vmatpush1.bf16.msra.mxu0 %v2446
        %3892 = vmatprep.subr.bf16.mxu0 %v2455
        %3893 = vmatpush1.bf16.msra.mxu0 %v2454
        %3894 = vmatprep.subr.bf16.mxu0 %v2463
        %3895 = vmatpush1.bf16.msra.mxu0 %v2462
        %3896 = vmatprep.subr.bf16.mxu0 %v2471
        %3897 = vmatpush1.bf16.msra.mxu0 %v2470
        %3898 = vmatprep.subr.bf16.mxu0 %v2479
        %3899 = vmatpush1.bf16.msra.mxu0 %v2478
        %3900 = vmatprep.mubr.bf16.mxu0 %v297
        %3901 = vmatmul.mubr.bf16.gmra.mrb[0].mxu0 %v296
        %v3902 = vpop.f32.mrb[0].mxu0
        %v3903 = vadd.f32 0.0, %v3902
        %v3904 = vpop.f32.mrb[0].mxu0
        %v3905 = vadd.f32 0.0, %v3904
        %v3906 = vpop.f32.mrb[0].mxu0
        %v3907 = vpop.f32.mrb[0].mxu0
        %3908 = vdwg.mxu0
        %3909 = vmatprep.subr.bf16.mxu0 %v2487
        %3910 = vmatpush1.bf16.msra.mxu0 %v2486
        %3911 = vmatprep.subr.bf16.mxu0 %v2495
        %3912 = vmatpush1.bf16.msra.mxu0 %v2494
        %3913 = vmatprep.subr.bf16.mxu0 %v2503
        %3914 = vmatpush1.bf16.msra.mxu0 %v2502
        %3915 = vmatprep.subr.bf16.mxu0 %v2511
        %3916 = vmatpush1.bf16.msra.mxu0 %v2510
        %3917 = vmatprep.subr.bf16.mxu0 %v2519
        %3918 = vmatpush1.bf16.msra.mxu0 %v2518
        %3919 = vmatprep.subr.bf16.mxu0 %v2527
        %3920 = vmatpush1.bf16.msra.mxu0 %v2526
        %3921 = vmatprep.subr.bf16.mxu0 %v2535
        %3922 = vmatpush1.bf16.msra.mxu0 %v2534
        %3923 = vmatprep.subr.bf16.mxu0 %v2543
        %3924 = vmatpush1.bf16.msra.mxu0 %v2542
        %3925 = vmatprep.subr.bf16.mxu0 %v2551
        %3926 = vmatpush1.bf16.msra.mxu0 %v2550
        %3927 = vmatprep.subr.bf16.mxu0 %v2559
        %3928 = vmatpush1.bf16.msra.mxu0 %v2558
        %3929 = vmatprep.subr.bf16.mxu0 %v2567
        %3930 = vmatpush1.bf16.msra.mxu0 %v2566
        %3931 = vmatprep.subr.bf16.mxu0 %v2575
        %3932 = vmatpush1.bf16.msra.mxu0 %v2574
        %3933 = vmatprep.subr.bf16.mxu0 %v2583
        %3934 = vmatpush1.bf16.msra.mxu0 %v2582
        %3935 = vmatprep.subr.bf16.mxu0 %v2591
        %3936 = vmatpush1.bf16.msra.mxu0 %v2590
        %3937 = vmatprep.subr.bf16.mxu0 %v2599
        %3938 = vmatpush1.bf16.msra.mxu0 %v2598
        %3939 = vmatprep.subr.bf16.mxu0 %v2607
        %3940 = vmatpush1.bf16.msra.mxu0 %v2606
        %3941 = vmatprep.mubr.bf16.mxu0 %v299
        %3942 = vmatmul.mubr.bf16.gmra.mrb[0].mxu0 %v298
        %v3943 = vpop.f32.mrb[0].mxu0
        %v3944 = vadd.f32 %v3903, %v3943
        %v3945 = vpop.f32.mrb[0].mxu0
        %v3946 = vadd.f32 %v3905, %v3945
        %v3947 = vpop.f32.mrb[0].mxu0
        %v3948 = vpop.f32.mrb[0].mxu0
        %3949 = vdwg.mxu0
        %3950 = vmatprep.subr.bf16.mxu0 %v2615
        %3951 = vmatpush1.bf16.msra.mxu0 %v2614
        %3952 = vmatprep.subr.bf16.mxu0 %v2623
        %3953 = vmatpush1.bf16.msra.mxu0 %v2622
        %3954 = vmatprep.subr.bf16.mxu0 %v2631
        %3955 = vmatpush1.bf16.msra.mxu0 %v2630
        %3956 = vmatprep.subr.bf16.mxu0 %v2639
        %3957 = vmatpush1.bf16.msra.mxu0 %v2638
        %3958 = vmatprep.subr.bf16.mxu0 %v2647
        %3959 = vmatpush1.bf16.msra.mxu0 %v2646
        %3960 = vmatprep.subr.bf16.mxu0 %v2655
        %3961 = vmatpush1.bf16.msra.mxu0 %v2654
        %3962 = vmatprep.subr.bf16.mxu0 %v2663
        %3963 = vmatpush1.bf16.msra.mxu0 %v2662
        %3964 = vmatprep.subr.bf16.mxu0 %v2671
        %3965 = vmatpush1.bf16.msra.mxu0 %v2670
        %3966 = vmatprep.subr.bf16.mxu0 %v2679
        %3967 = vmatpush1.bf16.msra.mxu0 %v2678
        %3968 = vmatprep.subr.bf16.mxu0 %v2687
        %3969 = vmatpush1.bf16.msra.mxu0 %v2686
        %3970 = vmatprep.subr.bf16.mxu0 %v2695
        %3971 = vmatpush1.bf16.msra.mxu0 %v2694
        %3972 = vmatprep.subr.bf16.mxu0 %v2703
        %3973 = vmatpush1.bf16.msra.mxu0 %v2702
        %3974 = vmatprep.subr.bf16.mxu0 %v2711
        %3975 = vmatpush1.bf16.msra.mxu0 %v2710
        %3976 = vmatprep.subr.bf16.mxu0 %v2719
        %3977 = vmatpush1.bf16.msra.mxu0 %v2718
        %3978 = vmatprep.subr.bf16.mxu0 %v2727
        %3979 = vmatpush1.bf16.msra.mxu0 %v2726
        %3980 = vmatprep.subr.bf16.mxu0 %v2735
        %3981 = vmatpush1.bf16.msra.mxu0 %v2734
        %3982 = vmatprep.mubr.bf16.mxu0 %v301
        %3983 = vmatmul.mubr.bf16.gmra.mrb[0].mxu0 %v300
        %v3984 = vpop.f32.mrb[0].mxu0
        %v3985 = vadd.f32 %v3944, %v3984
        %v3986 = vpop.f32.mrb[0].mxu0
        %v3987 = vadd.f32 %v3946, %v3986
        %v3988 = vpop.f32.mrb[0].mxu0
        %v3989 = vpop.f32.mrb[0].mxu0
        %3990 = vdwg.mxu0
        %3991 = vmatprep.subr.bf16.mxu0 %v2743
        %3992 = vmatpush1.bf16.msra.mxu0 %v2742
        %3993 = vmatprep.subr.bf16.mxu0 %v2751
        %3994 = vmatpush1.bf16.msra.mxu0 %v2750
        %3995 = vmatprep.subr.bf16.mxu0 %v2759
        %3996 = vmatpush1.bf16.msra.mxu0 %v2758
        %3997 = vmatprep.subr.bf16.mxu0 %v2767
        %3998 = vmatpush1.bf16.msra.mxu0 %v2766
        %3999 = vmatprep.subr.bf16.mxu0 %v2775
        %4000 = vmatpush1.bf16.msra.mxu0 %v2774
        %4001 = vmatprep.subr.bf16.mxu0 %v2783
        %4002 = vmatpush1.bf16.msra.mxu0 %v2782
        %4003 = vmatprep.subr.bf16.mxu0 %v2791
        %4004 = vmatpush1.bf16.msra.mxu0 %v2790
        %4005 = vmatprep.subr.bf16.mxu0 %v2799
        %4006 = vmatpush1.bf16.msra.mxu0 %v2798
        %4007 = vmatprep.subr.bf16.mxu0 %v2807
        %4008 = vmatpush1.bf16.msra.mxu0 %v2806
        %4009 = vmatprep.subr.bf16.mxu0 %v2815
        %4010 = vmatpush1.bf16.msra.mxu0 %v2814
        %4011 = vmatprep.subr.bf16.mxu0 %v2823
        %4012 = vmatpush1.bf16.msra.mxu0 %v2822
        %4013 = vmatprep.subr.bf16.mxu0 %v2831
        %4014 = vmatpush1.bf16.msra.mxu0 %v2830
        %4015 = vmatprep.subr.bf16.mxu0 %v2839
        %4016 = vmatpush1.bf16.msra.mxu0 %v2838
        %4017 = vmatprep.subr.bf16.mxu0 %v2847
        %4018 = vmatpush1.bf16.msra.mxu0 %v2846
        %4019 = vmatprep.subr.bf16.mxu0 %v2855
        %4020 = vmatpush1.bf16.msra.mxu0 %v2854
        %4021 = vmatprep.subr.bf16.mxu0 %v2863
        %4022 = vmatpush1.bf16.msra.mxu0 %v2862
        %4023 = vmatprep.mubr.bf16.mxu0 %v303
        %4024 = vmatmul.mubr.bf16.gmra.mrb[0].mxu0 %v302
        %v4025 = vpop.f32.mrb[0].mxu0
        %v4026 = vadd.f32 %v3985, %v4025
        %v4027 = vpop.f32.mrb[0].mxu0
        %v4028 = vadd.f32 %v3987, %v4027
        %v4029 = vpop.f32.mrb[0].mxu0
        %v4030 = vpop.f32.mrb[0].mxu0
        %4031 = vdwg.mxu0
        // Predicated region
        $region41: #{model_forward.4} parent=31 // pred_check
          %p4032 = pneg %p213
        $region42: #{model_forward.4} parent=31 // pred_check_branch
          %4034 = sbr.rel (%p4032) target = $region44
        $region43: #{model_forward.4} parent=31 // pred_region
          %v4043 = vcombine.low %v3534, %v3536
          %v4044 = vcombine.low %v3698, %v3700
          %v4045 = vcombine.low %v3862, %v3864
          %v4046 = vcombine.low %v4026, %v4028
          %v4048 = vunpack.c.l.s4 1966171168
          %v4049 = vunpack.c.0.s8 %v4048
          %v4050 = vlaneseq
          %v4051 = vshrl.u32 %v4050, 7
          %v4052 = vsub.s32 %v4049, %v4051
          %v4053 = vrot.slane %v4043, %v4052
          %v4055 = vunpack.c.l.s4 1966171168
          %v4056 = vunpack.c.0.s8 %v4055
          %v4057 = vlaneseq
          %v4058 = vshrl.u32 %v4057, 7
          %v4059 = vsub.s32 %v4056, %v4058
          %v4060 = vrot.slane %v4044, %v4059
          %v4062 = vunpack.c.l.s4 1966171168
          %v4063 = vunpack.c.0.s8 %v4062
          %v4064 = vlaneseq
          %v4065 = vshrl.u32 %v4064, 7
          %v4066 = vsub.s32 %v4063, %v4065
          %v4067 = vrot.slane %v4045, %v4066
          %v4069 = vunpack.c.l.s4 1966171168
          %v4070 = vunpack.c.0.s8 %v4069
          %v4071 = vlaneseq
          %v4072 = vshrl.u32 %v4071, 7
          %v4073 = vsub.s32 %v4070, %v4072
          %v4074 = vrot.slane %v4046, %v4073
          %v4075 = vcombine.low %v4053, %v4060
          %v4076 = vcombine.low %v4067, %v4074
          %v4078 = vunpack.c.l.s4 1966171168
          %v4079 = vunpack.c.0.s8 %v4078
          %v4080 = vlaneseq
          %v4081 = vshrl.u32 %v4080, 7
          %v4082 = vsub.s32 %v4079, %v4081
          %v4083 = vrot.slane %v4075, %v4082
          %v4085 = vunpack.c.l.s4 1966171168
          %v4086 = vunpack.c.0.s8 %v4085
          %v4087 = vlaneseq
          %v4088 = vshrl.u32 %v4087, 7
          %v4089 = vsub.s32 %v4086, %v4088
          %v4090 = vrot.slane %v4076, %v4089
          %v4091 = vcombine.low %v4083, %v4090
          %v4093 = vadd.f32 %v220, %v4091
          %v4102 = vcombine.low %v221, %v222
          %v4103 = vcombine.low %v223, %v224
          %v4104 = vcombine.low %v225, %v226
          %v4105 = vcombine.low %v227, %v228
          %v4107 = vunpack.c.l.s4 1966171168
          %v4108 = vunpack.c.0.s8 %v4107
          %v4109 = vlaneseq
          %v4110 = vshrl.u32 %v4109, 7
          %v4111 = vsub.s32 %v4108, %v4110
          %v4112 = vrot.slane %v4102, %v4111
          %v4114 = vunpack.c.l.s4 1966171168
          %v4115 = vunpack.c.0.s8 %v4114
          %v4116 = vlaneseq
          %v4117 = vshrl.u32 %v4116, 7
          %v4118 = vsub.s32 %v4115, %v4117
          %v4119 = vrot.slane %v4103, %v4118
          %v4121 = vunpack.c.l.s4 1966171168
          %v4122 = vunpack.c.0.s8 %v4121
          %v4123 = vlaneseq
          %v4124 = vshrl.u32 %v4123, 7
          %v4125 = vsub.s32 %v4122, %v4124
          %v4126 = vrot.slane %v4104, %v4125
          %v4128 = vunpack.c.l.s4 1966171168
          %v4129 = vunpack.c.0.s8 %v4128
          %v4130 = vlaneseq
          %v4131 = vshrl.u32 %v4130, 7
          %v4132 = vsub.s32 %v4129, %v4131
          %v4133 = vrot.slane %v4105, %v4132
          %v4134 = vcombine.low %v4112, %v4119
          %v4135 = vcombine.low %v4126, %v4133
          %v4137 = vunpack.c.l.s4 1966171168
          %v4138 = vunpack.c.0.s8 %v4137
          %v4139 = vlaneseq
          %v4140 = vshrl.u32 %v4139, 7
          %v4141 = vsub.s32 %v4138, %v4140
          %v4142 = vrot.slane %v4134, %v4141
          %v4144 = vunpack.c.l.s4 1966171168
          %v4145 = vunpack.c.0.s8 %v4144
          %v4146 = vlaneseq
          %v4147 = vshrl.u32 %v4146, 7
          %v4148 = vsub.s32 %v4145, %v4147
          %v4149 = vrot.slane %v4135, %v4148
          %v4150 = vcombine.low %v4142, %v4149
          %v4152 = vadd.f32 %v4093, %v4150
          %v4154 = vlaneseq
          %v4155 = vshrl.u32 %v4154, 7
          %v4156 = vsub.s32 0, %v4155
          %v4157 = vrot.slane %v4152, %v4156
          %v4158 = vlaneseq
          %v4159 = vshrl.u32 %v4158, 7
          %v4160 = vsub.s32 1, %v4159
          %v4161 = vrot.slane %v4152, %v4160
          %v4162 = vlaneseq
          %v4163 = vshrl.u32 %v4162, 7
          %v4164 = vsub.s32 2, %v4163
          %v4165 = vrot.slane %v4152, %v4164
          %v4166 = vlaneseq
          %v4167 = vshrl.u32 %v4166, 7
          %v4168 = vsub.s32 3, %v4167
          %v4169 = vrot.slane %v4152, %v4168
          %v4170 = vlaneseq
          %v4171 = vshrl.u32 %v4170, 7
          %v4172 = vsub.s32 4, %v4171
          %v4173 = vrot.slane %v4152, %v4172
          %v4174 = vlaneseq
          %v4175 = vshrl.u32 %v4174, 7
          %v4176 = vsub.s32 5, %v4175
          %v4177 = vrot.slane %v4152, %v4176
          %v4178 = vlaneseq
          %v4179 = vshrl.u32 %v4178, 7
          %v4180 = vsub.s32 6, %v4179
          %v4181 = vrot.slane %v4152, %v4180
          %v4182 = vlaneseq
          %v4183 = vshrl.u32 %v4182, 7
          %v4184 = vsub.s32 7, %v4183
          %v4185 = vrot.slane %v4152, %v4184
          %vm4194 = vcmask 1040384
          %v4195 = vsel %vm4194, %v4157, 0.0
          %v4196 = vsel %vm4194, %v4161, 0.0
          %v4197 = vadd.f32 %v4195, %v4196
          %v4198 = vsel %vm4194, %v4165, 0.0
          %v4199 = vadd.f32 %v4197, %v4198
          %v4200 = vsel %vm4194, %v4169, 0.0
          %v4201 = vadd.f32 %v4199, %v4200
          %v4202 = vsel %vm4194, %v4173, 0.0
          %v4203 = vadd.f32 %v4201, %v4202
          %v4204 = vsel %vm4194, %v4177, 0.0
          %v4205 = vadd.f32 %v4203, %v4204
          %v4206 = vsel %vm4194, %v4181, 0.0
          %v4207 = vadd.f32 %v4205, %v4206
          %v4208 = vsel %vm4194, %v4185, 0.0
          %v4209 = vadd.f32 %v4207, %v4208
          %4210 = vadd.xlane.f32.xlu0 %v4209
          %v4211 = vpop.xlane.xlu0 %4210
          %v4212 = vrcp.pop 1024.0
          %v4213 = vmul.f32 %v4211, %v4212
          %v4215 = vlaneseq
          %v4216 = vshrl.u32 %v4215, 7
          %v4217 = vsub.s32 0, %v4216
          %v4218 = vrot.slane %v4213, %v4217
          %v4220 = vsub.f32 %v4152, %v4218
          %v4221 = vmul.f32 %v4220, %v4220
          %v4223 = vlaneseq
          %v4224 = vshrl.u32 %v4223, 7
          %v4225 = vsub.s32 0, %v4224
          %v4226 = vrot.slane %v4221, %v4225
          %v4227 = vlaneseq
          %v4228 = vshrl.u32 %v4227, 7
          %v4229 = vsub.s32 1, %v4228
          %v4230 = vrot.slane %v4221, %v4229
          %v4231 = vlaneseq
          %v4232 = vshrl.u32 %v4231, 7
          %v4233 = vsub.s32 2, %v4232
          %v4234 = vrot.slane %v4221, %v4233
          %v4235 = vlaneseq
          %v4236 = vshrl.u32 %v4235, 7
          %v4237 = vsub.s32 3, %v4236
          %v4238 = vrot.slane %v4221, %v4237
          %v4239 = vlaneseq
          %v4240 = vshrl.u32 %v4239, 7
          %v4241 = vsub.s32 4, %v4240
          %v4242 = vrot.slane %v4221, %v4241
          %v4243 = vlaneseq
          %v4244 = vshrl.u32 %v4243, 7
          %v4245 = vsub.s32 5, %v4244
          %v4246 = vrot.slane %v4221, %v4245
          %v4247 = vlaneseq
          %v4248 = vshrl.u32 %v4247, 7
          %v4249 = vsub.s32 6, %v4248
          %v4250 = vrot.slane %v4221, %v4249
          %v4251 = vlaneseq
          %v4252 = vshrl.u32 %v4251, 7
          %v4253 = vsub.s32 7, %v4252
          %v4254 = vrot.slane %v4221, %v4253
          %v4263 = vsel %vm4194, %v4226, 0.0
          %v4264 = vsel %vm4194, %v4230, 0.0
          %v4265 = vadd.f32 %v4263, %v4264
          %v4266 = vsel %vm4194, %v4234, 0.0
          %v4267 = vadd.f32 %v4265, %v4266
          %v4268 = vsel %vm4194, %v4238, 0.0
          %v4269 = vadd.f32 %v4267, %v4268
          %v4270 = vsel %vm4194, %v4242, 0.0
          %v4271 = vadd.f32 %v4269, %v4270
          %v4272 = vsel %vm4194, %v4246, 0.0
          %v4273 = vadd.f32 %v4271, %v4272
          %v4274 = vsel %vm4194, %v4250, 0.0
          %v4275 = vadd.f32 %v4273, %v4274
          %v4276 = vsel %vm4194, %v4254, 0.0
          %v4277 = vadd.f32 %v4275, %v4276
          %4278 = vadd.xlane.f32.xlu0 %v4277
          %v4279 = vpop.xlane.xlu0 %4278
          %v4280 = vmul.f32 %v4279, %v4212
          %v4281 = vadd.f32 %v4280, 1e-05
          %v4282 = vrsqrt.pop %v4281
          %v4284 = vlaneseq
          %v4285 = vshrl.u32 %v4284, 7
          %v4286 = vsub.s32 0, %v4285
          %v4287 = vrot.slane %v4282, %v4286
          %v4289 = vmul.f32 %v4220, %v4287
          %v4290 = vcombine.high %v4112, %v4119
          %v4291 = vcombine.high %v4126, %v4133
          %v4293 = vunpack.c.l.s4 1966171168
          %v4294 = vunpack.c.0.s8 %v4293
          %v4295 = vlaneseq
          %v4296 = vshrl.u32 %v4295, 7
          %v4297 = vsub.s32 %v4294, %v4296
          %v4298 = vrot.slane %v4290, %v4297
          %v4300 = vunpack.c.l.s4 1966171168
          %v4301 = vunpack.c.0.s8 %v4300
          %v4302 = vlaneseq
          %v4303 = vshrl.u32 %v4302, 7
          %v4304 = vsub.s32 %v4301, %v4303
          %v4305 = vrot.slane %v4291, %v4304
          %v4306 = vcombine.low %v4298, %v4305
          %v4308 = vmul.f32 %v4289, %v4306
          %v4309 = vcombine.high %v4142, %v4149
          %v4311 = vadd.f32 %v4308, %v4309
          %4312 = vst [vmem:[#allocation2] sm:$0xff] %v4311
        $region44: #{model_forward.4} parent=31 // pred_fallthru
          _
        // Predicated region
        $region45: #{model_forward.4} parent=31 // pred_check
          %p4313 = pneg %p237
        $region46: #{model_forward.4} parent=31 // pred_check_branch
          %4315 = sbr.rel (%p4313) target = $region48
        $region47: #{model_forward.4} parent=31 // pred_region
          %v4324 = vcombine.low %v3534, %v3536
          %v4325 = vcombine.low %v3698, %v3700
          %v4326 = vcombine.low %v3862, %v3864
          %v4327 = vcombine.low %v4026, %v4028
          %v4329 = vunpack.c.l.s4 1966171168
          %v4330 = vunpack.c.0.s8 %v4329
          %v4331 = vlaneseq
          %v4332 = vshrl.u32 %v4331, 7
          %v4333 = vsub.s32 %v4330, %v4332
          %v4334 = vrot.slane %v4324, %v4333
          %v4336 = vunpack.c.l.s4 1966171168
          %v4337 = vunpack.c.0.s8 %v4336
          %v4338 = vlaneseq
          %v4339 = vshrl.u32 %v4338, 7
          %v4340 = vsub.s32 %v4337, %v4339
          %v4341 = vrot.slane %v4325, %v4340
          %v4343 = vunpack.c.l.s4 1966171168
          %v4344 = vunpack.c.0.s8 %v4343
          %v4345 = vlaneseq
          %v4346 = vshrl.u32 %v4345, 7
          %v4347 = vsub.s32 %v4344, %v4346
          %v4348 = vrot.slane %v4326, %v4347
          %v4350 = vunpack.c.l.s4 1966171168
          %v4351 = vunpack.c.0.s8 %v4350
          %v4352 = vlaneseq
          %v4353 = vshrl.u32 %v4352, 7
          %v4354 = vsub.s32 %v4351, %v4353
          %v4355 = vrot.slane %v4327, %v4354
          %v4356 = vcombine.low %v4334, %v4341
          %v4357 = vcombine.low %v4348, %v4355
          %v4359 = vunpack.c.l.s4 1966171168
          %v4360 = vunpack.c.0.s8 %v4359
          %v4361 = vlaneseq
          %v4362 = vshrl.u32 %v4361, 7
          %v4363 = vsub.s32 %v4360, %v4362
          %v4364 = vrot.slane %v4356, %v4363
          %v4366 = vunpack.c.l.s4 1966171168
          %v4367 = vunpack.c.0.s8 %v4366
          %v4368 = vlaneseq
          %v4369 = vshrl.u32 %v4368, 7
          %v4370 = vsub.s32 %v4367, %v4369
          %v4371 = vrot.slane %v4357, %v4370
          %v4372 = vcombine.low %v4364, %v4371
          %v4374 = vadd.f32 %v220, %v4372
          %v4383 = vcombine.low %v221, %v222
          %v4384 = vcombine.low %v223, %v224
          %v4385 = vcombine.low %v225, %v226
          %v4386 = vcombine.low %v227, %v228
          %v4388 = vunpack.c.l.s4 1966171168
          %v4389 = vunpack.c.0.s8 %v4388
          %v4390 = vlaneseq
          %v4391 = vshrl.u32 %v4390, 7
          %v4392 = vsub.s32 %v4389, %v4391
          %v4393 = vrot.slane %v4383, %v4392
          %v4395 = vunpack.c.l.s4 1966171168
          %v4396 = vunpack.c.0.s8 %v4395
          %v4397 = vlaneseq
          %v4398 = vshrl.u32 %v4397, 7
          %v4399 = vsub.s32 %v4396, %v4398
          %v4400 = vrot.slane %v4384, %v4399
          %v4402 = vunpack.c.l.s4 1966171168
          %v4403 = vunpack.c.0.s8 %v4402
          %v4404 = vlaneseq
          %v4405 = vshrl.u32 %v4404, 7
          %v4406 = vsub.s32 %v4403, %v4405
          %v4407 = vrot.slane %v4385, %v4406
          %v4409 = vunpack.c.l.s4 1966171168
          %v4410 = vunpack.c.0.s8 %v4409
          %v4411 = vlaneseq
          %v4412 = vshrl.u32 %v4411, 7
          %v4413 = vsub.s32 %v4410, %v4412
          %v4414 = vrot.slane %v4386, %v4413
          %v4415 = vcombine.high %v4393, %v4400
          %v4416 = vcombine.high %v4407, %v4414
          %v4418 = vunpack.c.l.s4 1966171168
          %v4419 = vunpack.c.0.s8 %v4418
          %v4420 = vlaneseq
          %v4421 = vshrl.u32 %v4420, 7
          %v4422 = vsub.s32 %v4419, %v4421
          %v4423 = vrot.slane %v4415, %v4422
          %v4425 = vunpack.c.l.s4 1966171168
          %v4426 = vunpack.c.0.s8 %v4425
          %v4427 = vlaneseq
          %v4428 = vshrl.u32 %v4427, 7
          %v4429 = vsub.s32 %v4426, %v4428
          %v4430 = vrot.slane %v4416, %v4429
          %v4431 = vcombine.high %v4423, %v4430
          %v4433 = vadd.f32 %v4374, %v4431
          %v4435 = vlaneseq
          %v4436 = vshrl.u32 %v4435, 7
          %v4437 = vsub.s32 0, %v4436
          %v4438 = vrot.slane %v4433, %v4437
          %v4439 = vlaneseq
          %v4440 = vshrl.u32 %v4439, 7
          %v4441 = vsub.s32 1, %v4440
          %v4442 = vrot.slane %v4433, %v4441
          %v4443 = vlaneseq
          %v4444 = vshrl.u32 %v4443, 7
          %v4445 = vsub.s32 2, %v4444
          %v4446 = vrot.slane %v4433, %v4445
          %v4447 = vlaneseq
          %v4448 = vshrl.u32 %v4447, 7
          %v4449 = vsub.s32 3, %v4448
          %v4450 = vrot.slane %v4433, %v4449
          %v4451 = vlaneseq
          %v4452 = vshrl.u32 %v4451, 7
          %v4453 = vsub.s32 4, %v4452
          %v4454 = vrot.slane %v4433, %v4453
          %v4455 = vlaneseq
          %v4456 = vshrl.u32 %v4455, 7
          %v4457 = vsub.s32 5, %v4456
          %v4458 = vrot.slane %v4433, %v4457
          %v4459 = vlaneseq
          %v4460 = vshrl.u32 %v4459, 7
          %v4461 = vsub.s32 6, %v4460
          %v4462 = vrot.slane %v4433, %v4461
          %v4463 = vlaneseq
          %v4464 = vshrl.u32 %v4463, 7
          %v4465 = vsub.s32 7, %v4464
          %v4466 = vrot.slane %v4433, %v4465
          %vm4475 = vcmask 1040384
          %v4476 = vsel %vm4475, %v4438, 0.0
          %v4477 = vsel %vm4475, %v4442, 0.0
          %v4478 = vadd.f32 %v4476, %v4477
          %v4479 = vsel %vm4475, %v4446, 0.0
          %v4480 = vadd.f32 %v4478, %v4479
          %v4481 = vsel %vm4475, %v4450, 0.0
          %v4482 = vadd.f32 %v4480, %v4481
          %v4483 = vsel %vm4475, %v4454, 0.0
          %v4484 = vadd.f32 %v4482, %v4483
          %v4485 = vsel %vm4475, %v4458, 0.0
          %v4486 = vadd.f32 %v4484, %v4485
          %v4487 = vsel %vm4475, %v4462, 0.0
          %v4488 = vadd.f32 %v4486, %v4487
          %v4489 = vsel %vm4475, %v4466, 0.0
          %v4490 = vadd.f32 %v4488, %v4489
          %4491 = vadd.xlane.f32.xlu0 %v4490
          %v4492 = vpop.xlane.xlu0 %4491
          %v4493 = vrcp.pop 1024.0
          %v4494 = vmul.f32 %v4492, %v4493
          %v4496 = vlaneseq
          %v4497 = vshrl.u32 %v4496, 7
          %v4498 = vsub.s32 0, %v4497
          %v4499 = vrot.slane %v4494, %v4498
          %v4501 = vsub.f32 %v4433, %v4499
          %v4502 = vmul.f32 %v4501, %v4501
          %v4504 = vlaneseq
          %v4505 = vshrl.u32 %v4504, 7
          %v4506 = vsub.s32 0, %v4505
          %v4507 = vrot.slane %v4502, %v4506
          %v4508 = vlaneseq
          %v4509 = vshrl.u32 %v4508, 7
          %v4510 = vsub.s32 1, %v4509
          %v4511 = vrot.slane %v4502, %v4510
          %v4512 = vlaneseq
          %v4513 = vshrl.u32 %v4512, 7
          %v4514 = vsub.s32 2, %v4513
          %v4515 = vrot.slane %v4502, %v4514
          %v4516 = vlaneseq
          %v4517 = vshrl.u32 %v4516, 7
          %v4518 = vsub.s32 3, %v4517
          %v4519 = vrot.slane %v4502, %v4518
          %v4520 = vlaneseq
          %v4521 = vshrl.u32 %v4520, 7
          %v4522 = vsub.s32 4, %v4521
          %v4523 = vrot.slane %v4502, %v4522
          %v4524 = vlaneseq
          %v4525 = vshrl.u32 %v4524, 7
          %v4526 = vsub.s32 5, %v4525
          %v4527 = vrot.slane %v4502, %v4526
          %v4528 = vlaneseq
          %v4529 = vshrl.u32 %v4528, 7
          %v4530 = vsub.s32 6, %v4529
          %v4531 = vrot.slane %v4502, %v4530
          %v4532 = vlaneseq
          %v4533 = vshrl.u32 %v4532, 7
          %v4534 = vsub.s32 7, %v4533
          %v4535 = vrot.slane %v4502, %v4534
          %v4544 = vsel %vm4475, %v4507, 0.0
          %v4545 = vsel %vm4475, %v4511, 0.0
          %v4546 = vadd.f32 %v4544, %v4545
          %v4547 = vsel %vm4475, %v4515, 0.0
          %v4548 = vadd.f32 %v4546, %v4547
          %v4549 = vsel %vm4475, %v4519, 0.0
          %v4550 = vadd.f32 %v4548, %v4549
          %v4551 = vsel %vm4475, %v4523, 0.0
          %v4552 = vadd.f32 %v4550, %v4551
          %v4553 = vsel %vm4475, %v4527, 0.0
          %v4554 = vadd.f32 %v4552, %v4553
          %v4555 = vsel %vm4475, %v4531, 0.0
          %v4556 = vadd.f32 %v4554, %v4555
          %v4557 = vsel %vm4475, %v4535, 0.0
          %v4558 = vadd.f32 %v4556, %v4557
          %4559 = vadd.xlane.f32.xlu0 %v4558
          %v4560 = vpop.xlane.xlu0 %4559
          %v4561 = vmul.f32 %v4560, %v4493
          %v4562 = vadd.f32 %v4561, 1e-05
          %v4563 = vrsqrt.pop %v4562
          %v4565 = vlaneseq
          %v4566 = vshrl.u32 %v4565, 7
          %v4567 = vsub.s32 0, %v4566
          %v4568 = vrot.slane %v4563, %v4567
          %v4570 = vmul.f32 %v4501, %v4568
          %v4571 = vcombine.high %v221, %v222
          %v4572 = vcombine.high %v223, %v224
          %v4573 = vcombine.high %v225, %v226
          %v4574 = vcombine.high %v227, %v228
          %v4576 = vunpack.c.l.s4 1966171168
          %v4577 = vunpack.c.0.s8 %v4576
          %v4578 = vlaneseq
          %v4579 = vshrl.u32 %v4578, 7
          %v4580 = vsub.s32 %v4577, %v4579
          %v4581 = vrot.slane %v4571, %v4580
          %v4583 = vunpack.c.l.s4 1966171168
          %v4584 = vunpack.c.0.s8 %v4583
          %v4585 = vlaneseq
          %v4586 = vshrl.u32 %v4585, 7
          %v4587 = vsub.s32 %v4584, %v4586
          %v4588 = vrot.slane %v4572, %v4587
          %v4590 = vunpack.c.l.s4 1966171168
          %v4591 = vunpack.c.0.s8 %v4590
          %v4592 = vlaneseq
          %v4593 = vshrl.u32 %v4592, 7
          %v4594 = vsub.s32 %v4591, %v4593
          %v4595 = vrot.slane %v4573, %v4594
          %v4597 = vunpack.c.l.s4 1966171168
          %v4598 = vunpack.c.0.s8 %v4597
          %v4599 = vlaneseq
          %v4600 = vshrl.u32 %v4599, 7
          %v4601 = vsub.s32 %v4598, %v4600
          %v4602 = vrot.slane %v4574, %v4601
          %v4603 = vcombine.low %v4581, %v4588
          %v4604 = vcombine.low %v4595, %v4602
          %v4606 = vunpack.c.l.s4 1966171168
          %v4607 = vunpack.c.0.s8 %v4606
          %v4608 = vlaneseq
          %v4609 = vshrl.u32 %v4608, 7
          %v4610 = vsub.s32 %v4607, %v4609
          %v4611 = vrot.slane %v4603, %v4610
          %v4613 = vunpack.c.l.s4 1966171168
          %v4614 = vunpack.c.0.s8 %v4613
          %v4615 = vlaneseq
          %v4616 = vshrl.u32 %v4615, 7
          %v4617 = vsub.s32 %v4614, %v4616
          %v4618 = vrot.slane %v4604, %v4617
          %v4619 = vcombine.low %v4611, %v4618
          %v4621 = vmul.f32 %v4570, %v4619
          %v4622 = vcombine.high %v4581, %v4588
          %v4623 = vcombine.high %v4595, %v4602
          %v4625 = vunpack.c.l.s4 1966171168
          %v4626 = vunpack.c.0.s8 %v4625
          %v4627 = vlaneseq
          %v4628 = vshrl.u32 %v4627, 7
          %v4629 = vsub.s32 %v4626, %v4628
          %v4630 = vrot.slane %v4622, %v4629
          %v4632 = vunpack.c.l.s4 1966171168
          %v4633 = vunpack.c.0.s8 %v4632
          %v4634 = vlaneseq
          %v4635 = vshrl.u32 %v4634, 7
          %v4636 = vsub.s32 %v4633, %v4635
          %v4637 = vrot.slane %v4623, %v4636
          %v4638 = vcombine.low %v4630, %v4637
          %v4640 = vadd.f32 %v4621, %v4638
          %4641 = vst [vmem:[#allocation2] sm:$0xff] %v4640
        $region48: #{model_forward.4} parent=31 // pred_fallthru
          _
        %p4642 = scmp.eq.s32.totalorder %s22, 2
        // Predicated region
        $region49: #{model_forward.4} parent=31 // pred_check
          %p4643 = pneg %p4642
        $region50: #{model_forward.4} parent=31 // pred_check_branch
          %4645 = sbr.rel (%p4643) target = $region52
        $region51: #{model_forward.4} parent=31 // pred_region
          %v4654 = vrot.slane %v221, 6
          %v4655 = vrot.slane %v222, 6
          %v4656 = vrot.slane %v223, 6
          %v4657 = vrot.slane %v224, 6
          %v4658 = vrot.slane %v225, 6
          %v4659 = vrot.slane %v226, 6
          %v4660 = vrot.slane %v227, 6
          %v4661 = vrot.slane %v228, 6
          %v4670 = vadd.f32 %v3534, %v4654
          %v4671 = vadd.f32 %v3536, %v4655
          %v4672 = vadd.f32 %v3698, %v4656
          %v4673 = vadd.f32 %v3700, %v4657
          %v4674 = vadd.f32 %v3862, %v4658
          %v4675 = vadd.f32 %v3864, %v4659
          %v4676 = vadd.f32 %v4026, %v4660
          %v4677 = vadd.f32 %v4028, %v4661
          %v4678 = vmax.f32 %v4670, 0.0
          %v4679 = vmax.f32 %v4671, 0.0
          %v4680 = vmax.f32 %v4672, 0.0
          %v4681 = vmax.f32 %v4673, 0.0
          %v4682 = vmax.f32 %v4674, 0.0
          %v4683 = vmax.f32 %v4675, 0.0
          %v4684 = vmax.f32 %v4676, 0.0
          %v4685 = vmax.f32 %v4677, 0.0
          %v4694 = vcombine.low %v4678, %v4679
          %v4695 = vcombine.low %v4680, %v4681
          %v4696 = vcombine.low %v4682, %v4683
          %v4697 = vcombine.low %v4684, %v4685
          %v4699 = vunpack.c.l.s4 1966171168
          %v4700 = vunpack.c.0.s8 %v4699
          %v4701 = vlaneseq
          %v4702 = vshrl.u32 %v4701, 7
          %v4703 = vsub.s32 %v4700, %v4702
          %v4704 = vrot.slane %v4694, %v4703
          %v4706 = vunpack.c.l.s4 1966171168
          %v4707 = vunpack.c.0.s8 %v4706
          %v4708 = vlaneseq
          %v4709 = vshrl.u32 %v4708, 7
          %v4710 = vsub.s32 %v4707, %v4709
          %v4711 = vrot.slane %v4695, %v4710
          %v4713 = vunpack.c.l.s4 1966171168
          %v4714 = vunpack.c.0.s8 %v4713
          %v4715 = vlaneseq
          %v4716 = vshrl.u32 %v4715, 7
          %v4717 = vsub.s32 %v4714, %v4716
          %v4718 = vrot.slane %v4696, %v4717
          %v4720 = vunpack.c.l.s4 1966171168
          %v4721 = vunpack.c.0.s8 %v4720
          %v4722 = vlaneseq
          %v4723 = vshrl.u32 %v4722, 7
          %v4724 = vsub.s32 %v4721, %v4723
          %v4725 = vrot.slane %v4697, %v4724
          %v4726 = vcombine.low %v4704, %v4711
          %v4727 = vcombine.low %v4718, %v4725
          %v4729 = vunpack.c.l.s4 1966171168
          %v4730 = vunpack.c.0.s8 %v4729
          %v4731 = vlaneseq
          %v4732 = vshrl.u32 %v4731, 7
          %v4733 = vsub.s32 %v4730, %v4732
          %v4734 = vrot.slane %v4726, %v4733
          %v4736 = vunpack.c.l.s4 1966171168
          %v4737 = vunpack.c.0.s8 %v4736
          %v4738 = vlaneseq
          %v4739 = vshrl.u32 %v4738, 7
          %v4740 = vsub.s32 %v4737, %v4739
          %v4741 = vrot.slane %v4727, %v4740
          %v4742 = vcombine.low %v4734, %v4741
          %4744 = vst [vmem:[#allocation3] sm:$0xff] %v4742
        $region52: #{model_forward.4} parent=31 // pred_fallthru
          _
        %p4745 = scmp.eq.s32.totalorder %s22, 3
        // Predicated region
        $region53: #{model_forward.4} parent=31 // pred_check
          %p4746 = pneg %p4745
        $region54: #{model_forward.4} parent=31 // pred_check_branch
          %4748 = sbr.rel (%p4746) target = $region56
        $region55: #{model_forward.4} parent=31 // pred_region
          %v4757 = vrot.slane %v221, 7
          %v4758 = vrot.slane %v222, 7
          %v4759 = vrot.slane %v223, 7
          %v4760 = vrot.slane %v224, 7
          %v4761 = vrot.slane %v225, 7
          %v4762 = vrot.slane %v226, 7
          %v4763 = vrot.slane %v227, 7
          %v4764 = vrot.slane %v228, 7
          %v4773 = vadd.f32 %v3534, %v4757
          %v4774 = vadd.f32 %v3536, %v4758
          %v4775 = vadd.f32 %v3698, %v4759
          %v4776 = vadd.f32 %v3700, %v4760
          %v4777 = vadd.f32 %v3862, %v4761
          %v4778 = vadd.f32 %v3864, %v4762
          %v4779 = vadd.f32 %v4026, %v4763
          %v4780 = vadd.f32 %v4028, %v4764
          %v4781 = vmax.f32 %v4773, 0.0
          %v4782 = vmax.f32 %v4774, 0.0
          %v4783 = vmax.f32 %v4775, 0.0
          %v4784 = vmax.f32 %v4776, 0.0
          %v4785 = vmax.f32 %v4777, 0.0
          %v4786 = vmax.f32 %v4778, 0.0
          %v4787 = vmax.f32 %v4779, 0.0
          %v4788 = vmax.f32 %v4780, 0.0
          %v4797 = vcombine.low %v4781, %v4782
          %v4798 = vcombine.low %v4783, %v4784
          %v4799 = vcombine.low %v4785, %v4786
          %v4800 = vcombine.low %v4787, %v4788
          %v4802 = vunpack.c.l.s4 1966171168
          %v4803 = vunpack.c.0.s8 %v4802
          %v4804 = vlaneseq
          %v4805 = vshrl.u32 %v4804, 7
          %v4806 = vsub.s32 %v4803, %v4805
          %v4807 = vrot.slane %v4797, %v4806
          %v4809 = vunpack.c.l.s4 1966171168
          %v4810 = vunpack.c.0.s8 %v4809
          %v4811 = vlaneseq
          %v4812 = vshrl.u32 %v4811, 7
          %v4813 = vsub.s32 %v4810, %v4812
          %v4814 = vrot.slane %v4798, %v4813
          %v4816 = vunpack.c.l.s4 1966171168
          %v4817 = vunpack.c.0.s8 %v4816
          %v4818 = vlaneseq
          %v4819 = vshrl.u32 %v4818, 7
          %v4820 = vsub.s32 %v4817, %v4819
          %v4821 = vrot.slane %v4799, %v4820
          %v4823 = vunpack.c.l.s4 1966171168
          %v4824 = vunpack.c.0.s8 %v4823
          %v4825 = vlaneseq
          %v4826 = vshrl.u32 %v4825, 7
          %v4827 = vsub.s32 %v4824, %v4826
          %v4828 = vrot.slane %v4800, %v4827
          %v4829 = vcombine.low %v4807, %v4814
          %v4830 = vcombine.low %v4821, %v4828
          %v4832 = vunpack.c.l.s4 1966171168
          %v4833 = vunpack.c.0.s8 %v4832
          %v4834 = vlaneseq
          %v4835 = vshrl.u32 %v4834, 7
          %v4836 = vsub.s32 %v4833, %v4835
          %v4837 = vrot.slane %v4829, %v4836
          %v4839 = vunpack.c.l.s4 1966171168
          %v4840 = vunpack.c.0.s8 %v4839
          %v4841 = vlaneseq
          %v4842 = vshrl.u32 %v4841, 7
          %v4843 = vsub.s32 %v4840, %v4842
          %v4844 = vrot.slane %v4830, %v4843
          %v4845 = vcombine.low %v4837, %v4844
          %4847 = vst [vmem:[#allocation4] sm:$0xff] %v4845
        $region56: #{model_forward.4} parent=31 // pred_fallthru
          _
        // Predicated region
        $region57: #{model_forward.4} parent=31 // pred_check
          %p4848 = pneg %p239
        $region58: #{model_forward.4} parent=31 // pred_check_branch
          %4850 = sbr.rel (%p4848) target = $region60
        $region59: #{model_forward.4} parent=31 // pred_region
          %v4859 = vcombine.low %v3534, %v3536
          %v4860 = vcombine.low %v3698, %v3700
          %v4861 = vcombine.low %v3862, %v3864
          %v4862 = vcombine.low %v4026, %v4028
          %v4864 = vunpack.c.l.s4 1966171168
          %v4865 = vunpack.c.0.s8 %v4864
          %v4866 = vlaneseq
          %v4867 = vshrl.u32 %v4866, 7
          %v4868 = vsub.s32 %v4865, %v4867
          %v4869 = vrot.slane %v4859, %v4868
          %v4871 = vunpack.c.l.s4 1966171168
          %v4872 = vunpack.c.0.s8 %v4871
          %v4873 = vlaneseq
          %v4874 = vshrl.u32 %v4873, 7
          %v4875 = vsub.s32 %v4872, %v4874
          %v4876 = vrot.slane %v4860, %v4875
          %v4878 = vunpack.c.l.s4 1966171168
          %v4879 = vunpack.c.0.s8 %v4878
          %v4880 = vlaneseq
          %v4881 = vshrl.u32 %v4880, 7
          %v4882 = vsub.s32 %v4879, %v4881
          %v4883 = vrot.slane %v4861, %v4882
          %v4885 = vunpack.c.l.s4 1966171168
          %v4886 = vunpack.c.0.s8 %v4885
          %v4887 = vlaneseq
          %v4888 = vshrl.u32 %v4887, 7
          %v4889 = vsub.s32 %v4886, %v4888
          %v4890 = vrot.slane %v4862, %v4889
          %v4891 = vcombine.low %v4869, %v4876
          %v4892 = vcombine.low %v4883, %v4890
          %v4894 = vunpack.c.l.s4 1966171168
          %v4895 = vunpack.c.0.s8 %v4894
          %v4896 = vlaneseq
          %v4897 = vshrl.u32 %v4896, 7
          %v4898 = vsub.s32 %v4895, %v4897
          %v4899 = vrot.slane %v4891, %v4898
          %v4901 = vunpack.c.l.s4 1966171168
          %v4902 = vunpack.c.0.s8 %v4901
          %v4903 = vlaneseq
          %v4904 = vshrl.u32 %v4903, 7
          %v4905 = vsub.s32 %v4902, %v4904
          %v4906 = vrot.slane %v4892, %v4905
          %v4907 = vcombine.low %v4899, %v4906
          %4909 = vst [vmem:[#allocation5] sm:$0xff] %v4907
        $region60: #{model_forward.4} parent=31 // pred_fallthru
          _
        // Predicated region
        $region61: #{model_forward.4} parent=31 // pred_check
          %p4910 = pneg %p241
        $region62: #{model_forward.4} parent=31 // pred_check_branch
          %4912 = sbr.rel (%p4910) target = $region64
        $region63: #{model_forward.4} parent=31 // pred_region
          %v4913 = vld [vmem:[#allocation5] sm:$0xff]
          %v4922 = vcombine.low %v3534, %v3536
          %v4923 = vcombine.low %v3698, %v3700
          %v4924 = vcombine.low %v3862, %v3864
          %v4925 = vcombine.low %v4026, %v4028
          %v4927 = vunpack.c.l.s4 1966171168
          %v4928 = vunpack.c.0.s8 %v4927
          %v4929 = vlaneseq
          %v4930 = vshrl.u32 %v4929, 7
          %v4931 = vsub.s32 %v4928, %v4930
          %v4932 = vrot.slane %v4922, %v4931
          %v4934 = vunpack.c.l.s4 1966171168
          %v4935 = vunpack.c.0.s8 %v4934
          %v4936 = vlaneseq
          %v4937 = vshrl.u32 %v4936, 7
          %v4938 = vsub.s32 %v4935, %v4937
          %v4939 = vrot.slane %v4923, %v4938
          %v4941 = vunpack.c.l.s4 1966171168
          %v4942 = vunpack.c.0.s8 %v4941
          %v4943 = vlaneseq
          %v4944 = vshrl.u32 %v4943, 7
          %v4945 = vsub.s32 %v4942, %v4944
          %v4946 = vrot.slane %v4924, %v4945
          %v4948 = vunpack.c.l.s4 1966171168
          %v4949 = vunpack.c.0.s8 %v4948
          %v4950 = vlaneseq
          %v4951 = vshrl.u32 %v4950, 7
          %v4952 = vsub.s32 %v4949, %v4951
          %v4953 = vrot.slane %v4925, %v4952
          %v4954 = vcombine.low %v4932, %v4939
          %v4955 = vcombine.low %v4946, %v4953
          %v4957 = vunpack.c.l.s4 1966171168
          %v4958 = vunpack.c.0.s8 %v4957
          %v4959 = vlaneseq
          %v4960 = vshrl.u32 %v4959, 7
          %v4961 = vsub.s32 %v4958, %v4960
          %v4962 = vrot.slane %v4954, %v4961
          %v4964 = vunpack.c.l.s4 1966171168
          %v4965 = vunpack.c.0.s8 %v4964
          %v4966 = vlaneseq
          %v4967 = vshrl.u32 %v4966, 7
          %v4968 = vsub.s32 %v4965, %v4967
          %v4969 = vrot.slane %v4955, %v4968
          %v4970 = vcombine.low %v4962, %v4969
          %v4972 = vadd.f32 %v4913, %v4970
          %v4981 = vcombine.low %v229, %v230
          %v4982 = vcombine.low %v231, %v232
          %v4983 = vcombine.low %v233, %v234
          %v4984 = vcombine.low %v235, %v236
          %v4986 = vunpack.c.l.s4 1966171168
          %v4987 = vunpack.c.0.s8 %v4986
          %v4988 = vlaneseq
          %v4989 = vshrl.u32 %v4988, 7
          %v4990 = vsub.s32 %v4987, %v4989
          %v4991 = vrot.slane %v4981, %v4990
          %v4993 = vunpack.c.l.s4 1966171168
          %v4994 = vunpack.c.0.s8 %v4993
          %v4995 = vlaneseq
          %v4996 = vshrl.u32 %v4995, 7
          %v4997 = vsub.s32 %v4994, %v4996
          %v4998 = vrot.slane %v4982, %v4997
          %v5000 = vunpack.c.l.s4 1966171168
          %v5001 = vunpack.c.0.s8 %v5000
          %v5002 = vlaneseq
          %v5003 = vshrl.u32 %v5002, 7
          %v5004 = vsub.s32 %v5001, %v5003
          %v5005 = vrot.slane %v4983, %v5004
          %v5007 = vunpack.c.l.s4 1966171168
          %v5008 = vunpack.c.0.s8 %v5007
          %v5009 = vlaneseq
          %v5010 = vshrl.u32 %v5009, 7
          %v5011 = vsub.s32 %v5008, %v5010
          %v5012 = vrot.slane %v4984, %v5011
          %v5013 = vcombine.low %v4991, %v4998
          %v5014 = vcombine.low %v5005, %v5012
          %v5016 = vunpack.c.l.s4 1966171168
          %v5017 = vunpack.c.0.s8 %v5016
          %v5018 = vlaneseq
          %v5019 = vshrl.u32 %v5018, 7
          %v5020 = vsub.s32 %v5017, %v5019
          %v5021 = vrot.slane %v5013, %v5020
          %v5023 = vunpack.c.l.s4 1966171168
          %v5024 = vunpack.c.0.s8 %v5023
          %v5025 = vlaneseq
          %v5026 = vshrl.u32 %v5025, 7
          %v5027 = vsub.s32 %v5024, %v5026
          %v5028 = vrot.slane %v5014, %v5027
          %v5029 = vcombine.low %v5021, %v5028
          %v5031 = vadd.f32 %v4972, %v5029
          %v5032 = vadd.f32 %v220, %v5031
          %v5034 = vlaneseq
          %v5035 = vshrl.u32 %v5034, 7
          %v5036 = vsub.s32 0, %v5035
          %v5037 = vrot.slane %v5032, %v5036
          %v5038 = vlaneseq
          %v5039 = vshrl.u32 %v5038, 7
          %v5040 = vsub.s32 1, %v5039
          %v5041 = vrot.slane %v5032, %v5040
          %v5042 = vlaneseq
          %v5043 = vshrl.u32 %v5042, 7
          %v5044 = vsub.s32 2, %v5043
          %v5045 = vrot.slane %v5032, %v5044
          %v5046 = vlaneseq
          %v5047 = vshrl.u32 %v5046, 7
          %v5048 = vsub.s32 3, %v5047
          %v5049 = vrot.slane %v5032, %v5048
          %v5050 = vlaneseq
          %v5051 = vshrl.u32 %v5050, 7
          %v5052 = vsub.s32 4, %v5051
          %v5053 = vrot.slane %v5032, %v5052
          %v5054 = vlaneseq
          %v5055 = vshrl.u32 %v5054, 7
          %v5056 = vsub.s32 5, %v5055
          %v5057 = vrot.slane %v5032, %v5056
          %v5058 = vlaneseq
          %v5059 = vshrl.u32 %v5058, 7
          %v5060 = vsub.s32 6, %v5059
          %v5061 = vrot.slane %v5032, %v5060
          %v5062 = vlaneseq
          %v5063 = vshrl.u32 %v5062, 7
          %v5064 = vsub.s32 7, %v5063
          %v5065 = vrot.slane %v5032, %v5064
          %vm5074 = vcmask 1040384
          %v5075 = vsel %vm5074, %v5037, 0.0
          %v5076 = vsel %vm5074, %v5041, 0.0
          %v5077 = vadd.f32 %v5075, %v5076
          %v5078 = vsel %vm5074, %v5045, 0.0
          %v5079 = vadd.f32 %v5077, %v5078
          %v5080 = vsel %vm5074, %v5049, 0.0
          %v5081 = vadd.f32 %v5079, %v5080
          %v5082 = vsel %vm5074, %v5053, 0.0
          %v5083 = vadd.f32 %v5081, %v5082
          %v5084 = vsel %vm5074, %v5057, 0.0
          %v5085 = vadd.f32 %v5083, %v5084
          %v5086 = vsel %vm5074, %v5061, 0.0
          %v5087 = vadd.f32 %v5085, %v5086
          %v5088 = vsel %vm5074, %v5065, 0.0
          %v5089 = vadd.f32 %v5087, %v5088
          %5090 = vadd.xlane.f32.xlu0 %v5089
          %v5091 = vpop.xlane.xlu0 %5090
          %v5092 = vrcp.pop 1024.0
          %v5093 = vmul.f32 %v5091, %v5092
          %v5095 = vlaneseq
          %v5096 = vshrl.u32 %v5095, 7
          %v5097 = vsub.s32 0, %v5096
          %v5098 = vrot.slane %v5093, %v5097
          %v5100 = vsub.f32 %v5032, %v5098
          %v5101 = vmul.f32 %v5100, %v5100
          %v5103 = vlaneseq
          %v5104 = vshrl.u32 %v5103, 7
          %v5105 = vsub.s32 0, %v5104
          %v5106 = vrot.slane %v5101, %v5105
          %v5107 = vlaneseq
          %v5108 = vshrl.u32 %v5107, 7
          %v5109 = vsub.s32 1, %v5108
          %v5110 = vrot.slane %v5101, %v5109
          %v5111 = vlaneseq
          %v5112 = vshrl.u32 %v5111, 7
          %v5113 = vsub.s32 2, %v5112
          %v5114 = vrot.slane %v5101, %v5113
          %v5115 = vlaneseq
          %v5116 = vshrl.u32 %v5115, 7
          %v5117 = vsub.s32 3, %v5116
          %v5118 = vrot.slane %v5101, %v5117
          %v5119 = vlaneseq
          %v5120 = vshrl.u32 %v5119, 7
          %v5121 = vsub.s32 4, %v5120
          %v5122 = vrot.slane %v5101, %v5121
          %v5123 = vlaneseq
          %v5124 = vshrl.u32 %v5123, 7
          %v5125 = vsub.s32 5, %v5124
          %v5126 = vrot.slane %v5101, %v5125
          %v5127 = vlaneseq
          %v5128 = vshrl.u32 %v5127, 7
          %v5129 = vsub.s32 6, %v5128
          %v5130 = vrot.slane %v5101, %v5129
          %v5131 = vlaneseq
          %v5132 = vshrl.u32 %v5131, 7
          %v5133 = vsub.s32 7, %v5132
          %v5134 = vrot.slane %v5101, %v5133
          %v5143 = vsel %vm5074, %v5106, 0.0
          %v5144 = vsel %vm5074, %v5110, 0.0
          %v5145 = vadd.f32 %v5143, %v5144
          %v5146 = vsel %vm5074, %v5114, 0.0
          %v5147 = vadd.f32 %v5145, %v5146
          %v5148 = vsel %vm5074, %v5118, 0.0
          %v5149 = vadd.f32 %v5147, %v5148
          %v5150 = vsel %vm5074, %v5122, 0.0
          %v5151 = vadd.f32 %v5149, %v5150
          %v5152 = vsel %vm5074, %v5126, 0.0
          %v5153 = vadd.f32 %v5151, %v5152
          %v5154 = vsel %vm5074, %v5130, 0.0
          %v5155 = vadd.f32 %v5153, %v5154
          %v5156 = vsel %vm5074, %v5134, 0.0
          %v5157 = vadd.f32 %v5155, %v5156
          %5158 = vadd.xlane.f32.xlu0 %v5157
          %v5159 = vpop.xlane.xlu0 %5158
          %v5160 = vmul.f32 %v5159, %v5092
          %v5161 = vadd.f32 %v5160, 1e-05
          %v5162 = vrsqrt.pop %v5161
          %v5164 = vlaneseq
          %v5165 = vshrl.u32 %v5164, 7
          %v5166 = vsub.s32 0, %v5165
          %v5167 = vrot.slane %v5162, %v5166
          %v5169 = vmul.f32 %v5100, %v5167
          %v5170 = vcombine.high %v4991, %v4998
          %v5171 = vcombine.high %v5005, %v5012
          %v5173 = vunpack.c.l.s4 1966171168
          %v5174 = vunpack.c.0.s8 %v5173
          %v5175 = vlaneseq
          %v5176 = vshrl.u32 %v5175, 7
          %v5177 = vsub.s32 %v5174, %v5176
          %v5178 = vrot.slane %v5170, %v5177
          %v5180 = vunpack.c.l.s4 1966171168
          %v5181 = vunpack.c.0.s8 %v5180
          %v5182 = vlaneseq
          %v5183 = vshrl.u32 %v5182, 7
          %v5184 = vsub.s32 %v5181, %v5183
          %v5185 = vrot.slane %v5171, %v5184
          %v5186 = vcombine.low %v5178, %v5185
          %v5188 = vmul.f32 %v5169, %v5186
          %v5189 = vcombine.high %v5021, %v5028
          %v5191 = vadd.f32 %v5188, %v5189
          %5192 = vst [vmem:[#allocation2] sm:$0xff] %v5191
        $region64: #{model_forward.4} parent=31 // pred_fallthru
          _
        %p5193 = scmp.eq.s32.totalorder %s21, 5
        %p5194 = pnand %p5193, %p241
        %p5195 = pneg %p5194
        // Predicated region
        $region65: #{model_forward.4} parent=31 // pred_check
          _
        $region66: #{model_forward.4} parent=31 // pred_check_branch
          %5197 = sbr.rel (%p5194) target = $region68
        $region67: #{model_forward.4} parent=31 // pred_region
          %v5198 = vld [vmem:[#allocation2] sm:$0xff]
          %5199 = vst [vmem:[%s3] sm:$0xff] %v5198
        $region68: #{model_forward.4} parent=31 // pred_fallthru
          _
        // Predicated region
        $region69: #{model_forward.4} parent=31 // pred_check
          %p5200 = pneg %p117
        $region70: #{model_forward.4} parent=31 // pred_check_branch
          %5202 = sbr.rel (%p5200) target = $region72
        $region71: #{model_forward.4} parent=31 // pred_region
          _
        $region72: #{model_forward.4} parent=31 // pred_fallthru
          _
        // Predicated region
        $region73: #{model_forward.4} parent=31 // pred_check
          %p5203 = pneg %p117
        $region74: #{model_forward.4} parent=31 // pred_check_branch
          %5205 = sbr.rel (%p5203) target = $region76
        $region75: #{model_forward.4} parent=31 // pred_region
          _
        $region76: #{model_forward.4} parent=31 // pred_fallthru
          _
      $region32: #{model_forward.4} parent=5 // pred_fallthru
        _
      %p5206 = scmp.le.s32.totalorder 2, %s12
      // Predicated region
      $region77: #{model_forward.4} parent=5 // pred_check
        %p5207 = pneg %p5206
      $region78: #{model_forward.4} parent=5 // pred_check_branch
        %5209 = sbr.rel (%p5207) target = $region80
      $region79: #{model_forward.4} parent=5 // pred_region
        %s5210 = ssub.s32 %s12, 2
      $region80: #{model_forward.4} parent=5 // pred_fallthru
        _
    $region6: #{model_forward.4} parent=1 // loop_footer
      %s16 = sadd.s32 1, %s12
    $region7: #{model_forward.4} parent=1 // loop_footer_branch
      %11 = sbr.rel target = $region3
    $region8: #{model_forward.4} parent=1 // loop_exit
      _
    %5211 = vsyncpa [#allocation7], 1
    %s5212 = scalar_lea.sflag [#allocation7], 1
    %5213 = vsyncpa %s5212, 1

</llo_original>
